<compile_context>
chip_gen: v6e
topology: v6e:2x2x1
jax: 0.10.0
libtpu: 0.0.40
codegen_flags: <defaults>
</compile_context>

<pallas_src>
import math
from functools import partial

import jax
import jax.numpy as jnp
from jax import lax
from jax.experimental import pallas as pl
from jax.experimental.pallas import tpu as pltpu


# ------------------------------------------------------------------
# Kernel helpers
# ------------------------------------------------------------------

def _per_batch_time_max(x, batch):
    """x: [n_t*batch, D], rows ordered (t-major, b-minor)  ->  [batch, D] max over t.

    Folding tree over contiguous sublane slabs: only elementwise maxima on contiguous
    slices (no strided loads, no (tt, B, D) reshape that would re-introduce sublane
    padding).  When n is odd the two halves overlap by one t-row (harmless for max)."""
    cur = x
    n = x.shape[0] // batch
    while n > 1:
        m = (n + 1) // 2
        cur = jnp.maximum(cur[: m * batch, :], cur[(n - m) * batch:, :])
        n = m
    return cur


def _localize_kernel(x_ref, wc_ref, bc_ref, we_ref, be_ref,
                     logits_ref, out2_ref, acc_ref, *, batch, fuse_event):
    """One grid step processes a flattened [tt*B, D] slab of fused_content.

    x_ref      : [tt*B, D]  activation tile (VMEM, double-buffered)
    wc_ref     : [D, 1]     classifier weight column (VMEM resident)
    bc_ref     : [1]        classifier bias (SMEM scalar)
    we_ref     : [D, 28]    event-classifier weight (VMEM resident)
    be_ref     : [1, 28]    event-classifier bias (VMEM resident)
    logits_ref : [1, tt*B]  lane-dense per-position logits for this tile
    out2_ref   : [B, 28]    event logits            (fuse_event=True,  written at last step)
                 [1, B, D]  per-split partial max   (fuse_event=False, written at last step)
    acc_ref    : [B, D]     running max over the time axis (VMEM scratch)
    """
    t = pl.program_id(1)

    x = x_ref[...]                                              # [tt*B, D]

    # ---- per-position classifier logit on the (otherwise idle) MXU ----------
    # Result is relaid out once to a lane-dense [1, tt*B] row so stores are
    # unmasked and the output VMEM block is not 128-lane padded.
    col = jnp.dot(x, wc_ref[...], preferred_element_type=jnp.float32,
                  precision=lax.Precision.HIGHEST)              # [tt*B, 1]
    logits_ref[...] = col.reshape(1, -1) + bc_ref[0]

    # ---- running per-batch max over the time axis ----------------------------
    tile_max = _per_batch_time_max(x, batch)                    # [B, D]

    @pl.when(t == 0)
    def _init():
        acc_ref[...] = tile_max                                 # init directly from first tile

    @pl.when(t != 0)
    def _update():
        acc_ref[...] = jnp.maximum(acc_ref[...], tile_max)

    @pl.when(t == pl.num_programs(1) - 1)
    def _finalize():
        if fuse_event:   # static: event classifier fused in-kernel (single-split grid)
            out2_ref[...] = (jnp.dot(acc_ref[...], we_ref[...],
                                     preferred_element_type=jnp.float32,
                                     precision=lax.Precision.HIGHEST)
                             + be_ref[...])
        else:            # static: emit this split's partial max; combined in the wrapper
            out2_ref[...] = acc_ref[...][None]


# ------------------------------------------------------------------
# Wrapper
# ------------------------------------------------------------------

def supv_localize_forward(params, fused_content, *, block_t=None, n_split=None):
    """SupvLocalizeModule.forward.  fused_content: [T, B, D] (seq-first).

    Returns (logits [T, B, 1], class_scores [B, 28])."""
    wc = params['w_cls']          # [D]
    bc = params['b_cls']          # [1]
    we = params['w_evt']          # [D, 28]
    be = params['b_evt']          # [28]

    if fused_content.dtype != jnp.float32:
        fused_content = fused_content.astype(jnp.float32)

    T, B, D = fused_content.shape
    n_evt = we.shape[1]

    # Flattened [T*B, D] view: contiguous, no sublane padding from a small B.
    x2d = fused_content.reshape(T * B, D)

    # ---- time-tile selection: biggest tile within an ~8 MiB/buffer budget ----
    bytes_per_t = B * D * 4
    lane_mult = 128 // math.gcd(B, 128)       # smallest tt step so that tt*B % 128 == 0
    budget = 8 << 20
    if block_t is None:
        tt = max(lane_mult, (budget // bytes_per_t) // lane_mult * lane_mult)
    else:
        tt = max(lane_mult, (block_t // lane_mult) * lane_mult)
    if tt >= T:                               # single full-extent block, no constraints
        tt, nb = T, 1
    else:
        nb = pl.cdiv(T, tt)

    # Optional 2-way split of the time range across TensorCores (v7x megacore).
    if n_split is None:
        n_split = 2 if nb >= 8 else 1
    n_split = max(1, min(n_split, nb))
    bps = pl.cdiv(nb, n_split)                # time blocks per split
    nb_total = n_split * bps
    t_pad = nb_total * tt
    fuse_event = (n_split == 1)

    if t_pad != T:
        # Pad with the most negative finite float: padded rows never win the max and
        # their (discarded) logits stay finite, so no per-step masking in the kernel.
        pad_val = float(jnp.finfo(jnp.float32).min)
        x2d = jnp.pad(x2d, ((0, (t_pad - T) * B), (0, 0)), constant_values=pad_val)

    rows = tt * B                             # rows per tile (multiple of 128 when tiled)

    if fuse_event:
        out2_shape = jax.ShapeDtypeStruct((B, n_evt), jnp.float32)
        out2_spec = pl.BlockSpec((B, n_evt), lambda p, t: (0, 0))
    else:
        out2_shape = jax.ShapeDtypeStruct((n_split, B, D), jnp.float32)
        out2_spec = pl.BlockSpec((1, B, D), lambda p, t: (p, 0, 0))

    in_tile_bytes = rows * D * 4
    vmem_limit = int(min(64 << 20, max(32 << 20, 2 * in_tile_bytes + (8 << 20))))

    cost = pl.CostEstimate(
        flops=3 * T * B * D + 2 * B * D * n_evt,
        transcendentals=0,
        bytes_accessed=4 * (T * B * D + T * B + B * n_evt + D * (n_evt + 1) + n_evt + 1))

    kernel = partial(_localize_kernel, batch=B, fuse_event=fuse_event)

    logits2d, out2 = pl.pallas_call(
        kernel,
        out_shape=(jax.ShapeDtypeStruct((nb_total, rows), jnp.float32), out2_shape),
        grid=(n_split, bps),
        in_specs=[
            pl.BlockSpec((rows, D), lambda p, t: (p * bps + t, 0)),        # activations
            pl.BlockSpec((D, 1), lambda p, t: (0, 0)),                     # classifier w
            pl.BlockSpec(memory_space=pltpu.MemorySpace.SMEM),             # classifier b
            pl.BlockSpec((D, n_evt), lambda p, t: (0, 0)),                 # event w
            pl.BlockSpec((1, n_evt), lambda p, t: (0, 0)),                 # event b
        ],
        out_specs=(
            pl.BlockSpec((1, rows), lambda p, t: (p * bps + t, 0)),        # lane-dense logits
            out2_spec,                                                     # class / partial max
        ),
        scratch_shapes=[pltpu.VMEM((B, D), jnp.float32)],                  # running max
        compiler_params=pltpu.CompilerParams(
            dimension_semantics=("parallel", "arbitrary"),                 # split x reduction
            vmem_limit_bytes=vmem_limit),
        cost_estimate=cost,
    )(x2d, wc.reshape(D, 1), bc.reshape(1), we, be.reshape(1, n_evt))

    logits = logits2d.reshape(-1)[: T * B].reshape(T, B, 1)     # metadata-only reshape/slice

    if fuse_event:
        class_scores = out2
    else:
        # Tiny epilogue (max-combine over splits + [B,D]@[D,28]) when the time range was
        # split across TensorCores; trivially cheap wherever it runs.
        max_fused = jnp.max(out2, axis=0)
        class_scores = jnp.dot(max_fused, we, precision=lax.Precision.HIGHEST) + be

    return logits, class_scores


# ------------------------------------------------------------------
# Plain-JAX reference (for correctness checking only)
# ------------------------------------------------------------------

def _reference(params, fused_content):
    logits = (jnp.dot(fused_content, params['w_cls'][:, None],
                      precision=lax.Precision.HIGHEST) + params['b_cls'])
    max_fused = jnp.max(fused_content, axis=0)
    class_scores = (jnp.dot(max_fused, params['w_evt'],
                            precision=lax.Precision.HIGHEST) + params['b_evt'])
    return logits, class_scores


# ------------------------------------------------------------------

if __name__ == "__main__":
    key = jax.random.PRNGKey(0)
    k1, k2, k3, k4, kx1, kx2, kx3 = jax.random.split(key, 7)

    D = 256                       # d_model used by the surrounding model
    s = 1.0 / math.sqrt(D)
    params = dict(
        w_cls=jax.random.uniform(k1, (D,), jnp.float32, -s, s),
        b_cls=jax.random.uniform(k2, (1,), jnp.float32, -s, s),
        w_evt=jax.random.uniform(k3, (D, 28), jnp.float32, -s, s),
        b_evt=jax.random.uniform(k4, (28,), jnp.float32, -s, s),
    )

    def check(fn, x, name):
        logits, scores = fn(params, x)
        jax.block_until_ready((logits, scores))
        ref_l, ref_s = _reference(params, x)
        assert logits.shape == (x.shape[0], x.shape[1], 1), name
        assert scores.shape == (x.shape[1], 28), name
        assert jnp.allclose(logits, ref_l, atol=1e-4, rtol=1e-4), name
        assert jnp.allclose(scores, ref_s, atol=1e-4, rtol=1e-4), name

    # case 1: the module's reference shape (T=32, B=10, d_model=256): single fused step
    x1 = jax.random.normal(kx1, (32, 10, D), jnp.float32)
    check(jax.jit(supv_localize_forward), x1, "case1")

    # case 2: tiled time axis with the event classifier fused in-kernel (n_split=1)
    x2 = jax.random.normal(kx2, (200, 4, D), jnp.float32)
    check(jax.jit(partial(supv_localize_forward, block_t=64, n_split=1)), x2, "case2")

    # case 3: tiled + 2-way "parallel" split of the time range (v7x dual-TensorCore path)
    x3 = jax.random.normal(kx3, (300, 4, D), jnp.float32)
    check(jax.jit(partial(supv_localize_forward, block_t=64, n_split=2)), x3, "case3")

    print("KERNEL_OK")
</pallas_src>

<mosaic_0001>
module attributes {stable_mosaic.version = 11 : i64} {
  func.func @_localize_kernel(%arg0: i32, %arg1: i32, %arg2: memref<320x256xf32, #tpu.memory_space<vmem>>, %arg3: memref<256x1xf32, #tpu.memory_space<vmem>>, %arg4: memref<1xf32, #tpu.memory_space<smem>>, %arg5: memref<256x28xf32, #tpu.memory_space<vmem>>, %arg6: memref<1x28xf32, #tpu.memory_space<vmem>>, %arg7: memref<1x320xf32, #tpu.memory_space<vmem>>, %arg8: memref<10x28xf32, #tpu.memory_space<vmem>>, %arg9: memref<10x256xf32, #tpu.memory_space<vmem>>) attributes {dimension_semantics = [#tpu.dimension_semantics<parallel>, #tpu.dimension_semantics<arbitrary>], iteration_bounds = array<i64: 1, 1>, scalar_prefetch = 0 : i64, scratch_operands = 1 : i64, tpu.core_type = #tpu.core_type<tc>, window_params = [{transform_indices = @transform_0, window_bounds = array<i64: 320, 256>}, {pipeline_mode = #tpu.pipeline_mode<synchronous>, transform_indices = @transform_1, window_bounds = array<i64: 256, 1>}, {transform_indices = @transform_2, window_bounds = array<i64: 1>}, {pipeline_mode = #tpu.pipeline_mode<synchronous>, transform_indices = @transform_3, window_bounds = array<i64: 256, 28>}, {pipeline_mode = #tpu.pipeline_mode<synchronous>, transform_indices = @transform_4, window_bounds = array<i64: 1, 28>}, {transform_indices = @transform_5, window_bounds = array<i64: 1, 320>}, {pipeline_mode = #tpu.pipeline_mode<synchronous>, transform_indices = @transform_6, window_bounds = array<i64: 10, 28>}]} {
    %c0 = arith.constant 0 : index
    %c0_0 = arith.constant 0 : index
    %0 = vector.load %arg2[%c0, %c0_0] : memref<320x256xf32, #tpu.memory_space<vmem>>, vector<320x256xf32>
    %c0_1 = arith.constant 0 : index
    %c0_2 = arith.constant 0 : index
    %1 = vector.load %arg3[%c0_1, %c0_2] : memref<256x1xf32, #tpu.memory_space<vmem>>, vector<256x1xf32>
    %cst = arith.constant dense<0.000000e+00> : vector<320x1xf32>
    %2 = tpu.matmul %0, %1, %cst {dimension_numbers = #tpu.dot_dimension_numbers<[1], [0], [0], [1], [0, 0, 1, 1], [], []>, precision = #tpu.contract_precision<fp32>} : vector<320x256xf32>, vector<256x1xf32>, vector<320x1xf32> -> vector<320x1xf32>
    %3 = vector.shape_cast %2 : vector<320x1xf32> to vector<1x320xf32>
    %c0_3 = arith.constant 0 : index
    %4 = memref.load %arg4[%c0_3] : memref<1xf32, #tpu.memory_space<smem>>
    %5 = vector.broadcast %4 : f32 to vector<1x320xf32>
    %6 = arith.addf %3, %5 : vector<1x320xf32>
    %c0_4 = arith.constant 0 : index
    %c0_5 = arith.constant 0 : index
    %7 = vector.load %arg7[%c0_4, %c0_5] : memref<1x320xf32, #tpu.memory_space<vmem>>, vector<1x320xf32>
    tpu.vector_store %arg7[%c0_4, %c0_5], %6 {strides = array<i32>} : memref<1x320xf32, #tpu.memory_space<vmem>>, vector<1x320xf32>,
    %8 = vector.extract_strided_slice %0 {offsets = [0, 0], sizes = [160, 256], strides = [1, 1]} : vector<320x256xf32> to vector<160x256xf32>
    %9 = vector.extract_strided_slice %0 {offsets = [160, 0], sizes = [160, 256], strides = [1, 1]} : vector<320x256xf32> to vector<160x256xf32>
    %10 = arith.maximumf %8, %9 : vector<160x256xf32>
    %11 = vector.extract_strided_slice %10 {offsets = [0, 0], sizes = [80, 256], strides = [1, 1]} : vector<160x256xf32> to vector<80x256xf32>
    %12 = vector.extract_strided_slice %10 {offsets = [80, 0], sizes = [80, 256], strides = [1, 1]} : vector<160x256xf32> to vector<80x256xf32>
    %13 = arith.maximumf %11, %12 : vector<80x256xf32>
    %14 = vector.extract_strided_slice %13 {offsets = [0, 0], sizes = [40, 256], strides = [1, 1]} : vector<80x256xf32> to vector<40x256xf32>
    %15 = vector.extract_strided_slice %13 {offsets = [40, 0], sizes = [40, 256], strides = [1, 1]} : vector<80x256xf32> to vector<40x256xf32>
    %16 = arith.maximumf %14, %15 : vector<40x256xf32>
    %17 = vector.extract_strided_slice %16 {offsets = [0, 0], sizes = [20, 256], strides = [1, 1]} : vector<40x256xf32> to vector<20x256xf32>
    %18 = vector.extract_strided_slice %16 {offsets = [20, 0], sizes = [20, 256], strides = [1, 1]} : vector<40x256xf32> to vector<20x256xf32>
    %19 = arith.maximumf %17, %18 : vector<20x256xf32>
    %20 = vector.extract_strided_slice %19 {offsets = [0, 0], sizes = [10, 256], strides = [1, 1]} : vector<20x256xf32> to vector<10x256xf32>
    %21 = vector.extract_strided_slice %19 {offsets = [10, 0], sizes = [10, 256], strides = [1, 1]} : vector<20x256xf32> to vector<10x256xf32>
    %22 = arith.maximumf %20, %21 : vector<10x256xf32>
    %c0_i32 = arith.constant 0 : i32
    %23 = arith.cmpi eq, %arg1, %c0_i32 : i32
    %24 = arith.extui %23 : i1 to i32
    %c0_i32_6 = arith.constant 0 : i32
    %25 = arith.cmpi ne, %24, %c0_i32_6 : i32
    scf.if %25 {
      %c0_11 = arith.constant 0 : index
      %c0_12 = arith.constant 0 : index
      %32 = vector.load %arg9[%c0_11, %c0_12] : memref<10x256xf32, #tpu.memory_space<vmem>>, vector<10x256xf32>
      tpu.vector_store %arg9[%c0_11, %c0_12], %22 {strides = array<i32>} : memref<10x256xf32, #tpu.memory_space<vmem>>, vector<10x256xf32>,
    } else {
    }
    %c0_i32_7 = arith.constant 0 : i32
    %26 = arith.cmpi ne, %arg1, %c0_i32_7 : i32
    %27 = arith.extui %26 : i1 to i32
    %c0_i32_8 = arith.constant 0 : i32
    %28 = arith.cmpi ne, %27, %c0_i32_8 : i32
    scf.if %28 {
      %c0_11 = arith.constant 0 : index
      %c0_12 = arith.constant 0 : index
      %32 = vector.load %arg9[%c0_11, %c0_12] : memref<10x256xf32, #tpu.memory_space<vmem>>, vector<10x256xf32>
      %33 = arith.maximumf %32, %22 : vector<10x256xf32>
      %c0_13 = arith.constant 0 : index
      %c0_14 = arith.constant 0 : index
      %34 = vector.load %arg9[%c0_13, %c0_14] : memref<10x256xf32, #tpu.memory_space<vmem>>, vector<10x256xf32>
      tpu.vector_store %arg9[%c0_13, %c0_14], %33 {strides = array<i32>} : memref<10x256xf32, #tpu.memory_space<vmem>>, vector<10x256xf32>,
    } else {
    }
    %c0_i32_9 = arith.constant 0 : i32
    %29 = arith.cmpi eq, %arg1, %c0_i32_9 : i32
    %30 = arith.extui %29 : i1 to i32
    %c0_i32_10 = arith.constant 0 : i32
    %31 = arith.cmpi ne, %30, %c0_i32_10 : i32
    scf.if %31 {
      %c0_11 = arith.constant 0 : index
      %c0_12 = arith.constant 0 : index
      %32 = vector.load %arg9[%c0_11, %c0_12] : memref<10x256xf32, #tpu.memory_space<vmem>>, vector<10x256xf32>
      %c0_13 = arith.constant 0 : index
      %c0_14 = arith.constant 0 : index
      %33 = vector.load %arg5[%c0_13, %c0_14] : memref<256x28xf32, #tpu.memory_space<vmem>>, vector<256x28xf32>
      %cst_15 = arith.constant dense<0.000000e+00> : vector<10x28xf32>
      %34 = tpu.matmul %32, %33, %cst_15 {dimension_numbers = #tpu.dot_dimension_numbers<[1], [0], [0], [1], [0, 0, 1, 1], [], []>, precision = #tpu.contract_precision<fp32>} : vector<10x256xf32>, vector<256x28xf32>, vector<10x28xf32> -> vector<10x28xf32>
      %c0_16 = arith.constant 0 : index
      %c0_17 = arith.constant 0 : index
      %35 = vector.load %arg6[%c0_16, %c0_17] : memref<1x28xf32, #tpu.memory_space<vmem>>, vector<1x28xf32>
      %36 = vector.broadcast %35 : vector<1x28xf32> to vector<10x28xf32>
      %37 = arith.addf %34, %36 : vector<10x28xf32>
      %c0_18 = arith.constant 0 : index
      %c0_19 = arith.constant 0 : index
      %38 = vector.load %arg8[%c0_18, %c0_19] : memref<10x28xf32, #tpu.memory_space<vmem>>, vector<10x28xf32>
      tpu.vector_store %arg8[%c0_18, %c0_19], %37 {strides = array<i32>} : memref<10x28xf32, #tpu.memory_space<vmem>>, vector<10x28xf32>,
    } else {
    }
    return
  }
  func.func @transform_0(%arg0: i32, %arg1: i32) -> (i32, i32) {
    %c1_i32 = arith.constant 1 : i32
    %0 = arith.muli %arg0, %c1_i32 : i32
    %1 = arith.addi %0, %arg1 : i32
    %c0_i32 = arith.constant 0 : i32
    %c0_i32_0 = arith.constant 0 : i32
    return %1, %c0_i32 : i32, i32
  }
  func.func @transform_1(%arg0: i32, %arg1: i32) -> (i32, i32) {
    %c0_i32 = arith.constant 0 : i32
    %c0_i32_0 = arith.constant 0 : i32
    %c0_i32_1 = arith.constant 0 : i32
    return %c0_i32, %c0_i32_0 : i32, i32
  }
  func.func @transform_2(%arg0: i32, %arg1: i32) -> i32 {
    %c0_i32 = arith.constant 0 : i32
    %c0_i32_0 = arith.constant 0 : i32
    return %c0_i32 : i32
  }
  func.func @transform_3(%arg0: i32, %arg1: i32) -> (i32, i32) {
    %c0_i32 = arith.constant 0 : i32
    %c0_i32_0 = arith.constant 0 : i32
    %c0_i32_1 = arith.constant 0 : i32
    return %c0_i32, %c0_i32_0 : i32, i32
  }
  func.func @transform_4(%arg0: i32, %arg1: i32) -> (i32, i32) {
    %c0_i32 = arith.constant 0 : i32
    %c0_i32_0 = arith.constant 0 : i32
    %c0_i32_1 = arith.constant 0 : i32
    return %c0_i32, %c0_i32_0 : i32, i32
  }
  func.func @transform_5(%arg0: i32, %arg1: i32) -> (i32, i32) {
    %c1_i32 = arith.constant 1 : i32
    %0 = arith.muli %arg0, %c1_i32 : i32
    %1 = arith.addi %0, %arg1 : i32
    %c0_i32 = arith.constant 0 : i32
    %c0_i32_0 = arith.constant 0 : i32
    return %1, %c0_i32 : i32, i32
  }
  func.func @transform_6(%arg0: i32, %arg1: i32) -> (i32, i32) {
    %c0_i32 = arith.constant 0 : i32
    %c0_i32_0 = arith.constant 0 : i32
    %c0_i32_1 = arith.constant 0 : i32
    return %c0_i32, %c0_i32_0 : i32, i32
  }
}

</mosaic_0001>

<llo_original>
// kernel: supv_localize_forward.1
$region0: #{supv_localize_forward.1}
  #allocation0 [shape = 'u32[]', space=smem, size = 0x4, offset = 0x4, fixed_abs, tag = 'smem constant byte address 0x4 - core index']
  #allocation1 [shape = 'u32[144,128]{1,0:T(1,128)}', space=vmem, size = 0x12000, scoped, tag = 'internal scratch']
  #allocation2 [shape = 'f32[10,256]{1,0:T(8,128)}', space=vmem, size = 0x4000, scoped, tag = 'scratch operand']
  #allocation3 [shape = 'f32[1]{0:T(128)S(6)}', space=smem, size = 0x200, scoped, tag = 'scoped memory for supv_localize_forward.1']
  %s0 = inlined_call_operand.vmem [shape: f32[320,256], index: 0, kind: input, shape index: {}]
  %s1 = inlined_call_operand.vmem [shape: f32[256,1], index: 1, kind: input, shape index: {}]
  %s2 = inlined_call_operand.<no memory space> [shape: f32[1], index: 2, kind: input, shape index: {}]
  %s3 = inlined_call_operand.vmem [shape: f32[256,28], index: 3, kind: input, shape index: {}]
  %s4 = inlined_call_operand.vmem [shape: f32[1,28], index: 4, kind: input, shape index: {}]
  %s5 = inlined_call_operand.vmem [shape: f32[1,320], index: 5, kind: output, shape index: {0}]
  %s6 = inlined_call_operand.hbm [shape: f32[10,28], index: 6, kind: output, shape index: {1}]
  %7 = xla_tuple %s5, %s6
  %s8 = sld [smem:[#allocation0]]
  $region50: #{supv_localize_forward.1} parent=0
    _
  %s10 = ssub.s32 1, %s8
  %s11 = scalar_select 0, %s10, %s8
  %12 = sst [smem:[#allocation3]] %s2
  $region1: #{supv_localize_forward.1} parent=0
    #allocation4 [shape = 'u8[8192]{0}', space=vmem, size = 0x2000, scoped, tag = 'output window, operand 1, single buffered']
    #allocation5 [shape = 's32[1]{0}', space=sflag, size = 0x4, scoped, tag = 'scoped memory for supv_localize_forward.1']
    %13 = vsyncpa [#allocation5], 0
    // Predicated region
    $region2: #{supv_localize_forward.1} parent=1 // pred_check
      _
    $region3: #{supv_localize_forward.1} parent=1 // pred_check_branch
      %15 = sbr.rel (0) target = $region5
    $region4: #{supv_localize_forward.1} parent=1 // pred_region
      %s16 = sadd.s32 0, 0
      %s17 = smul.u32 40, %s16
      %p18 = scmp.lt.s32.totalorder %s17, 39
      %s19 = scalar_select %p18, %s17, 39
      %s20 = smul.addr %s19, 2
      %s21 = smul.addr %s20, 8
      %s22 = scalar_lea.vmem %s0, %s21
      %s23 = sadd.s32 0, 0
      %s24 = smul.u32 40, %s23
    $region5: #{supv_localize_forward.1} parent=1 // pred_fallthru
      _
    // Predicated region
    $region6: #{supv_localize_forward.1} parent=1 // pred_check
      _
    $region7: #{supv_localize_forward.1} parent=1 // pred_check_branch
      %26 = sbr.rel (0) target = $region9
    $region8: #{supv_localize_forward.1} parent=1 // pred_region
      _
    $region9: #{supv_localize_forward.1} parent=1 // pred_fallthru
      _
    // Predicated region
    $region10: #{supv_localize_forward.1} parent=1 // pred_check
      _
    $region11: #{supv_localize_forward.1} parent=1 // pred_check_branch
      %28 = sbr.rel (0) target = $region13
    $region12: #{supv_localize_forward.1} parent=1 // pred_region
      _
    $region13: #{supv_localize_forward.1} parent=1 // pred_fallthru
      _
    // Predicated region
    $region14: #{supv_localize_forward.1} parent=1 // pred_check
      _
    $region15: #{supv_localize_forward.1} parent=1 // pred_check_branch
      %30 = sbr.rel (0) target = $region17
    $region16: #{supv_localize_forward.1} parent=1 // pred_region
      _
    $region17: #{supv_localize_forward.1} parent=1 // pred_fallthru
      _
    // Predicated region
    $region18: #{supv_localize_forward.1} parent=1 // pred_check
      _
    $region19: #{supv_localize_forward.1} parent=1 // pred_check_branch
      %32 = sbr.rel (0) target = $region21
    $region20: #{supv_localize_forward.1} parent=1 // pred_region
      _
    $region21: #{supv_localize_forward.1} parent=1 // pred_fallthru
      _
    %s33 = sadd.s32 0, 0
    %s34 = smul.u32 40, %s33
    %p35 = scmp.lt.s32.totalorder %s34, 39
    %s36 = scalar_select %p35, %s34, 39
    %s37 = smul.addr %s36, 2
    %s38 = smul.addr %s37, 8
    %s39 = scalar_lea.vmem %s0, %s38
    %s40 = sadd.s32 0, 0
    %p41 = scmp.lt.s32.totalorder %s40, 0
    %s42 = scalar_select %p41, %s40, 0
    %s43 = smul.addr %s42, 3
    %s44 = scalar_lea.vmem %s5, %s43
    %s45 = sadd.s32 0, 0
    %s46 = smul.u32 40, %s45
    %p47 = scmp.lt.s32.totalorder %s46, 39
    %s48 = scalar_select %p47, %s46, 39
    %s49 = smul.addr %s48, 2
    %s50 = smul.addr %s49, 8
    %s51 = scalar_lea.vmem %s0, %s50
    %s52 = sadd.s32 0, 0
    %s53 = smul.u32 40, %s52
    %s54 = sadd.s32 0, 0
    %p55 = scmp.lt.s32.totalorder %s54, 0
    %s56 = scalar_select %p55, %s54, 0
    %s57 = smul.addr %s56, 3
    %s58 = scalar_lea.vmem %s5, %s57
    %s59 = sadd.s32 0, 0
    %v60 = vld [vmem:[%s51] sm:$0xff]
    %v61 = vld [vmem:[%s51 + $0x8] sm:$0xff]
    %v62 = vld [vmem:[%s51 + $0x10] sm:$0xff]
    %v63 = vld [vmem:[%s51 + $0x18] sm:$0xff]
    %v64 = vld [vmem:[%s51 + $0x20] sm:$0xff]
    %v65 = vld [vmem:[%s51 + $0x28] sm:$0xff]
    %v66 = vld [vmem:[%s51 + $0x30] sm:$0xff]
    %v67 = vld [vmem:[%s51 + $0x38] sm:$0xff]
    %v68 = vld [vmem:[%s51 + $0x40] sm:$0xff]
    %v69 = vld [vmem:[%s51 + $0x48] sm:$0xff]
    %v70 = vld [vmem:[%s51 + $0x50] sm:$0xff]
    %v71 = vld [vmem:[%s51 + $0x58] sm:$0xff]
    %v72 = vld [vmem:[%s51 + $0x60] sm:$0xff]
    %v73 = vld [vmem:[%s51 + $0x68] sm:$0xff]
    %v74 = vld [vmem:[%s51 + $0x70] sm:$0xff]
    %v75 = vld [vmem:[%s51 + $0x78] sm:$0xff]
    %v76 = vld [vmem:[%s51 + $0x80] sm:$0xff]
    %v77 = vld [vmem:[%s51 + $0x88] sm:$0xff]
    %v78 = vld [vmem:[%s51 + $0x90] sm:$0xff]
    %v79 = vld [vmem:[%s51 + $0x98] sm:$0xff]
    %v80 = vld [vmem:[%s51 + $0xa0] sm:$0xff]
    %v81 = vld [vmem:[%s51 + $0xa8] sm:$0xff]
    %v82 = vld [vmem:[%s51 + $0xb0] sm:$0xff]
    %v83 = vld [vmem:[%s51 + $0xb8] sm:$0xff]
    %v84 = vld [vmem:[%s51 + $0xc0] sm:$0xff]
    %v85 = vld [vmem:[%s51 + $0xc8] sm:$0xff]
    %v86 = vld [vmem:[%s51 + $0xd0] sm:$0xff]
    %v87 = vld [vmem:[%s51 + $0xd8] sm:$0xff]
    %v88 = vld [vmem:[%s51 + $0xe0] sm:$0xff]
    %v89 = vld [vmem:[%s51 + $0xe8] sm:$0xff]
    %v90 = vld [vmem:[%s51 + $0xf0] sm:$0xff]
    %v91 = vld [vmem:[%s51 + $0xf8] sm:$0xff]
    %v92 = vld [vmem:[%s51 + $0x100] sm:$0xff]
    %v93 = vld [vmem:[%s51 + $0x108] sm:$0xff]
    %v94 = vld [vmem:[%s51 + $0x110] sm:$0xff]
    %v95 = vld [vmem:[%s51 + $0x118] sm:$0xff]
    %v96 = vld [vmem:[%s51 + $0x120] sm:$0xff]
    %v97 = vld [vmem:[%s51 + $0x128] sm:$0xff]
    %v98 = vld [vmem:[%s51 + $0x130] sm:$0xff]
    %v99 = vld [vmem:[%s51 + $0x138] sm:$0xff]
    %v100 = vld [vmem:[%s51 + $0x140] sm:$0xff]
    %v101 = vld [vmem:[%s51 + $0x148] sm:$0xff]
    %v102 = vld [vmem:[%s51 + $0x150] sm:$0xff]
    %v103 = vld [vmem:[%s51 + $0x158] sm:$0xff]
    %v104 = vld [vmem:[%s51 + $0x160] sm:$0xff]
    %v105 = vld [vmem:[%s51 + $0x168] sm:$0xff]
    %v106 = vld [vmem:[%s51 + $0x170] sm:$0xff]
    %v107 = vld [vmem:[%s51 + $0x178] sm:$0xff]
    %v108 = vld [vmem:[%s51 + $0x180] sm:$0xff]
    %v109 = vld [vmem:[%s51 + $0x188] sm:$0xff]
    %v110 = vld [vmem:[%s51 + $0x190] sm:$0xff]
    %v111 = vld [vmem:[%s51 + $0x198] sm:$0xff]
    %v112 = vld [vmem:[%s51 + $0x1a0] sm:$0xff]
    %v113 = vld [vmem:[%s51 + $0x1a8] sm:$0xff]
    %v114 = vld [vmem:[%s51 + $0x1b0] sm:$0xff]
    %v115 = vld [vmem:[%s51 + $0x1b8] sm:$0xff]
    %v116 = vld [vmem:[%s51 + $0x1c0] sm:$0xff]
    %v117 = vld [vmem:[%s51 + $0x1c8] sm:$0xff]
    %v118 = vld [vmem:[%s51 + $0x1d0] sm:$0xff]
    %v119 = vld [vmem:[%s51 + $0x1d8] sm:$0xff]
    %v120 = vld [vmem:[%s51 + $0x1e0] sm:$0xff]
    %v121 = vld [vmem:[%s51 + $0x1e8] sm:$0xff]
    %v122 = vld [vmem:[%s51 + $0x1f0] sm:$0xff]
    %v123 = vld [vmem:[%s51 + $0x1f8] sm:$0xff]
    %v124 = vld [vmem:[%s51 + $0x200] sm:$0xff]
    %v125 = vld [vmem:[%s51 + $0x208] sm:$0xff]
    %v126 = vld [vmem:[%s51 + $0x210] sm:$0xff]
    %v127 = vld [vmem:[%s51 + $0x218] sm:$0xff]
    %v128 = vld [vmem:[%s51 + $0x220] sm:$0xff]
    %v129 = vld [vmem:[%s51 + $0x228] sm:$0xff]
    %v130 = vld [vmem:[%s51 + $0x230] sm:$0xff]
    %v131 = vld [vmem:[%s51 + $0x238] sm:$0xff]
    %v132 = vld [vmem:[%s51 + $0x240] sm:$0xff]
    %v133 = vld [vmem:[%s51 + $0x248] sm:$0xff]
    %v134 = vld [vmem:[%s51 + $0x250] sm:$0xff]
    %v135 = vld [vmem:[%s51 + $0x258] sm:$0xff]
    %v136 = vld [vmem:[%s51 + $0x260] sm:$0xff]
    %v137 = vld [vmem:[%s51 + $0x268] sm:$0xff]
    %v138 = vld [vmem:[%s51 + $0x270] sm:$0xff]
    %v139 = vld [vmem:[%s51 + $0x278] sm:$0xff]
    %v140 = vld [vmem:[%s1] sm:$0xff]
    %v141 = vld [vmem:[%s1 + $0x8] sm:$0xff]
    %v142 = vld [vmem:[%s1 + $0x10] sm:$0xff]
    %v143 = vld [vmem:[%s1 + $0x18] sm:$0xff]
    %v144 = vld [vmem:[%s1 + $0x20] sm:$0xff]
    %v145 = vld [vmem:[%s1 + $0x28] sm:$0xff]
    %v146 = vld [vmem:[%s1 + $0x30] sm:$0xff]
    %v147 = vld [vmem:[%s1 + $0x38] sm:$0xff]
    %v148 = vld [vmem:[%s1 + $0x40] sm:$0xff]
    %v149 = vld [vmem:[%s1 + $0x48] sm:$0xff]
    %v150 = vld [vmem:[%s1 + $0x50] sm:$0xff]
    %v151 = vld [vmem:[%s1 + $0x58] sm:$0xff]
    %v152 = vld [vmem:[%s1 + $0x60] sm:$0xff]
    %v153 = vld [vmem:[%s1 + $0x68] sm:$0xff]
    %v154 = vld [vmem:[%s1 + $0x70] sm:$0xff]
    %v155 = vld [vmem:[%s1 + $0x78] sm:$0xff]
    %v156 = vld [vmem:[%s1 + $0x80] sm:$0xff]
    %v157 = vld [vmem:[%s1 + $0x88] sm:$0xff]
    %v158 = vld [vmem:[%s1 + $0x90] sm:$0xff]
    %v159 = vld [vmem:[%s1 + $0x98] sm:$0xff]
    %v160 = vld [vmem:[%s1 + $0xa0] sm:$0xff]
    %v161 = vld [vmem:[%s1 + $0xa8] sm:$0xff]
    %v162 = vld [vmem:[%s1 + $0xb0] sm:$0xff]
    %v163 = vld [vmem:[%s1 + $0xb8] sm:$0xff]
    %v164 = vld [vmem:[%s1 + $0xc0] sm:$0xff]
    %v165 = vld [vmem:[%s1 + $0xc8] sm:$0xff]
    %v166 = vld [vmem:[%s1 + $0xd0] sm:$0xff]
    %v167 = vld [vmem:[%s1 + $0xd8] sm:$0xff]
    %v168 = vld [vmem:[%s1 + $0xe0] sm:$0xff]
    %v169 = vld [vmem:[%s1 + $0xe8] sm:$0xff]
    %v170 = vld [vmem:[%s1 + $0xf0] sm:$0xff]
    %v171 = vld [vmem:[%s1 + $0xf8] sm:$0xff]
    %172 = vmatprep.subr.mxu0 0.0
    %v173 = vand.u32 %v155, 4294901760
    %174 = vmatpush1.msra.mxu0 %v173
    %175 = vmatprep.subr.mxu0 0.0
    %v176 = vand.u32 %v154, 4294901760
    %177 = vmatpush1.msra.mxu0 %v176
    %178 = vmatprep.subr.mxu0 0.0
    %v179 = vand.u32 %v153, 4294901760
    %180 = vmatpush1.msra.mxu0 %v179
    %181 = vmatprep.subr.mxu0 0.0
    %v182 = vand.u32 %v152, 4294901760
    %183 = vmatpush1.msra.mxu0 %v182
    %184 = vmatprep.subr.mxu0 0.0
    %v185 = vand.u32 %v151, 4294901760
    %186 = vmatpush1.msra.mxu0 %v185
    %187 = vmatprep.subr.mxu0 0.0
    %v188 = vand.u32 %v150, 4294901760
    %189 = vmatpush1.msra.mxu0 %v188
    %190 = vmatprep.subr.mxu0 0.0
    %v191 = vand.u32 %v149, 4294901760
    %192 = vmatpush1.msra.mxu0 %v191
    %193 = vmatprep.subr.mxu0 0.0
    %v194 = vand.u32 %v148, 4294901760
    %195 = vmatpush1.msra.mxu0 %v194
    %196 = vmatprep.subr.mxu0 0.0
    %v197 = vand.u32 %v147, 4294901760
    %198 = vmatpush1.msra.mxu0 %v197
    %199 = vmatprep.subr.mxu0 0.0
    %v200 = vand.u32 %v146, 4294901760
    %201 = vmatpush1.msra.mxu0 %v200
    %202 = vmatprep.subr.mxu0 0.0
    %v203 = vand.u32 %v145, 4294901760
    %204 = vmatpush1.msra.mxu0 %v203
    %205 = vmatprep.subr.mxu0 0.0
    %v206 = vand.u32 %v144, 4294901760
    %207 = vmatpush1.msra.mxu0 %v206
    %208 = vmatprep.subr.mxu0 0.0
    %v209 = vand.u32 %v143, 4294901760
    %210 = vmatpush1.msra.mxu0 %v209
    %211 = vmatprep.subr.mxu0 0.0
    %v212 = vand.u32 %v142, 4294901760
    %213 = vmatpush1.msra.mxu0 %v212
    %214 = vmatprep.subr.mxu0 0.0
    %v215 = vand.u32 %v141, 4294901760
    %216 = vmatpush1.msra.mxu0 %v215
    %217 = vmatprep.subr.mxu0 0.0
    %v218 = vand.u32 %v140, 4294901760
    %219 = vmatpush1.msra.mxu0 %v218
    %220 = vmatprep.subr.mxu0 0.0
    %v221 = vand.u32 %v171, 4294901760
    %222 = vmatpush2.msra.mxu0 %v221
    %223 = vmatprep.subr.mxu0 0.0
    %v224 = vand.u32 %v170, 4294901760
    %225 = vmatpush2.msra.mxu0 %v224
    %226 = vmatprep.subr.mxu0 0.0
    %v227 = vand.u32 %v169, 4294901760
    %228 = vmatpush2.msra.mxu0 %v227
    %229 = vmatprep.subr.mxu0 0.0
    %v230 = vand.u32 %v168, 4294901760
    %231 = vmatpush2.msra.mxu0 %v230
    %232 = vmatprep.subr.mxu0 0.0
    %v233 = vand.u32 %v167, 4294901760
    %234 = vmatpush2.msra.mxu0 %v233
    %235 = vmatprep.subr.mxu0 0.0
    %v236 = vand.u32 %v166, 4294901760
    %237 = vmatpush2.msra.mxu0 %v236
    %238 = vmatprep.subr.mxu0 0.0
    %v239 = vand.u32 %v165, 4294901760
    %240 = vmatpush2.msra.mxu0 %v239
    %241 = vmatprep.subr.mxu0 0.0
    %v242 = vand.u32 %v164, 4294901760
    %243 = vmatpush2.msra.mxu0 %v242
    %244 = vmatprep.subr.mxu0 0.0
    %v245 = vand.u32 %v163, 4294901760
    %246 = vmatpush2.msra.mxu0 %v245
    %247 = vmatprep.subr.mxu0 0.0
    %v248 = vand.u32 %v162, 4294901760
    %249 = vmatpush2.msra.mxu0 %v248
    %250 = vmatprep.subr.mxu0 0.0
    %v251 = vand.u32 %v161, 4294901760
    %252 = vmatpush2.msra.mxu0 %v251
    %253 = vmatprep.subr.mxu0 0.0
    %v254 = vand.u32 %v160, 4294901760
    %255 = vmatpush2.msra.mxu0 %v254
    %256 = vmatprep.subr.mxu0 0.0
    %v257 = vand.u32 %v159, 4294901760
    %258 = vmatpush2.msra.mxu0 %v257
    %259 = vmatprep.subr.mxu0 0.0
    %v260 = vand.u32 %v158, 4294901760
    %261 = vmatpush2.msra.mxu0 %v260
    %262 = vmatprep.subr.mxu0 0.0
    %v263 = vand.u32 %v157, 4294901760
    %264 = vmatpush2.msra.mxu0 %v263
    %265 = vmatprep.subr.mxu0 0.0
    %v266 = vand.u32 %v156, 4294901760
    %267 = vmatpush2.msra.mxu0 %v266
    %v268 = vand.u32 %v61, 4294901760
    %v269 = vsub.f32 %v61, %v268
    %v270 = vand.u32 %v269, 4294901760
    %v271 = vsub.f32 %v269, %v270
    %v272 = vand.u32 %v271, 4294901760
    %273 = vmatprep.mubr.f32.mxu0 %v272
    %v274 = vand.u32 %v60, 4294901760
    %v275 = vsub.f32 %v60, %v274
    %v276 = vand.u32 %v275, 4294901760
    %v277 = vsub.f32 %v275, %v276
    %v278 = vand.u32 %v277, 4294901760
    %279 = vmatmul.mubr.f32.gmra.mxu0 %v278
    %v280 = vpop.f32.mrf.mxu0
    %v281 = vadd.f32 0.0, %v280
    %v282 = vpop.f32.mrf.mxu0
    %v283 = vand.u32 %v63, 4294901760
    %v284 = vsub.f32 %v63, %v283
    %v285 = vand.u32 %v284, 4294901760
    %v286 = vsub.f32 %v284, %v285
    %v287 = vand.u32 %v286, 4294901760
    %288 = vmatprep.mubr.f32.mxu0 %v287
    %v289 = vand.u32 %v62, 4294901760
    %v290 = vsub.f32 %v62, %v289
    %v291 = vand.u32 %v290, 4294901760
    %v292 = vsub.f32 %v290, %v291
    %v293 = vand.u32 %v292, 4294901760
    %294 = vmatmul.mubr.f32.gmra.mxu0 %v293
    %v295 = vpop.f32.mrf.mxu0
    %v296 = vadd.f32 0.0, %v295
    %v297 = vpop.f32.mrf.mxu0
    %v298 = vand.u32 %v65, 4294901760
    %v299 = vsub.f32 %v65, %v298
    %v300 = vand.u32 %v299, 4294901760
    %v301 = vsub.f32 %v299, %v300
    %v302 = vand.u32 %v301, 4294901760
    %303 = vmatprep.mubr.f32.mxu0 %v302
    %v304 = vand.u32 %v64, 4294901760
    %v305 = vsub.f32 %v64, %v304
    %v306 = vand.u32 %v305, 4294901760
    %v307 = vsub.f32 %v305, %v306
    %v308 = vand.u32 %v307, 4294901760
    %309 = vmatmul.mubr.f32.gmra.mxu0 %v308
    %v310 = vpop.f32.mrf.mxu0
    %v311 = vadd.f32 0.0, %v310
    %v312 = vpop.f32.mrf.mxu0
    %v313 = vand.u32 %v67, 4294901760
    %v314 = vsub.f32 %v67, %v313
    %v315 = vand.u32 %v314, 4294901760
    %v316 = vsub.f32 %v314, %v315
    %v317 = vand.u32 %v316, 4294901760
    %318 = vmatprep.mubr.f32.mxu0 %v317
    %v319 = vand.u32 %v66, 4294901760
    %v320 = vsub.f32 %v66, %v319
    %v321 = vand.u32 %v320, 4294901760
    %v322 = vsub.f32 %v320, %v321
    %v323 = vand.u32 %v322, 4294901760
    %324 = vmatmul.mubr.f32.gmra.mxu0 %v323
    %v325 = vpop.f32.mrf.mxu0
    %v326 = vadd.f32 0.0, %v325
    %v327 = vpop.f32.mrf.mxu0
    %v328 = vand.u32 %v69, 4294901760
    %v329 = vsub.f32 %v69, %v328
    %v330 = vand.u32 %v329, 4294901760
    %v331 = vsub.f32 %v329, %v330
    %v332 = vand.u32 %v331, 4294901760
    %333 = vmatprep.mubr.f32.mxu0 %v332
    %v334 = vand.u32 %v68, 4294901760
    %v335 = vsub.f32 %v68, %v334
    %v336 = vand.u32 %v335, 4294901760
    %v337 = vsub.f32 %v335, %v336
    %v338 = vand.u32 %v337, 4294901760
    %339 = vmatmul.mubr.f32.gmra.mxu0 %v338
    %v340 = vpop.f32.mrf.mxu0
    %v341 = vadd.f32 0.0, %v340
    %v342 = vpop.f32.mrf.mxu0
    %v343 = vand.u32 %v71, 4294901760
    %v344 = vsub.f32 %v71, %v343
    %v345 = vand.u32 %v344, 4294901760
    %v346 = vsub.f32 %v344, %v345
    %v347 = vand.u32 %v346, 4294901760
    %348 = vmatprep.mubr.f32.mxu0 %v347
    %v349 = vand.u32 %v70, 4294901760
    %v350 = vsub.f32 %v70, %v349
    %v351 = vand.u32 %v350, 4294901760
    %v352 = vsub.f32 %v350, %v351
    %v353 = vand.u32 %v352, 4294901760
    %354 = vmatmul.mubr.f32.gmra.mxu0 %v353
    %v355 = vpop.f32.mrf.mxu0
    %v356 = vadd.f32 0.0, %v355
    %v357 = vpop.f32.mrf.mxu0
    %v358 = vand.u32 %v73, 4294901760
    %v359 = vsub.f32 %v73, %v358
    %v360 = vand.u32 %v359, 4294901760
    %v361 = vsub.f32 %v359, %v360
    %v362 = vand.u32 %v361, 4294901760
    %363 = vmatprep.mubr.f32.mxu0 %v362
    %v364 = vand.u32 %v72, 4294901760
    %v365 = vsub.f32 %v72, %v364
    %v366 = vand.u32 %v365, 4294901760
    %v367 = vsub.f32 %v365, %v366
    %v368 = vand.u32 %v367, 4294901760
    %369 = vmatmul.mubr.f32.gmra.mxu0 %v368
    %v370 = vpop.f32.mrf.mxu0
    %v371 = vadd.f32 0.0, %v370
    %v372 = vpop.f32.mrf.mxu0
    %v373 = vand.u32 %v75, 4294901760
    %v374 = vsub.f32 %v75, %v373
    %v375 = vand.u32 %v374, 4294901760
    %v376 = vsub.f32 %v374, %v375
    %v377 = vand.u32 %v376, 4294901760
    %378 = vmatprep.mubr.f32.mxu0 %v377
    %v379 = vand.u32 %v74, 4294901760
    %v380 = vsub.f32 %v74, %v379
    %v381 = vand.u32 %v380, 4294901760
    %v382 = vsub.f32 %v380, %v381
    %v383 = vand.u32 %v382, 4294901760
    %384 = vmatmul.mubr.f32.gmra.mxu0 %v383
    %v385 = vpop.f32.mrf.mxu0
    %v386 = vadd.f32 0.0, %v385
    %v387 = vpop.f32.mrf.mxu0
    %v388 = vand.u32 %v77, 4294901760
    %v389 = vsub.f32 %v77, %v388
    %v390 = vand.u32 %v389, 4294901760
    %v391 = vsub.f32 %v389, %v390
    %v392 = vand.u32 %v391, 4294901760
    %393 = vmatprep.mubr.f32.mxu0 %v392
    %v394 = vand.u32 %v76, 4294901760
    %v395 = vsub.f32 %v76, %v394
    %v396 = vand.u32 %v395, 4294901760
    %v397 = vsub.f32 %v395, %v396
    %v398 = vand.u32 %v397, 4294901760
    %399 = vmatmul.mubr.f32.gmra.mxu0 %v398
    %v400 = vpop.f32.mrf.mxu0
    %v401 = vadd.f32 0.0, %v400
    %v402 = vpop.f32.mrf.mxu0
    %v403 = vand.u32 %v79, 4294901760
    %v404 = vsub.f32 %v79, %v403
    %v405 = vand.u32 %v404, 4294901760
    %v406 = vsub.f32 %v404, %v405
    %v407 = vand.u32 %v406, 4294901760
    %408 = vmatprep.mubr.f32.mxu0 %v407
    %v409 = vand.u32 %v78, 4294901760
    %v410 = vsub.f32 %v78, %v409
    %v411 = vand.u32 %v410, 4294901760
    %v412 = vsub.f32 %v410, %v411
    %v413 = vand.u32 %v412, 4294901760
    %414 = vmatmul.mubr.f32.gmra.mxu0 %v413
    %v415 = vpop.f32.mrf.mxu0
    %v416 = vadd.f32 0.0, %v415
    %v417 = vpop.f32.mrf.mxu0
    %v418 = vand.u32 %v81, 4294901760
    %v419 = vsub.f32 %v81, %v418
    %v420 = vand.u32 %v419, 4294901760
    %v421 = vsub.f32 %v419, %v420
    %v422 = vand.u32 %v421, 4294901760
    %423 = vmatprep.mubr.f32.mxu0 %v422
    %v424 = vand.u32 %v80, 4294901760
    %v425 = vsub.f32 %v80, %v424
    %v426 = vand.u32 %v425, 4294901760
    %v427 = vsub.f32 %v425, %v426
    %v428 = vand.u32 %v427, 4294901760
    %429 = vmatmul.mubr.f32.gmra.mxu0 %v428
    %v430 = vpop.f32.mrf.mxu0
    %v431 = vadd.f32 0.0, %v430
    %v432 = vpop.f32.mrf.mxu0
    %v433 = vand.u32 %v83, 4294901760
    %v434 = vsub.f32 %v83, %v433
    %v435 = vand.u32 %v434, 4294901760
    %v436 = vsub.f32 %v434, %v435
    %v437 = vand.u32 %v436, 4294901760
    %438 = vmatprep.mubr.f32.mxu0 %v437
    %v439 = vand.u32 %v82, 4294901760
    %v440 = vsub.f32 %v82, %v439
    %v441 = vand.u32 %v440, 4294901760
    %v442 = vsub.f32 %v440, %v441
    %v443 = vand.u32 %v442, 4294901760
    %444 = vmatmul.mubr.f32.gmra.mxu0 %v443
    %v445 = vpop.f32.mrf.mxu0
    %v446 = vadd.f32 0.0, %v445
    %v447 = vpop.f32.mrf.mxu0
    %v448 = vand.u32 %v85, 4294901760
    %v449 = vsub.f32 %v85, %v448
    %v450 = vand.u32 %v449, 4294901760
    %v451 = vsub.f32 %v449, %v450
    %v452 = vand.u32 %v451, 4294901760
    %453 = vmatprep.mubr.f32.mxu0 %v452
    %v454 = vand.u32 %v84, 4294901760
    %v455 = vsub.f32 %v84, %v454
    %v456 = vand.u32 %v455, 4294901760
    %v457 = vsub.f32 %v455, %v456
    %v458 = vand.u32 %v457, 4294901760
    %459 = vmatmul.mubr.f32.gmra.mxu0 %v458
    %v460 = vpop.f32.mrf.mxu0
    %v461 = vadd.f32 0.0, %v460
    %v462 = vpop.f32.mrf.mxu0
    %v463 = vand.u32 %v87, 4294901760
    %v464 = vsub.f32 %v87, %v463
    %v465 = vand.u32 %v464, 4294901760
    %v466 = vsub.f32 %v464, %v465
    %v467 = vand.u32 %v466, 4294901760
    %468 = vmatprep.mubr.f32.mxu0 %v467
    %v469 = vand.u32 %v86, 4294901760
    %v470 = vsub.f32 %v86, %v469
    %v471 = vand.u32 %v470, 4294901760
    %v472 = vsub.f32 %v470, %v471
    %v473 = vand.u32 %v472, 4294901760
    %474 = vmatmul.mubr.f32.gmra.mxu0 %v473
    %v475 = vpop.f32.mrf.mxu0
    %v476 = vadd.f32 0.0, %v475
    %v477 = vpop.f32.mrf.mxu0
    %v478 = vand.u32 %v89, 4294901760
    %v479 = vsub.f32 %v89, %v478
    %v480 = vand.u32 %v479, 4294901760
    %v481 = vsub.f32 %v479, %v480
    %v482 = vand.u32 %v481, 4294901760
    %483 = vmatprep.mubr.f32.mxu0 %v482
    %v484 = vand.u32 %v88, 4294901760
    %v485 = vsub.f32 %v88, %v484
    %v486 = vand.u32 %v485, 4294901760
    %v487 = vsub.f32 %v485, %v486
    %v488 = vand.u32 %v487, 4294901760
    %489 = vmatmul.mubr.f32.gmra.mxu0 %v488
    %v490 = vpop.f32.mrf.mxu0
    %v491 = vadd.f32 0.0, %v490
    %v492 = vpop.f32.mrf.mxu0
    %v493 = vand.u32 %v91, 4294901760
    %v494 = vsub.f32 %v91, %v493
    %v495 = vand.u32 %v494, 4294901760
    %v496 = vsub.f32 %v494, %v495
    %v497 = vand.u32 %v496, 4294901760
    %498 = vmatprep.mubr.f32.mxu0 %v497
    %v499 = vand.u32 %v90, 4294901760
    %v500 = vsub.f32 %v90, %v499
    %v501 = vand.u32 %v500, 4294901760
    %v502 = vsub.f32 %v500, %v501
    %v503 = vand.u32 %v502, 4294901760
    %504 = vmatmul.mubr.f32.gmra.mxu0 %v503
    %v505 = vpop.f32.mrf.mxu0
    %v506 = vadd.f32 0.0, %v505
    %v507 = vpop.f32.mrf.mxu0
    %v508 = vand.u32 %v93, 4294901760
    %v509 = vsub.f32 %v93, %v508
    %v510 = vand.u32 %v509, 4294901760
    %v511 = vsub.f32 %v509, %v510
    %v512 = vand.u32 %v511, 4294901760
    %513 = vmatprep.mubr.f32.mxu0 %v512
    %v514 = vand.u32 %v92, 4294901760
    %v515 = vsub.f32 %v92, %v514
    %v516 = vand.u32 %v515, 4294901760
    %v517 = vsub.f32 %v515, %v516
    %v518 = vand.u32 %v517, 4294901760
    %519 = vmatmul.mubr.f32.gmra.mxu0 %v518
    %v520 = vpop.f32.mrf.mxu0
    %v521 = vadd.f32 0.0, %v520
    %v522 = vpop.f32.mrf.mxu0
    %v523 = vand.u32 %v95, 4294901760
    %v524 = vsub.f32 %v95, %v523
    %v525 = vand.u32 %v524, 4294901760
    %v526 = vsub.f32 %v524, %v525
    %v527 = vand.u32 %v526, 4294901760
    %528 = vmatprep.mubr.f32.mxu0 %v527
    %v529 = vand.u32 %v94, 4294901760
    %v530 = vsub.f32 %v94, %v529
    %v531 = vand.u32 %v530, 4294901760
    %v532 = vsub.f32 %v530, %v531
    %v533 = vand.u32 %v532, 4294901760
    %534 = vmatmul.mubr.f32.gmra.mxu0 %v533
    %v535 = vpop.f32.mrf.mxu0
    %v536 = vadd.f32 0.0, %v535
    %v537 = vpop.f32.mrf.mxu0
    %v538 = vand.u32 %v97, 4294901760
    %v539 = vsub.f32 %v97, %v538
    %v540 = vand.u32 %v539, 4294901760
    %v541 = vsub.f32 %v539, %v540
    %v542 = vand.u32 %v541, 4294901760
    %543 = vmatprep.mubr.f32.mxu0 %v542
    %v544 = vand.u32 %v96, 4294901760
    %v545 = vsub.f32 %v96, %v544
    %v546 = vand.u32 %v545, 4294901760
    %v547 = vsub.f32 %v545, %v546
    %v548 = vand.u32 %v547, 4294901760
    %549 = vmatmul.mubr.f32.gmra.mxu0 %v548
    %v550 = vpop.f32.mrf.mxu0
    %v551 = vadd.f32 0.0, %v550
    %v552 = vpop.f32.mrf.mxu0
    %v553 = vand.u32 %v99, 4294901760
    %v554 = vsub.f32 %v99, %v553
    %v555 = vand.u32 %v554, 4294901760
    %v556 = vsub.f32 %v554, %v555
    %v557 = vand.u32 %v556, 4294901760
    %558 = vmatprep.mubr.f32.mxu0 %v557
    %v559 = vand.u32 %v98, 4294901760
    %v560 = vsub.f32 %v98, %v559
    %v561 = vand.u32 %v560, 4294901760
    %v562 = vsub.f32 %v560, %v561
    %v563 = vand.u32 %v562, 4294901760
    %564 = vmatmul.mubr.f32.gmra.mxu0 %v563
    %v565 = vpop.f32.mrf.mxu0
    %v566 = vadd.f32 0.0, %v565
    %v567 = vpop.f32.mrf.mxu0
    %v568 = vand.u32 %v101, 4294901760
    %v569 = vsub.f32 %v101, %v568
    %v570 = vand.u32 %v569, 4294901760
    %v571 = vsub.f32 %v569, %v570
    %v572 = vand.u32 %v571, 4294901760
    %573 = vmatprep.mubr.f32.mxu0 %v572
    %v574 = vand.u32 %v100, 4294901760
    %v575 = vsub.f32 %v100, %v574
    %v576 = vand.u32 %v575, 4294901760
    %v577 = vsub.f32 %v575, %v576
    %v578 = vand.u32 %v577, 4294901760
    %579 = vmatmul.mubr.f32.gmra.mxu0 %v578
    %v580 = vpop.f32.mrf.mxu0
    %v581 = vadd.f32 0.0, %v580
    %v582 = vpop.f32.mrf.mxu0
    %v583 = vand.u32 %v103, 4294901760
    %v584 = vsub.f32 %v103, %v583
    %v585 = vand.u32 %v584, 4294901760
    %v586 = vsub.f32 %v584, %v585
    %v587 = vand.u32 %v586, 4294901760
    %588 = vmatprep.mubr.f32.mxu0 %v587
    %v589 = vand.u32 %v102, 4294901760
    %v590 = vsub.f32 %v102, %v589
    %v591 = vand.u32 %v590, 4294901760
    %v592 = vsub.f32 %v590, %v591
    %v593 = vand.u32 %v592, 4294901760
    %594 = vmatmul.mubr.f32.gmra.mxu0 %v593
    %v595 = vpop.f32.mrf.mxu0
    %v596 = vadd.f32 0.0, %v595
    %v597 = vpop.f32.mrf.mxu0
    %v598 = vand.u32 %v105, 4294901760
    %v599 = vsub.f32 %v105, %v598
    %v600 = vand.u32 %v599, 4294901760
    %v601 = vsub.f32 %v599, %v600
    %v602 = vand.u32 %v601, 4294901760
    %603 = vmatprep.mubr.f32.mxu0 %v602
    %v604 = vand.u32 %v104, 4294901760
    %v605 = vsub.f32 %v104, %v604
    %v606 = vand.u32 %v605, 4294901760
    %v607 = vsub.f32 %v605, %v606
    %v608 = vand.u32 %v607, 4294901760
    %609 = vmatmul.mubr.f32.gmra.mxu0 %v608
    %v610 = vpop.f32.mrf.mxu0
    %v611 = vadd.f32 0.0, %v610
    %v612 = vpop.f32.mrf.mxu0
    %v613 = vand.u32 %v107, 4294901760
    %v614 = vsub.f32 %v107, %v613
    %v615 = vand.u32 %v614, 4294901760
    %v616 = vsub.f32 %v614, %v615
    %v617 = vand.u32 %v616, 4294901760
    %618 = vmatprep.mubr.f32.mxu0 %v617
    %v619 = vand.u32 %v106, 4294901760
    %v620 = vsub.f32 %v106, %v619
    %v621 = vand.u32 %v620, 4294901760
    %v622 = vsub.f32 %v620, %v621
    %v623 = vand.u32 %v622, 4294901760
    %624 = vmatmul.mubr.f32.gmra.mxu0 %v623
    %v625 = vpop.f32.mrf.mxu0
    %v626 = vadd.f32 0.0, %v625
    %v627 = vpop.f32.mrf.mxu0
    %v628 = vand.u32 %v109, 4294901760
    %v629 = vsub.f32 %v109, %v628
    %v630 = vand.u32 %v629, 4294901760
    %v631 = vsub.f32 %v629, %v630
    %v632 = vand.u32 %v631, 4294901760
    %633 = vmatprep.mubr.f32.mxu0 %v632
    %v634 = vand.u32 %v108, 4294901760
    %v635 = vsub.f32 %v108, %v634
    %v636 = vand.u32 %v635, 4294901760
    %v637 = vsub.f32 %v635, %v636
    %v638 = vand.u32 %v637, 4294901760
    %639 = vmatmul.mubr.f32.gmra.mxu0 %v638
    %v640 = vpop.f32.mrf.mxu0
    %v641 = vadd.f32 0.0, %v640
    %v642 = vpop.f32.mrf.mxu0
    %v643 = vand.u32 %v111, 4294901760
    %v644 = vsub.f32 %v111, %v643
    %v645 = vand.u32 %v644, 4294901760
    %v646 = vsub.f32 %v644, %v645
    %v647 = vand.u32 %v646, 4294901760
    %648 = vmatprep.mubr.f32.mxu0 %v647
    %v649 = vand.u32 %v110, 4294901760
    %v650 = vsub.f32 %v110, %v649
    %v651 = vand.u32 %v650, 4294901760
    %v652 = vsub.f32 %v650, %v651
    %v653 = vand.u32 %v652, 4294901760
    %654 = vmatmul.mubr.f32.gmra.mxu0 %v653
    %v655 = vpop.f32.mrf.mxu0
    %v656 = vadd.f32 0.0, %v655
    %v657 = vpop.f32.mrf.mxu0
    %v658 = vand.u32 %v113, 4294901760
    %v659 = vsub.f32 %v113, %v658
    %v660 = vand.u32 %v659, 4294901760
    %v661 = vsub.f32 %v659, %v660
    %v662 = vand.u32 %v661, 4294901760
    %663 = vmatprep.mubr.f32.mxu0 %v662
    %v664 = vand.u32 %v112, 4294901760
    %v665 = vsub.f32 %v112, %v664
    %v666 = vand.u32 %v665, 4294901760
    %v667 = vsub.f32 %v665, %v666
    %v668 = vand.u32 %v667, 4294901760
    %669 = vmatmul.mubr.f32.gmra.mxu0 %v668
    %v670 = vpop.f32.mrf.mxu0
    %v671 = vadd.f32 0.0, %v670
    %v672 = vpop.f32.mrf.mxu0
    %v673 = vand.u32 %v115, 4294901760
    %v674 = vsub.f32 %v115, %v673
    %v675 = vand.u32 %v674, 4294901760
    %v676 = vsub.f32 %v674, %v675
    %v677 = vand.u32 %v676, 4294901760
    %678 = vmatprep.mubr.f32.mxu0 %v677
    %v679 = vand.u32 %v114, 4294901760
    %v680 = vsub.f32 %v114, %v679
    %v681 = vand.u32 %v680, 4294901760
    %v682 = vsub.f32 %v680, %v681
    %v683 = vand.u32 %v682, 4294901760
    %684 = vmatmul.mubr.f32.gmra.mxu0 %v683
    %v685 = vpop.f32.mrf.mxu0
    %v686 = vadd.f32 0.0, %v685
    %v687 = vpop.f32.mrf.mxu0
    %v688 = vand.u32 %v117, 4294901760
    %v689 = vsub.f32 %v117, %v688
    %v690 = vand.u32 %v689, 4294901760
    %v691 = vsub.f32 %v689, %v690
    %v692 = vand.u32 %v691, 4294901760
    %693 = vmatprep.mubr.f32.mxu0 %v692
    %v694 = vand.u32 %v116, 4294901760
    %v695 = vsub.f32 %v116, %v694
    %v696 = vand.u32 %v695, 4294901760
    %v697 = vsub.f32 %v695, %v696
    %v698 = vand.u32 %v697, 4294901760
    %699 = vmatmul.mubr.f32.gmra.mxu0 %v698
    %v700 = vpop.f32.mrf.mxu0
    %v701 = vadd.f32 0.0, %v700
    %v702 = vpop.f32.mrf.mxu0
    %v703 = vand.u32 %v119, 4294901760
    %v704 = vsub.f32 %v119, %v703
    %v705 = vand.u32 %v704, 4294901760
    %v706 = vsub.f32 %v704, %v705
    %v707 = vand.u32 %v706, 4294901760
    %708 = vmatprep.mubr.f32.mxu0 %v707
    %v709 = vand.u32 %v118, 4294901760
    %v710 = vsub.f32 %v118, %v709
    %v711 = vand.u32 %v710, 4294901760
    %v712 = vsub.f32 %v710, %v711
    %v713 = vand.u32 %v712, 4294901760
    %714 = vmatmul.mubr.f32.gmra.mxu0 %v713
    %v715 = vpop.f32.mrf.mxu0
    %v716 = vadd.f32 0.0, %v715
    %v717 = vpop.f32.mrf.mxu0
    %v718 = vand.u32 %v121, 4294901760
    %v719 = vsub.f32 %v121, %v718
    %v720 = vand.u32 %v719, 4294901760
    %v721 = vsub.f32 %v719, %v720
    %v722 = vand.u32 %v721, 4294901760
    %723 = vmatprep.mubr.f32.mxu0 %v722
    %v724 = vand.u32 %v120, 4294901760
    %v725 = vsub.f32 %v120, %v724
    %v726 = vand.u32 %v725, 4294901760
    %v727 = vsub.f32 %v725, %v726
    %v728 = vand.u32 %v727, 4294901760
    %729 = vmatmul.mubr.f32.gmra.mxu0 %v728
    %v730 = vpop.f32.mrf.mxu0
    %v731 = vadd.f32 0.0, %v730
    %v732 = vpop.f32.mrf.mxu0
    %v733 = vand.u32 %v123, 4294901760
    %v734 = vsub.f32 %v123, %v733
    %v735 = vand.u32 %v734, 4294901760
    %v736 = vsub.f32 %v734, %v735
    %v737 = vand.u32 %v736, 4294901760
    %738 = vmatprep.mubr.f32.mxu0 %v737
    %v739 = vand.u32 %v122, 4294901760
    %v740 = vsub.f32 %v122, %v739
    %v741 = vand.u32 %v740, 4294901760
    %v742 = vsub.f32 %v740, %v741
    %v743 = vand.u32 %v742, 4294901760
    %744 = vmatmul.mubr.f32.gmra.mxu0 %v743
    %v745 = vpop.f32.mrf.mxu0
    %v746 = vadd.f32 0.0, %v745
    %v747 = vpop.f32.mrf.mxu0
    %v748 = vand.u32 %v125, 4294901760
    %v749 = vsub.f32 %v125, %v748
    %v750 = vand.u32 %v749, 4294901760
    %v751 = vsub.f32 %v749, %v750
    %v752 = vand.u32 %v751, 4294901760
    %753 = vmatprep.mubr.f32.mxu0 %v752
    %v754 = vand.u32 %v124, 4294901760
    %v755 = vsub.f32 %v124, %v754
    %v756 = vand.u32 %v755, 4294901760
    %v757 = vsub.f32 %v755, %v756
    %v758 = vand.u32 %v757, 4294901760
    %759 = vmatmul.mubr.f32.gmra.mxu0 %v758
    %v760 = vpop.f32.mrf.mxu0
    %v761 = vadd.f32 0.0, %v760
    %v762 = vpop.f32.mrf.mxu0
    %v763 = vand.u32 %v127, 4294901760
    %v764 = vsub.f32 %v127, %v763
    %v765 = vand.u32 %v764, 4294901760
    %v766 = vsub.f32 %v764, %v765
    %v767 = vand.u32 %v766, 4294901760
    %768 = vmatprep.mubr.f32.mxu0 %v767
    %v769 = vand.u32 %v126, 4294901760
    %v770 = vsub.f32 %v126, %v769
    %v771 = vand.u32 %v770, 4294901760
    %v772 = vsub.f32 %v770, %v771
    %v773 = vand.u32 %v772, 4294901760
    %774 = vmatmul.mubr.f32.gmra.mxu0 %v773
    %v775 = vpop.f32.mrf.mxu0
    %v776 = vadd.f32 0.0, %v775
    %v777 = vpop.f32.mrf.mxu0
    %v778 = vand.u32 %v129, 4294901760
    %v779 = vsub.f32 %v129, %v778
    %v780 = vand.u32 %v779, 4294901760
    %v781 = vsub.f32 %v779, %v780
    %v782 = vand.u32 %v781, 4294901760
    %783 = vmatprep.mubr.f32.mxu0 %v782
    %v784 = vand.u32 %v128, 4294901760
    %v785 = vsub.f32 %v128, %v784
    %v786 = vand.u32 %v785, 4294901760
    %v787 = vsub.f32 %v785, %v786
    %v788 = vand.u32 %v787, 4294901760
    %789 = vmatmul.mubr.f32.gmra.mxu0 %v788
    %v790 = vpop.f32.mrf.mxu0
    %v791 = vadd.f32 0.0, %v790
    %v792 = vpop.f32.mrf.mxu0
    %v793 = vand.u32 %v131, 4294901760
    %v794 = vsub.f32 %v131, %v793
    %v795 = vand.u32 %v794, 4294901760
    %v796 = vsub.f32 %v794, %v795
    %v797 = vand.u32 %v796, 4294901760
    %798 = vmatprep.mubr.f32.mxu0 %v797
    %v799 = vand.u32 %v130, 4294901760
    %v800 = vsub.f32 %v130, %v799
    %v801 = vand.u32 %v800, 4294901760
    %v802 = vsub.f32 %v800, %v801
    %v803 = vand.u32 %v802, 4294901760
    %804 = vmatmul.mubr.f32.gmra.mxu0 %v803
    %v805 = vpop.f32.mrf.mxu0
    %v806 = vadd.f32 0.0, %v805
    %v807 = vpop.f32.mrf.mxu0
    %v808 = vand.u32 %v133, 4294901760
    %v809 = vsub.f32 %v133, %v808
    %v810 = vand.u32 %v809, 4294901760
    %v811 = vsub.f32 %v809, %v810
    %v812 = vand.u32 %v811, 4294901760
    %813 = vmatprep.mubr.f32.mxu0 %v812
    %v814 = vand.u32 %v132, 4294901760
    %v815 = vsub.f32 %v132, %v814
    %v816 = vand.u32 %v815, 4294901760
    %v817 = vsub.f32 %v815, %v816
    %v818 = vand.u32 %v817, 4294901760
    %819 = vmatmul.mubr.f32.gmra.mxu0 %v818
    %v820 = vpop.f32.mrf.mxu0
    %v821 = vadd.f32 0.0, %v820
    %v822 = vpop.f32.mrf.mxu0
    %v823 = vand.u32 %v135, 4294901760
    %v824 = vsub.f32 %v135, %v823
    %v825 = vand.u32 %v824, 4294901760
    %v826 = vsub.f32 %v824, %v825
    %v827 = vand.u32 %v826, 4294901760
    %828 = vmatprep.mubr.f32.mxu0 %v827
    %v829 = vand.u32 %v134, 4294901760
    %v830 = vsub.f32 %v134, %v829
    %v831 = vand.u32 %v830, 4294901760
    %v832 = vsub.f32 %v830, %v831
    %v833 = vand.u32 %v832, 4294901760
    %834 = vmatmul.mubr.f32.gmra.mxu0 %v833
    %v835 = vpop.f32.mrf.mxu0
    %v836 = vadd.f32 0.0, %v835
    %v837 = vpop.f32.mrf.mxu0
    %v838 = vand.u32 %v137, 4294901760
    %v839 = vsub.f32 %v137, %v838
    %v840 = vand.u32 %v839, 4294901760
    %v841 = vsub.f32 %v839, %v840
    %v842 = vand.u32 %v841, 4294901760
    %843 = vmatprep.mubr.f32.mxu0 %v842
    %v844 = vand.u32 %v136, 4294901760
    %v845 = vsub.f32 %v136, %v844
    %v846 = vand.u32 %v845, 4294901760
    %v847 = vsub.f32 %v845, %v846
    %v848 = vand.u32 %v847, 4294901760
    %849 = vmatmul.mubr.f32.gmra.mxu0 %v848
    %v850 = vpop.f32.mrf.mxu0
    %v851 = vadd.f32 0.0, %v850
    %v852 = vpop.f32.mrf.mxu0
    %v853 = vand.u32 %v139, 4294901760
    %v854 = vsub.f32 %v139, %v853
    %v855 = vand.u32 %v854, 4294901760
    %v856 = vsub.f32 %v854, %v855
    %v857 = vand.u32 %v856, 4294901760
    %858 = vmatprep.mubr.f32.mxu0 %v857
    %v859 = vand.u32 %v138, 4294901760
    %v860 = vsub.f32 %v138, %v859
    %v861 = vand.u32 %v860, 4294901760
    %v862 = vsub.f32 %v860, %v861
    %v863 = vand.u32 %v862, 4294901760
    %864 = vmatmul.mubr.f32.gmra.mxu0 %v863
    %v865 = vpop.f32.mrf.mxu0
    %v866 = vadd.f32 0.0, %v865
    %v867 = vpop.f32.mrf.mxu0
    %868 = vdwg.mxu0
    %869 = vmatprep.subr.mxu0 0.0
    %v870 = vand.u32 %v155, 4294901760
    %v871 = vsub.f32 %v155, %v870
    %v872 = vand.u32 %v871, 4294901760
    %v873 = vsub.f32 %v871, %v872
    %v874 = vand.u32 %v873, 4294901760
    %875 = vmatpush1.msra.mxu0 %v874
    %876 = vmatprep.subr.mxu0 0.0
    %v877 = vand.u32 %v154, 4294901760
    %v878 = vsub.f32 %v154, %v877
    %v879 = vand.u32 %v878, 4294901760
    %v880 = vsub.f32 %v878, %v879
    %v881 = vand.u32 %v880, 4294901760
    %882 = vmatpush1.msra.mxu0 %v881
    %883 = vmatprep.subr.mxu0 0.0
    %v884 = vand.u32 %v153, 4294901760
    %v885 = vsub.f32 %v153, %v884
    %v886 = vand.u32 %v885, 4294901760
    %v887 = vsub.f32 %v885, %v886
    %v888 = vand.u32 %v887, 4294901760
    %889 = vmatpush1.msra.mxu0 %v888
    %890 = vmatprep.subr.mxu0 0.0
    %v891 = vand.u32 %v152, 4294901760
    %v892 = vsub.f32 %v152, %v891
    %v893 = vand.u32 %v892, 4294901760
    %v894 = vsub.f32 %v892, %v893
    %v895 = vand.u32 %v894, 4294901760
    %896 = vmatpush1.msra.mxu0 %v895
    %897 = vmatprep.subr.mxu0 0.0
    %v898 = vand.u32 %v151, 4294901760
    %v899 = vsub.f32 %v151, %v898
    %v900 = vand.u32 %v899, 4294901760
    %v901 = vsub.f32 %v899, %v900
    %v902 = vand.u32 %v901, 4294901760
    %903 = vmatpush1.msra.mxu0 %v902
    %904 = vmatprep.subr.mxu0 0.0
    %v905 = vand.u32 %v150, 4294901760
    %v906 = vsub.f32 %v150, %v905
    %v907 = vand.u32 %v906, 4294901760
    %v908 = vsub.f32 %v906, %v907
    %v909 = vand.u32 %v908, 4294901760
    %910 = vmatpush1.msra.mxu0 %v909
    %911 = vmatprep.subr.mxu0 0.0
    %v912 = vand.u32 %v149, 4294901760
    %v913 = vsub.f32 %v149, %v912
    %v914 = vand.u32 %v913, 4294901760
    %v915 = vsub.f32 %v913, %v914
    %v916 = vand.u32 %v915, 4294901760
    %917 = vmatpush1.msra.mxu0 %v916
    %918 = vmatprep.subr.mxu0 0.0
    %v919 = vand.u32 %v148, 4294901760
    %v920 = vsub.f32 %v148, %v919
    %v921 = vand.u32 %v920, 4294901760
    %v922 = vsub.f32 %v920, %v921
    %v923 = vand.u32 %v922, 4294901760
    %924 = vmatpush1.msra.mxu0 %v923
    %925 = vmatprep.subr.mxu0 0.0
    %v926 = vand.u32 %v147, 4294901760
    %v927 = vsub.f32 %v147, %v926
    %v928 = vand.u32 %v927, 4294901760
    %v929 = vsub.f32 %v927, %v928
    %v930 = vand.u32 %v929, 4294901760
    %931 = vmatpush1.msra.mxu0 %v930
    %932 = vmatprep.subr.mxu0 0.0
    %v933 = vand.u32 %v146, 4294901760
    %v934 = vsub.f32 %v146, %v933
    %v935 = vand.u32 %v934, 4294901760
    %v936 = vsub.f32 %v934, %v935
    %v937 = vand.u32 %v936, 4294901760
    %938 = vmatpush1.msra.mxu0 %v937
    %939 = vmatprep.subr.mxu0 0.0
    %v940 = vand.u32 %v145, 4294901760
    %v941 = vsub.f32 %v145, %v940
    %v942 = vand.u32 %v941, 4294901760
    %v943 = vsub.f32 %v941, %v942
    %v944 = vand.u32 %v943, 4294901760
    %945 = vmatpush1.msra.mxu0 %v944
    %946 = vmatprep.subr.mxu0 0.0
    %v947 = vand.u32 %v144, 4294901760
    %v948 = vsub.f32 %v144, %v947
    %v949 = vand.u32 %v948, 4294901760
    %v950 = vsub.f32 %v948, %v949
    %v951 = vand.u32 %v950, 4294901760
    %952 = vmatpush1.msra.mxu0 %v951
    %953 = vmatprep.subr.mxu0 0.0
    %v954 = vand.u32 %v143, 4294901760
    %v955 = vsub.f32 %v143, %v954
    %v956 = vand.u32 %v955, 4294901760
    %v957 = vsub.f32 %v955, %v956
    %v958 = vand.u32 %v957, 4294901760
    %959 = vmatpush1.msra.mxu0 %v958
    %960 = vmatprep.subr.mxu0 0.0
    %v961 = vand.u32 %v142, 4294901760
    %v962 = vsub.f32 %v142, %v961
    %v963 = vand.u32 %v962, 4294901760
    %v964 = vsub.f32 %v962, %v963
    %v965 = vand.u32 %v964, 4294901760
    %966 = vmatpush1.msra.mxu0 %v965
    %967 = vmatprep.subr.mxu0 0.0
    %v968 = vand.u32 %v141, 4294901760
    %v969 = vsub.f32 %v141, %v968
    %v970 = vand.u32 %v969, 4294901760
    %v971 = vsub.f32 %v969, %v970
    %v972 = vand.u32 %v971, 4294901760
    %973 = vmatpush1.msra.mxu0 %v972
    %974 = vmatprep.subr.mxu0 0.0
    %v975 = vand.u32 %v140, 4294901760
    %v976 = vsub.f32 %v140, %v975
    %v977 = vand.u32 %v976, 4294901760
    %v978 = vsub.f32 %v976, %v977
    %v979 = vand.u32 %v978, 4294901760
    %980 = vmatpush1.msra.mxu0 %v979
    %981 = vmatprep.subr.mxu0 0.0
    %v982 = vand.u32 %v171, 4294901760
    %v983 = vsub.f32 %v171, %v982
    %v984 = vand.u32 %v983, 4294901760
    %v985 = vsub.f32 %v983, %v984
    %v986 = vand.u32 %v985, 4294901760
    %987 = vmatpush2.msra.mxu0 %v986
    %988 = vmatprep.subr.mxu0 0.0
    %v989 = vand.u32 %v170, 4294901760
    %v990 = vsub.f32 %v170, %v989
    %v991 = vand.u32 %v990, 4294901760
    %v992 = vsub.f32 %v990, %v991
    %v993 = vand.u32 %v992, 4294901760
    %994 = vmatpush2.msra.mxu0 %v993
    %995 = vmatprep.subr.mxu0 0.0
    %v996 = vand.u32 %v169, 4294901760
    %v997 = vsub.f32 %v169, %v996
    %v998 = vand.u32 %v997, 4294901760
    %v999 = vsub.f32 %v997, %v998
    %v1000 = vand.u32 %v999, 4294901760
    %1001 = vmatpush2.msra.mxu0 %v1000
    %1002 = vmatprep.subr.mxu0 0.0
    %v1003 = vand.u32 %v168, 4294901760
    %v1004 = vsub.f32 %v168, %v1003
    %v1005 = vand.u32 %v1004, 4294901760
    %v1006 = vsub.f32 %v1004, %v1005
    %v1007 = vand.u32 %v1006, 4294901760
    %1008 = vmatpush2.msra.mxu0 %v1007
    %1009 = vmatprep.subr.mxu0 0.0
    %v1010 = vand.u32 %v167, 4294901760
    %v1011 = vsub.f32 %v167, %v1010
    %v1012 = vand.u32 %v1011, 4294901760
    %v1013 = vsub.f32 %v1011, %v1012
    %v1014 = vand.u32 %v1013, 4294901760
    %1015 = vmatpush2.msra.mxu0 %v1014
    %1016 = vmatprep.subr.mxu0 0.0
    %v1017 = vand.u32 %v166, 4294901760
    %v1018 = vsub.f32 %v166, %v1017
    %v1019 = vand.u32 %v1018, 4294901760
    %v1020 = vsub.f32 %v1018, %v1019
    %v1021 = vand.u32 %v1020, 4294901760
    %1022 = vmatpush2.msra.mxu0 %v1021
    %1023 = vmatprep.subr.mxu0 0.0
    %v1024 = vand.u32 %v165, 4294901760
    %v1025 = vsub.f32 %v165, %v1024
    %v1026 = vand.u32 %v1025, 4294901760
    %v1027 = vsub.f32 %v1025, %v1026
    %v1028 = vand.u32 %v1027, 4294901760
    %1029 = vmatpush2.msra.mxu0 %v1028
    %1030 = vmatprep.subr.mxu0 0.0
    %v1031 = vand.u32 %v164, 4294901760
    %v1032 = vsub.f32 %v164, %v1031
    %v1033 = vand.u32 %v1032, 4294901760
    %v1034 = vsub.f32 %v1032, %v1033
    %v1035 = vand.u32 %v1034, 4294901760
    %1036 = vmatpush2.msra.mxu0 %v1035
    %1037 = vmatprep.subr.mxu0 0.0
    %v1038 = vand.u32 %v163, 4294901760
    %v1039 = vsub.f32 %v163, %v1038
    %v1040 = vand.u32 %v1039, 4294901760
    %v1041 = vsub.f32 %v1039, %v1040
    %v1042 = vand.u32 %v1041, 4294901760
    %1043 = vmatpush2.msra.mxu0 %v1042
    %1044 = vmatprep.subr.mxu0 0.0
    %v1045 = vand.u32 %v162, 4294901760
    %v1046 = vsub.f32 %v162, %v1045
    %v1047 = vand.u32 %v1046, 4294901760
    %v1048 = vsub.f32 %v1046, %v1047
    %v1049 = vand.u32 %v1048, 4294901760
    %1050 = vmatpush2.msra.mxu0 %v1049
    %1051 = vmatprep.subr.mxu0 0.0
    %v1052 = vand.u32 %v161, 4294901760
    %v1053 = vsub.f32 %v161, %v1052
    %v1054 = vand.u32 %v1053, 4294901760
    %v1055 = vsub.f32 %v1053, %v1054
    %v1056 = vand.u32 %v1055, 4294901760
    %1057 = vmatpush2.msra.mxu0 %v1056
    %1058 = vmatprep.subr.mxu0 0.0
    %v1059 = vand.u32 %v160, 4294901760
    %v1060 = vsub.f32 %v160, %v1059
    %v1061 = vand.u32 %v1060, 4294901760
    %v1062 = vsub.f32 %v1060, %v1061
    %v1063 = vand.u32 %v1062, 4294901760
    %1064 = vmatpush2.msra.mxu0 %v1063
    %1065 = vmatprep.subr.mxu0 0.0
    %v1066 = vand.u32 %v159, 4294901760
    %v1067 = vsub.f32 %v159, %v1066
    %v1068 = vand.u32 %v1067, 4294901760
    %v1069 = vsub.f32 %v1067, %v1068
    %v1070 = vand.u32 %v1069, 4294901760
    %1071 = vmatpush2.msra.mxu0 %v1070
    %1072 = vmatprep.subr.mxu0 0.0
    %v1073 = vand.u32 %v158, 4294901760
    %v1074 = vsub.f32 %v158, %v1073
    %v1075 = vand.u32 %v1074, 4294901760
    %v1076 = vsub.f32 %v1074, %v1075
    %v1077 = vand.u32 %v1076, 4294901760
    %1078 = vmatpush2.msra.mxu0 %v1077
    %1079 = vmatprep.subr.mxu0 0.0
    %v1080 = vand.u32 %v157, 4294901760
    %v1081 = vsub.f32 %v157, %v1080
    %v1082 = vand.u32 %v1081, 4294901760
    %v1083 = vsub.f32 %v1081, %v1082
    %v1084 = vand.u32 %v1083, 4294901760
    %1085 = vmatpush2.msra.mxu0 %v1084
    %1086 = vmatprep.subr.mxu0 0.0
    %v1087 = vand.u32 %v156, 4294901760
    %v1088 = vsub.f32 %v156, %v1087
    %v1089 = vand.u32 %v1088, 4294901760
    %v1090 = vsub.f32 %v1088, %v1089
    %v1091 = vand.u32 %v1090, 4294901760
    %1092 = vmatpush2.msra.mxu0 %v1091
    %v1093 = vand.u32 %v61, 4294901760
    %1094 = vmatprep.mubr.f32.mxu0 %v1093
    %v1095 = vand.u32 %v60, 4294901760
    %1096 = vmatmul.mubr.f32.gmra.mxu0 %v1095
    %v1097 = vpop.f32.mrf.mxu0
    %v1098 = vadd.f32 %v281, %v1097
    %v1099 = vpop.f32.mrf.mxu0
    %v1100 = vand.u32 %v63, 4294901760
    %1101 = vmatprep.mubr.f32.mxu0 %v1100
    %v1102 = vand.u32 %v62, 4294901760
    %1103 = vmatmul.mubr.f32.gmra.mxu0 %v1102
    %v1104 = vpop.f32.mrf.mxu0
    %v1105 = vadd.f32 %v296, %v1104
    %v1106 = vpop.f32.mrf.mxu0
    %v1107 = vand.u32 %v65, 4294901760
    %1108 = vmatprep.mubr.f32.mxu0 %v1107
    %v1109 = vand.u32 %v64, 4294901760
    %1110 = vmatmul.mubr.f32.gmra.mxu0 %v1109
    %v1111 = vpop.f32.mrf.mxu0
    %v1112 = vadd.f32 %v311, %v1111
    %v1113 = vpop.f32.mrf.mxu0
    %v1114 = vand.u32 %v67, 4294901760
    %1115 = vmatprep.mubr.f32.mxu0 %v1114
    %v1116 = vand.u32 %v66, 4294901760
    %1117 = vmatmul.mubr.f32.gmra.mxu0 %v1116
    %v1118 = vpop.f32.mrf.mxu0
    %v1119 = vadd.f32 %v326, %v1118
    %v1120 = vpop.f32.mrf.mxu0
    %v1121 = vand.u32 %v69, 4294901760
    %1122 = vmatprep.mubr.f32.mxu0 %v1121
    %v1123 = vand.u32 %v68, 4294901760
    %1124 = vmatmul.mubr.f32.gmra.mxu0 %v1123
    %v1125 = vpop.f32.mrf.mxu0
    %v1126 = vadd.f32 %v341, %v1125
    %v1127 = vpop.f32.mrf.mxu0
    %v1128 = vand.u32 %v71, 4294901760
    %1129 = vmatprep.mubr.f32.mxu0 %v1128
    %v1130 = vand.u32 %v70, 4294901760
    %1131 = vmatmul.mubr.f32.gmra.mxu0 %v1130
    %v1132 = vpop.f32.mrf.mxu0
    %v1133 = vadd.f32 %v356, %v1132
    %v1134 = vpop.f32.mrf.mxu0
    %v1135 = vand.u32 %v73, 4294901760
    %1136 = vmatprep.mubr.f32.mxu0 %v1135
    %v1137 = vand.u32 %v72, 4294901760
    %1138 = vmatmul.mubr.f32.gmra.mxu0 %v1137
    %v1139 = vpop.f32.mrf.mxu0
    %v1140 = vadd.f32 %v371, %v1139
    %v1141 = vpop.f32.mrf.mxu0
    %v1142 = vand.u32 %v75, 4294901760
    %1143 = vmatprep.mubr.f32.mxu0 %v1142
    %v1144 = vand.u32 %v74, 4294901760
    %1145 = vmatmul.mubr.f32.gmra.mxu0 %v1144
    %v1146 = vpop.f32.mrf.mxu0
    %v1147 = vadd.f32 %v386, %v1146
    %v1148 = vpop.f32.mrf.mxu0
    %v1149 = vand.u32 %v77, 4294901760
    %1150 = vmatprep.mubr.f32.mxu0 %v1149
    %v1151 = vand.u32 %v76, 4294901760
    %1152 = vmatmul.mubr.f32.gmra.mxu0 %v1151
    %v1153 = vpop.f32.mrf.mxu0
    %v1154 = vadd.f32 %v401, %v1153
    %v1155 = vpop.f32.mrf.mxu0
    %v1156 = vand.u32 %v79, 4294901760
    %1157 = vmatprep.mubr.f32.mxu0 %v1156
    %v1158 = vand.u32 %v78, 4294901760
    %1159 = vmatmul.mubr.f32.gmra.mxu0 %v1158
    %v1160 = vpop.f32.mrf.mxu0
    %v1161 = vadd.f32 %v416, %v1160
    %v1162 = vpop.f32.mrf.mxu0
    %v1163 = vand.u32 %v81, 4294901760
    %1164 = vmatprep.mubr.f32.mxu0 %v1163
    %v1165 = vand.u32 %v80, 4294901760
    %1166 = vmatmul.mubr.f32.gmra.mxu0 %v1165
    %v1167 = vpop.f32.mrf.mxu0
    %v1168 = vadd.f32 %v431, %v1167
    %v1169 = vpop.f32.mrf.mxu0
    %v1170 = vand.u32 %v83, 4294901760
    %1171 = vmatprep.mubr.f32.mxu0 %v1170
    %v1172 = vand.u32 %v82, 4294901760
    %1173 = vmatmul.mubr.f32.gmra.mxu0 %v1172
    %v1174 = vpop.f32.mrf.mxu0
    %v1175 = vadd.f32 %v446, %v1174
    %v1176 = vpop.f32.mrf.mxu0
    %v1177 = vand.u32 %v85, 4294901760
    %1178 = vmatprep.mubr.f32.mxu0 %v1177
    %v1179 = vand.u32 %v84, 4294901760
    %1180 = vmatmul.mubr.f32.gmra.mxu0 %v1179
    %v1181 = vpop.f32.mrf.mxu0
    %v1182 = vadd.f32 %v461, %v1181
    %v1183 = vpop.f32.mrf.mxu0
    %v1184 = vand.u32 %v87, 4294901760
    %1185 = vmatprep.mubr.f32.mxu0 %v1184
    %v1186 = vand.u32 %v86, 4294901760
    %1187 = vmatmul.mubr.f32.gmra.mxu0 %v1186
    %v1188 = vpop.f32.mrf.mxu0
    %v1189 = vadd.f32 %v476, %v1188
    %v1190 = vpop.f32.mrf.mxu0
    %v1191 = vand.u32 %v89, 4294901760
    %1192 = vmatprep.mubr.f32.mxu0 %v1191
    %v1193 = vand.u32 %v88, 4294901760
    %1194 = vmatmul.mubr.f32.gmra.mxu0 %v1193
    %v1195 = vpop.f32.mrf.mxu0
    %v1196 = vadd.f32 %v491, %v1195
    %v1197 = vpop.f32.mrf.mxu0
    %v1198 = vand.u32 %v91, 4294901760
    %1199 = vmatprep.mubr.f32.mxu0 %v1198
    %v1200 = vand.u32 %v90, 4294901760
    %1201 = vmatmul.mubr.f32.gmra.mxu0 %v1200
    %v1202 = vpop.f32.mrf.mxu0
    %v1203 = vadd.f32 %v506, %v1202
    %v1204 = vpop.f32.mrf.mxu0
    %v1205 = vand.u32 %v93, 4294901760
    %1206 = vmatprep.mubr.f32.mxu0 %v1205
    %v1207 = vand.u32 %v92, 4294901760
    %1208 = vmatmul.mubr.f32.gmra.mxu0 %v1207
    %v1209 = vpop.f32.mrf.mxu0
    %v1210 = vadd.f32 %v521, %v1209
    %v1211 = vpop.f32.mrf.mxu0
    %v1212 = vand.u32 %v95, 4294901760
    %1213 = vmatprep.mubr.f32.mxu0 %v1212
    %v1214 = vand.u32 %v94, 4294901760
    %1215 = vmatmul.mubr.f32.gmra.mxu0 %v1214
    %v1216 = vpop.f32.mrf.mxu0
    %v1217 = vadd.f32 %v536, %v1216
    %v1218 = vpop.f32.mrf.mxu0
    %v1219 = vand.u32 %v97, 4294901760
    %1220 = vmatprep.mubr.f32.mxu0 %v1219
    %v1221 = vand.u32 %v96, 4294901760
    %1222 = vmatmul.mubr.f32.gmra.mxu0 %v1221
    %v1223 = vpop.f32.mrf.mxu0
    %v1224 = vadd.f32 %v551, %v1223
    %v1225 = vpop.f32.mrf.mxu0
    %v1226 = vand.u32 %v99, 4294901760
    %1227 = vmatprep.mubr.f32.mxu0 %v1226
    %v1228 = vand.u32 %v98, 4294901760
    %1229 = vmatmul.mubr.f32.gmra.mxu0 %v1228
    %v1230 = vpop.f32.mrf.mxu0
    %v1231 = vadd.f32 %v566, %v1230
    %v1232 = vpop.f32.mrf.mxu0
    %v1233 = vand.u32 %v101, 4294901760
    %1234 = vmatprep.mubr.f32.mxu0 %v1233
    %v1235 = vand.u32 %v100, 4294901760
    %1236 = vmatmul.mubr.f32.gmra.mxu0 %v1235
    %v1237 = vpop.f32.mrf.mxu0
    %v1238 = vadd.f32 %v581, %v1237
    %v1239 = vpop.f32.mrf.mxu0
    %v1240 = vand.u32 %v103, 4294901760
    %1241 = vmatprep.mubr.f32.mxu0 %v1240
    %v1242 = vand.u32 %v102, 4294901760
    %1243 = vmatmul.mubr.f32.gmra.mxu0 %v1242
    %v1244 = vpop.f32.mrf.mxu0
    %v1245 = vadd.f32 %v596, %v1244
    %v1246 = vpop.f32.mrf.mxu0
    %v1247 = vand.u32 %v105, 4294901760
    %1248 = vmatprep.mubr.f32.mxu0 %v1247
    %v1249 = vand.u32 %v104, 4294901760
    %1250 = vmatmul.mubr.f32.gmra.mxu0 %v1249
    %v1251 = vpop.f32.mrf.mxu0
    %v1252 = vadd.f32 %v611, %v1251
    %v1253 = vpop.f32.mrf.mxu0
    %v1254 = vand.u32 %v107, 4294901760
    %1255 = vmatprep.mubr.f32.mxu0 %v1254
    %v1256 = vand.u32 %v106, 4294901760
    %1257 = vmatmul.mubr.f32.gmra.mxu0 %v1256
    %v1258 = vpop.f32.mrf.mxu0
    %v1259 = vadd.f32 %v626, %v1258
    %v1260 = vpop.f32.mrf.mxu0
    %v1261 = vand.u32 %v109, 4294901760
    %1262 = vmatprep.mubr.f32.mxu0 %v1261
    %v1263 = vand.u32 %v108, 4294901760
    %1264 = vmatmul.mubr.f32.gmra.mxu0 %v1263
    %v1265 = vpop.f32.mrf.mxu0
    %v1266 = vadd.f32 %v641, %v1265
    %v1267 = vpop.f32.mrf.mxu0
    %v1268 = vand.u32 %v111, 4294901760
    %1269 = vmatprep.mubr.f32.mxu0 %v1268
    %v1270 = vand.u32 %v110, 4294901760
    %1271 = vmatmul.mubr.f32.gmra.mxu0 %v1270
    %v1272 = vpop.f32.mrf.mxu0
    %v1273 = vadd.f32 %v656, %v1272
    %v1274 = vpop.f32.mrf.mxu0
    %v1275 = vand.u32 %v113, 4294901760
    %1276 = vmatprep.mubr.f32.mxu0 %v1275
    %v1277 = vand.u32 %v112, 4294901760
    %1278 = vmatmul.mubr.f32.gmra.mxu0 %v1277
    %v1279 = vpop.f32.mrf.mxu0
    %v1280 = vadd.f32 %v671, %v1279
    %v1281 = vpop.f32.mrf.mxu0
    %v1282 = vand.u32 %v115, 4294901760
    %1283 = vmatprep.mubr.f32.mxu0 %v1282
    %v1284 = vand.u32 %v114, 4294901760
    %1285 = vmatmul.mubr.f32.gmra.mxu0 %v1284
    %v1286 = vpop.f32.mrf.mxu0
    %v1287 = vadd.f32 %v686, %v1286
    %v1288 = vpop.f32.mrf.mxu0
    %v1289 = vand.u32 %v117, 4294901760
    %1290 = vmatprep.mubr.f32.mxu0 %v1289
    %v1291 = vand.u32 %v116, 4294901760
    %1292 = vmatmul.mubr.f32.gmra.mxu0 %v1291
    %v1293 = vpop.f32.mrf.mxu0
    %v1294 = vadd.f32 %v701, %v1293
    %v1295 = vpop.f32.mrf.mxu0
    %v1296 = vand.u32 %v119, 4294901760
    %1297 = vmatprep.mubr.f32.mxu0 %v1296
    %v1298 = vand.u32 %v118, 4294901760
    %1299 = vmatmul.mubr.f32.gmra.mxu0 %v1298
    %v1300 = vpop.f32.mrf.mxu0
    %v1301 = vadd.f32 %v716, %v1300
    %v1302 = vpop.f32.mrf.mxu0
    %v1303 = vand.u32 %v121, 4294901760
    %1304 = vmatprep.mubr.f32.mxu0 %v1303
    %v1305 = vand.u32 %v120, 4294901760
    %1306 = vmatmul.mubr.f32.gmra.mxu0 %v1305
    %v1307 = vpop.f32.mrf.mxu0
    %v1308 = vadd.f32 %v731, %v1307
    %v1309 = vpop.f32.mrf.mxu0
    %v1310 = vand.u32 %v123, 4294901760
    %1311 = vmatprep.mubr.f32.mxu0 %v1310
    %v1312 = vand.u32 %v122, 4294901760
    %1313 = vmatmul.mubr.f32.gmra.mxu0 %v1312
    %v1314 = vpop.f32.mrf.mxu0
    %v1315 = vadd.f32 %v746, %v1314
    %v1316 = vpop.f32.mrf.mxu0
    %v1317 = vand.u32 %v125, 4294901760
    %1318 = vmatprep.mubr.f32.mxu0 %v1317
    %v1319 = vand.u32 %v124, 4294901760
    %1320 = vmatmul.mubr.f32.gmra.mxu0 %v1319
    %v1321 = vpop.f32.mrf.mxu0
    %v1322 = vadd.f32 %v761, %v1321
    %v1323 = vpop.f32.mrf.mxu0
    %v1324 = vand.u32 %v127, 4294901760
    %1325 = vmatprep.mubr.f32.mxu0 %v1324
    %v1326 = vand.u32 %v126, 4294901760
    %1327 = vmatmul.mubr.f32.gmra.mxu0 %v1326
    %v1328 = vpop.f32.mrf.mxu0
    %v1329 = vadd.f32 %v776, %v1328
    %v1330 = vpop.f32.mrf.mxu0
    %v1331 = vand.u32 %v129, 4294901760
    %1332 = vmatprep.mubr.f32.mxu0 %v1331
    %v1333 = vand.u32 %v128, 4294901760
    %1334 = vmatmul.mubr.f32.gmra.mxu0 %v1333
    %v1335 = vpop.f32.mrf.mxu0
    %v1336 = vadd.f32 %v791, %v1335
    %v1337 = vpop.f32.mrf.mxu0
    %v1338 = vand.u32 %v131, 4294901760
    %1339 = vmatprep.mubr.f32.mxu0 %v1338
    %v1340 = vand.u32 %v130, 4294901760
    %1341 = vmatmul.mubr.f32.gmra.mxu0 %v1340
    %v1342 = vpop.f32.mrf.mxu0
    %v1343 = vadd.f32 %v806, %v1342
    %v1344 = vpop.f32.mrf.mxu0
    %v1345 = vand.u32 %v133, 4294901760
    %1346 = vmatprep.mubr.f32.mxu0 %v1345
    %v1347 = vand.u32 %v132, 4294901760
    %1348 = vmatmul.mubr.f32.gmra.mxu0 %v1347
    %v1349 = vpop.f32.mrf.mxu0
    %v1350 = vadd.f32 %v821, %v1349
    %v1351 = vpop.f32.mrf.mxu0
    %v1352 = vand.u32 %v135, 4294901760
    %1353 = vmatprep.mubr.f32.mxu0 %v1352
    %v1354 = vand.u32 %v134, 4294901760
    %1355 = vmatmul.mubr.f32.gmra.mxu0 %v1354
    %v1356 = vpop.f32.mrf.mxu0
    %v1357 = vadd.f32 %v836, %v1356
    %v1358 = vpop.f32.mrf.mxu0
    %v1359 = vand.u32 %v137, 4294901760
    %1360 = vmatprep.mubr.f32.mxu0 %v1359
    %v1361 = vand.u32 %v136, 4294901760
    %1362 = vmatmul.mubr.f32.gmra.mxu0 %v1361
    %v1363 = vpop.f32.mrf.mxu0
    %v1364 = vadd.f32 %v851, %v1363
    %v1365 = vpop.f32.mrf.mxu0
    %v1366 = vand.u32 %v139, 4294901760
    %1367 = vmatprep.mubr.f32.mxu0 %v1366
    %v1368 = vand.u32 %v138, 4294901760
    %1369 = vmatmul.mubr.f32.gmra.mxu0 %v1368
    %v1370 = vpop.f32.mrf.mxu0
    %v1371 = vadd.f32 %v866, %v1370
    %v1372 = vpop.f32.mrf.mxu0
    %1373 = vdwg.mxu0
    %1374 = vmatprep.subr.mxu0 0.0
    %v1375 = vand.u32 %v155, 4294901760
    %v1376 = vsub.f32 %v155, %v1375
    %1377 = vmatpush1.msra.mxu0 %v1376
    %1378 = vmatprep.subr.mxu0 0.0
    %v1379 = vand.u32 %v154, 4294901760
    %v1380 = vsub.f32 %v154, %v1379
    %1381 = vmatpush1.msra.mxu0 %v1380
    %1382 = vmatprep.subr.mxu0 0.0
    %v1383 = vand.u32 %v153, 4294901760
    %v1384 = vsub.f32 %v153, %v1383
    %1385 = vmatpush1.msra.mxu0 %v1384
    %1386 = vmatprep.subr.mxu0 0.0
    %v1387 = vand.u32 %v152, 4294901760
    %v1388 = vsub.f32 %v152, %v1387
    %1389 = vmatpush1.msra.mxu0 %v1388
    %1390 = vmatprep.subr.mxu0 0.0
    %v1391 = vand.u32 %v151, 4294901760
    %v1392 = vsub.f32 %v151, %v1391
    %1393 = vmatpush1.msra.mxu0 %v1392
    %1394 = vmatprep.subr.mxu0 0.0
    %v1395 = vand.u32 %v150, 4294901760
    %v1396 = vsub.f32 %v150, %v1395
    %1397 = vmatpush1.msra.mxu0 %v1396
    %1398 = vmatprep.subr.mxu0 0.0
    %v1399 = vand.u32 %v149, 4294901760
    %v1400 = vsub.f32 %v149, %v1399
    %1401 = vmatpush1.msra.mxu0 %v1400
    %1402 = vmatprep.subr.mxu0 0.0
    %v1403 = vand.u32 %v148, 4294901760
    %v1404 = vsub.f32 %v148, %v1403
    %1405 = vmatpush1.msra.mxu0 %v1404
    %1406 = vmatprep.subr.mxu0 0.0
    %v1407 = vand.u32 %v147, 4294901760
    %v1408 = vsub.f32 %v147, %v1407
    %1409 = vmatpush1.msra.mxu0 %v1408
    %1410 = vmatprep.subr.mxu0 0.0
    %v1411 = vand.u32 %v146, 4294901760
    %v1412 = vsub.f32 %v146, %v1411
    %1413 = vmatpush1.msra.mxu0 %v1412
    %1414 = vmatprep.subr.mxu0 0.0
    %v1415 = vand.u32 %v145, 4294901760
    %v1416 = vsub.f32 %v145, %v1415
    %1417 = vmatpush1.msra.mxu0 %v1416
    %1418 = vmatprep.subr.mxu0 0.0
    %v1419 = vand.u32 %v144, 4294901760
    %v1420 = vsub.f32 %v144, %v1419
    %1421 = vmatpush1.msra.mxu0 %v1420
    %1422 = vmatprep.subr.mxu0 0.0
    %v1423 = vand.u32 %v143, 4294901760
    %v1424 = vsub.f32 %v143, %v1423
    %1425 = vmatpush1.msra.mxu0 %v1424
    %1426 = vmatprep.subr.mxu0 0.0
    %v1427 = vand.u32 %v142, 4294901760
    %v1428 = vsub.f32 %v142, %v1427
    %1429 = vmatpush1.msra.mxu0 %v1428
    %1430 = vmatprep.subr.mxu0 0.0
    %v1431 = vand.u32 %v141, 4294901760
    %v1432 = vsub.f32 %v141, %v1431
    %1433 = vmatpush1.msra.mxu0 %v1432
    %1434 = vmatprep.subr.mxu0 0.0
    %v1435 = vand.u32 %v140, 4294901760
    %v1436 = vsub.f32 %v140, %v1435
    %1437 = vmatpush1.msra.mxu0 %v1436
    %1438 = vmatprep.subr.mxu0 0.0
    %v1439 = vand.u32 %v171, 4294901760
    %v1440 = vsub.f32 %v171, %v1439
    %1441 = vmatpush2.msra.mxu0 %v1440
    %1442 = vmatprep.subr.mxu0 0.0
    %v1443 = vand.u32 %v170, 4294901760
    %v1444 = vsub.f32 %v170, %v1443
    %1445 = vmatpush2.msra.mxu0 %v1444
    %1446 = vmatprep.subr.mxu0 0.0
    %v1447 = vand.u32 %v169, 4294901760
    %v1448 = vsub.f32 %v169, %v1447
    %1449 = vmatpush2.msra.mxu0 %v1448
    %1450 = vmatprep.subr.mxu0 0.0
    %v1451 = vand.u32 %v168, 4294901760
    %v1452 = vsub.f32 %v168, %v1451
    %1453 = vmatpush2.msra.mxu0 %v1452
    %1454 = vmatprep.subr.mxu0 0.0
    %v1455 = vand.u32 %v167, 4294901760
    %v1456 = vsub.f32 %v167, %v1455
    %1457 = vmatpush2.msra.mxu0 %v1456
    %1458 = vmatprep.subr.mxu0 0.0
    %v1459 = vand.u32 %v166, 4294901760
    %v1460 = vsub.f32 %v166, %v1459
    %1461 = vmatpush2.msra.mxu0 %v1460
    %1462 = vmatprep.subr.mxu0 0.0
    %v1463 = vand.u32 %v165, 4294901760
    %v1464 = vsub.f32 %v165, %v1463
    %1465 = vmatpush2.msra.mxu0 %v1464
    %1466 = vmatprep.subr.mxu0 0.0
    %v1467 = vand.u32 %v164, 4294901760
    %v1468 = vsub.f32 %v164, %v1467
    %1469 = vmatpush2.msra.mxu0 %v1468
    %1470 = vmatprep.subr.mxu0 0.0
    %v1471 = vand.u32 %v163, 4294901760
    %v1472 = vsub.f32 %v163, %v1471
    %1473 = vmatpush2.msra.mxu0 %v1472
    %1474 = vmatprep.subr.mxu0 0.0
    %v1475 = vand.u32 %v162, 4294901760
    %v1476 = vsub.f32 %v162, %v1475
    %1477 = vmatpush2.msra.mxu0 %v1476
    %1478 = vmatprep.subr.mxu0 0.0
    %v1479 = vand.u32 %v161, 4294901760
    %v1480 = vsub.f32 %v161, %v1479
    %1481 = vmatpush2.msra.mxu0 %v1480
    %1482 = vmatprep.subr.mxu0 0.0
    %v1483 = vand.u32 %v160, 4294901760
    %v1484 = vsub.f32 %v160, %v1483
    %1485 = vmatpush2.msra.mxu0 %v1484
    %1486 = vmatprep.subr.mxu0 0.0
    %v1487 = vand.u32 %v159, 4294901760
    %v1488 = vsub.f32 %v159, %v1487
    %1489 = vmatpush2.msra.mxu0 %v1488
    %1490 = vmatprep.subr.mxu0 0.0
    %v1491 = vand.u32 %v158, 4294901760
    %v1492 = vsub.f32 %v158, %v1491
    %1493 = vmatpush2.msra.mxu0 %v1492
    %1494 = vmatprep.subr.mxu0 0.0
    %v1495 = vand.u32 %v157, 4294901760
    %v1496 = vsub.f32 %v157, %v1495
    %1497 = vmatpush2.msra.mxu0 %v1496
    %1498 = vmatprep.subr.mxu0 0.0
    %v1499 = vand.u32 %v156, 4294901760
    %v1500 = vsub.f32 %v156, %v1499
    %1501 = vmatpush2.msra.mxu0 %v1500
    %v1502 = vand.u32 %v61, 4294901760
    %v1503 = vsub.f32 %v61, %v1502
    %1504 = vmatprep.mubr.f32.mxu0 %v1503
    %v1505 = vand.u32 %v60, 4294901760
    %v1506 = vsub.f32 %v60, %v1505
    %1507 = vmatmul.mubr.f32.gmra.mxu0 %v1506
    %v1508 = vpop.f32.mrf.mxu0
    %v1509 = vadd.f32 %v1098, %v1508
    %v1510 = vpop.f32.mrf.mxu0
    %v1511 = vand.u32 %v63, 4294901760
    %v1512 = vsub.f32 %v63, %v1511
    %1513 = vmatprep.mubr.f32.mxu0 %v1512
    %v1514 = vand.u32 %v62, 4294901760
    %v1515 = vsub.f32 %v62, %v1514
    %1516 = vmatmul.mubr.f32.gmra.mxu0 %v1515
    %v1517 = vpop.f32.mrf.mxu0
    %v1518 = vadd.f32 %v1105, %v1517
    %v1519 = vpop.f32.mrf.mxu0
    %v1520 = vand.u32 %v65, 4294901760
    %v1521 = vsub.f32 %v65, %v1520
    %1522 = vmatprep.mubr.f32.mxu0 %v1521
    %v1523 = vand.u32 %v64, 4294901760
    %v1524 = vsub.f32 %v64, %v1523
    %1525 = vmatmul.mubr.f32.gmra.mxu0 %v1524
    %v1526 = vpop.f32.mrf.mxu0
    %v1527 = vadd.f32 %v1112, %v1526
    %v1528 = vpop.f32.mrf.mxu0
    %v1529 = vand.u32 %v67, 4294901760
    %v1530 = vsub.f32 %v67, %v1529
    %1531 = vmatprep.mubr.f32.mxu0 %v1530
    %v1532 = vand.u32 %v66, 4294901760
    %v1533 = vsub.f32 %v66, %v1532
    %1534 = vmatmul.mubr.f32.gmra.mxu0 %v1533
    %v1535 = vpop.f32.mrf.mxu0
    %v1536 = vadd.f32 %v1119, %v1535
    %v1537 = vpop.f32.mrf.mxu0
    %v1538 = vand.u32 %v69, 4294901760
    %v1539 = vsub.f32 %v69, %v1538
    %1540 = vmatprep.mubr.f32.mxu0 %v1539
    %v1541 = vand.u32 %v68, 4294901760
    %v1542 = vsub.f32 %v68, %v1541
    %1543 = vmatmul.mubr.f32.gmra.mxu0 %v1542
    %v1544 = vpop.f32.mrf.mxu0
    %v1545 = vadd.f32 %v1126, %v1544
    %v1546 = vpop.f32.mrf.mxu0
    %v1547 = vand.u32 %v71, 4294901760
    %v1548 = vsub.f32 %v71, %v1547
    %1549 = vmatprep.mubr.f32.mxu0 %v1548
    %v1550 = vand.u32 %v70, 4294901760
    %v1551 = vsub.f32 %v70, %v1550
    %1552 = vmatmul.mubr.f32.gmra.mxu0 %v1551
    %v1553 = vpop.f32.mrf.mxu0
    %v1554 = vadd.f32 %v1133, %v1553
    %v1555 = vpop.f32.mrf.mxu0
    %v1556 = vand.u32 %v73, 4294901760
    %v1557 = vsub.f32 %v73, %v1556
    %1558 = vmatprep.mubr.f32.mxu0 %v1557
    %v1559 = vand.u32 %v72, 4294901760
    %v1560 = vsub.f32 %v72, %v1559
    %1561 = vmatmul.mubr.f32.gmra.mxu0 %v1560
    %v1562 = vpop.f32.mrf.mxu0
    %v1563 = vadd.f32 %v1140, %v1562
    %v1564 = vpop.f32.mrf.mxu0
    %v1565 = vand.u32 %v75, 4294901760
    %v1566 = vsub.f32 %v75, %v1565
    %1567 = vmatprep.mubr.f32.mxu0 %v1566
    %v1568 = vand.u32 %v74, 4294901760
    %v1569 = vsub.f32 %v74, %v1568
    %1570 = vmatmul.mubr.f32.gmra.mxu0 %v1569
    %v1571 = vpop.f32.mrf.mxu0
    %v1572 = vadd.f32 %v1147, %v1571
    %v1573 = vpop.f32.mrf.mxu0
    %v1574 = vand.u32 %v77, 4294901760
    %v1575 = vsub.f32 %v77, %v1574
    %1576 = vmatprep.mubr.f32.mxu0 %v1575
    %v1577 = vand.u32 %v76, 4294901760
    %v1578 = vsub.f32 %v76, %v1577
    %1579 = vmatmul.mubr.f32.gmra.mxu0 %v1578
    %v1580 = vpop.f32.mrf.mxu0
    %v1581 = vadd.f32 %v1154, %v1580
    %v1582 = vpop.f32.mrf.mxu0
    %v1583 = vand.u32 %v79, 4294901760
    %v1584 = vsub.f32 %v79, %v1583
    %1585 = vmatprep.mubr.f32.mxu0 %v1584
    %v1586 = vand.u32 %v78, 4294901760
    %v1587 = vsub.f32 %v78, %v1586
    %1588 = vmatmul.mubr.f32.gmra.mxu0 %v1587
    %v1589 = vpop.f32.mrf.mxu0
    %v1590 = vadd.f32 %v1161, %v1589
    %v1591 = vpop.f32.mrf.mxu0
    %v1592 = vand.u32 %v81, 4294901760
    %v1593 = vsub.f32 %v81, %v1592
    %1594 = vmatprep.mubr.f32.mxu0 %v1593
    %v1595 = vand.u32 %v80, 4294901760
    %v1596 = vsub.f32 %v80, %v1595
    %1597 = vmatmul.mubr.f32.gmra.mxu0 %v1596
    %v1598 = vpop.f32.mrf.mxu0
    %v1599 = vadd.f32 %v1168, %v1598
    %v1600 = vpop.f32.mrf.mxu0
    %v1601 = vand.u32 %v83, 4294901760
    %v1602 = vsub.f32 %v83, %v1601
    %1603 = vmatprep.mubr.f32.mxu0 %v1602
    %v1604 = vand.u32 %v82, 4294901760
    %v1605 = vsub.f32 %v82, %v1604
    %1606 = vmatmul.mubr.f32.gmra.mxu0 %v1605
    %v1607 = vpop.f32.mrf.mxu0
    %v1608 = vadd.f32 %v1175, %v1607
    %v1609 = vpop.f32.mrf.mxu0
    %v1610 = vand.u32 %v85, 4294901760
    %v1611 = vsub.f32 %v85, %v1610
    %1612 = vmatprep.mubr.f32.mxu0 %v1611
    %v1613 = vand.u32 %v84, 4294901760
    %v1614 = vsub.f32 %v84, %v1613
    %1615 = vmatmul.mubr.f32.gmra.mxu0 %v1614
    %v1616 = vpop.f32.mrf.mxu0
    %v1617 = vadd.f32 %v1182, %v1616
    %v1618 = vpop.f32.mrf.mxu0
    %v1619 = vand.u32 %v87, 4294901760
    %v1620 = vsub.f32 %v87, %v1619
    %1621 = vmatprep.mubr.f32.mxu0 %v1620
    %v1622 = vand.u32 %v86, 4294901760
    %v1623 = vsub.f32 %v86, %v1622
    %1624 = vmatmul.mubr.f32.gmra.mxu0 %v1623
    %v1625 = vpop.f32.mrf.mxu0
    %v1626 = vadd.f32 %v1189, %v1625
    %v1627 = vpop.f32.mrf.mxu0
    %v1628 = vand.u32 %v89, 4294901760
    %v1629 = vsub.f32 %v89, %v1628
    %1630 = vmatprep.mubr.f32.mxu0 %v1629
    %v1631 = vand.u32 %v88, 4294901760
    %v1632 = vsub.f32 %v88, %v1631
    %1633 = vmatmul.mubr.f32.gmra.mxu0 %v1632
    %v1634 = vpop.f32.mrf.mxu0
    %v1635 = vadd.f32 %v1196, %v1634
    %v1636 = vpop.f32.mrf.mxu0
    %v1637 = vand.u32 %v91, 4294901760
    %v1638 = vsub.f32 %v91, %v1637
    %1639 = vmatprep.mubr.f32.mxu0 %v1638
    %v1640 = vand.u32 %v90, 4294901760
    %v1641 = vsub.f32 %v90, %v1640
    %1642 = vmatmul.mubr.f32.gmra.mxu0 %v1641
    %v1643 = vpop.f32.mrf.mxu0
    %v1644 = vadd.f32 %v1203, %v1643
    %v1645 = vpop.f32.mrf.mxu0
    %v1646 = vand.u32 %v93, 4294901760
    %v1647 = vsub.f32 %v93, %v1646
    %1648 = vmatprep.mubr.f32.mxu0 %v1647
    %v1649 = vand.u32 %v92, 4294901760
    %v1650 = vsub.f32 %v92, %v1649
    %1651 = vmatmul.mubr.f32.gmra.mxu0 %v1650
    %v1652 = vpop.f32.mrf.mxu0
    %v1653 = vadd.f32 %v1210, %v1652
    %v1654 = vpop.f32.mrf.mxu0
    %v1655 = vand.u32 %v95, 4294901760
    %v1656 = vsub.f32 %v95, %v1655
    %1657 = vmatprep.mubr.f32.mxu0 %v1656
    %v1658 = vand.u32 %v94, 4294901760
    %v1659 = vsub.f32 %v94, %v1658
    %1660 = vmatmul.mubr.f32.gmra.mxu0 %v1659
    %v1661 = vpop.f32.mrf.mxu0
    %v1662 = vadd.f32 %v1217, %v1661
    %v1663 = vpop.f32.mrf.mxu0
    %v1664 = vand.u32 %v97, 4294901760
    %v1665 = vsub.f32 %v97, %v1664
    %1666 = vmatprep.mubr.f32.mxu0 %v1665
    %v1667 = vand.u32 %v96, 4294901760
    %v1668 = vsub.f32 %v96, %v1667
    %1669 = vmatmul.mubr.f32.gmra.mxu0 %v1668
    %v1670 = vpop.f32.mrf.mxu0
    %v1671 = vadd.f32 %v1224, %v1670
    %v1672 = vpop.f32.mrf.mxu0
    %v1673 = vand.u32 %v99, 4294901760
    %v1674 = vsub.f32 %v99, %v1673
    %1675 = vmatprep.mubr.f32.mxu0 %v1674
    %v1676 = vand.u32 %v98, 4294901760
    %v1677 = vsub.f32 %v98, %v1676
    %1678 = vmatmul.mubr.f32.gmra.mxu0 %v1677
    %v1679 = vpop.f32.mrf.mxu0
    %v1680 = vadd.f32 %v1231, %v1679
    %v1681 = vpop.f32.mrf.mxu0
    %v1682 = vand.u32 %v101, 4294901760
    %v1683 = vsub.f32 %v101, %v1682
    %1684 = vmatprep.mubr.f32.mxu0 %v1683
    %v1685 = vand.u32 %v100, 4294901760
    %v1686 = vsub.f32 %v100, %v1685
    %1687 = vmatmul.mubr.f32.gmra.mxu0 %v1686
    %v1688 = vpop.f32.mrf.mxu0
    %v1689 = vadd.f32 %v1238, %v1688
    %v1690 = vpop.f32.mrf.mxu0
    %v1691 = vand.u32 %v103, 4294901760
    %v1692 = vsub.f32 %v103, %v1691
    %1693 = vmatprep.mubr.f32.mxu0 %v1692
    %v1694 = vand.u32 %v102, 4294901760
    %v1695 = vsub.f32 %v102, %v1694
    %1696 = vmatmul.mubr.f32.gmra.mxu0 %v1695
    %v1697 = vpop.f32.mrf.mxu0
    %v1698 = vadd.f32 %v1245, %v1697
    %v1699 = vpop.f32.mrf.mxu0
    %v1700 = vand.u32 %v105, 4294901760
    %v1701 = vsub.f32 %v105, %v1700
    %1702 = vmatprep.mubr.f32.mxu0 %v1701
    %v1703 = vand.u32 %v104, 4294901760
    %v1704 = vsub.f32 %v104, %v1703
    %1705 = vmatmul.mubr.f32.gmra.mxu0 %v1704
    %v1706 = vpop.f32.mrf.mxu0
    %v1707 = vadd.f32 %v1252, %v1706
    %v1708 = vpop.f32.mrf.mxu0
    %v1709 = vand.u32 %v107, 4294901760
    %v1710 = vsub.f32 %v107, %v1709
    %1711 = vmatprep.mubr.f32.mxu0 %v1710
    %v1712 = vand.u32 %v106, 4294901760
    %v1713 = vsub.f32 %v106, %v1712
    %1714 = vmatmul.mubr.f32.gmra.mxu0 %v1713
    %v1715 = vpop.f32.mrf.mxu0
    %v1716 = vadd.f32 %v1259, %v1715
    %v1717 = vpop.f32.mrf.mxu0
    %v1718 = vand.u32 %v109, 4294901760
    %v1719 = vsub.f32 %v109, %v1718
    %1720 = vmatprep.mubr.f32.mxu0 %v1719
    %v1721 = vand.u32 %v108, 4294901760
    %v1722 = vsub.f32 %v108, %v1721
    %1723 = vmatmul.mubr.f32.gmra.mxu0 %v1722
    %v1724 = vpop.f32.mrf.mxu0
    %v1725 = vadd.f32 %v1266, %v1724
    %v1726 = vpop.f32.mrf.mxu0
    %v1727 = vand.u32 %v111, 4294901760
    %v1728 = vsub.f32 %v111, %v1727
    %1729 = vmatprep.mubr.f32.mxu0 %v1728
    %v1730 = vand.u32 %v110, 4294901760
    %v1731 = vsub.f32 %v110, %v1730
    %1732 = vmatmul.mubr.f32.gmra.mxu0 %v1731
    %v1733 = vpop.f32.mrf.mxu0
    %v1734 = vadd.f32 %v1273, %v1733
    %v1735 = vpop.f32.mrf.mxu0
    %v1736 = vand.u32 %v113, 4294901760
    %v1737 = vsub.f32 %v113, %v1736
    %1738 = vmatprep.mubr.f32.mxu0 %v1737
    %v1739 = vand.u32 %v112, 4294901760
    %v1740 = vsub.f32 %v112, %v1739
    %1741 = vmatmul.mubr.f32.gmra.mxu0 %v1740
    %v1742 = vpop.f32.mrf.mxu0
    %v1743 = vadd.f32 %v1280, %v1742
    %v1744 = vpop.f32.mrf.mxu0
    %v1745 = vand.u32 %v115, 4294901760
    %v1746 = vsub.f32 %v115, %v1745
    %1747 = vmatprep.mubr.f32.mxu0 %v1746
    %v1748 = vand.u32 %v114, 4294901760
    %v1749 = vsub.f32 %v114, %v1748
    %1750 = vmatmul.mubr.f32.gmra.mxu0 %v1749
    %v1751 = vpop.f32.mrf.mxu0
    %v1752 = vadd.f32 %v1287, %v1751
    %v1753 = vpop.f32.mrf.mxu0
    %v1754 = vand.u32 %v117, 4294901760
    %v1755 = vsub.f32 %v117, %v1754
    %1756 = vmatprep.mubr.f32.mxu0 %v1755
    %v1757 = vand.u32 %v116, 4294901760
    %v1758 = vsub.f32 %v116, %v1757
    %1759 = vmatmul.mubr.f32.gmra.mxu0 %v1758
    %v1760 = vpop.f32.mrf.mxu0
    %v1761 = vadd.f32 %v1294, %v1760
    %v1762 = vpop.f32.mrf.mxu0
    %v1763 = vand.u32 %v119, 4294901760
    %v1764 = vsub.f32 %v119, %v1763
    %1765 = vmatprep.mubr.f32.mxu0 %v1764
    %v1766 = vand.u32 %v118, 4294901760
    %v1767 = vsub.f32 %v118, %v1766
    %1768 = vmatmul.mubr.f32.gmra.mxu0 %v1767
    %v1769 = vpop.f32.mrf.mxu0
    %v1770 = vadd.f32 %v1301, %v1769
    %v1771 = vpop.f32.mrf.mxu0
    %v1772 = vand.u32 %v121, 4294901760
    %v1773 = vsub.f32 %v121, %v1772
    %1774 = vmatprep.mubr.f32.mxu0 %v1773
    %v1775 = vand.u32 %v120, 4294901760
    %v1776 = vsub.f32 %v120, %v1775
    %1777 = vmatmul.mubr.f32.gmra.mxu0 %v1776
    %v1778 = vpop.f32.mrf.mxu0
    %v1779 = vadd.f32 %v1308, %v1778
    %v1780 = vpop.f32.mrf.mxu0
    %v1781 = vand.u32 %v123, 4294901760
    %v1782 = vsub.f32 %v123, %v1781
    %1783 = vmatprep.mubr.f32.mxu0 %v1782
    %v1784 = vand.u32 %v122, 4294901760
    %v1785 = vsub.f32 %v122, %v1784
    %1786 = vmatmul.mubr.f32.gmra.mxu0 %v1785
    %v1787 = vpop.f32.mrf.mxu0
    %v1788 = vadd.f32 %v1315, %v1787
    %v1789 = vpop.f32.mrf.mxu0
    %v1790 = vand.u32 %v125, 4294901760
    %v1791 = vsub.f32 %v125, %v1790
    %1792 = vmatprep.mubr.f32.mxu0 %v1791
    %v1793 = vand.u32 %v124, 4294901760
    %v1794 = vsub.f32 %v124, %v1793
    %1795 = vmatmul.mubr.f32.gmra.mxu0 %v1794
    %v1796 = vpop.f32.mrf.mxu0
    %v1797 = vadd.f32 %v1322, %v1796
    %v1798 = vpop.f32.mrf.mxu0
    %v1799 = vand.u32 %v127, 4294901760
    %v1800 = vsub.f32 %v127, %v1799
    %1801 = vmatprep.mubr.f32.mxu0 %v1800
    %v1802 = vand.u32 %v126, 4294901760
    %v1803 = vsub.f32 %v126, %v1802
    %1804 = vmatmul.mubr.f32.gmra.mxu0 %v1803
    %v1805 = vpop.f32.mrf.mxu0
    %v1806 = vadd.f32 %v1329, %v1805
    %v1807 = vpop.f32.mrf.mxu0
    %v1808 = vand.u32 %v129, 4294901760
    %v1809 = vsub.f32 %v129, %v1808
    %1810 = vmatprep.mubr.f32.mxu0 %v1809
    %v1811 = vand.u32 %v128, 4294901760
    %v1812 = vsub.f32 %v128, %v1811
    %1813 = vmatmul.mubr.f32.gmra.mxu0 %v1812
    %v1814 = vpop.f32.mrf.mxu0
    %v1815 = vadd.f32 %v1336, %v1814
    %v1816 = vpop.f32.mrf.mxu0
    %v1817 = vand.u32 %v131, 4294901760
    %v1818 = vsub.f32 %v131, %v1817
    %1819 = vmatprep.mubr.f32.mxu0 %v1818
    %v1820 = vand.u32 %v130, 4294901760
    %v1821 = vsub.f32 %v130, %v1820
    %1822 = vmatmul.mubr.f32.gmra.mxu0 %v1821
    %v1823 = vpop.f32.mrf.mxu0
    %v1824 = vadd.f32 %v1343, %v1823
    %v1825 = vpop.f32.mrf.mxu0
    %v1826 = vand.u32 %v133, 4294901760
    %v1827 = vsub.f32 %v133, %v1826
    %1828 = vmatprep.mubr.f32.mxu0 %v1827
    %v1829 = vand.u32 %v132, 4294901760
    %v1830 = vsub.f32 %v132, %v1829
    %1831 = vmatmul.mubr.f32.gmra.mxu0 %v1830
    %v1832 = vpop.f32.mrf.mxu0
    %v1833 = vadd.f32 %v1350, %v1832
    %v1834 = vpop.f32.mrf.mxu0
    %v1835 = vand.u32 %v135, 4294901760
    %v1836 = vsub.f32 %v135, %v1835
    %1837 = vmatprep.mubr.f32.mxu0 %v1836
    %v1838 = vand.u32 %v134, 4294901760
    %v1839 = vsub.f32 %v134, %v1838
    %1840 = vmatmul.mubr.f32.gmra.mxu0 %v1839
    %v1841 = vpop.f32.mrf.mxu0
    %v1842 = vadd.f32 %v1357, %v1841
    %v1843 = vpop.f32.mrf.mxu0
    %v1844 = vand.u32 %v137, 4294901760
    %v1845 = vsub.f32 %v137, %v1844
    %1846 = vmatprep.mubr.f32.mxu0 %v1845
    %v1847 = vand.u32 %v136, 4294901760
    %v1848 = vsub.f32 %v136, %v1847
    %1849 = vmatmul.mubr.f32.gmra.mxu0 %v1848
    %v1850 = vpop.f32.mrf.mxu0
    %v1851 = vadd.f32 %v1364, %v1850
    %v1852 = vpop.f32.mrf.mxu0
    %v1853 = vand.u32 %v139, 4294901760
    %v1854 = vsub.f32 %v139, %v1853
    %1855 = vmatprep.mubr.f32.mxu0 %v1854
    %v1856 = vand.u32 %v138, 4294901760
    %v1857 = vsub.f32 %v138, %v1856
    %1858 = vmatmul.mubr.f32.gmra.mxu0 %v1857
    %v1859 = vpop.f32.mrf.mxu0
    %v1860 = vadd.f32 %v1371, %v1859
    %v1861 = vpop.f32.mrf.mxu0
    %1862 = vdwg.mxu0
    %1863 = vmatprep.subr.mxu0 0.0
    %v1864 = vand.u32 %v155, 4294901760
    %1865 = vmatpush1.msra.mxu0 %v1864
    %1866 = vmatprep.subr.mxu0 0.0
    %v1867 = vand.u32 %v154, 4294901760
    %1868 = vmatpush1.msra.mxu0 %v1867
    %1869 = vmatprep.subr.mxu0 0.0
    %v1870 = vand.u32 %v153, 4294901760
    %1871 = vmatpush1.msra.mxu0 %v1870
    %1872 = vmatprep.subr.mxu0 0.0
    %v1873 = vand.u32 %v152, 4294901760
    %1874 = vmatpush1.msra.mxu0 %v1873
    %1875 = vmatprep.subr.mxu0 0.0
    %v1876 = vand.u32 %v151, 4294901760
    %1877 = vmatpush1.msra.mxu0 %v1876
    %1878 = vmatprep.subr.mxu0 0.0
    %v1879 = vand.u32 %v150, 4294901760
    %1880 = vmatpush1.msra.mxu0 %v1879
    %1881 = vmatprep.subr.mxu0 0.0
    %v1882 = vand.u32 %v149, 4294901760
    %1883 = vmatpush1.msra.mxu0 %v1882
    %1884 = vmatprep.subr.mxu0 0.0
    %v1885 = vand.u32 %v148, 4294901760
    %1886 = vmatpush1.msra.mxu0 %v1885
    %1887 = vmatprep.subr.mxu0 0.0
    %v1888 = vand.u32 %v147, 4294901760
    %1889 = vmatpush1.msra.mxu0 %v1888
    %1890 = vmatprep.subr.mxu0 0.0
    %v1891 = vand.u32 %v146, 4294901760
    %1892 = vmatpush1.msra.mxu0 %v1891
    %1893 = vmatprep.subr.mxu0 0.0
    %v1894 = vand.u32 %v145, 4294901760
    %1895 = vmatpush1.msra.mxu0 %v1894
    %1896 = vmatprep.subr.mxu0 0.0
    %v1897 = vand.u32 %v144, 4294901760
    %1898 = vmatpush1.msra.mxu0 %v1897
    %1899 = vmatprep.subr.mxu0 0.0
    %v1900 = vand.u32 %v143, 4294901760
    %1901 = vmatpush1.msra.mxu0 %v1900
    %1902 = vmatprep.subr.mxu0 0.0
    %v1903 = vand.u32 %v142, 4294901760
    %1904 = vmatpush1.msra.mxu0 %v1903
    %1905 = vmatprep.subr.mxu0 0.0
    %v1906 = vand.u32 %v141, 4294901760
    %1907 = vmatpush1.msra.mxu0 %v1906
    %1908 = vmatprep.subr.mxu0 0.0
    %v1909 = vand.u32 %v140, 4294901760
    %1910 = vmatpush1.msra.mxu0 %v1909
    %1911 = vmatprep.subr.mxu0 0.0
    %v1912 = vand.u32 %v171, 4294901760
    %1913 = vmatpush2.msra.mxu0 %v1912
    %1914 = vmatprep.subr.mxu0 0.0
    %v1915 = vand.u32 %v170, 4294901760
    %1916 = vmatpush2.msra.mxu0 %v1915
    %1917 = vmatprep.subr.mxu0 0.0
    %v1918 = vand.u32 %v169, 4294901760
    %1919 = vmatpush2.msra.mxu0 %v1918
    %1920 = vmatprep.subr.mxu0 0.0
    %v1921 = vand.u32 %v168, 4294901760
    %1922 = vmatpush2.msra.mxu0 %v1921
    %1923 = vmatprep.subr.mxu0 0.0
    %v1924 = vand.u32 %v167, 4294901760
    %1925 = vmatpush2.msra.mxu0 %v1924
    %1926 = vmatprep.subr.mxu0 0.0
    %v1927 = vand.u32 %v166, 4294901760
    %1928 = vmatpush2.msra.mxu0 %v1927
    %1929 = vmatprep.subr.mxu0 0.0
    %v1930 = vand.u32 %v165, 4294901760
    %1931 = vmatpush2.msra.mxu0 %v1930
    %1932 = vmatprep.subr.mxu0 0.0
    %v1933 = vand.u32 %v164, 4294901760
    %1934 = vmatpush2.msra.mxu0 %v1933
    %1935 = vmatprep.subr.mxu0 0.0
    %v1936 = vand.u32 %v163, 4294901760
    %1937 = vmatpush2.msra.mxu0 %v1936
    %1938 = vmatprep.subr.mxu0 0.0
    %v1939 = vand.u32 %v162, 4294901760
    %1940 = vmatpush2.msra.mxu0 %v1939
    %1941 = vmatprep.subr.mxu0 0.0
    %v1942 = vand.u32 %v161, 4294901760
    %1943 = vmatpush2.msra.mxu0 %v1942
    %1944 = vmatprep.subr.mxu0 0.0
    %v1945 = vand.u32 %v160, 4294901760
    %1946 = vmatpush2.msra.mxu0 %v1945
    %1947 = vmatprep.subr.mxu0 0.0
    %v1948 = vand.u32 %v159, 4294901760
    %1949 = vmatpush2.msra.mxu0 %v1948
    %1950 = vmatprep.subr.mxu0 0.0
    %v1951 = vand.u32 %v158, 4294901760
    %1952 = vmatpush2.msra.mxu0 %v1951
    %1953 = vmatprep.subr.mxu0 0.0
    %v1954 = vand.u32 %v157, 4294901760
    %1955 = vmatpush2.msra.mxu0 %v1954
    %1956 = vmatprep.subr.mxu0 0.0
    %v1957 = vand.u32 %v156, 4294901760
    %1958 = vmatpush2.msra.mxu0 %v1957
    %v1959 = vand.u32 %v61, 4294901760
    %v1960 = vsub.f32 %v61, %v1959
    %v1961 = vand.u32 %v1960, 4294901760
    %1962 = vmatprep.mubr.f32.mxu0 %v1961
    %v1963 = vand.u32 %v60, 4294901760
    %v1964 = vsub.f32 %v60, %v1963
    %v1965 = vand.u32 %v1964, 4294901760
    %1966 = vmatmul.mubr.f32.gmra.mxu0 %v1965
    %v1967 = vpop.f32.mrf.mxu0
    %v1968 = vadd.f32 %v1509, %v1967
    %v1969 = vpop.f32.mrf.mxu0
    %v1970 = vand.u32 %v63, 4294901760
    %v1971 = vsub.f32 %v63, %v1970
    %v1972 = vand.u32 %v1971, 4294901760
    %1973 = vmatprep.mubr.f32.mxu0 %v1972
    %v1974 = vand.u32 %v62, 4294901760
    %v1975 = vsub.f32 %v62, %v1974
    %v1976 = vand.u32 %v1975, 4294901760
    %1977 = vmatmul.mubr.f32.gmra.mxu0 %v1976
    %v1978 = vpop.f32.mrf.mxu0
    %v1979 = vadd.f32 %v1518, %v1978
    %v1980 = vpop.f32.mrf.mxu0
    %v1981 = vand.u32 %v65, 4294901760
    %v1982 = vsub.f32 %v65, %v1981
    %v1983 = vand.u32 %v1982, 4294901760
    %1984 = vmatprep.mubr.f32.mxu0 %v1983
    %v1985 = vand.u32 %v64, 4294901760
    %v1986 = vsub.f32 %v64, %v1985
    %v1987 = vand.u32 %v1986, 4294901760
    %1988 = vmatmul.mubr.f32.gmra.mxu0 %v1987
    %v1989 = vpop.f32.mrf.mxu0
    %v1990 = vadd.f32 %v1527, %v1989
    %v1991 = vpop.f32.mrf.mxu0
    %v1992 = vand.u32 %v67, 4294901760
    %v1993 = vsub.f32 %v67, %v1992
    %v1994 = vand.u32 %v1993, 4294901760
    %1995 = vmatprep.mubr.f32.mxu0 %v1994
    %v1996 = vand.u32 %v66, 4294901760
    %v1997 = vsub.f32 %v66, %v1996
    %v1998 = vand.u32 %v1997, 4294901760
    %1999 = vmatmul.mubr.f32.gmra.mxu0 %v1998
    %v2000 = vpop.f32.mrf.mxu0
    %v2001 = vadd.f32 %v1536, %v2000
    %v2002 = vpop.f32.mrf.mxu0
    %v2003 = vand.u32 %v69, 4294901760
    %v2004 = vsub.f32 %v69, %v2003
    %v2005 = vand.u32 %v2004, 4294901760
    %2006 = vmatprep.mubr.f32.mxu0 %v2005
    %v2007 = vand.u32 %v68, 4294901760
    %v2008 = vsub.f32 %v68, %v2007
    %v2009 = vand.u32 %v2008, 4294901760
    %2010 = vmatmul.mubr.f32.gmra.mxu0 %v2009
    %v2011 = vpop.f32.mrf.mxu0
    %v2012 = vadd.f32 %v1545, %v2011
    %v2013 = vpop.f32.mrf.mxu0
    %v2014 = vand.u32 %v71, 4294901760
    %v2015 = vsub.f32 %v71, %v2014
    %v2016 = vand.u32 %v2015, 4294901760
    %2017 = vmatprep.mubr.f32.mxu0 %v2016
    %v2018 = vand.u32 %v70, 4294901760
    %v2019 = vsub.f32 %v70, %v2018
    %v2020 = vand.u32 %v2019, 4294901760
    %2021 = vmatmul.mubr.f32.gmra.mxu0 %v2020
    %v2022 = vpop.f32.mrf.mxu0
    %v2023 = vadd.f32 %v1554, %v2022
    %v2024 = vpop.f32.mrf.mxu0
    %v2025 = vand.u32 %v73, 4294901760
    %v2026 = vsub.f32 %v73, %v2025
    %v2027 = vand.u32 %v2026, 4294901760
    %2028 = vmatprep.mubr.f32.mxu0 %v2027
    %v2029 = vand.u32 %v72, 4294901760
    %v2030 = vsub.f32 %v72, %v2029
    %v2031 = vand.u32 %v2030, 4294901760
    %2032 = vmatmul.mubr.f32.gmra.mxu0 %v2031
    %v2033 = vpop.f32.mrf.mxu0
    %v2034 = vadd.f32 %v1563, %v2033
    %v2035 = vpop.f32.mrf.mxu0
    %v2036 = vand.u32 %v75, 4294901760
    %v2037 = vsub.f32 %v75, %v2036
    %v2038 = vand.u32 %v2037, 4294901760
    %2039 = vmatprep.mubr.f32.mxu0 %v2038
    %v2040 = vand.u32 %v74, 4294901760
    %v2041 = vsub.f32 %v74, %v2040
    %v2042 = vand.u32 %v2041, 4294901760
    %2043 = vmatmul.mubr.f32.gmra.mxu0 %v2042
    %v2044 = vpop.f32.mrf.mxu0
    %v2045 = vadd.f32 %v1572, %v2044
    %v2046 = vpop.f32.mrf.mxu0
    %v2047 = vand.u32 %v77, 4294901760
    %v2048 = vsub.f32 %v77, %v2047
    %v2049 = vand.u32 %v2048, 4294901760
    %2050 = vmatprep.mubr.f32.mxu0 %v2049
    %v2051 = vand.u32 %v76, 4294901760
    %v2052 = vsub.f32 %v76, %v2051
    %v2053 = vand.u32 %v2052, 4294901760
    %2054 = vmatmul.mubr.f32.gmra.mxu0 %v2053
    %v2055 = vpop.f32.mrf.mxu0
    %v2056 = vadd.f32 %v1581, %v2055
    %v2057 = vpop.f32.mrf.mxu0
    %v2058 = vand.u32 %v79, 4294901760
    %v2059 = vsub.f32 %v79, %v2058
    %v2060 = vand.u32 %v2059, 4294901760
    %2061 = vmatprep.mubr.f32.mxu0 %v2060
    %v2062 = vand.u32 %v78, 4294901760
    %v2063 = vsub.f32 %v78, %v2062
    %v2064 = vand.u32 %v2063, 4294901760
    %2065 = vmatmul.mubr.f32.gmra.mxu0 %v2064
    %v2066 = vpop.f32.mrf.mxu0
    %v2067 = vadd.f32 %v1590, %v2066
    %v2068 = vpop.f32.mrf.mxu0
    %v2069 = vand.u32 %v81, 4294901760
    %v2070 = vsub.f32 %v81, %v2069
    %v2071 = vand.u32 %v2070, 4294901760
    %2072 = vmatprep.mubr.f32.mxu0 %v2071
    %v2073 = vand.u32 %v80, 4294901760
    %v2074 = vsub.f32 %v80, %v2073
    %v2075 = vand.u32 %v2074, 4294901760
    %2076 = vmatmul.mubr.f32.gmra.mxu0 %v2075
    %v2077 = vpop.f32.mrf.mxu0
    %v2078 = vadd.f32 %v1599, %v2077
    %v2079 = vpop.f32.mrf.mxu0
    %v2080 = vand.u32 %v83, 4294901760
    %v2081 = vsub.f32 %v83, %v2080
    %v2082 = vand.u32 %v2081, 4294901760
    %2083 = vmatprep.mubr.f32.mxu0 %v2082
    %v2084 = vand.u32 %v82, 4294901760
    %v2085 = vsub.f32 %v82, %v2084
    %v2086 = vand.u32 %v2085, 4294901760
    %2087 = vmatmul.mubr.f32.gmra.mxu0 %v2086
    %v2088 = vpop.f32.mrf.mxu0
    %v2089 = vadd.f32 %v1608, %v2088
    %v2090 = vpop.f32.mrf.mxu0
    %v2091 = vand.u32 %v85, 4294901760
    %v2092 = vsub.f32 %v85, %v2091
    %v2093 = vand.u32 %v2092, 4294901760
    %2094 = vmatprep.mubr.f32.mxu0 %v2093
    %v2095 = vand.u32 %v84, 4294901760
    %v2096 = vsub.f32 %v84, %v2095
    %v2097 = vand.u32 %v2096, 4294901760
    %2098 = vmatmul.mubr.f32.gmra.mxu0 %v2097
    %v2099 = vpop.f32.mrf.mxu0
    %v2100 = vadd.f32 %v1617, %v2099
    %v2101 = vpop.f32.mrf.mxu0
    %v2102 = vand.u32 %v87, 4294901760
    %v2103 = vsub.f32 %v87, %v2102
    %v2104 = vand.u32 %v2103, 4294901760
    %2105 = vmatprep.mubr.f32.mxu0 %v2104
    %v2106 = vand.u32 %v86, 4294901760
    %v2107 = vsub.f32 %v86, %v2106
    %v2108 = vand.u32 %v2107, 4294901760
    %2109 = vmatmul.mubr.f32.gmra.mxu0 %v2108
    %v2110 = vpop.f32.mrf.mxu0
    %v2111 = vadd.f32 %v1626, %v2110
    %v2112 = vpop.f32.mrf.mxu0
    %v2113 = vand.u32 %v89, 4294901760
    %v2114 = vsub.f32 %v89, %v2113
    %v2115 = vand.u32 %v2114, 4294901760
    %2116 = vmatprep.mubr.f32.mxu0 %v2115
    %v2117 = vand.u32 %v88, 4294901760
    %v2118 = vsub.f32 %v88, %v2117
    %v2119 = vand.u32 %v2118, 4294901760
    %2120 = vmatmul.mubr.f32.gmra.mxu0 %v2119
    %v2121 = vpop.f32.mrf.mxu0
    %v2122 = vadd.f32 %v1635, %v2121
    %v2123 = vpop.f32.mrf.mxu0
    %v2124 = vand.u32 %v91, 4294901760
    %v2125 = vsub.f32 %v91, %v2124
    %v2126 = vand.u32 %v2125, 4294901760
    %2127 = vmatprep.mubr.f32.mxu0 %v2126
    %v2128 = vand.u32 %v90, 4294901760
    %v2129 = vsub.f32 %v90, %v2128
    %v2130 = vand.u32 %v2129, 4294901760
    %2131 = vmatmul.mubr.f32.gmra.mxu0 %v2130
    %v2132 = vpop.f32.mrf.mxu0
    %v2133 = vadd.f32 %v1644, %v2132
    %v2134 = vpop.f32.mrf.mxu0
    %v2135 = vand.u32 %v93, 4294901760
    %v2136 = vsub.f32 %v93, %v2135
    %v2137 = vand.u32 %v2136, 4294901760
    %2138 = vmatprep.mubr.f32.mxu0 %v2137
    %v2139 = vand.u32 %v92, 4294901760
    %v2140 = vsub.f32 %v92, %v2139
    %v2141 = vand.u32 %v2140, 4294901760
    %2142 = vmatmul.mubr.f32.gmra.mxu0 %v2141
    %v2143 = vpop.f32.mrf.mxu0
    %v2144 = vadd.f32 %v1653, %v2143
    %v2145 = vpop.f32.mrf.mxu0
    %v2146 = vand.u32 %v95, 4294901760
    %v2147 = vsub.f32 %v95, %v2146
    %v2148 = vand.u32 %v2147, 4294901760
    %2149 = vmatprep.mubr.f32.mxu0 %v2148
    %v2150 = vand.u32 %v94, 4294901760
    %v2151 = vsub.f32 %v94, %v2150
    %v2152 = vand.u32 %v2151, 4294901760
    %2153 = vmatmul.mubr.f32.gmra.mxu0 %v2152
    %v2154 = vpop.f32.mrf.mxu0
    %v2155 = vadd.f32 %v1662, %v2154
    %v2156 = vpop.f32.mrf.mxu0
    %v2157 = vand.u32 %v97, 4294901760
    %v2158 = vsub.f32 %v97, %v2157
    %v2159 = vand.u32 %v2158, 4294901760
    %2160 = vmatprep.mubr.f32.mxu0 %v2159
    %v2161 = vand.u32 %v96, 4294901760
    %v2162 = vsub.f32 %v96, %v2161
    %v2163 = vand.u32 %v2162, 4294901760
    %2164 = vmatmul.mubr.f32.gmra.mxu0 %v2163
    %v2165 = vpop.f32.mrf.mxu0
    %v2166 = vadd.f32 %v1671, %v2165
    %v2167 = vpop.f32.mrf.mxu0
    %v2168 = vand.u32 %v99, 4294901760
    %v2169 = vsub.f32 %v99, %v2168
    %v2170 = vand.u32 %v2169, 4294901760
    %2171 = vmatprep.mubr.f32.mxu0 %v2170
    %v2172 = vand.u32 %v98, 4294901760
    %v2173 = vsub.f32 %v98, %v2172
    %v2174 = vand.u32 %v2173, 4294901760
    %2175 = vmatmul.mubr.f32.gmra.mxu0 %v2174
    %v2176 = vpop.f32.mrf.mxu0
    %v2177 = vadd.f32 %v1680, %v2176
    %v2178 = vpop.f32.mrf.mxu0
    %v2179 = vand.u32 %v101, 4294901760
    %v2180 = vsub.f32 %v101, %v2179
    %v2181 = vand.u32 %v2180, 4294901760
    %2182 = vmatprep.mubr.f32.mxu0 %v2181
    %v2183 = vand.u32 %v100, 4294901760
    %v2184 = vsub.f32 %v100, %v2183
    %v2185 = vand.u32 %v2184, 4294901760
    %2186 = vmatmul.mubr.f32.gmra.mxu0 %v2185
    %v2187 = vpop.f32.mrf.mxu0
    %v2188 = vadd.f32 %v1689, %v2187
    %v2189 = vpop.f32.mrf.mxu0
    %v2190 = vand.u32 %v103, 4294901760
    %v2191 = vsub.f32 %v103, %v2190
    %v2192 = vand.u32 %v2191, 4294901760
    %2193 = vmatprep.mubr.f32.mxu0 %v2192
    %v2194 = vand.u32 %v102, 4294901760
    %v2195 = vsub.f32 %v102, %v2194
    %v2196 = vand.u32 %v2195, 4294901760
    %2197 = vmatmul.mubr.f32.gmra.mxu0 %v2196
    %v2198 = vpop.f32.mrf.mxu0
    %v2199 = vadd.f32 %v1698, %v2198
    %v2200 = vpop.f32.mrf.mxu0
    %v2201 = vand.u32 %v105, 4294901760
    %v2202 = vsub.f32 %v105, %v2201
    %v2203 = vand.u32 %v2202, 4294901760
    %2204 = vmatprep.mubr.f32.mxu0 %v2203
    %v2205 = vand.u32 %v104, 4294901760
    %v2206 = vsub.f32 %v104, %v2205
    %v2207 = vand.u32 %v2206, 4294901760
    %2208 = vmatmul.mubr.f32.gmra.mxu0 %v2207
    %v2209 = vpop.f32.mrf.mxu0
    %v2210 = vadd.f32 %v1707, %v2209
    %v2211 = vpop.f32.mrf.mxu0
    %v2212 = vand.u32 %v107, 4294901760
    %v2213 = vsub.f32 %v107, %v2212
    %v2214 = vand.u32 %v2213, 4294901760
    %2215 = vmatprep.mubr.f32.mxu0 %v2214
    %v2216 = vand.u32 %v106, 4294901760
    %v2217 = vsub.f32 %v106, %v2216
    %v2218 = vand.u32 %v2217, 4294901760
    %2219 = vmatmul.mubr.f32.gmra.mxu0 %v2218
    %v2220 = vpop.f32.mrf.mxu0
    %v2221 = vadd.f32 %v1716, %v2220
    %v2222 = vpop.f32.mrf.mxu0
    %v2223 = vand.u32 %v109, 4294901760
    %v2224 = vsub.f32 %v109, %v2223
    %v2225 = vand.u32 %v2224, 4294901760
    %2226 = vmatprep.mubr.f32.mxu0 %v2225
    %v2227 = vand.u32 %v108, 4294901760
    %v2228 = vsub.f32 %v108, %v2227
    %v2229 = vand.u32 %v2228, 4294901760
    %2230 = vmatmul.mubr.f32.gmra.mxu0 %v2229
    %v2231 = vpop.f32.mrf.mxu0
    %v2232 = vadd.f32 %v1725, %v2231
    %v2233 = vpop.f32.mrf.mxu0
    %v2234 = vand.u32 %v111, 4294901760
    %v2235 = vsub.f32 %v111, %v2234
    %v2236 = vand.u32 %v2235, 4294901760
    %2237 = vmatprep.mubr.f32.mxu0 %v2236
    %v2238 = vand.u32 %v110, 4294901760
    %v2239 = vsub.f32 %v110, %v2238
    %v2240 = vand.u32 %v2239, 4294901760
    %2241 = vmatmul.mubr.f32.gmra.mxu0 %v2240
    %v2242 = vpop.f32.mrf.mxu0
    %v2243 = vadd.f32 %v1734, %v2242
    %v2244 = vpop.f32.mrf.mxu0
    %v2245 = vand.u32 %v113, 4294901760
    %v2246 = vsub.f32 %v113, %v2245
    %v2247 = vand.u32 %v2246, 4294901760
    %2248 = vmatprep.mubr.f32.mxu0 %v2247
    %v2249 = vand.u32 %v112, 4294901760
    %v2250 = vsub.f32 %v112, %v2249
    %v2251 = vand.u32 %v2250, 4294901760
    %2252 = vmatmul.mubr.f32.gmra.mxu0 %v2251
    %v2253 = vpop.f32.mrf.mxu0
    %v2254 = vadd.f32 %v1743, %v2253
    %v2255 = vpop.f32.mrf.mxu0
    %v2256 = vand.u32 %v115, 4294901760
    %v2257 = vsub.f32 %v115, %v2256
    %v2258 = vand.u32 %v2257, 4294901760
    %2259 = vmatprep.mubr.f32.mxu0 %v2258
    %v2260 = vand.u32 %v114, 4294901760
    %v2261 = vsub.f32 %v114, %v2260
    %v2262 = vand.u32 %v2261, 4294901760
    %2263 = vmatmul.mubr.f32.gmra.mxu0 %v2262
    %v2264 = vpop.f32.mrf.mxu0
    %v2265 = vadd.f32 %v1752, %v2264
    %v2266 = vpop.f32.mrf.mxu0
    %v2267 = vand.u32 %v117, 4294901760
    %v2268 = vsub.f32 %v117, %v2267
    %v2269 = vand.u32 %v2268, 4294901760
    %2270 = vmatprep.mubr.f32.mxu0 %v2269
    %v2271 = vand.u32 %v116, 4294901760
    %v2272 = vsub.f32 %v116, %v2271
    %v2273 = vand.u32 %v2272, 4294901760
    %2274 = vmatmul.mubr.f32.gmra.mxu0 %v2273
    %v2275 = vpop.f32.mrf.mxu0
    %v2276 = vadd.f32 %v1761, %v2275
    %v2277 = vpop.f32.mrf.mxu0
    %v2278 = vand.u32 %v119, 4294901760
    %v2279 = vsub.f32 %v119, %v2278
    %v2280 = vand.u32 %v2279, 4294901760
    %2281 = vmatprep.mubr.f32.mxu0 %v2280
    %v2282 = vand.u32 %v118, 4294901760
    %v2283 = vsub.f32 %v118, %v2282
    %v2284 = vand.u32 %v2283, 4294901760
    %2285 = vmatmul.mubr.f32.gmra.mxu0 %v2284
    %v2286 = vpop.f32.mrf.mxu0
    %v2287 = vadd.f32 %v1770, %v2286
    %v2288 = vpop.f32.mrf.mxu0
    %v2289 = vand.u32 %v121, 4294901760
    %v2290 = vsub.f32 %v121, %v2289
    %v2291 = vand.u32 %v2290, 4294901760
    %2292 = vmatprep.mubr.f32.mxu0 %v2291
    %v2293 = vand.u32 %v120, 4294901760
    %v2294 = vsub.f32 %v120, %v2293
    %v2295 = vand.u32 %v2294, 4294901760
    %2296 = vmatmul.mubr.f32.gmra.mxu0 %v2295
    %v2297 = vpop.f32.mrf.mxu0
    %v2298 = vadd.f32 %v1779, %v2297
    %v2299 = vpop.f32.mrf.mxu0
    %v2300 = vand.u32 %v123, 4294901760
    %v2301 = vsub.f32 %v123, %v2300
    %v2302 = vand.u32 %v2301, 4294901760
    %2303 = vmatprep.mubr.f32.mxu0 %v2302
    %v2304 = vand.u32 %v122, 4294901760
    %v2305 = vsub.f32 %v122, %v2304
    %v2306 = vand.u32 %v2305, 4294901760
    %2307 = vmatmul.mubr.f32.gmra.mxu0 %v2306
    %v2308 = vpop.f32.mrf.mxu0
    %v2309 = vadd.f32 %v1788, %v2308
    %v2310 = vpop.f32.mrf.mxu0
    %v2311 = vand.u32 %v125, 4294901760
    %v2312 = vsub.f32 %v125, %v2311
    %v2313 = vand.u32 %v2312, 4294901760
    %2314 = vmatprep.mubr.f32.mxu0 %v2313
    %v2315 = vand.u32 %v124, 4294901760
    %v2316 = vsub.f32 %v124, %v2315
    %v2317 = vand.u32 %v2316, 4294901760
    %2318 = vmatmul.mubr.f32.gmra.mxu0 %v2317
    %v2319 = vpop.f32.mrf.mxu0
    %v2320 = vadd.f32 %v1797, %v2319
    %v2321 = vpop.f32.mrf.mxu0
    %v2322 = vand.u32 %v127, 4294901760
    %v2323 = vsub.f32 %v127, %v2322
    %v2324 = vand.u32 %v2323, 4294901760
    %2325 = vmatprep.mubr.f32.mxu0 %v2324
    %v2326 = vand.u32 %v126, 4294901760
    %v2327 = vsub.f32 %v126, %v2326
    %v2328 = vand.u32 %v2327, 4294901760
    %2329 = vmatmul.mubr.f32.gmra.mxu0 %v2328
    %v2330 = vpop.f32.mrf.mxu0
    %v2331 = vadd.f32 %v1806, %v2330
    %v2332 = vpop.f32.mrf.mxu0
    %v2333 = vand.u32 %v129, 4294901760
    %v2334 = vsub.f32 %v129, %v2333
    %v2335 = vand.u32 %v2334, 4294901760
    %2336 = vmatprep.mubr.f32.mxu0 %v2335
    %v2337 = vand.u32 %v128, 4294901760
    %v2338 = vsub.f32 %v128, %v2337
    %v2339 = vand.u32 %v2338, 4294901760
    %2340 = vmatmul.mubr.f32.gmra.mxu0 %v2339
    %v2341 = vpop.f32.mrf.mxu0
    %v2342 = vadd.f32 %v1815, %v2341
    %v2343 = vpop.f32.mrf.mxu0
    %v2344 = vand.u32 %v131, 4294901760
    %v2345 = vsub.f32 %v131, %v2344
    %v2346 = vand.u32 %v2345, 4294901760
    %2347 = vmatprep.mubr.f32.mxu0 %v2346
    %v2348 = vand.u32 %v130, 4294901760
    %v2349 = vsub.f32 %v130, %v2348
    %v2350 = vand.u32 %v2349, 4294901760
    %2351 = vmatmul.mubr.f32.gmra.mxu0 %v2350
    %v2352 = vpop.f32.mrf.mxu0
    %v2353 = vadd.f32 %v1824, %v2352
    %v2354 = vpop.f32.mrf.mxu0
    %v2355 = vand.u32 %v133, 4294901760
    %v2356 = vsub.f32 %v133, %v2355
    %v2357 = vand.u32 %v2356, 4294901760
    %2358 = vmatprep.mubr.f32.mxu0 %v2357
    %v2359 = vand.u32 %v132, 4294901760
    %v2360 = vsub.f32 %v132, %v2359
    %v2361 = vand.u32 %v2360, 4294901760
    %2362 = vmatmul.mubr.f32.gmra.mxu0 %v2361
    %v2363 = vpop.f32.mrf.mxu0
    %v2364 = vadd.f32 %v1833, %v2363
    %v2365 = vpop.f32.mrf.mxu0
    %v2366 = vand.u32 %v135, 4294901760
    %v2367 = vsub.f32 %v135, %v2366
    %v2368 = vand.u32 %v2367, 4294901760
    %2369 = vmatprep.mubr.f32.mxu0 %v2368
    %v2370 = vand.u32 %v134, 4294901760
    %v2371 = vsub.f32 %v134, %v2370
    %v2372 = vand.u32 %v2371, 4294901760
    %2373 = vmatmul.mubr.f32.gmra.mxu0 %v2372
    %v2374 = vpop.f32.mrf.mxu0
    %v2375 = vadd.f32 %v1842, %v2374
    %v2376 = vpop.f32.mrf.mxu0
    %v2377 = vand.u32 %v137, 4294901760
    %v2378 = vsub.f32 %v137, %v2377
    %v2379 = vand.u32 %v2378, 4294901760
    %2380 = vmatprep.mubr.f32.mxu0 %v2379
    %v2381 = vand.u32 %v136, 4294901760
    %v2382 = vsub.f32 %v136, %v2381
    %v2383 = vand.u32 %v2382, 4294901760
    %2384 = vmatmul.mubr.f32.gmra.mxu0 %v2383
    %v2385 = vpop.f32.mrf.mxu0
    %v2386 = vadd.f32 %v1851, %v2385
    %v2387 = vpop.f32.mrf.mxu0
    %v2388 = vand.u32 %v139, 4294901760
    %v2389 = vsub.f32 %v139, %v2388
    %v2390 = vand.u32 %v2389, 4294901760
    %2391 = vmatprep.mubr.f32.mxu0 %v2390
    %v2392 = vand.u32 %v138, 4294901760
    %v2393 = vsub.f32 %v138, %v2392
    %v2394 = vand.u32 %v2393, 4294901760
    %2395 = vmatmul.mubr.f32.gmra.mxu0 %v2394
    %v2396 = vpop.f32.mrf.mxu0
    %v2397 = vadd.f32 %v1860, %v2396
    %v2398 = vpop.f32.mrf.mxu0
    %2399 = vdwg.mxu0
    %2400 = vmatprep.subr.mxu0 0.0
    %v2401 = vand.u32 %v155, 4294901760
    %v2402 = vsub.f32 %v155, %v2401
    %v2403 = vand.u32 %v2402, 4294901760
    %2404 = vmatpush1.msra.mxu0 %v2403
    %2405 = vmatprep.subr.mxu0 0.0
    %v2406 = vand.u32 %v154, 4294901760
    %v2407 = vsub.f32 %v154, %v2406
    %v2408 = vand.u32 %v2407, 4294901760
    %2409 = vmatpush1.msra.mxu0 %v2408
    %2410 = vmatprep.subr.mxu0 0.0
    %v2411 = vand.u32 %v153, 4294901760
    %v2412 = vsub.f32 %v153, %v2411
    %v2413 = vand.u32 %v2412, 4294901760
    %2414 = vmatpush1.msra.mxu0 %v2413
    %2415 = vmatprep.subr.mxu0 0.0
    %v2416 = vand.u32 %v152, 4294901760
    %v2417 = vsub.f32 %v152, %v2416
    %v2418 = vand.u32 %v2417, 4294901760
    %2419 = vmatpush1.msra.mxu0 %v2418
    %2420 = vmatprep.subr.mxu0 0.0
    %v2421 = vand.u32 %v151, 4294901760
    %v2422 = vsub.f32 %v151, %v2421
    %v2423 = vand.u32 %v2422, 4294901760
    %2424 = vmatpush1.msra.mxu0 %v2423
    %2425 = vmatprep.subr.mxu0 0.0
    %v2426 = vand.u32 %v150, 4294901760
    %v2427 = vsub.f32 %v150, %v2426
    %v2428 = vand.u32 %v2427, 4294901760
    %2429 = vmatpush1.msra.mxu0 %v2428
    %2430 = vmatprep.subr.mxu0 0.0
    %v2431 = vand.u32 %v149, 4294901760
    %v2432 = vsub.f32 %v149, %v2431
    %v2433 = vand.u32 %v2432, 4294901760
    %2434 = vmatpush1.msra.mxu0 %v2433
    %2435 = vmatprep.subr.mxu0 0.0
    %v2436 = vand.u32 %v148, 4294901760
    %v2437 = vsub.f32 %v148, %v2436
    %v2438 = vand.u32 %v2437, 4294901760
    %2439 = vmatpush1.msra.mxu0 %v2438
    %2440 = vmatprep.subr.mxu0 0.0
    %v2441 = vand.u32 %v147, 4294901760
    %v2442 = vsub.f32 %v147, %v2441
    %v2443 = vand.u32 %v2442, 4294901760
    %2444 = vmatpush1.msra.mxu0 %v2443
    %2445 = vmatprep.subr.mxu0 0.0
    %v2446 = vand.u32 %v146, 4294901760
    %v2447 = vsub.f32 %v146, %v2446
    %v2448 = vand.u32 %v2447, 4294901760
    %2449 = vmatpush1.msra.mxu0 %v2448
    %2450 = vmatprep.subr.mxu0 0.0
    %v2451 = vand.u32 %v145, 4294901760
    %v2452 = vsub.f32 %v145, %v2451
    %v2453 = vand.u32 %v2452, 4294901760
    %2454 = vmatpush1.msra.mxu0 %v2453
    %2455 = vmatprep.subr.mxu0 0.0
    %v2456 = vand.u32 %v144, 4294901760
    %v2457 = vsub.f32 %v144, %v2456
    %v2458 = vand.u32 %v2457, 4294901760
    %2459 = vmatpush1.msra.mxu0 %v2458
    %2460 = vmatprep.subr.mxu0 0.0
    %v2461 = vand.u32 %v143, 4294901760
    %v2462 = vsub.f32 %v143, %v2461
    %v2463 = vand.u32 %v2462, 4294901760
    %2464 = vmatpush1.msra.mxu0 %v2463
    %2465 = vmatprep.subr.mxu0 0.0
    %v2466 = vand.u32 %v142, 4294901760
    %v2467 = vsub.f32 %v142, %v2466
    %v2468 = vand.u32 %v2467, 4294901760
    %2469 = vmatpush1.msra.mxu0 %v2468
    %2470 = vmatprep.subr.mxu0 0.0
    %v2471 = vand.u32 %v141, 4294901760
    %v2472 = vsub.f32 %v141, %v2471
    %v2473 = vand.u32 %v2472, 4294901760
    %2474 = vmatpush1.msra.mxu0 %v2473
    %2475 = vmatprep.subr.mxu0 0.0
    %v2476 = vand.u32 %v140, 4294901760
    %v2477 = vsub.f32 %v140, %v2476
    %v2478 = vand.u32 %v2477, 4294901760
    %2479 = vmatpush1.msra.mxu0 %v2478
    %2480 = vmatprep.subr.mxu0 0.0
    %v2481 = vand.u32 %v171, 4294901760
    %v2482 = vsub.f32 %v171, %v2481
    %v2483 = vand.u32 %v2482, 4294901760
    %2484 = vmatpush2.msra.mxu0 %v2483
    %2485 = vmatprep.subr.mxu0 0.0
    %v2486 = vand.u32 %v170, 4294901760
    %v2487 = vsub.f32 %v170, %v2486
    %v2488 = vand.u32 %v2487, 4294901760
    %2489 = vmatpush2.msra.mxu0 %v2488
    %2490 = vmatprep.subr.mxu0 0.0
    %v2491 = vand.u32 %v169, 4294901760
    %v2492 = vsub.f32 %v169, %v2491
    %v2493 = vand.u32 %v2492, 4294901760
    %2494 = vmatpush2.msra.mxu0 %v2493
    %2495 = vmatprep.subr.mxu0 0.0
    %v2496 = vand.u32 %v168, 4294901760
    %v2497 = vsub.f32 %v168, %v2496
    %v2498 = vand.u32 %v2497, 4294901760
    %2499 = vmatpush2.msra.mxu0 %v2498
    %2500 = vmatprep.subr.mxu0 0.0
    %v2501 = vand.u32 %v167, 4294901760
    %v2502 = vsub.f32 %v167, %v2501
    %v2503 = vand.u32 %v2502, 4294901760
    %2504 = vmatpush2.msra.mxu0 %v2503
    %2505 = vmatprep.subr.mxu0 0.0
    %v2506 = vand.u32 %v166, 4294901760
    %v2507 = vsub.f32 %v166, %v2506
    %v2508 = vand.u32 %v2507, 4294901760
    %2509 = vmatpush2.msra.mxu0 %v2508
    %2510 = vmatprep.subr.mxu0 0.0
    %v2511 = vand.u32 %v165, 4294901760
    %v2512 = vsub.f32 %v165, %v2511
    %v2513 = vand.u32 %v2512, 4294901760
    %2514 = vmatpush2.msra.mxu0 %v2513
    %2515 = vmatprep.subr.mxu0 0.0
    %v2516 = vand.u32 %v164, 4294901760
    %v2517 = vsub.f32 %v164, %v2516
    %v2518 = vand.u32 %v2517, 4294901760
    %2519 = vmatpush2.msra.mxu0 %v2518
    %2520 = vmatprep.subr.mxu0 0.0
    %v2521 = vand.u32 %v163, 4294901760
    %v2522 = vsub.f32 %v163, %v2521
    %v2523 = vand.u32 %v2522, 4294901760
    %2524 = vmatpush2.msra.mxu0 %v2523
    %2525 = vmatprep.subr.mxu0 0.0
    %v2526 = vand.u32 %v162, 4294901760
    %v2527 = vsub.f32 %v162, %v2526
    %v2528 = vand.u32 %v2527, 4294901760
    %2529 = vmatpush2.msra.mxu0 %v2528
    %2530 = vmatprep.subr.mxu0 0.0
    %v2531 = vand.u32 %v161, 4294901760
    %v2532 = vsub.f32 %v161, %v2531
    %v2533 = vand.u32 %v2532, 4294901760
    %2534 = vmatpush2.msra.mxu0 %v2533
    %2535 = vmatprep.subr.mxu0 0.0
    %v2536 = vand.u32 %v160, 4294901760
    %v2537 = vsub.f32 %v160, %v2536
    %v2538 = vand.u32 %v2537, 4294901760
    %2539 = vmatpush2.msra.mxu0 %v2538
    %2540 = vmatprep.subr.mxu0 0.0
    %v2541 = vand.u32 %v159, 4294901760
    %v2542 = vsub.f32 %v159, %v2541
    %v2543 = vand.u32 %v2542, 4294901760
    %2544 = vmatpush2.msra.mxu0 %v2543
    %2545 = vmatprep.subr.mxu0 0.0
    %v2546 = vand.u32 %v158, 4294901760
    %v2547 = vsub.f32 %v158, %v2546
    %v2548 = vand.u32 %v2547, 4294901760
    %2549 = vmatpush2.msra.mxu0 %v2548
    %2550 = vmatprep.subr.mxu0 0.0
    %v2551 = vand.u32 %v157, 4294901760
    %v2552 = vsub.f32 %v157, %v2551
    %v2553 = vand.u32 %v2552, 4294901760
    %2554 = vmatpush2.msra.mxu0 %v2553
    %2555 = vmatprep.subr.mxu0 0.0
    %v2556 = vand.u32 %v156, 4294901760
    %v2557 = vsub.f32 %v156, %v2556
    %v2558 = vand.u32 %v2557, 4294901760
    %2559 = vmatpush2.msra.mxu0 %v2558
    %v2560 = vand.u32 %v61, 4294901760
    %2561 = vmatprep.mubr.f32.mxu0 %v2560
    %v2562 = vand.u32 %v60, 4294901760
    %2563 = vmatmul.mubr.f32.gmra.mxu0 %v2562
    %v2564 = vpop.f32.mrf.mxu0
    %v2565 = vadd.f32 %v1968, %v2564
    %v2566 = vpop.f32.mrf.mxu0
    %v2567 = vand.u32 %v63, 4294901760
    %2568 = vmatprep.mubr.f32.mxu0 %v2567
    %v2569 = vand.u32 %v62, 4294901760
    %2570 = vmatmul.mubr.f32.gmra.mxu0 %v2569
    %v2571 = vpop.f32.mrf.mxu0
    %v2572 = vadd.f32 %v1979, %v2571
    %v2573 = vpop.f32.mrf.mxu0
    %v2574 = vand.u32 %v65, 4294901760
    %2575 = vmatprep.mubr.f32.mxu0 %v2574
    %v2576 = vand.u32 %v64, 4294901760
    %2577 = vmatmul.mubr.f32.gmra.mxu0 %v2576
    %v2578 = vpop.f32.mrf.mxu0
    %v2579 = vadd.f32 %v1990, %v2578
    %v2580 = vpop.f32.mrf.mxu0
    %v2581 = vand.u32 %v67, 4294901760
    %2582 = vmatprep.mubr.f32.mxu0 %v2581
    %v2583 = vand.u32 %v66, 4294901760
    %2584 = vmatmul.mubr.f32.gmra.mxu0 %v2583
    %v2585 = vpop.f32.mrf.mxu0
    %v2586 = vadd.f32 %v2001, %v2585
    %v2587 = vpop.f32.mrf.mxu0
    %v2588 = vand.u32 %v69, 4294901760
    %2589 = vmatprep.mubr.f32.mxu0 %v2588
    %v2590 = vand.u32 %v68, 4294901760
    %2591 = vmatmul.mubr.f32.gmra.mxu0 %v2590
    %v2592 = vpop.f32.mrf.mxu0
    %v2593 = vadd.f32 %v2012, %v2592
    %v2594 = vpop.f32.mrf.mxu0
    %v2595 = vand.u32 %v71, 4294901760
    %2596 = vmatprep.mubr.f32.mxu0 %v2595
    %v2597 = vand.u32 %v70, 4294901760
    %2598 = vmatmul.mubr.f32.gmra.mxu0 %v2597
    %v2599 = vpop.f32.mrf.mxu0
    %v2600 = vadd.f32 %v2023, %v2599
    %v2601 = vpop.f32.mrf.mxu0
    %v2602 = vand.u32 %v73, 4294901760
    %2603 = vmatprep.mubr.f32.mxu0 %v2602
    %v2604 = vand.u32 %v72, 4294901760
    %2605 = vmatmul.mubr.f32.gmra.mxu0 %v2604
    %v2606 = vpop.f32.mrf.mxu0
    %v2607 = vadd.f32 %v2034, %v2606
    %v2608 = vpop.f32.mrf.mxu0
    %v2609 = vand.u32 %v75, 4294901760
    %2610 = vmatprep.mubr.f32.mxu0 %v2609
    %v2611 = vand.u32 %v74, 4294901760
    %2612 = vmatmul.mubr.f32.gmra.mxu0 %v2611
    %v2613 = vpop.f32.mrf.mxu0
    %v2614 = vadd.f32 %v2045, %v2613
    %v2615 = vpop.f32.mrf.mxu0
    %v2616 = vand.u32 %v77, 4294901760
    %2617 = vmatprep.mubr.f32.mxu0 %v2616
    %v2618 = vand.u32 %v76, 4294901760
    %2619 = vmatmul.mubr.f32.gmra.mxu0 %v2618
    %v2620 = vpop.f32.mrf.mxu0
    %v2621 = vadd.f32 %v2056, %v2620
    %v2622 = vpop.f32.mrf.mxu0
    %v2623 = vand.u32 %v79, 4294901760
    %2624 = vmatprep.mubr.f32.mxu0 %v2623
    %v2625 = vand.u32 %v78, 4294901760
    %2626 = vmatmul.mubr.f32.gmra.mxu0 %v2625
    %v2627 = vpop.f32.mrf.mxu0
    %v2628 = vadd.f32 %v2067, %v2627
    %v2629 = vpop.f32.mrf.mxu0
    %v2630 = vand.u32 %v81, 4294901760
    %2631 = vmatprep.mubr.f32.mxu0 %v2630
    %v2632 = vand.u32 %v80, 4294901760
    %2633 = vmatmul.mubr.f32.gmra.mxu0 %v2632
    %v2634 = vpop.f32.mrf.mxu0
    %v2635 = vadd.f32 %v2078, %v2634
    %v2636 = vpop.f32.mrf.mxu0
    %v2637 = vand.u32 %v83, 4294901760
    %2638 = vmatprep.mubr.f32.mxu0 %v2637
    %v2639 = vand.u32 %v82, 4294901760
    %2640 = vmatmul.mubr.f32.gmra.mxu0 %v2639
    %v2641 = vpop.f32.mrf.mxu0
    %v2642 = vadd.f32 %v2089, %v2641
    %v2643 = vpop.f32.mrf.mxu0
    %v2644 = vand.u32 %v85, 4294901760
    %2645 = vmatprep.mubr.f32.mxu0 %v2644
    %v2646 = vand.u32 %v84, 4294901760
    %2647 = vmatmul.mubr.f32.gmra.mxu0 %v2646
    %v2648 = vpop.f32.mrf.mxu0
    %v2649 = vadd.f32 %v2100, %v2648
    %v2650 = vpop.f32.mrf.mxu0
    %v2651 = vand.u32 %v87, 4294901760
    %2652 = vmatprep.mubr.f32.mxu0 %v2651
    %v2653 = vand.u32 %v86, 4294901760
    %2654 = vmatmul.mubr.f32.gmra.mxu0 %v2653
    %v2655 = vpop.f32.mrf.mxu0
    %v2656 = vadd.f32 %v2111, %v2655
    %v2657 = vpop.f32.mrf.mxu0
    %v2658 = vand.u32 %v89, 4294901760
    %2659 = vmatprep.mubr.f32.mxu0 %v2658
    %v2660 = vand.u32 %v88, 4294901760
    %2661 = vmatmul.mubr.f32.gmra.mxu0 %v2660
    %v2662 = vpop.f32.mrf.mxu0
    %v2663 = vadd.f32 %v2122, %v2662
    %v2664 = vpop.f32.mrf.mxu0
    %v2665 = vand.u32 %v91, 4294901760
    %2666 = vmatprep.mubr.f32.mxu0 %v2665
    %v2667 = vand.u32 %v90, 4294901760
    %2668 = vmatmul.mubr.f32.gmra.mxu0 %v2667
    %v2669 = vpop.f32.mrf.mxu0
    %v2670 = vadd.f32 %v2133, %v2669
    %v2671 = vpop.f32.mrf.mxu0
    %v2672 = vand.u32 %v93, 4294901760
    %2673 = vmatprep.mubr.f32.mxu0 %v2672
    %v2674 = vand.u32 %v92, 4294901760
    %2675 = vmatmul.mubr.f32.gmra.mxu0 %v2674
    %v2676 = vpop.f32.mrf.mxu0
    %v2677 = vadd.f32 %v2144, %v2676
    %v2678 = vpop.f32.mrf.mxu0
    %v2679 = vand.u32 %v95, 4294901760
    %2680 = vmatprep.mubr.f32.mxu0 %v2679
    %v2681 = vand.u32 %v94, 4294901760
    %2682 = vmatmul.mubr.f32.gmra.mxu0 %v2681
    %v2683 = vpop.f32.mrf.mxu0
    %v2684 = vadd.f32 %v2155, %v2683
    %v2685 = vpop.f32.mrf.mxu0
    %v2686 = vand.u32 %v97, 4294901760
    %2687 = vmatprep.mubr.f32.mxu0 %v2686
    %v2688 = vand.u32 %v96, 4294901760
    %2689 = vmatmul.mubr.f32.gmra.mxu0 %v2688
    %v2690 = vpop.f32.mrf.mxu0
    %v2691 = vadd.f32 %v2166, %v2690
    %v2692 = vpop.f32.mrf.mxu0
    %v2693 = vand.u32 %v99, 4294901760
    %2694 = vmatprep.mubr.f32.mxu0 %v2693
    %v2695 = vand.u32 %v98, 4294901760
    %2696 = vmatmul.mubr.f32.gmra.mxu0 %v2695
    %v2697 = vpop.f32.mrf.mxu0
    %v2698 = vadd.f32 %v2177, %v2697
    %v2699 = vpop.f32.mrf.mxu0
    %v2700 = vand.u32 %v101, 4294901760
    %2701 = vmatprep.mubr.f32.mxu0 %v2700
    %v2702 = vand.u32 %v100, 4294901760
    %2703 = vmatmul.mubr.f32.gmra.mxu0 %v2702
    %v2704 = vpop.f32.mrf.mxu0
    %v2705 = vadd.f32 %v2188, %v2704
    %v2706 = vpop.f32.mrf.mxu0
    %v2707 = vand.u32 %v103, 4294901760
    %2708 = vmatprep.mubr.f32.mxu0 %v2707
    %v2709 = vand.u32 %v102, 4294901760
    %2710 = vmatmul.mubr.f32.gmra.mxu0 %v2709
    %v2711 = vpop.f32.mrf.mxu0
    %v2712 = vadd.f32 %v2199, %v2711
    %v2713 = vpop.f32.mrf.mxu0
    %v2714 = vand.u32 %v105, 4294901760
    %2715 = vmatprep.mubr.f32.mxu0 %v2714
    %v2716 = vand.u32 %v104, 4294901760
    %2717 = vmatmul.mubr.f32.gmra.mxu0 %v2716
    %v2718 = vpop.f32.mrf.mxu0
    %v2719 = vadd.f32 %v2210, %v2718
    %v2720 = vpop.f32.mrf.mxu0
    %v2721 = vand.u32 %v107, 4294901760
    %2722 = vmatprep.mubr.f32.mxu0 %v2721
    %v2723 = vand.u32 %v106, 4294901760
    %2724 = vmatmul.mubr.f32.gmra.mxu0 %v2723
    %v2725 = vpop.f32.mrf.mxu0
    %v2726 = vadd.f32 %v2221, %v2725
    %v2727 = vpop.f32.mrf.mxu0
    %v2728 = vand.u32 %v109, 4294901760
    %2729 = vmatprep.mubr.f32.mxu0 %v2728
    %v2730 = vand.u32 %v108, 4294901760
    %2731 = vmatmul.mubr.f32.gmra.mxu0 %v2730
    %v2732 = vpop.f32.mrf.mxu0
    %v2733 = vadd.f32 %v2232, %v2732
    %v2734 = vpop.f32.mrf.mxu0
    %v2735 = vand.u32 %v111, 4294901760
    %2736 = vmatprep.mubr.f32.mxu0 %v2735
    %v2737 = vand.u32 %v110, 4294901760
    %2738 = vmatmul.mubr.f32.gmra.mxu0 %v2737
    %v2739 = vpop.f32.mrf.mxu0
    %v2740 = vadd.f32 %v2243, %v2739
    %v2741 = vpop.f32.mrf.mxu0
    %v2742 = vand.u32 %v113, 4294901760
    %2743 = vmatprep.mubr.f32.mxu0 %v2742
    %v2744 = vand.u32 %v112, 4294901760
    %2745 = vmatmul.mubr.f32.gmra.mxu0 %v2744
    %v2746 = vpop.f32.mrf.mxu0
    %v2747 = vadd.f32 %v2254, %v2746
    %v2748 = vpop.f32.mrf.mxu0
    %v2749 = vand.u32 %v115, 4294901760
    %2750 = vmatprep.mubr.f32.mxu0 %v2749
    %v2751 = vand.u32 %v114, 4294901760
    %2752 = vmatmul.mubr.f32.gmra.mxu0 %v2751
    %v2753 = vpop.f32.mrf.mxu0
    %v2754 = vadd.f32 %v2265, %v2753
    %v2755 = vpop.f32.mrf.mxu0
    %v2756 = vand.u32 %v117, 4294901760
    %2757 = vmatprep.mubr.f32.mxu0 %v2756
    %v2758 = vand.u32 %v116, 4294901760
    %2759 = vmatmul.mubr.f32.gmra.mxu0 %v2758
    %v2760 = vpop.f32.mrf.mxu0
    %v2761 = vadd.f32 %v2276, %v2760
    %v2762 = vpop.f32.mrf.mxu0
    %v2763 = vand.u32 %v119, 4294901760
    %2764 = vmatprep.mubr.f32.mxu0 %v2763
    %v2765 = vand.u32 %v118, 4294901760
    %2766 = vmatmul.mubr.f32.gmra.mxu0 %v2765
    %v2767 = vpop.f32.mrf.mxu0
    %v2768 = vadd.f32 %v2287, %v2767
    %v2769 = vpop.f32.mrf.mxu0
    %v2770 = vand.u32 %v121, 4294901760
    %2771 = vmatprep.mubr.f32.mxu0 %v2770
    %v2772 = vand.u32 %v120, 4294901760
    %2773 = vmatmul.mubr.f32.gmra.mxu0 %v2772
    %v2774 = vpop.f32.mrf.mxu0
    %v2775 = vadd.f32 %v2298, %v2774
    %v2776 = vpop.f32.mrf.mxu0
    %v2777 = vand.u32 %v123, 4294901760
    %2778 = vmatprep.mubr.f32.mxu0 %v2777
    %v2779 = vand.u32 %v122, 4294901760
    %2780 = vmatmul.mubr.f32.gmra.mxu0 %v2779
    %v2781 = vpop.f32.mrf.mxu0
    %v2782 = vadd.f32 %v2309, %v2781
    %v2783 = vpop.f32.mrf.mxu0
    %v2784 = vand.u32 %v125, 4294901760
    %2785 = vmatprep.mubr.f32.mxu0 %v2784
    %v2786 = vand.u32 %v124, 4294901760
    %2787 = vmatmul.mubr.f32.gmra.mxu0 %v2786
    %v2788 = vpop.f32.mrf.mxu0
    %v2789 = vadd.f32 %v2320, %v2788
    %v2790 = vpop.f32.mrf.mxu0
    %v2791 = vand.u32 %v127, 4294901760
    %2792 = vmatprep.mubr.f32.mxu0 %v2791
    %v2793 = vand.u32 %v126, 4294901760
    %2794 = vmatmul.mubr.f32.gmra.mxu0 %v2793
    %v2795 = vpop.f32.mrf.mxu0
    %v2796 = vadd.f32 %v2331, %v2795
    %v2797 = vpop.f32.mrf.mxu0
    %v2798 = vand.u32 %v129, 4294901760
    %2799 = vmatprep.mubr.f32.mxu0 %v2798
    %v2800 = vand.u32 %v128, 4294901760
    %2801 = vmatmul.mubr.f32.gmra.mxu0 %v2800
    %v2802 = vpop.f32.mrf.mxu0
    %v2803 = vadd.f32 %v2342, %v2802
    %v2804 = vpop.f32.mrf.mxu0
    %v2805 = vand.u32 %v131, 4294901760
    %2806 = vmatprep.mubr.f32.mxu0 %v2805
    %v2807 = vand.u32 %v130, 4294901760
    %2808 = vmatmul.mubr.f32.gmra.mxu0 %v2807
    %v2809 = vpop.f32.mrf.mxu0
    %v2810 = vadd.f32 %v2353, %v2809
    %v2811 = vpop.f32.mrf.mxu0
    %v2812 = vand.u32 %v133, 4294901760
    %2813 = vmatprep.mubr.f32.mxu0 %v2812
    %v2814 = vand.u32 %v132, 4294901760
    %2815 = vmatmul.mubr.f32.gmra.mxu0 %v2814
    %v2816 = vpop.f32.mrf.mxu0
    %v2817 = vadd.f32 %v2364, %v2816
    %v2818 = vpop.f32.mrf.mxu0
    %v2819 = vand.u32 %v135, 4294901760
    %2820 = vmatprep.mubr.f32.mxu0 %v2819
    %v2821 = vand.u32 %v134, 4294901760
    %2822 = vmatmul.mubr.f32.gmra.mxu0 %v2821
    %v2823 = vpop.f32.mrf.mxu0
    %v2824 = vadd.f32 %v2375, %v2823
    %v2825 = vpop.f32.mrf.mxu0
    %v2826 = vand.u32 %v137, 4294901760
    %2827 = vmatprep.mubr.f32.mxu0 %v2826
    %v2828 = vand.u32 %v136, 4294901760
    %2829 = vmatmul.mubr.f32.gmra.mxu0 %v2828
    %v2830 = vpop.f32.mrf.mxu0
    %v2831 = vadd.f32 %v2386, %v2830
    %v2832 = vpop.f32.mrf.mxu0
    %v2833 = vand.u32 %v139, 4294901760
    %2834 = vmatprep.mubr.f32.mxu0 %v2833
    %v2835 = vand.u32 %v138, 4294901760
    %2836 = vmatmul.mubr.f32.gmra.mxu0 %v2835
    %v2837 = vpop.f32.mrf.mxu0
    %v2838 = vadd.f32 %v2397, %v2837
    %v2839 = vpop.f32.mrf.mxu0
    %2840 = vdwg.mxu0
    %2841 = vmatprep.subr.mxu0 0.0
    %v2842 = vand.u32 %v155, 4294901760
    %2843 = vmatpush1.msra.mxu0 %v2842
    %2844 = vmatprep.subr.mxu0 0.0
    %v2845 = vand.u32 %v154, 4294901760
    %2846 = vmatpush1.msra.mxu0 %v2845
    %2847 = vmatprep.subr.mxu0 0.0
    %v2848 = vand.u32 %v153, 4294901760
    %2849 = vmatpush1.msra.mxu0 %v2848
    %2850 = vmatprep.subr.mxu0 0.0
    %v2851 = vand.u32 %v152, 4294901760
    %2852 = vmatpush1.msra.mxu0 %v2851
    %2853 = vmatprep.subr.mxu0 0.0
    %v2854 = vand.u32 %v151, 4294901760
    %2855 = vmatpush1.msra.mxu0 %v2854
    %2856 = vmatprep.subr.mxu0 0.0
    %v2857 = vand.u32 %v150, 4294901760
    %2858 = vmatpush1.msra.mxu0 %v2857
    %2859 = vmatprep.subr.mxu0 0.0
    %v2860 = vand.u32 %v149, 4294901760
    %2861 = vmatpush1.msra.mxu0 %v2860
    %2862 = vmatprep.subr.mxu0 0.0
    %v2863 = vand.u32 %v148, 4294901760
    %2864 = vmatpush1.msra.mxu0 %v2863
    %2865 = vmatprep.subr.mxu0 0.0
    %v2866 = vand.u32 %v147, 4294901760
    %2867 = vmatpush1.msra.mxu0 %v2866
    %2868 = vmatprep.subr.mxu0 0.0
    %v2869 = vand.u32 %v146, 4294901760
    %2870 = vmatpush1.msra.mxu0 %v2869
    %2871 = vmatprep.subr.mxu0 0.0
    %v2872 = vand.u32 %v145, 4294901760
    %2873 = vmatpush1.msra.mxu0 %v2872
    %2874 = vmatprep.subr.mxu0 0.0
    %v2875 = vand.u32 %v144, 4294901760
    %2876 = vmatpush1.msra.mxu0 %v2875
    %2877 = vmatprep.subr.mxu0 0.0
    %v2878 = vand.u32 %v143, 4294901760
    %2879 = vmatpush1.msra.mxu0 %v2878
    %2880 = vmatprep.subr.mxu0 0.0
    %v2881 = vand.u32 %v142, 4294901760
    %2882 = vmatpush1.msra.mxu0 %v2881
    %2883 = vmatprep.subr.mxu0 0.0
    %v2884 = vand.u32 %v141, 4294901760
    %2885 = vmatpush1.msra.mxu0 %v2884
    %2886 = vmatprep.subr.mxu0 0.0
    %v2887 = vand.u32 %v140, 4294901760
    %2888 = vmatpush1.msra.mxu0 %v2887
    %2889 = vmatprep.subr.mxu0 0.0
    %v2890 = vand.u32 %v171, 4294901760
    %2891 = vmatpush2.msra.mxu0 %v2890
    %2892 = vmatprep.subr.mxu0 0.0
    %v2893 = vand.u32 %v170, 4294901760
    %2894 = vmatpush2.msra.mxu0 %v2893
    %2895 = vmatprep.subr.mxu0 0.0
    %v2896 = vand.u32 %v169, 4294901760
    %2897 = vmatpush2.msra.mxu0 %v2896
    %2898 = vmatprep.subr.mxu0 0.0
    %v2899 = vand.u32 %v168, 4294901760
    %2900 = vmatpush2.msra.mxu0 %v2899
    %2901 = vmatprep.subr.mxu0 0.0
    %v2902 = vand.u32 %v167, 4294901760
    %2903 = vmatpush2.msra.mxu0 %v2902
    %2904 = vmatprep.subr.mxu0 0.0
    %v2905 = vand.u32 %v166, 4294901760
    %2906 = vmatpush2.msra.mxu0 %v2905
    %2907 = vmatprep.subr.mxu0 0.0
    %v2908 = vand.u32 %v165, 4294901760
    %2909 = vmatpush2.msra.mxu0 %v2908
    %2910 = vmatprep.subr.mxu0 0.0
    %v2911 = vand.u32 %v164, 4294901760
    %2912 = vmatpush2.msra.mxu0 %v2911
    %2913 = vmatprep.subr.mxu0 0.0
    %v2914 = vand.u32 %v163, 4294901760
    %2915 = vmatpush2.msra.mxu0 %v2914
    %2916 = vmatprep.subr.mxu0 0.0
    %v2917 = vand.u32 %v162, 4294901760
    %2918 = vmatpush2.msra.mxu0 %v2917
    %2919 = vmatprep.subr.mxu0 0.0
    %v2920 = vand.u32 %v161, 4294901760
    %2921 = vmatpush2.msra.mxu0 %v2920
    %2922 = vmatprep.subr.mxu0 0.0
    %v2923 = vand.u32 %v160, 4294901760
    %2924 = vmatpush2.msra.mxu0 %v2923
    %2925 = vmatprep.subr.mxu0 0.0
    %v2926 = vand.u32 %v159, 4294901760
    %2927 = vmatpush2.msra.mxu0 %v2926
    %2928 = vmatprep.subr.mxu0 0.0
    %v2929 = vand.u32 %v158, 4294901760
    %2930 = vmatpush2.msra.mxu0 %v2929
    %2931 = vmatprep.subr.mxu0 0.0
    %v2932 = vand.u32 %v157, 4294901760
    %2933 = vmatpush2.msra.mxu0 %v2932
    %2934 = vmatprep.subr.mxu0 0.0
    %v2935 = vand.u32 %v156, 4294901760
    %2936 = vmatpush2.msra.mxu0 %v2935
    %v2937 = vand.u32 %v61, 4294901760
    %2938 = vmatprep.mubr.f32.mxu0 %v2937
    %v2939 = vand.u32 %v60, 4294901760
    %2940 = vmatmul.mubr.f32.gmra.mxu0 %v2939
    %v2941 = vpop.f32.mrf.mxu0
    %v2942 = vadd.f32 %v2565, %v2941
    %v2943 = vpop.f32.mrf.mxu0
    %v2944 = vand.u32 %v63, 4294901760
    %2945 = vmatprep.mubr.f32.mxu0 %v2944
    %v2946 = vand.u32 %v62, 4294901760
    %2947 = vmatmul.mubr.f32.gmra.mxu0 %v2946
    %v2948 = vpop.f32.mrf.mxu0
    %v2949 = vadd.f32 %v2572, %v2948
    %v2950 = vpop.f32.mrf.mxu0
    %v2951 = vand.u32 %v65, 4294901760
    %2952 = vmatprep.mubr.f32.mxu0 %v2951
    %v2953 = vand.u32 %v64, 4294901760
    %2954 = vmatmul.mubr.f32.gmra.mxu0 %v2953
    %v2955 = vpop.f32.mrf.mxu0
    %v2956 = vadd.f32 %v2579, %v2955
    %v2957 = vpop.f32.mrf.mxu0
    %v2958 = vand.u32 %v67, 4294901760
    %2959 = vmatprep.mubr.f32.mxu0 %v2958
    %v2960 = vand.u32 %v66, 4294901760
    %2961 = vmatmul.mubr.f32.gmra.mxu0 %v2960
    %v2962 = vpop.f32.mrf.mxu0
    %v2963 = vadd.f32 %v2586, %v2962
    %v2964 = vpop.f32.mrf.mxu0
    %v2965 = vand.u32 %v69, 4294901760
    %2966 = vmatprep.mubr.f32.mxu0 %v2965
    %v2967 = vand.u32 %v68, 4294901760
    %2968 = vmatmul.mubr.f32.gmra.mxu0 %v2967
    %v2969 = vpop.f32.mrf.mxu0
    %v2970 = vadd.f32 %v2593, %v2969
    %v2971 = vpop.f32.mrf.mxu0
    %v2972 = vand.u32 %v71, 4294901760
    %2973 = vmatprep.mubr.f32.mxu0 %v2972
    %v2974 = vand.u32 %v70, 4294901760
    %2975 = vmatmul.mubr.f32.gmra.mxu0 %v2974
    %v2976 = vpop.f32.mrf.mxu0
    %v2977 = vadd.f32 %v2600, %v2976
    %v2978 = vpop.f32.mrf.mxu0
    %v2979 = vand.u32 %v73, 4294901760
    %2980 = vmatprep.mubr.f32.mxu0 %v2979
    %v2981 = vand.u32 %v72, 4294901760
    %2982 = vmatmul.mubr.f32.gmra.mxu0 %v2981
    %v2983 = vpop.f32.mrf.mxu0
    %v2984 = vadd.f32 %v2607, %v2983
    %v2985 = vpop.f32.mrf.mxu0
    %v2986 = vand.u32 %v75, 4294901760
    %2987 = vmatprep.mubr.f32.mxu0 %v2986
    %v2988 = vand.u32 %v74, 4294901760
    %2989 = vmatmul.mubr.f32.gmra.mxu0 %v2988
    %v2990 = vpop.f32.mrf.mxu0
    %v2991 = vadd.f32 %v2614, %v2990
    %v2992 = vpop.f32.mrf.mxu0
    %v2993 = vand.u32 %v77, 4294901760
    %2994 = vmatprep.mubr.f32.mxu0 %v2993
    %v2995 = vand.u32 %v76, 4294901760
    %2996 = vmatmul.mubr.f32.gmra.mxu0 %v2995
    %v2997 = vpop.f32.mrf.mxu0
    %v2998 = vadd.f32 %v2621, %v2997
    %v2999 = vpop.f32.mrf.mxu0
    %v3000 = vand.u32 %v79, 4294901760
    %3001 = vmatprep.mubr.f32.mxu0 %v3000
    %v3002 = vand.u32 %v78, 4294901760
    %3003 = vmatmul.mubr.f32.gmra.mxu0 %v3002
    %v3004 = vpop.f32.mrf.mxu0
    %v3005 = vadd.f32 %v2628, %v3004
    %v3006 = vpop.f32.mrf.mxu0
    %v3007 = vand.u32 %v81, 4294901760
    %3008 = vmatprep.mubr.f32.mxu0 %v3007
    %v3009 = vand.u32 %v80, 4294901760
    %3010 = vmatmul.mubr.f32.gmra.mxu0 %v3009
    %v3011 = vpop.f32.mrf.mxu0
    %v3012 = vadd.f32 %v2635, %v3011
    %v3013 = vpop.f32.mrf.mxu0
    %v3014 = vand.u32 %v83, 4294901760
    %3015 = vmatprep.mubr.f32.mxu0 %v3014
    %v3016 = vand.u32 %v82, 4294901760
    %3017 = vmatmul.mubr.f32.gmra.mxu0 %v3016
    %v3018 = vpop.f32.mrf.mxu0
    %v3019 = vadd.f32 %v2642, %v3018
    %v3020 = vpop.f32.mrf.mxu0
    %v3021 = vand.u32 %v85, 4294901760
    %3022 = vmatprep.mubr.f32.mxu0 %v3021
    %v3023 = vand.u32 %v84, 4294901760
    %3024 = vmatmul.mubr.f32.gmra.mxu0 %v3023
    %v3025 = vpop.f32.mrf.mxu0
    %v3026 = vadd.f32 %v2649, %v3025
    %v3027 = vpop.f32.mrf.mxu0
    %v3028 = vand.u32 %v87, 4294901760
    %3029 = vmatprep.mubr.f32.mxu0 %v3028
    %v3030 = vand.u32 %v86, 4294901760
    %3031 = vmatmul.mubr.f32.gmra.mxu0 %v3030
    %v3032 = vpop.f32.mrf.mxu0
    %v3033 = vadd.f32 %v2656, %v3032
    %v3034 = vpop.f32.mrf.mxu0
    %v3035 = vand.u32 %v89, 4294901760
    %3036 = vmatprep.mubr.f32.mxu0 %v3035
    %v3037 = vand.u32 %v88, 4294901760
    %3038 = vmatmul.mubr.f32.gmra.mxu0 %v3037
    %v3039 = vpop.f32.mrf.mxu0
    %v3040 = vadd.f32 %v2663, %v3039
    %v3041 = vpop.f32.mrf.mxu0
    %v3042 = vand.u32 %v91, 4294901760
    %3043 = vmatprep.mubr.f32.mxu0 %v3042
    %v3044 = vand.u32 %v90, 4294901760
    %3045 = vmatmul.mubr.f32.gmra.mxu0 %v3044
    %v3046 = vpop.f32.mrf.mxu0
    %v3047 = vadd.f32 %v2670, %v3046
    %v3048 = vpop.f32.mrf.mxu0
    %v3049 = vand.u32 %v93, 4294901760
    %3050 = vmatprep.mubr.f32.mxu0 %v3049
    %v3051 = vand.u32 %v92, 4294901760
    %3052 = vmatmul.mubr.f32.gmra.mxu0 %v3051
    %v3053 = vpop.f32.mrf.mxu0
    %v3054 = vadd.f32 %v2677, %v3053
    %v3055 = vpop.f32.mrf.mxu0
    %v3056 = vand.u32 %v95, 4294901760
    %3057 = vmatprep.mubr.f32.mxu0 %v3056
    %v3058 = vand.u32 %v94, 4294901760
    %3059 = vmatmul.mubr.f32.gmra.mxu0 %v3058
    %v3060 = vpop.f32.mrf.mxu0
    %v3061 = vadd.f32 %v2684, %v3060
    %v3062 = vpop.f32.mrf.mxu0
    %v3063 = vand.u32 %v97, 4294901760
    %3064 = vmatprep.mubr.f32.mxu0 %v3063
    %v3065 = vand.u32 %v96, 4294901760
    %3066 = vmatmul.mubr.f32.gmra.mxu0 %v3065
    %v3067 = vpop.f32.mrf.mxu0
    %v3068 = vadd.f32 %v2691, %v3067
    %v3069 = vpop.f32.mrf.mxu0
    %v3070 = vand.u32 %v99, 4294901760
    %3071 = vmatprep.mubr.f32.mxu0 %v3070
    %v3072 = vand.u32 %v98, 4294901760
    %3073 = vmatmul.mubr.f32.gmra.mxu0 %v3072
    %v3074 = vpop.f32.mrf.mxu0
    %v3075 = vadd.f32 %v2698, %v3074
    %v3076 = vpop.f32.mrf.mxu0
    %v3077 = vand.u32 %v101, 4294901760
    %3078 = vmatprep.mubr.f32.mxu0 %v3077
    %v3079 = vand.u32 %v100, 4294901760
    %3080 = vmatmul.mubr.f32.gmra.mxu0 %v3079
    %v3081 = vpop.f32.mrf.mxu0
    %v3082 = vadd.f32 %v2705, %v3081
    %v3083 = vpop.f32.mrf.mxu0
    %v3084 = vand.u32 %v103, 4294901760
    %3085 = vmatprep.mubr.f32.mxu0 %v3084
    %v3086 = vand.u32 %v102, 4294901760
    %3087 = vmatmul.mubr.f32.gmra.mxu0 %v3086
    %v3088 = vpop.f32.mrf.mxu0
    %v3089 = vadd.f32 %v2712, %v3088
    %v3090 = vpop.f32.mrf.mxu0
    %v3091 = vand.u32 %v105, 4294901760
    %3092 = vmatprep.mubr.f32.mxu0 %v3091
    %v3093 = vand.u32 %v104, 4294901760
    %3094 = vmatmul.mubr.f32.gmra.mxu0 %v3093
    %v3095 = vpop.f32.mrf.mxu0
    %v3096 = vadd.f32 %v2719, %v3095
    %v3097 = vpop.f32.mrf.mxu0
    %v3098 = vand.u32 %v107, 4294901760
    %3099 = vmatprep.mubr.f32.mxu0 %v3098
    %v3100 = vand.u32 %v106, 4294901760
    %3101 = vmatmul.mubr.f32.gmra.mxu0 %v3100
    %v3102 = vpop.f32.mrf.mxu0
    %v3103 = vadd.f32 %v2726, %v3102
    %v3104 = vpop.f32.mrf.mxu0
    %v3105 = vand.u32 %v109, 4294901760
    %3106 = vmatprep.mubr.f32.mxu0 %v3105
    %v3107 = vand.u32 %v108, 4294901760
    %3108 = vmatmul.mubr.f32.gmra.mxu0 %v3107
    %v3109 = vpop.f32.mrf.mxu0
    %v3110 = vadd.f32 %v2733, %v3109
    %v3111 = vpop.f32.mrf.mxu0
    %v3112 = vand.u32 %v111, 4294901760
    %3113 = vmatprep.mubr.f32.mxu0 %v3112
    %v3114 = vand.u32 %v110, 4294901760
    %3115 = vmatmul.mubr.f32.gmra.mxu0 %v3114
    %v3116 = vpop.f32.mrf.mxu0
    %v3117 = vadd.f32 %v2740, %v3116
    %v3118 = vpop.f32.mrf.mxu0
    %v3119 = vand.u32 %v113, 4294901760
    %3120 = vmatprep.mubr.f32.mxu0 %v3119
    %v3121 = vand.u32 %v112, 4294901760
    %3122 = vmatmul.mubr.f32.gmra.mxu0 %v3121
    %v3123 = vpop.f32.mrf.mxu0
    %v3124 = vadd.f32 %v2747, %v3123
    %v3125 = vpop.f32.mrf.mxu0
    %v3126 = vand.u32 %v115, 4294901760
    %3127 = vmatprep.mubr.f32.mxu0 %v3126
    %v3128 = vand.u32 %v114, 4294901760
    %3129 = vmatmul.mubr.f32.gmra.mxu0 %v3128
    %v3130 = vpop.f32.mrf.mxu0
    %v3131 = vadd.f32 %v2754, %v3130
    %v3132 = vpop.f32.mrf.mxu0
    %v3133 = vand.u32 %v117, 4294901760
    %3134 = vmatprep.mubr.f32.mxu0 %v3133
    %v3135 = vand.u32 %v116, 4294901760
    %3136 = vmatmul.mubr.f32.gmra.mxu0 %v3135
    %v3137 = vpop.f32.mrf.mxu0
    %v3138 = vadd.f32 %v2761, %v3137
    %v3139 = vpop.f32.mrf.mxu0
    %v3140 = vand.u32 %v119, 4294901760
    %3141 = vmatprep.mubr.f32.mxu0 %v3140
    %v3142 = vand.u32 %v118, 4294901760
    %3143 = vmatmul.mubr.f32.gmra.mxu0 %v3142
    %v3144 = vpop.f32.mrf.mxu0
    %v3145 = vadd.f32 %v2768, %v3144
    %v3146 = vpop.f32.mrf.mxu0
    %v3147 = vand.u32 %v121, 4294901760
    %3148 = vmatprep.mubr.f32.mxu0 %v3147
    %v3149 = vand.u32 %v120, 4294901760
    %3150 = vmatmul.mubr.f32.gmra.mxu0 %v3149
    %v3151 = vpop.f32.mrf.mxu0
    %v3152 = vadd.f32 %v2775, %v3151
    %v3153 = vpop.f32.mrf.mxu0
    %v3154 = vand.u32 %v123, 4294901760
    %3155 = vmatprep.mubr.f32.mxu0 %v3154
    %v3156 = vand.u32 %v122, 4294901760
    %3157 = vmatmul.mubr.f32.gmra.mxu0 %v3156
    %v3158 = vpop.f32.mrf.mxu0
    %v3159 = vadd.f32 %v2782, %v3158
    %v3160 = vpop.f32.mrf.mxu0
    %v3161 = vand.u32 %v125, 4294901760
    %3162 = vmatprep.mubr.f32.mxu0 %v3161
    %v3163 = vand.u32 %v124, 4294901760
    %3164 = vmatmul.mubr.f32.gmra.mxu0 %v3163
    %v3165 = vpop.f32.mrf.mxu0
    %v3166 = vadd.f32 %v2789, %v3165
    %v3167 = vpop.f32.mrf.mxu0
    %v3168 = vand.u32 %v127, 4294901760
    %3169 = vmatprep.mubr.f32.mxu0 %v3168
    %v3170 = vand.u32 %v126, 4294901760
    %3171 = vmatmul.mubr.f32.gmra.mxu0 %v3170
    %v3172 = vpop.f32.mrf.mxu0
    %v3173 = vadd.f32 %v2796, %v3172
    %v3174 = vpop.f32.mrf.mxu0
    %v3175 = vand.u32 %v129, 4294901760
    %3176 = vmatprep.mubr.f32.mxu0 %v3175
    %v3177 = vand.u32 %v128, 4294901760
    %3178 = vmatmul.mubr.f32.gmra.mxu0 %v3177
    %v3179 = vpop.f32.mrf.mxu0
    %v3180 = vadd.f32 %v2803, %v3179
    %v3181 = vpop.f32.mrf.mxu0
    %v3182 = vand.u32 %v131, 4294901760
    %3183 = vmatprep.mubr.f32.mxu0 %v3182
    %v3184 = vand.u32 %v130, 4294901760
    %3185 = vmatmul.mubr.f32.gmra.mxu0 %v3184
    %v3186 = vpop.f32.mrf.mxu0
    %v3187 = vadd.f32 %v2810, %v3186
    %v3188 = vpop.f32.mrf.mxu0
    %v3189 = vand.u32 %v133, 4294901760
    %3190 = vmatprep.mubr.f32.mxu0 %v3189
    %v3191 = vand.u32 %v132, 4294901760
    %3192 = vmatmul.mubr.f32.gmra.mxu0 %v3191
    %v3193 = vpop.f32.mrf.mxu0
    %v3194 = vadd.f32 %v2817, %v3193
    %v3195 = vpop.f32.mrf.mxu0
    %v3196 = vand.u32 %v135, 4294901760
    %3197 = vmatprep.mubr.f32.mxu0 %v3196
    %v3198 = vand.u32 %v134, 4294901760
    %3199 = vmatmul.mubr.f32.gmra.mxu0 %v3198
    %v3200 = vpop.f32.mrf.mxu0
    %v3201 = vadd.f32 %v2824, %v3200
    %v3202 = vpop.f32.mrf.mxu0
    %v3203 = vand.u32 %v137, 4294901760
    %3204 = vmatprep.mubr.f32.mxu0 %v3203
    %v3205 = vand.u32 %v136, 4294901760
    %3206 = vmatmul.mubr.f32.gmra.mxu0 %v3205
    %v3207 = vpop.f32.mrf.mxu0
    %v3208 = vadd.f32 %v2831, %v3207
    %v3209 = vpop.f32.mrf.mxu0
    %v3210 = vand.u32 %v139, 4294901760
    %3211 = vmatprep.mubr.f32.mxu0 %v3210
    %v3212 = vand.u32 %v138, 4294901760
    %3213 = vmatmul.mubr.f32.gmra.mxu0 %v3212
    %v3214 = vpop.f32.mrf.mxu0
    %v3215 = vadd.f32 %v2838, %v3214
    %v3216 = vpop.f32.mrf.mxu0
    %3217 = vdwg.mxu0
    %s3218 = sld [smem:[#allocation3]]
    %v3219 = vstv %s3218
    %v3220 = vadd.f32 %v2942, %v3219
    %v3221 = vadd.f32 %v2949, %v3219
    %v3222 = vadd.f32 %v2956, %v3219
    %v3223 = vadd.f32 %v2963, %v3219
    %v3224 = vadd.f32 %v2970, %v3219
    %v3225 = vadd.f32 %v2977, %v3219
    %v3226 = vadd.f32 %v2984, %v3219
    %v3227 = vadd.f32 %v2991, %v3219
    %v3228 = vadd.f32 %v2998, %v3219
    %v3229 = vadd.f32 %v3005, %v3219
    %v3230 = vadd.f32 %v3012, %v3219
    %v3231 = vadd.f32 %v3019, %v3219
    %v3232 = vadd.f32 %v3026, %v3219
    %v3233 = vadd.f32 %v3033, %v3219
    %v3234 = vadd.f32 %v3040, %v3219
    %v3235 = vadd.f32 %v3047, %v3219
    %v3236 = vadd.f32 %v3054, %v3219
    %v3237 = vadd.f32 %v3061, %v3219
    %v3238 = vadd.f32 %v3068, %v3219
    %v3239 = vadd.f32 %v3075, %v3219
    %v3240 = vadd.f32 %v3082, %v3219
    %v3241 = vadd.f32 %v3089, %v3219
    %v3242 = vadd.f32 %v3096, %v3219
    %v3243 = vadd.f32 %v3103, %v3219
    %v3244 = vadd.f32 %v3110, %v3219
    %v3245 = vadd.f32 %v3117, %v3219
    %v3246 = vadd.f32 %v3124, %v3219
    %v3247 = vadd.f32 %v3131, %v3219
    %v3248 = vadd.f32 %v3138, %v3219
    %v3249 = vadd.f32 %v3145, %v3219
    %v3250 = vadd.f32 %v3152, %v3219
    %v3251 = vadd.f32 %v3159, %v3219
    %v3252 = vadd.f32 %v3166, %v3219
    %v3253 = vadd.f32 %v3173, %v3219
    %v3254 = vadd.f32 %v3180, %v3219
    %v3255 = vadd.f32 %v3187, %v3219
    %v3256 = vadd.f32 %v3194, %v3219
    %v3257 = vadd.f32 %v3201, %v3219
    %v3258 = vadd.f32 %v3208, %v3219
    %v3259 = vadd.f32 %v3215, %v3219
    %v3300 = vcombine.high %v3220, %v3220
    %v3302 = vunpack.c.l.s4 1966171168
    %v3303 = vunpack.c.0.s8 %v3302
    %v3304 = vlaneseq
    %v3305 = vshrl.u32 %v3304, 7
    %v3306 = vsub.s32 %v3303, %v3305
    %v3307 = vrot.slane %v3220, %v3306
    %v3309 = vunpack.c.l.s4 1966171168
    %v3310 = vunpack.c.0.s8 %v3309
    %v3311 = vlaneseq
    %v3312 = vshrl.u32 %v3311, 7
    %v3313 = vsub.s32 %v3310, %v3312
    %v3314 = vrot.slane %v3300, %v3313
    %v3315 = vcombine.high %v3307, %v3307
    %v3316 = vcombine.high %v3314, %v3314
    %v3318 = vunpack.c.l.s4 1966171168
    %v3319 = vunpack.c.0.s8 %v3318
    %v3320 = vlaneseq
    %v3321 = vshrl.u32 %v3320, 7
    %v3322 = vsub.s32 %v3319, %v3321
    %v3323 = vrot.slane %v3307, %v3322
    %v3325 = vunpack.c.l.s4 1966171168
    %v3326 = vunpack.c.0.s8 %v3325
    %v3327 = vlaneseq
    %v3328 = vshrl.u32 %v3327, 7
    %v3329 = vsub.s32 %v3326, %v3328
    %v3330 = vrot.slane %v3314, %v3329
    %v3332 = vunpack.c.l.s4 1966171168
    %v3333 = vunpack.c.0.s8 %v3332
    %v3334 = vlaneseq
    %v3335 = vshrl.u32 %v3334, 7
    %v3336 = vsub.s32 %v3333, %v3335
    %v3337 = vrot.slane %v3315, %v3336
    %v3339 = vunpack.c.l.s4 1966171168
    %v3340 = vunpack.c.0.s8 %v3339
    %v3341 = vlaneseq
    %v3342 = vshrl.u32 %v3341, 7
    %v3343 = vsub.s32 %v3340, %v3342
    %v3344 = vrot.slane %v3316, %v3343
    %v3345 = vcombine.high %v3323, %v3323
    %v3346 = vcombine.high %v3330, %v3330
    %v3347 = vcombine.high %v3337, %v3337
    %v3348 = vcombine.high %v3344, %v3344
    %v3349 = vcombine.high %v3221, %v3221
    %v3351 = vunpack.c.l.s4 1966171168
    %v3352 = vunpack.c.0.s8 %v3351
    %v3353 = vlaneseq
    %v3354 = vshrl.u32 %v3353, 7
    %v3355 = vsub.s32 %v3352, %v3354
    %v3356 = vrot.slane %v3221, %v3355
    %v3358 = vunpack.c.l.s4 1966171168
    %v3359 = vunpack.c.0.s8 %v3358
    %v3360 = vlaneseq
    %v3361 = vshrl.u32 %v3360, 7
    %v3362 = vsub.s32 %v3359, %v3361
    %v3363 = vrot.slane %v3349, %v3362
    %v3364 = vcombine.high %v3356, %v3356
    %v3365 = vcombine.high %v3363, %v3363
    %v3367 = vunpack.c.l.s4 1966171168
    %v3368 = vunpack.c.0.s8 %v3367
    %v3369 = vlaneseq
    %v3370 = vshrl.u32 %v3369, 7
    %v3371 = vsub.s32 %v3368, %v3370
    %v3372 = vrot.slane %v3356, %v3371
    %v3374 = vunpack.c.l.s4 1966171168
    %v3375 = vunpack.c.0.s8 %v3374
    %v3376 = vlaneseq
    %v3377 = vshrl.u32 %v3376, 7
    %v3378 = vsub.s32 %v3375, %v3377
    %v3379 = vrot.slane %v3363, %v3378
    %v3381 = vunpack.c.l.s4 1966171168
    %v3382 = vunpack.c.0.s8 %v3381
    %v3383 = vlaneseq
    %v3384 = vshrl.u32 %v3383, 7
    %v3385 = vsub.s32 %v3382, %v3384
    %v3386 = vrot.slane %v3364, %v3385
    %v3388 = vunpack.c.l.s4 1966171168
    %v3389 = vunpack.c.0.s8 %v3388
    %v3390 = vlaneseq
    %v3391 = vshrl.u32 %v3390, 7
    %v3392 = vsub.s32 %v3389, %v3391
    %v3393 = vrot.slane %v3365, %v3392
    %v3394 = vcombine.high %v3372, %v3372
    %v3395 = vcombine.high %v3379, %v3379
    %v3396 = vcombine.high %v3386, %v3386
    %v3397 = vcombine.high %v3393, %v3393
    %v3398 = vcombine.high %v3222, %v3222
    %v3400 = vunpack.c.l.s4 1966171168
    %v3401 = vunpack.c.0.s8 %v3400
    %v3402 = vlaneseq
    %v3403 = vshrl.u32 %v3402, 7
    %v3404 = vsub.s32 %v3401, %v3403
    %v3405 = vrot.slane %v3222, %v3404
    %v3407 = vunpack.c.l.s4 1966171168
    %v3408 = vunpack.c.0.s8 %v3407
    %v3409 = vlaneseq
    %v3410 = vshrl.u32 %v3409, 7
    %v3411 = vsub.s32 %v3408, %v3410
    %v3412 = vrot.slane %v3398, %v3411
    %v3413 = vcombine.high %v3405, %v3405
    %v3414 = vcombine.high %v3412, %v3412
    %v3416 = vunpack.c.l.s4 1966171168
    %v3417 = vunpack.c.0.s8 %v3416
    %v3418 = vlaneseq
    %v3419 = vshrl.u32 %v3418, 7
    %v3420 = vsub.s32 %v3417, %v3419
    %v3421 = vrot.slane %v3405, %v3420
    %v3423 = vunpack.c.l.s4 1966171168
    %v3424 = vunpack.c.0.s8 %v3423
    %v3425 = vlaneseq
    %v3426 = vshrl.u32 %v3425, 7
    %v3427 = vsub.s32 %v3424, %v3426
    %v3428 = vrot.slane %v3412, %v3427
    %v3430 = vunpack.c.l.s4 1966171168
    %v3431 = vunpack.c.0.s8 %v3430
    %v3432 = vlaneseq
    %v3433 = vshrl.u32 %v3432, 7
    %v3434 = vsub.s32 %v3431, %v3433
    %v3435 = vrot.slane %v3413, %v3434
    %v3437 = vunpack.c.l.s4 1966171168
    %v3438 = vunpack.c.0.s8 %v3437
    %v3439 = vlaneseq
    %v3440 = vshrl.u32 %v3439, 7
    %v3441 = vsub.s32 %v3438, %v3440
    %v3442 = vrot.slane %v3414, %v3441
    %v3443 = vcombine.high %v3421, %v3421
    %v3444 = vcombine.high %v3428, %v3428
    %v3445 = vcombine.high %v3435, %v3435
    %v3446 = vcombine.high %v3442, %v3442
    %v3447 = vcombine.high %v3223, %v3223
    %v3449 = vunpack.c.l.s4 1966171168
    %v3450 = vunpack.c.0.s8 %v3449
    %v3451 = vlaneseq
    %v3452 = vshrl.u32 %v3451, 7
    %v3453 = vsub.s32 %v3450, %v3452
    %v3454 = vrot.slane %v3223, %v3453
    %v3456 = vunpack.c.l.s4 1966171168
    %v3457 = vunpack.c.0.s8 %v3456
    %v3458 = vlaneseq
    %v3459 = vshrl.u32 %v3458, 7
    %v3460 = vsub.s32 %v3457, %v3459
    %v3461 = vrot.slane %v3447, %v3460
    %v3462 = vcombine.high %v3454, %v3454
    %v3463 = vcombine.high %v3461, %v3461
    %v3465 = vunpack.c.l.s4 1966171168
    %v3466 = vunpack.c.0.s8 %v3465
    %v3467 = vlaneseq
    %v3468 = vshrl.u32 %v3467, 7
    %v3469 = vsub.s32 %v3466, %v3468
    %v3470 = vrot.slane %v3454, %v3469
    %v3472 = vunpack.c.l.s4 1966171168
    %v3473 = vunpack.c.0.s8 %v3472
    %v3474 = vlaneseq
    %v3475 = vshrl.u32 %v3474, 7
    %v3476 = vsub.s32 %v3473, %v3475
    %v3477 = vrot.slane %v3461, %v3476
    %v3479 = vunpack.c.l.s4 1966171168
    %v3480 = vunpack.c.0.s8 %v3479
    %v3481 = vlaneseq
    %v3482 = vshrl.u32 %v3481, 7
    %v3483 = vsub.s32 %v3480, %v3482
    %v3484 = vrot.slane %v3462, %v3483
    %v3486 = vunpack.c.l.s4 1966171168
    %v3487 = vunpack.c.0.s8 %v3486
    %v3488 = vlaneseq
    %v3489 = vshrl.u32 %v3488, 7
    %v3490 = vsub.s32 %v3487, %v3489
    %v3491 = vrot.slane %v3463, %v3490
    %v3492 = vcombine.high %v3470, %v3470
    %v3493 = vcombine.high %v3477, %v3477
    %v3494 = vcombine.high %v3484, %v3484
    %v3495 = vcombine.high %v3491, %v3491
    %v3496 = vcombine.high %v3224, %v3224
    %v3498 = vunpack.c.l.s4 1966171168
    %v3499 = vunpack.c.0.s8 %v3498
    %v3500 = vlaneseq
    %v3501 = vshrl.u32 %v3500, 7
    %v3502 = vsub.s32 %v3499, %v3501
    %v3503 = vrot.slane %v3224, %v3502
    %v3505 = vunpack.c.l.s4 1966171168
    %v3506 = vunpack.c.0.s8 %v3505
    %v3507 = vlaneseq
    %v3508 = vshrl.u32 %v3507, 7
    %v3509 = vsub.s32 %v3506, %v3508
    %v3510 = vrot.slane %v3496, %v3509
    %v3511 = vcombine.high %v3503, %v3503
    %v3512 = vcombine.high %v3510, %v3510
    %v3514 = vunpack.c.l.s4 1966171168
    %v3515 = vunpack.c.0.s8 %v3514
    %v3516 = vlaneseq
    %v3517 = vshrl.u32 %v3516, 7
    %v3518 = vsub.s32 %v3515, %v3517
    %v3519 = vrot.slane %v3503, %v3518
    %v3521 = vunpack.c.l.s4 1966171168
    %v3522 = vunpack.c.0.s8 %v3521
    %v3523 = vlaneseq
    %v3524 = vshrl.u32 %v3523, 7
    %v3525 = vsub.s32 %v3522, %v3524
    %v3526 = vrot.slane %v3510, %v3525
    %v3528 = vunpack.c.l.s4 1966171168
    %v3529 = vunpack.c.0.s8 %v3528
    %v3530 = vlaneseq
    %v3531 = vshrl.u32 %v3530, 7
    %v3532 = vsub.s32 %v3529, %v3531
    %v3533 = vrot.slane %v3511, %v3532
    %v3535 = vunpack.c.l.s4 1966171168
    %v3536 = vunpack.c.0.s8 %v3535
    %v3537 = vlaneseq
    %v3538 = vshrl.u32 %v3537, 7
    %v3539 = vsub.s32 %v3536, %v3538
    %v3540 = vrot.slane %v3512, %v3539
    %v3541 = vcombine.high %v3519, %v3519
    %v3542 = vcombine.high %v3526, %v3526
    %v3543 = vcombine.high %v3533, %v3533
    %v3544 = vcombine.high %v3540, %v3540
    %v3545 = vcombine.high %v3225, %v3225
    %v3547 = vunpack.c.l.s4 1966171168
    %v3548 = vunpack.c.0.s8 %v3547
    %v3549 = vlaneseq
    %v3550 = vshrl.u32 %v3549, 7
    %v3551 = vsub.s32 %v3548, %v3550
    %v3552 = vrot.slane %v3225, %v3551
    %v3554 = vunpack.c.l.s4 1966171168
    %v3555 = vunpack.c.0.s8 %v3554
    %v3556 = vlaneseq
    %v3557 = vshrl.u32 %v3556, 7
    %v3558 = vsub.s32 %v3555, %v3557
    %v3559 = vrot.slane %v3545, %v3558
    %v3560 = vcombine.high %v3552, %v3552
    %v3561 = vcombine.high %v3559, %v3559
    %v3563 = vunpack.c.l.s4 1966171168
    %v3564 = vunpack.c.0.s8 %v3563
    %v3565 = vlaneseq
    %v3566 = vshrl.u32 %v3565, 7
    %v3567 = vsub.s32 %v3564, %v3566
    %v3568 = vrot.slane %v3552, %v3567
    %v3570 = vunpack.c.l.s4 1966171168
    %v3571 = vunpack.c.0.s8 %v3570
    %v3572 = vlaneseq
    %v3573 = vshrl.u32 %v3572, 7
    %v3574 = vsub.s32 %v3571, %v3573
    %v3575 = vrot.slane %v3559, %v3574
    %v3577 = vunpack.c.l.s4 1966171168
    %v3578 = vunpack.c.0.s8 %v3577
    %v3579 = vlaneseq
    %v3580 = vshrl.u32 %v3579, 7
    %v3581 = vsub.s32 %v3578, %v3580
    %v3582 = vrot.slane %v3560, %v3581
    %v3584 = vunpack.c.l.s4 1966171168
    %v3585 = vunpack.c.0.s8 %v3584
    %v3586 = vlaneseq
    %v3587 = vshrl.u32 %v3586, 7
    %v3588 = vsub.s32 %v3585, %v3587
    %v3589 = vrot.slane %v3561, %v3588
    %v3590 = vcombine.high %v3568, %v3568
    %v3591 = vcombine.high %v3575, %v3575
    %v3592 = vcombine.high %v3582, %v3582
    %v3593 = vcombine.high %v3589, %v3589
    %v3594 = vcombine.high %v3226, %v3226
    %v3596 = vunpack.c.l.s4 1966171168
    %v3597 = vunpack.c.0.s8 %v3596
    %v3598 = vlaneseq
    %v3599 = vshrl.u32 %v3598, 7
    %v3600 = vsub.s32 %v3597, %v3599
    %v3601 = vrot.slane %v3226, %v3600
    %v3603 = vunpack.c.l.s4 1966171168
    %v3604 = vunpack.c.0.s8 %v3603
    %v3605 = vlaneseq
    %v3606 = vshrl.u32 %v3605, 7
    %v3607 = vsub.s32 %v3604, %v3606
    %v3608 = vrot.slane %v3594, %v3607
    %v3609 = vcombine.high %v3601, %v3601
    %v3610 = vcombine.high %v3608, %v3608
    %v3612 = vunpack.c.l.s4 1966171168
    %v3613 = vunpack.c.0.s8 %v3612
    %v3614 = vlaneseq
    %v3615 = vshrl.u32 %v3614, 7
    %v3616 = vsub.s32 %v3613, %v3615
    %v3617 = vrot.slane %v3601, %v3616
    %v3619 = vunpack.c.l.s4 1966171168
    %v3620 = vunpack.c.0.s8 %v3619
    %v3621 = vlaneseq
    %v3622 = vshrl.u32 %v3621, 7
    %v3623 = vsub.s32 %v3620, %v3622
    %v3624 = vrot.slane %v3608, %v3623
    %v3626 = vunpack.c.l.s4 1966171168
    %v3627 = vunpack.c.0.s8 %v3626
    %v3628 = vlaneseq
    %v3629 = vshrl.u32 %v3628, 7
    %v3630 = vsub.s32 %v3627, %v3629
    %v3631 = vrot.slane %v3609, %v3630
    %v3633 = vunpack.c.l.s4 1966171168
    %v3634 = vunpack.c.0.s8 %v3633
    %v3635 = vlaneseq
    %v3636 = vshrl.u32 %v3635, 7
    %v3637 = vsub.s32 %v3634, %v3636
    %v3638 = vrot.slane %v3610, %v3637
    %v3639 = vcombine.high %v3617, %v3617
    %v3640 = vcombine.high %v3624, %v3624
    %v3641 = vcombine.high %v3631, %v3631
    %v3642 = vcombine.high %v3638, %v3638
    %v3643 = vcombine.high %v3227, %v3227
    %v3645 = vunpack.c.l.s4 1966171168
    %v3646 = vunpack.c.0.s8 %v3645
    %v3647 = vlaneseq
    %v3648 = vshrl.u32 %v3647, 7
    %v3649 = vsub.s32 %v3646, %v3648
    %v3650 = vrot.slane %v3227, %v3649
    %v3652 = vunpack.c.l.s4 1966171168
    %v3653 = vunpack.c.0.s8 %v3652
    %v3654 = vlaneseq
    %v3655 = vshrl.u32 %v3654, 7
    %v3656 = vsub.s32 %v3653, %v3655
    %v3657 = vrot.slane %v3643, %v3656
    %v3658 = vcombine.high %v3650, %v3650
    %v3659 = vcombine.high %v3657, %v3657
    %v3661 = vunpack.c.l.s4 1966171168
    %v3662 = vunpack.c.0.s8 %v3661
    %v3663 = vlaneseq
    %v3664 = vshrl.u32 %v3663, 7
    %v3665 = vsub.s32 %v3662, %v3664
    %v3666 = vrot.slane %v3650, %v3665
    %v3668 = vunpack.c.l.s4 1966171168
    %v3669 = vunpack.c.0.s8 %v3668
    %v3670 = vlaneseq
    %v3671 = vshrl.u32 %v3670, 7
    %v3672 = vsub.s32 %v3669, %v3671
    %v3673 = vrot.slane %v3657, %v3672
    %v3675 = vunpack.c.l.s4 1966171168
    %v3676 = vunpack.c.0.s8 %v3675
    %v3677 = vlaneseq
    %v3678 = vshrl.u32 %v3677, 7
    %v3679 = vsub.s32 %v3676, %v3678
    %v3680 = vrot.slane %v3658, %v3679
    %v3682 = vunpack.c.l.s4 1966171168
    %v3683 = vunpack.c.0.s8 %v3682
    %v3684 = vlaneseq
    %v3685 = vshrl.u32 %v3684, 7
    %v3686 = vsub.s32 %v3683, %v3685
    %v3687 = vrot.slane %v3659, %v3686
    %v3688 = vcombine.high %v3666, %v3666
    %v3689 = vcombine.high %v3673, %v3673
    %v3690 = vcombine.high %v3680, %v3680
    %v3691 = vcombine.high %v3687, %v3687
    %v3692 = vcombine.high %v3228, %v3228
    %v3694 = vunpack.c.l.s4 1966171168
    %v3695 = vunpack.c.0.s8 %v3694
    %v3696 = vlaneseq
    %v3697 = vshrl.u32 %v3696, 7
    %v3698 = vsub.s32 %v3695, %v3697
    %v3699 = vrot.slane %v3228, %v3698
    %v3701 = vunpack.c.l.s4 1966171168
    %v3702 = vunpack.c.0.s8 %v3701
    %v3703 = vlaneseq
    %v3704 = vshrl.u32 %v3703, 7
    %v3705 = vsub.s32 %v3702, %v3704
    %v3706 = vrot.slane %v3692, %v3705
    %v3707 = vcombine.high %v3699, %v3699
    %v3708 = vcombine.high %v3706, %v3706
    %v3710 = vunpack.c.l.s4 1966171168
    %v3711 = vunpack.c.0.s8 %v3710
    %v3712 = vlaneseq
    %v3713 = vshrl.u32 %v3712, 7
    %v3714 = vsub.s32 %v3711, %v3713
    %v3715 = vrot.slane %v3699, %v3714
    %v3717 = vunpack.c.l.s4 1966171168
    %v3718 = vunpack.c.0.s8 %v3717
    %v3719 = vlaneseq
    %v3720 = vshrl.u32 %v3719, 7
    %v3721 = vsub.s32 %v3718, %v3720
    %v3722 = vrot.slane %v3706, %v3721
    %v3724 = vunpack.c.l.s4 1966171168
    %v3725 = vunpack.c.0.s8 %v3724
    %v3726 = vlaneseq
    %v3727 = vshrl.u32 %v3726, 7
    %v3728 = vsub.s32 %v3725, %v3727
    %v3729 = vrot.slane %v3707, %v3728
    %v3731 = vunpack.c.l.s4 1966171168
    %v3732 = vunpack.c.0.s8 %v3731
    %v3733 = vlaneseq
    %v3734 = vshrl.u32 %v3733, 7
    %v3735 = vsub.s32 %v3732, %v3734
    %v3736 = vrot.slane %v3708, %v3735
    %v3737 = vcombine.high %v3715, %v3715
    %v3738 = vcombine.high %v3722, %v3722
    %v3739 = vcombine.high %v3729, %v3729
    %v3740 = vcombine.high %v3736, %v3736
    %v3741 = vcombine.high %v3229, %v3229
    %v3743 = vunpack.c.l.s4 1966171168
    %v3744 = vunpack.c.0.s8 %v3743
    %v3745 = vlaneseq
    %v3746 = vshrl.u32 %v3745, 7
    %v3747 = vsub.s32 %v3744, %v3746
    %v3748 = vrot.slane %v3229, %v3747
    %v3750 = vunpack.c.l.s4 1966171168
    %v3751 = vunpack.c.0.s8 %v3750
    %v3752 = vlaneseq
    %v3753 = vshrl.u32 %v3752, 7
    %v3754 = vsub.s32 %v3751, %v3753
    %v3755 = vrot.slane %v3741, %v3754
    %v3756 = vcombine.high %v3748, %v3748
    %v3757 = vcombine.high %v3755, %v3755
    %v3759 = vunpack.c.l.s4 1966171168
    %v3760 = vunpack.c.0.s8 %v3759
    %v3761 = vlaneseq
    %v3762 = vshrl.u32 %v3761, 7
    %v3763 = vsub.s32 %v3760, %v3762
    %v3764 = vrot.slane %v3748, %v3763
    %v3766 = vunpack.c.l.s4 1966171168
    %v3767 = vunpack.c.0.s8 %v3766
    %v3768 = vlaneseq
    %v3769 = vshrl.u32 %v3768, 7
    %v3770 = vsub.s32 %v3767, %v3769
    %v3771 = vrot.slane %v3755, %v3770
    %v3773 = vunpack.c.l.s4 1966171168
    %v3774 = vunpack.c.0.s8 %v3773
    %v3775 = vlaneseq
    %v3776 = vshrl.u32 %v3775, 7
    %v3777 = vsub.s32 %v3774, %v3776
    %v3778 = vrot.slane %v3756, %v3777
    %v3780 = vunpack.c.l.s4 1966171168
    %v3781 = vunpack.c.0.s8 %v3780
    %v3782 = vlaneseq
    %v3783 = vshrl.u32 %v3782, 7
    %v3784 = vsub.s32 %v3781, %v3783
    %v3785 = vrot.slane %v3757, %v3784
    %v3786 = vcombine.high %v3764, %v3764
    %v3787 = vcombine.high %v3771, %v3771
    %v3788 = vcombine.high %v3778, %v3778
    %v3789 = vcombine.high %v3785, %v3785
    %v3790 = vcombine.high %v3230, %v3230
    %v3792 = vunpack.c.l.s4 1966171168
    %v3793 = vunpack.c.0.s8 %v3792
    %v3794 = vlaneseq
    %v3795 = vshrl.u32 %v3794, 7
    %v3796 = vsub.s32 %v3793, %v3795
    %v3797 = vrot.slane %v3230, %v3796
    %v3799 = vunpack.c.l.s4 1966171168
    %v3800 = vunpack.c.0.s8 %v3799
    %v3801 = vlaneseq
    %v3802 = vshrl.u32 %v3801, 7
    %v3803 = vsub.s32 %v3800, %v3802
    %v3804 = vrot.slane %v3790, %v3803
    %v3805 = vcombine.high %v3797, %v3797
    %v3806 = vcombine.high %v3804, %v3804
    %v3808 = vunpack.c.l.s4 1966171168
    %v3809 = vunpack.c.0.s8 %v3808
    %v3810 = vlaneseq
    %v3811 = vshrl.u32 %v3810, 7
    %v3812 = vsub.s32 %v3809, %v3811
    %v3813 = vrot.slane %v3797, %v3812
    %v3815 = vunpack.c.l.s4 1966171168
    %v3816 = vunpack.c.0.s8 %v3815
    %v3817 = vlaneseq
    %v3818 = vshrl.u32 %v3817, 7
    %v3819 = vsub.s32 %v3816, %v3818
    %v3820 = vrot.slane %v3804, %v3819
    %v3822 = vunpack.c.l.s4 1966171168
    %v3823 = vunpack.c.0.s8 %v3822
    %v3824 = vlaneseq
    %v3825 = vshrl.u32 %v3824, 7
    %v3826 = vsub.s32 %v3823, %v3825
    %v3827 = vrot.slane %v3805, %v3826
    %v3829 = vunpack.c.l.s4 1966171168
    %v3830 = vunpack.c.0.s8 %v3829
    %v3831 = vlaneseq
    %v3832 = vshrl.u32 %v3831, 7
    %v3833 = vsub.s32 %v3830, %v3832
    %v3834 = vrot.slane %v3806, %v3833
    %v3835 = vcombine.high %v3813, %v3813
    %v3836 = vcombine.high %v3820, %v3820
    %v3837 = vcombine.high %v3827, %v3827
    %v3838 = vcombine.high %v3834, %v3834
    %v3839 = vcombine.high %v3231, %v3231
    %v3841 = vunpack.c.l.s4 1966171168
    %v3842 = vunpack.c.0.s8 %v3841
    %v3843 = vlaneseq
    %v3844 = vshrl.u32 %v3843, 7
    %v3845 = vsub.s32 %v3842, %v3844
    %v3846 = vrot.slane %v3231, %v3845
    %v3848 = vunpack.c.l.s4 1966171168
    %v3849 = vunpack.c.0.s8 %v3848
    %v3850 = vlaneseq
    %v3851 = vshrl.u32 %v3850, 7
    %v3852 = vsub.s32 %v3849, %v3851
    %v3853 = vrot.slane %v3839, %v3852
    %v3854 = vcombine.high %v3846, %v3846
    %v3855 = vcombine.high %v3853, %v3853
    %v3857 = vunpack.c.l.s4 1966171168
    %v3858 = vunpack.c.0.s8 %v3857
    %v3859 = vlaneseq
    %v3860 = vshrl.u32 %v3859, 7
    %v3861 = vsub.s32 %v3858, %v3860
    %v3862 = vrot.slane %v3846, %v3861
    %v3864 = vunpack.c.l.s4 1966171168
    %v3865 = vunpack.c.0.s8 %v3864
    %v3866 = vlaneseq
    %v3867 = vshrl.u32 %v3866, 7
    %v3868 = vsub.s32 %v3865, %v3867
    %v3869 = vrot.slane %v3853, %v3868
    %v3871 = vunpack.c.l.s4 1966171168
    %v3872 = vunpack.c.0.s8 %v3871
    %v3873 = vlaneseq
    %v3874 = vshrl.u32 %v3873, 7
    %v3875 = vsub.s32 %v3872, %v3874
    %v3876 = vrot.slane %v3854, %v3875
    %v3878 = vunpack.c.l.s4 1966171168
    %v3879 = vunpack.c.0.s8 %v3878
    %v3880 = vlaneseq
    %v3881 = vshrl.u32 %v3880, 7
    %v3882 = vsub.s32 %v3879, %v3881
    %v3883 = vrot.slane %v3855, %v3882
    %v3884 = vcombine.high %v3862, %v3862
    %v3885 = vcombine.high %v3869, %v3869
    %v3886 = vcombine.high %v3876, %v3876
    %v3887 = vcombine.high %v3883, %v3883
    %v3888 = vcombine.high %v3232, %v3232
    %v3890 = vunpack.c.l.s4 1966171168
    %v3891 = vunpack.c.0.s8 %v3890
    %v3892 = vlaneseq
    %v3893 = vshrl.u32 %v3892, 7
    %v3894 = vsub.s32 %v3891, %v3893
    %v3895 = vrot.slane %v3232, %v3894
    %v3897 = vunpack.c.l.s4 1966171168
    %v3898 = vunpack.c.0.s8 %v3897
    %v3899 = vlaneseq
    %v3900 = vshrl.u32 %v3899, 7
    %v3901 = vsub.s32 %v3898, %v3900
    %v3902 = vrot.slane %v3888, %v3901
    %v3903 = vcombine.high %v3895, %v3895
    %v3904 = vcombine.high %v3902, %v3902
    %v3906 = vunpack.c.l.s4 1966171168
    %v3907 = vunpack.c.0.s8 %v3906
    %v3908 = vlaneseq
    %v3909 = vshrl.u32 %v3908, 7
    %v3910 = vsub.s32 %v3907, %v3909
    %v3911 = vrot.slane %v3895, %v3910
    %v3913 = vunpack.c.l.s4 1966171168
    %v3914 = vunpack.c.0.s8 %v3913
    %v3915 = vlaneseq
    %v3916 = vshrl.u32 %v3915, 7
    %v3917 = vsub.s32 %v3914, %v3916
    %v3918 = vrot.slane %v3902, %v3917
    %v3920 = vunpack.c.l.s4 1966171168
    %v3921 = vunpack.c.0.s8 %v3920
    %v3922 = vlaneseq
    %v3923 = vshrl.u32 %v3922, 7
    %v3924 = vsub.s32 %v3921, %v3923
    %v3925 = vrot.slane %v3903, %v3924
    %v3927 = vunpack.c.l.s4 1966171168
    %v3928 = vunpack.c.0.s8 %v3927
    %v3929 = vlaneseq
    %v3930 = vshrl.u32 %v3929, 7
    %v3931 = vsub.s32 %v3928, %v3930
    %v3932 = vrot.slane %v3904, %v3931
    %v3933 = vcombine.high %v3911, %v3911
    %v3934 = vcombine.high %v3918, %v3918
    %v3935 = vcombine.high %v3925, %v3925
    %v3936 = vcombine.high %v3932, %v3932
    %v3937 = vcombine.high %v3233, %v3233
    %v3939 = vunpack.c.l.s4 1966171168
    %v3940 = vunpack.c.0.s8 %v3939
    %v3941 = vlaneseq
    %v3942 = vshrl.u32 %v3941, 7
    %v3943 = vsub.s32 %v3940, %v3942
    %v3944 = vrot.slane %v3233, %v3943
    %v3946 = vunpack.c.l.s4 1966171168
    %v3947 = vunpack.c.0.s8 %v3946
    %v3948 = vlaneseq
    %v3949 = vshrl.u32 %v3948, 7
    %v3950 = vsub.s32 %v3947, %v3949
    %v3951 = vrot.slane %v3937, %v3950
    %v3952 = vcombine.high %v3944, %v3944
    %v3953 = vcombine.high %v3951, %v3951
    %v3955 = vunpack.c.l.s4 1966171168
    %v3956 = vunpack.c.0.s8 %v3955
    %v3957 = vlaneseq
    %v3958 = vshrl.u32 %v3957, 7
    %v3959 = vsub.s32 %v3956, %v3958
    %v3960 = vrot.slane %v3944, %v3959
    %v3962 = vunpack.c.l.s4 1966171168
    %v3963 = vunpack.c.0.s8 %v3962
    %v3964 = vlaneseq
    %v3965 = vshrl.u32 %v3964, 7
    %v3966 = vsub.s32 %v3963, %v3965
    %v3967 = vrot.slane %v3951, %v3966
    %v3969 = vunpack.c.l.s4 1966171168
    %v3970 = vunpack.c.0.s8 %v3969
    %v3971 = vlaneseq
    %v3972 = vshrl.u32 %v3971, 7
    %v3973 = vsub.s32 %v3970, %v3972
    %v3974 = vrot.slane %v3952, %v3973
    %v3976 = vunpack.c.l.s4 1966171168
    %v3977 = vunpack.c.0.s8 %v3976
    %v3978 = vlaneseq
    %v3979 = vshrl.u32 %v3978, 7
    %v3980 = vsub.s32 %v3977, %v3979
    %v3981 = vrot.slane %v3953, %v3980
    %v3982 = vcombine.high %v3960, %v3960
    %v3983 = vcombine.high %v3967, %v3967
    %v3984 = vcombine.high %v3974, %v3974
    %v3985 = vcombine.high %v3981, %v3981
    %v3986 = vcombine.high %v3234, %v3234
    %v3988 = vunpack.c.l.s4 1966171168
    %v3989 = vunpack.c.0.s8 %v3988
    %v3990 = vlaneseq
    %v3991 = vshrl.u32 %v3990, 7
    %v3992 = vsub.s32 %v3989, %v3991
    %v3993 = vrot.slane %v3234, %v3992
    %v3995 = vunpack.c.l.s4 1966171168
    %v3996 = vunpack.c.0.s8 %v3995
    %v3997 = vlaneseq
    %v3998 = vshrl.u32 %v3997, 7
    %v3999 = vsub.s32 %v3996, %v3998
    %v4000 = vrot.slane %v3986, %v3999
    %v4001 = vcombine.high %v3993, %v3993
    %v4002 = vcombine.high %v4000, %v4000
    %v4004 = vunpack.c.l.s4 1966171168
    %v4005 = vunpack.c.0.s8 %v4004
    %v4006 = vlaneseq
    %v4007 = vshrl.u32 %v4006, 7
    %v4008 = vsub.s32 %v4005, %v4007
    %v4009 = vrot.slane %v3993, %v4008
    %v4011 = vunpack.c.l.s4 1966171168
    %v4012 = vunpack.c.0.s8 %v4011
    %v4013 = vlaneseq
    %v4014 = vshrl.u32 %v4013, 7
    %v4015 = vsub.s32 %v4012, %v4014
    %v4016 = vrot.slane %v4000, %v4015
    %v4018 = vunpack.c.l.s4 1966171168
    %v4019 = vunpack.c.0.s8 %v4018
    %v4020 = vlaneseq
    %v4021 = vshrl.u32 %v4020, 7
    %v4022 = vsub.s32 %v4019, %v4021
    %v4023 = vrot.slane %v4001, %v4022
    %v4025 = vunpack.c.l.s4 1966171168
    %v4026 = vunpack.c.0.s8 %v4025
    %v4027 = vlaneseq
    %v4028 = vshrl.u32 %v4027, 7
    %v4029 = vsub.s32 %v4026, %v4028
    %v4030 = vrot.slane %v4002, %v4029
    %v4031 = vcombine.high %v4009, %v4009
    %v4032 = vcombine.high %v4016, %v4016
    %v4033 = vcombine.high %v4023, %v4023
    %v4034 = vcombine.high %v4030, %v4030
    %v4035 = vcombine.high %v3235, %v3235
    %v4037 = vunpack.c.l.s4 1966171168
    %v4038 = vunpack.c.0.s8 %v4037
    %v4039 = vlaneseq
    %v4040 = vshrl.u32 %v4039, 7
    %v4041 = vsub.s32 %v4038, %v4040
    %v4042 = vrot.slane %v3235, %v4041
    %v4044 = vunpack.c.l.s4 1966171168
    %v4045 = vunpack.c.0.s8 %v4044
    %v4046 = vlaneseq
    %v4047 = vshrl.u32 %v4046, 7
    %v4048 = vsub.s32 %v4045, %v4047
    %v4049 = vrot.slane %v4035, %v4048
    %v4050 = vcombine.high %v4042, %v4042
    %v4051 = vcombine.high %v4049, %v4049
    %v4053 = vunpack.c.l.s4 1966171168
    %v4054 = vunpack.c.0.s8 %v4053
    %v4055 = vlaneseq
    %v4056 = vshrl.u32 %v4055, 7
    %v4057 = vsub.s32 %v4054, %v4056
    %v4058 = vrot.slane %v4042, %v4057
    %v4060 = vunpack.c.l.s4 1966171168
    %v4061 = vunpack.c.0.s8 %v4060
    %v4062 = vlaneseq
    %v4063 = vshrl.u32 %v4062, 7
    %v4064 = vsub.s32 %v4061, %v4063
    %v4065 = vrot.slane %v4049, %v4064
    %v4067 = vunpack.c.l.s4 1966171168
    %v4068 = vunpack.c.0.s8 %v4067
    %v4069 = vlaneseq
    %v4070 = vshrl.u32 %v4069, 7
    %v4071 = vsub.s32 %v4068, %v4070
    %v4072 = vrot.slane %v4050, %v4071
    %v4074 = vunpack.c.l.s4 1966171168
    %v4075 = vunpack.c.0.s8 %v4074
    %v4076 = vlaneseq
    %v4077 = vshrl.u32 %v4076, 7
    %v4078 = vsub.s32 %v4075, %v4077
    %v4079 = vrot.slane %v4051, %v4078
    %v4080 = vcombine.high %v4058, %v4058
    %v4081 = vcombine.high %v4065, %v4065
    %v4082 = vcombine.high %v4072, %v4072
    %v4083 = vcombine.high %v4079, %v4079
    %v4084 = vcombine.high %v3236, %v3236
    %v4086 = vunpack.c.l.s4 1966171168
    %v4087 = vunpack.c.0.s8 %v4086
    %v4088 = vlaneseq
    %v4089 = vshrl.u32 %v4088, 7
    %v4090 = vsub.s32 %v4087, %v4089
    %v4091 = vrot.slane %v3236, %v4090
    %v4093 = vunpack.c.l.s4 1966171168
    %v4094 = vunpack.c.0.s8 %v4093
    %v4095 = vlaneseq
    %v4096 = vshrl.u32 %v4095, 7
    %v4097 = vsub.s32 %v4094, %v4096
    %v4098 = vrot.slane %v4084, %v4097
    %v4099 = vcombine.high %v4091, %v4091
    %v4100 = vcombine.high %v4098, %v4098
    %v4102 = vunpack.c.l.s4 1966171168
    %v4103 = vunpack.c.0.s8 %v4102
    %v4104 = vlaneseq
    %v4105 = vshrl.u32 %v4104, 7
    %v4106 = vsub.s32 %v4103, %v4105
    %v4107 = vrot.slane %v4091, %v4106
    %v4109 = vunpack.c.l.s4 1966171168
    %v4110 = vunpack.c.0.s8 %v4109
    %v4111 = vlaneseq
    %v4112 = vshrl.u32 %v4111, 7
    %v4113 = vsub.s32 %v4110, %v4112
    %v4114 = vrot.slane %v4098, %v4113
    %v4116 = vunpack.c.l.s4 1966171168
    %v4117 = vunpack.c.0.s8 %v4116
    %v4118 = vlaneseq
    %v4119 = vshrl.u32 %v4118, 7
    %v4120 = vsub.s32 %v4117, %v4119
    %v4121 = vrot.slane %v4099, %v4120
    %v4123 = vunpack.c.l.s4 1966171168
    %v4124 = vunpack.c.0.s8 %v4123
    %v4125 = vlaneseq
    %v4126 = vshrl.u32 %v4125, 7
    %v4127 = vsub.s32 %v4124, %v4126
    %v4128 = vrot.slane %v4100, %v4127
    %v4129 = vcombine.high %v4107, %v4107
    %v4130 = vcombine.high %v4114, %v4114
    %v4131 = vcombine.high %v4121, %v4121
    %v4132 = vcombine.high %v4128, %v4128
    %v4133 = vcombine.high %v3237, %v3237
    %v4135 = vunpack.c.l.s4 1966171168
    %v4136 = vunpack.c.0.s8 %v4135
    %v4137 = vlaneseq
    %v4138 = vshrl.u32 %v4137, 7
    %v4139 = vsub.s32 %v4136, %v4138
    %v4140 = vrot.slane %v3237, %v4139
    %v4142 = vunpack.c.l.s4 1966171168
    %v4143 = vunpack.c.0.s8 %v4142
    %v4144 = vlaneseq
    %v4145 = vshrl.u32 %v4144, 7
    %v4146 = vsub.s32 %v4143, %v4145
    %v4147 = vrot.slane %v4133, %v4146
    %v4148 = vcombine.high %v4140, %v4140
    %v4149 = vcombine.high %v4147, %v4147
    %v4151 = vunpack.c.l.s4 1966171168
    %v4152 = vunpack.c.0.s8 %v4151
    %v4153 = vlaneseq
    %v4154 = vshrl.u32 %v4153, 7
    %v4155 = vsub.s32 %v4152, %v4154
    %v4156 = vrot.slane %v4140, %v4155
    %v4158 = vunpack.c.l.s4 1966171168
    %v4159 = vunpack.c.0.s8 %v4158
    %v4160 = vlaneseq
    %v4161 = vshrl.u32 %v4160, 7
    %v4162 = vsub.s32 %v4159, %v4161
    %v4163 = vrot.slane %v4147, %v4162
    %v4165 = vunpack.c.l.s4 1966171168
    %v4166 = vunpack.c.0.s8 %v4165
    %v4167 = vlaneseq
    %v4168 = vshrl.u32 %v4167, 7
    %v4169 = vsub.s32 %v4166, %v4168
    %v4170 = vrot.slane %v4148, %v4169
    %v4172 = vunpack.c.l.s4 1966171168
    %v4173 = vunpack.c.0.s8 %v4172
    %v4174 = vlaneseq
    %v4175 = vshrl.u32 %v4174, 7
    %v4176 = vsub.s32 %v4173, %v4175
    %v4177 = vrot.slane %v4149, %v4176
    %v4178 = vcombine.high %v4156, %v4156
    %v4179 = vcombine.high %v4163, %v4163
    %v4180 = vcombine.high %v4170, %v4170
    %v4181 = vcombine.high %v4177, %v4177
    %v4182 = vcombine.high %v3238, %v3238
    %v4184 = vunpack.c.l.s4 1966171168
    %v4185 = vunpack.c.0.s8 %v4184
    %v4186 = vlaneseq
    %v4187 = vshrl.u32 %v4186, 7
    %v4188 = vsub.s32 %v4185, %v4187
    %v4189 = vrot.slane %v3238, %v4188
    %v4191 = vunpack.c.l.s4 1966171168
    %v4192 = vunpack.c.0.s8 %v4191
    %v4193 = vlaneseq
    %v4194 = vshrl.u32 %v4193, 7
    %v4195 = vsub.s32 %v4192, %v4194
    %v4196 = vrot.slane %v4182, %v4195
    %v4197 = vcombine.high %v4189, %v4189
    %v4198 = vcombine.high %v4196, %v4196
    %v4200 = vunpack.c.l.s4 1966171168
    %v4201 = vunpack.c.0.s8 %v4200
    %v4202 = vlaneseq
    %v4203 = vshrl.u32 %v4202, 7
    %v4204 = vsub.s32 %v4201, %v4203
    %v4205 = vrot.slane %v4189, %v4204
    %v4207 = vunpack.c.l.s4 1966171168
    %v4208 = vunpack.c.0.s8 %v4207
    %v4209 = vlaneseq
    %v4210 = vshrl.u32 %v4209, 7
    %v4211 = vsub.s32 %v4208, %v4210
    %v4212 = vrot.slane %v4196, %v4211
    %v4214 = vunpack.c.l.s4 1966171168
    %v4215 = vunpack.c.0.s8 %v4214
    %v4216 = vlaneseq
    %v4217 = vshrl.u32 %v4216, 7
    %v4218 = vsub.s32 %v4215, %v4217
    %v4219 = vrot.slane %v4197, %v4218
    %v4221 = vunpack.c.l.s4 1966171168
    %v4222 = vunpack.c.0.s8 %v4221
    %v4223 = vlaneseq
    %v4224 = vshrl.u32 %v4223, 7
    %v4225 = vsub.s32 %v4222, %v4224
    %v4226 = vrot.slane %v4198, %v4225
    %v4227 = vcombine.high %v4205, %v4205
    %v4228 = vcombine.high %v4212, %v4212
    %v4229 = vcombine.high %v4219, %v4219
    %v4230 = vcombine.high %v4226, %v4226
    %v4231 = vcombine.high %v3239, %v3239
    %v4233 = vunpack.c.l.s4 1966171168
    %v4234 = vunpack.c.0.s8 %v4233
    %v4235 = vlaneseq
    %v4236 = vshrl.u32 %v4235, 7
    %v4237 = vsub.s32 %v4234, %v4236
    %v4238 = vrot.slane %v3239, %v4237
    %v4240 = vunpack.c.l.s4 1966171168
    %v4241 = vunpack.c.0.s8 %v4240
    %v4242 = vlaneseq
    %v4243 = vshrl.u32 %v4242, 7
    %v4244 = vsub.s32 %v4241, %v4243
    %v4245 = vrot.slane %v4231, %v4244
    %v4246 = vcombine.high %v4238, %v4238
    %v4247 = vcombine.high %v4245, %v4245
    %v4249 = vunpack.c.l.s4 1966171168
    %v4250 = vunpack.c.0.s8 %v4249
    %v4251 = vlaneseq
    %v4252 = vshrl.u32 %v4251, 7
    %v4253 = vsub.s32 %v4250, %v4252
    %v4254 = vrot.slane %v4238, %v4253
    %v4256 = vunpack.c.l.s4 1966171168
    %v4257 = vunpack.c.0.s8 %v4256
    %v4258 = vlaneseq
    %v4259 = vshrl.u32 %v4258, 7
    %v4260 = vsub.s32 %v4257, %v4259
    %v4261 = vrot.slane %v4245, %v4260
    %v4263 = vunpack.c.l.s4 1966171168
    %v4264 = vunpack.c.0.s8 %v4263
    %v4265 = vlaneseq
    %v4266 = vshrl.u32 %v4265, 7
    %v4267 = vsub.s32 %v4264, %v4266
    %v4268 = vrot.slane %v4246, %v4267
    %v4270 = vunpack.c.l.s4 1966171168
    %v4271 = vunpack.c.0.s8 %v4270
    %v4272 = vlaneseq
    %v4273 = vshrl.u32 %v4272, 7
    %v4274 = vsub.s32 %v4271, %v4273
    %v4275 = vrot.slane %v4247, %v4274
    %v4276 = vcombine.high %v4254, %v4254
    %v4277 = vcombine.high %v4261, %v4261
    %v4278 = vcombine.high %v4268, %v4268
    %v4279 = vcombine.high %v4275, %v4275
    %v4280 = vcombine.high %v3240, %v3240
    %v4282 = vunpack.c.l.s4 1966171168
    %v4283 = vunpack.c.0.s8 %v4282
    %v4284 = vlaneseq
    %v4285 = vshrl.u32 %v4284, 7
    %v4286 = vsub.s32 %v4283, %v4285
    %v4287 = vrot.slane %v3240, %v4286
    %v4289 = vunpack.c.l.s4 1966171168
    %v4290 = vunpack.c.0.s8 %v4289
    %v4291 = vlaneseq
    %v4292 = vshrl.u32 %v4291, 7
    %v4293 = vsub.s32 %v4290, %v4292
    %v4294 = vrot.slane %v4280, %v4293
    %v4295 = vcombine.high %v4287, %v4287
    %v4296 = vcombine.high %v4294, %v4294
    %v4298 = vunpack.c.l.s4 1966171168
    %v4299 = vunpack.c.0.s8 %v4298
    %v4300 = vlaneseq
    %v4301 = vshrl.u32 %v4300, 7
    %v4302 = vsub.s32 %v4299, %v4301
    %v4303 = vrot.slane %v4287, %v4302
    %v4305 = vunpack.c.l.s4 1966171168
    %v4306 = vunpack.c.0.s8 %v4305
    %v4307 = vlaneseq
    %v4308 = vshrl.u32 %v4307, 7
    %v4309 = vsub.s32 %v4306, %v4308
    %v4310 = vrot.slane %v4294, %v4309
    %v4312 = vunpack.c.l.s4 1966171168
    %v4313 = vunpack.c.0.s8 %v4312
    %v4314 = vlaneseq
    %v4315 = vshrl.u32 %v4314, 7
    %v4316 = vsub.s32 %v4313, %v4315
    %v4317 = vrot.slane %v4295, %v4316
    %v4319 = vunpack.c.l.s4 1966171168
    %v4320 = vunpack.c.0.s8 %v4319
    %v4321 = vlaneseq
    %v4322 = vshrl.u32 %v4321, 7
    %v4323 = vsub.s32 %v4320, %v4322
    %v4324 = vrot.slane %v4296, %v4323
    %v4325 = vcombine.high %v4303, %v4303
    %v4326 = vcombine.high %v4310, %v4310
    %v4327 = vcombine.high %v4317, %v4317
    %v4328 = vcombine.high %v4324, %v4324
    %v4329 = vcombine.high %v3241, %v3241
    %v4331 = vunpack.c.l.s4 1966171168
    %v4332 = vunpack.c.0.s8 %v4331
    %v4333 = vlaneseq
    %v4334 = vshrl.u32 %v4333, 7
    %v4335 = vsub.s32 %v4332, %v4334
    %v4336 = vrot.slane %v3241, %v4335
    %v4338 = vunpack.c.l.s4 1966171168
    %v4339 = vunpack.c.0.s8 %v4338
    %v4340 = vlaneseq
    %v4341 = vshrl.u32 %v4340, 7
    %v4342 = vsub.s32 %v4339, %v4341
    %v4343 = vrot.slane %v4329, %v4342
    %v4344 = vcombine.high %v4336, %v4336
    %v4345 = vcombine.high %v4343, %v4343
    %v4347 = vunpack.c.l.s4 1966171168
    %v4348 = vunpack.c.0.s8 %v4347
    %v4349 = vlaneseq
    %v4350 = vshrl.u32 %v4349, 7
    %v4351 = vsub.s32 %v4348, %v4350
    %v4352 = vrot.slane %v4336, %v4351
    %v4354 = vunpack.c.l.s4 1966171168
    %v4355 = vunpack.c.0.s8 %v4354
    %v4356 = vlaneseq
    %v4357 = vshrl.u32 %v4356, 7
    %v4358 = vsub.s32 %v4355, %v4357
    %v4359 = vrot.slane %v4343, %v4358
    %v4361 = vunpack.c.l.s4 1966171168
    %v4362 = vunpack.c.0.s8 %v4361
    %v4363 = vlaneseq
    %v4364 = vshrl.u32 %v4363, 7
    %v4365 = vsub.s32 %v4362, %v4364
    %v4366 = vrot.slane %v4344, %v4365
    %v4368 = vunpack.c.l.s4 1966171168
    %v4369 = vunpack.c.0.s8 %v4368
    %v4370 = vlaneseq
    %v4371 = vshrl.u32 %v4370, 7
    %v4372 = vsub.s32 %v4369, %v4371
    %v4373 = vrot.slane %v4345, %v4372
    %v4374 = vcombine.high %v4352, %v4352
    %v4375 = vcombine.high %v4359, %v4359
    %v4376 = vcombine.high %v4366, %v4366
    %v4377 = vcombine.high %v4373, %v4373
    %v4378 = vcombine.high %v3242, %v3242
    %v4380 = vunpack.c.l.s4 1966171168
    %v4381 = vunpack.c.0.s8 %v4380
    %v4382 = vlaneseq
    %v4383 = vshrl.u32 %v4382, 7
    %v4384 = vsub.s32 %v4381, %v4383
    %v4385 = vrot.slane %v3242, %v4384
    %v4387 = vunpack.c.l.s4 1966171168
    %v4388 = vunpack.c.0.s8 %v4387
    %v4389 = vlaneseq
    %v4390 = vshrl.u32 %v4389, 7
    %v4391 = vsub.s32 %v4388, %v4390
    %v4392 = vrot.slane %v4378, %v4391
    %v4393 = vcombine.high %v4385, %v4385
    %v4394 = vcombine.high %v4392, %v4392
    %v4396 = vunpack.c.l.s4 1966171168
    %v4397 = vunpack.c.0.s8 %v4396
    %v4398 = vlaneseq
    %v4399 = vshrl.u32 %v4398, 7
    %v4400 = vsub.s32 %v4397, %v4399
    %v4401 = vrot.slane %v4385, %v4400
    %v4403 = vunpack.c.l.s4 1966171168
    %v4404 = vunpack.c.0.s8 %v4403
    %v4405 = vlaneseq
    %v4406 = vshrl.u32 %v4405, 7
    %v4407 = vsub.s32 %v4404, %v4406
    %v4408 = vrot.slane %v4392, %v4407
    %v4410 = vunpack.c.l.s4 1966171168
    %v4411 = vunpack.c.0.s8 %v4410
    %v4412 = vlaneseq
    %v4413 = vshrl.u32 %v4412, 7
    %v4414 = vsub.s32 %v4411, %v4413
    %v4415 = vrot.slane %v4393, %v4414
    %v4417 = vunpack.c.l.s4 1966171168
    %v4418 = vunpack.c.0.s8 %v4417
    %v4419 = vlaneseq
    %v4420 = vshrl.u32 %v4419, 7
    %v4421 = vsub.s32 %v4418, %v4420
    %v4422 = vrot.slane %v4394, %v4421
    %v4423 = vcombine.high %v4401, %v4401
    %v4424 = vcombine.high %v4408, %v4408
    %v4425 = vcombine.high %v4415, %v4415
    %v4426 = vcombine.high %v4422, %v4422
    %v4427 = vcombine.high %v3243, %v3243
    %v4429 = vunpack.c.l.s4 1966171168
    %v4430 = vunpack.c.0.s8 %v4429
    %v4431 = vlaneseq
    %v4432 = vshrl.u32 %v4431, 7
    %v4433 = vsub.s32 %v4430, %v4432
    %v4434 = vrot.slane %v3243, %v4433
    %v4436 = vunpack.c.l.s4 1966171168
    %v4437 = vunpack.c.0.s8 %v4436
    %v4438 = vlaneseq
    %v4439 = vshrl.u32 %v4438, 7
    %v4440 = vsub.s32 %v4437, %v4439
    %v4441 = vrot.slane %v4427, %v4440
    %v4442 = vcombine.high %v4434, %v4434
    %v4443 = vcombine.high %v4441, %v4441
    %v4445 = vunpack.c.l.s4 1966171168
    %v4446 = vunpack.c.0.s8 %v4445
    %v4447 = vlaneseq
    %v4448 = vshrl.u32 %v4447, 7
    %v4449 = vsub.s32 %v4446, %v4448
    %v4450 = vrot.slane %v4434, %v4449
    %v4452 = vunpack.c.l.s4 1966171168
    %v4453 = vunpack.c.0.s8 %v4452
    %v4454 = vlaneseq
    %v4455 = vshrl.u32 %v4454, 7
    %v4456 = vsub.s32 %v4453, %v4455
    %v4457 = vrot.slane %v4441, %v4456
    %v4459 = vunpack.c.l.s4 1966171168
    %v4460 = vunpack.c.0.s8 %v4459
    %v4461 = vlaneseq
    %v4462 = vshrl.u32 %v4461, 7
    %v4463 = vsub.s32 %v4460, %v4462
    %v4464 = vrot.slane %v4442, %v4463
    %v4466 = vunpack.c.l.s4 1966171168
    %v4467 = vunpack.c.0.s8 %v4466
    %v4468 = vlaneseq
    %v4469 = vshrl.u32 %v4468, 7
    %v4470 = vsub.s32 %v4467, %v4469
    %v4471 = vrot.slane %v4443, %v4470
    %v4472 = vcombine.high %v4450, %v4450
    %v4473 = vcombine.high %v4457, %v4457
    %v4474 = vcombine.high %v4464, %v4464
    %v4475 = vcombine.high %v4471, %v4471
    %v4476 = vcombine.high %v3244, %v3244
    %v4478 = vunpack.c.l.s4 1966171168
    %v4479 = vunpack.c.0.s8 %v4478
    %v4480 = vlaneseq
    %v4481 = vshrl.u32 %v4480, 7
    %v4482 = vsub.s32 %v4479, %v4481
    %v4483 = vrot.slane %v3244, %v4482
    %v4485 = vunpack.c.l.s4 1966171168
    %v4486 = vunpack.c.0.s8 %v4485
    %v4487 = vlaneseq
    %v4488 = vshrl.u32 %v4487, 7
    %v4489 = vsub.s32 %v4486, %v4488
    %v4490 = vrot.slane %v4476, %v4489
    %v4491 = vcombine.high %v4483, %v4483
    %v4492 = vcombine.high %v4490, %v4490
    %v4494 = vunpack.c.l.s4 1966171168
    %v4495 = vunpack.c.0.s8 %v4494
    %v4496 = vlaneseq
    %v4497 = vshrl.u32 %v4496, 7
    %v4498 = vsub.s32 %v4495, %v4497
    %v4499 = vrot.slane %v4483, %v4498
    %v4501 = vunpack.c.l.s4 1966171168
    %v4502 = vunpack.c.0.s8 %v4501
    %v4503 = vlaneseq
    %v4504 = vshrl.u32 %v4503, 7
    %v4505 = vsub.s32 %v4502, %v4504
    %v4506 = vrot.slane %v4490, %v4505
    %v4508 = vunpack.c.l.s4 1966171168
    %v4509 = vunpack.c.0.s8 %v4508
    %v4510 = vlaneseq
    %v4511 = vshrl.u32 %v4510, 7
    %v4512 = vsub.s32 %v4509, %v4511
    %v4513 = vrot.slane %v4491, %v4512
    %v4515 = vunpack.c.l.s4 1966171168
    %v4516 = vunpack.c.0.s8 %v4515
    %v4517 = vlaneseq
    %v4518 = vshrl.u32 %v4517, 7
    %v4519 = vsub.s32 %v4516, %v4518
    %v4520 = vrot.slane %v4492, %v4519
    %v4521 = vcombine.high %v4499, %v4499
    %v4522 = vcombine.high %v4506, %v4506
    %v4523 = vcombine.high %v4513, %v4513
    %v4524 = vcombine.high %v4520, %v4520
    %v4525 = vcombine.high %v3245, %v3245
    %v4527 = vunpack.c.l.s4 1966171168
    %v4528 = vunpack.c.0.s8 %v4527
    %v4529 = vlaneseq
    %v4530 = vshrl.u32 %v4529, 7
    %v4531 = vsub.s32 %v4528, %v4530
    %v4532 = vrot.slane %v3245, %v4531
    %v4534 = vunpack.c.l.s4 1966171168
    %v4535 = vunpack.c.0.s8 %v4534
    %v4536 = vlaneseq
    %v4537 = vshrl.u32 %v4536, 7
    %v4538 = vsub.s32 %v4535, %v4537
    %v4539 = vrot.slane %v4525, %v4538
    %v4540 = vcombine.high %v4532, %v4532
    %v4541 = vcombine.high %v4539, %v4539
    %v4543 = vunpack.c.l.s4 1966171168
    %v4544 = vunpack.c.0.s8 %v4543
    %v4545 = vlaneseq
    %v4546 = vshrl.u32 %v4545, 7
    %v4547 = vsub.s32 %v4544, %v4546
    %v4548 = vrot.slane %v4532, %v4547
    %v4550 = vunpack.c.l.s4 1966171168
    %v4551 = vunpack.c.0.s8 %v4550
    %v4552 = vlaneseq
    %v4553 = vshrl.u32 %v4552, 7
    %v4554 = vsub.s32 %v4551, %v4553
    %v4555 = vrot.slane %v4539, %v4554
    %v4557 = vunpack.c.l.s4 1966171168
    %v4558 = vunpack.c.0.s8 %v4557
    %v4559 = vlaneseq
    %v4560 = vshrl.u32 %v4559, 7
    %v4561 = vsub.s32 %v4558, %v4560
    %v4562 = vrot.slane %v4540, %v4561
    %v4564 = vunpack.c.l.s4 1966171168
    %v4565 = vunpack.c.0.s8 %v4564
    %v4566 = vlaneseq
    %v4567 = vshrl.u32 %v4566, 7
    %v4568 = vsub.s32 %v4565, %v4567
    %v4569 = vrot.slane %v4541, %v4568
    %v4570 = vcombine.high %v4548, %v4548
    %v4571 = vcombine.high %v4555, %v4555
    %v4572 = vcombine.high %v4562, %v4562
    %v4573 = vcombine.high %v4569, %v4569
    %v4574 = vcombine.high %v3246, %v3246
    %v4576 = vunpack.c.l.s4 1966171168
    %v4577 = vunpack.c.0.s8 %v4576
    %v4578 = vlaneseq
    %v4579 = vshrl.u32 %v4578, 7
    %v4580 = vsub.s32 %v4577, %v4579
    %v4581 = vrot.slane %v3246, %v4580
    %v4583 = vunpack.c.l.s4 1966171168
    %v4584 = vunpack.c.0.s8 %v4583
    %v4585 = vlaneseq
    %v4586 = vshrl.u32 %v4585, 7
    %v4587 = vsub.s32 %v4584, %v4586
    %v4588 = vrot.slane %v4574, %v4587
    %v4589 = vcombine.high %v4581, %v4581
    %v4590 = vcombine.high %v4588, %v4588
    %v4592 = vunpack.c.l.s4 1966171168
    %v4593 = vunpack.c.0.s8 %v4592
    %v4594 = vlaneseq
    %v4595 = vshrl.u32 %v4594, 7
    %v4596 = vsub.s32 %v4593, %v4595
    %v4597 = vrot.slane %v4581, %v4596
    %v4599 = vunpack.c.l.s4 1966171168
    %v4600 = vunpack.c.0.s8 %v4599
    %v4601 = vlaneseq
    %v4602 = vshrl.u32 %v4601, 7
    %v4603 = vsub.s32 %v4600, %v4602
    %v4604 = vrot.slane %v4588, %v4603
    %v4606 = vunpack.c.l.s4 1966171168
    %v4607 = vunpack.c.0.s8 %v4606
    %v4608 = vlaneseq
    %v4609 = vshrl.u32 %v4608, 7
    %v4610 = vsub.s32 %v4607, %v4609
    %v4611 = vrot.slane %v4589, %v4610
    %v4613 = vunpack.c.l.s4 1966171168
    %v4614 = vunpack.c.0.s8 %v4613
    %v4615 = vlaneseq
    %v4616 = vshrl.u32 %v4615, 7
    %v4617 = vsub.s32 %v4614, %v4616
    %v4618 = vrot.slane %v4590, %v4617
    %v4619 = vcombine.high %v4597, %v4597
    %v4620 = vcombine.high %v4604, %v4604
    %v4621 = vcombine.high %v4611, %v4611
    %v4622 = vcombine.high %v4618, %v4618
    %v4623 = vcombine.high %v3247, %v3247
    %v4625 = vunpack.c.l.s4 1966171168
    %v4626 = vunpack.c.0.s8 %v4625
    %v4627 = vlaneseq
    %v4628 = vshrl.u32 %v4627, 7
    %v4629 = vsub.s32 %v4626, %v4628
    %v4630 = vrot.slane %v3247, %v4629
    %v4632 = vunpack.c.l.s4 1966171168
    %v4633 = vunpack.c.0.s8 %v4632
    %v4634 = vlaneseq
    %v4635 = vshrl.u32 %v4634, 7
    %v4636 = vsub.s32 %v4633, %v4635
    %v4637 = vrot.slane %v4623, %v4636
    %v4638 = vcombine.high %v4630, %v4630
    %v4639 = vcombine.high %v4637, %v4637
    %v4641 = vunpack.c.l.s4 1966171168
    %v4642 = vunpack.c.0.s8 %v4641
    %v4643 = vlaneseq
    %v4644 = vshrl.u32 %v4643, 7
    %v4645 = vsub.s32 %v4642, %v4644
    %v4646 = vrot.slane %v4630, %v4645
    %v4648 = vunpack.c.l.s4 1966171168
    %v4649 = vunpack.c.0.s8 %v4648
    %v4650 = vlaneseq
    %v4651 = vshrl.u32 %v4650, 7
    %v4652 = vsub.s32 %v4649, %v4651
    %v4653 = vrot.slane %v4637, %v4652
    %v4655 = vunpack.c.l.s4 1966171168
    %v4656 = vunpack.c.0.s8 %v4655
    %v4657 = vlaneseq
    %v4658 = vshrl.u32 %v4657, 7
    %v4659 = vsub.s32 %v4656, %v4658
    %v4660 = vrot.slane %v4638, %v4659
    %v4662 = vunpack.c.l.s4 1966171168
    %v4663 = vunpack.c.0.s8 %v4662
    %v4664 = vlaneseq
    %v4665 = vshrl.u32 %v4664, 7
    %v4666 = vsub.s32 %v4663, %v4665
    %v4667 = vrot.slane %v4639, %v4666
    %v4668 = vcombine.high %v4646, %v4646
    %v4669 = vcombine.high %v4653, %v4653
    %v4670 = vcombine.high %v4660, %v4660
    %v4671 = vcombine.high %v4667, %v4667
    %v4672 = vcombine.high %v3248, %v3248
    %v4674 = vunpack.c.l.s4 1966171168
    %v4675 = vunpack.c.0.s8 %v4674
    %v4676 = vlaneseq
    %v4677 = vshrl.u32 %v4676, 7
    %v4678 = vsub.s32 %v4675, %v4677
    %v4679 = vrot.slane %v3248, %v4678
    %v4681 = vunpack.c.l.s4 1966171168
    %v4682 = vunpack.c.0.s8 %v4681
    %v4683 = vlaneseq
    %v4684 = vshrl.u32 %v4683, 7
    %v4685 = vsub.s32 %v4682, %v4684
    %v4686 = vrot.slane %v4672, %v4685
    %v4687 = vcombine.high %v4679, %v4679
    %v4688 = vcombine.high %v4686, %v4686
    %v4690 = vunpack.c.l.s4 1966171168
    %v4691 = vunpack.c.0.s8 %v4690
    %v4692 = vlaneseq
    %v4693 = vshrl.u32 %v4692, 7
    %v4694 = vsub.s32 %v4691, %v4693
    %v4695 = vrot.slane %v4679, %v4694
    %v4697 = vunpack.c.l.s4 1966171168
    %v4698 = vunpack.c.0.s8 %v4697
    %v4699 = vlaneseq
    %v4700 = vshrl.u32 %v4699, 7
    %v4701 = vsub.s32 %v4698, %v4700
    %v4702 = vrot.slane %v4686, %v4701
    %v4704 = vunpack.c.l.s4 1966171168
    %v4705 = vunpack.c.0.s8 %v4704
    %v4706 = vlaneseq
    %v4707 = vshrl.u32 %v4706, 7
    %v4708 = vsub.s32 %v4705, %v4707
    %v4709 = vrot.slane %v4687, %v4708
    %v4711 = vunpack.c.l.s4 1966171168
    %v4712 = vunpack.c.0.s8 %v4711
    %v4713 = vlaneseq
    %v4714 = vshrl.u32 %v4713, 7
    %v4715 = vsub.s32 %v4712, %v4714
    %v4716 = vrot.slane %v4688, %v4715
    %v4717 = vcombine.high %v4695, %v4695
    %v4718 = vcombine.high %v4702, %v4702
    %v4719 = vcombine.high %v4709, %v4709
    %v4720 = vcombine.high %v4716, %v4716
    %v4721 = vcombine.high %v3249, %v3249
    %v4723 = vunpack.c.l.s4 1966171168
    %v4724 = vunpack.c.0.s8 %v4723
    %v4725 = vlaneseq
    %v4726 = vshrl.u32 %v4725, 7
    %v4727 = vsub.s32 %v4724, %v4726
    %v4728 = vrot.slane %v3249, %v4727
    %v4730 = vunpack.c.l.s4 1966171168
    %v4731 = vunpack.c.0.s8 %v4730
    %v4732 = vlaneseq
    %v4733 = vshrl.u32 %v4732, 7
    %v4734 = vsub.s32 %v4731, %v4733
    %v4735 = vrot.slane %v4721, %v4734
    %v4736 = vcombine.high %v4728, %v4728
    %v4737 = vcombine.high %v4735, %v4735
    %v4739 = vunpack.c.l.s4 1966171168
    %v4740 = vunpack.c.0.s8 %v4739
    %v4741 = vlaneseq
    %v4742 = vshrl.u32 %v4741, 7
    %v4743 = vsub.s32 %v4740, %v4742
    %v4744 = vrot.slane %v4728, %v4743
    %v4746 = vunpack.c.l.s4 1966171168
    %v4747 = vunpack.c.0.s8 %v4746
    %v4748 = vlaneseq
    %v4749 = vshrl.u32 %v4748, 7
    %v4750 = vsub.s32 %v4747, %v4749
    %v4751 = vrot.slane %v4735, %v4750
    %v4753 = vunpack.c.l.s4 1966171168
    %v4754 = vunpack.c.0.s8 %v4753
    %v4755 = vlaneseq
    %v4756 = vshrl.u32 %v4755, 7
    %v4757 = vsub.s32 %v4754, %v4756
    %v4758 = vrot.slane %v4736, %v4757
    %v4760 = vunpack.c.l.s4 1966171168
    %v4761 = vunpack.c.0.s8 %v4760
    %v4762 = vlaneseq
    %v4763 = vshrl.u32 %v4762, 7
    %v4764 = vsub.s32 %v4761, %v4763
    %v4765 = vrot.slane %v4737, %v4764
    %v4766 = vcombine.high %v4744, %v4744
    %v4767 = vcombine.high %v4751, %v4751
    %v4768 = vcombine.high %v4758, %v4758
    %v4769 = vcombine.high %v4765, %v4765
    %v4770 = vcombine.high %v3250, %v3250
    %v4772 = vunpack.c.l.s4 1966171168
    %v4773 = vunpack.c.0.s8 %v4772
    %v4774 = vlaneseq
    %v4775 = vshrl.u32 %v4774, 7
    %v4776 = vsub.s32 %v4773, %v4775
    %v4777 = vrot.slane %v3250, %v4776
    %v4779 = vunpack.c.l.s4 1966171168
    %v4780 = vunpack.c.0.s8 %v4779
    %v4781 = vlaneseq
    %v4782 = vshrl.u32 %v4781, 7
    %v4783 = vsub.s32 %v4780, %v4782
    %v4784 = vrot.slane %v4770, %v4783
    %v4785 = vcombine.high %v4777, %v4777
    %v4786 = vcombine.high %v4784, %v4784
    %v4788 = vunpack.c.l.s4 1966171168
    %v4789 = vunpack.c.0.s8 %v4788
    %v4790 = vlaneseq
    %v4791 = vshrl.u32 %v4790, 7
    %v4792 = vsub.s32 %v4789, %v4791
    %v4793 = vrot.slane %v4777, %v4792
    %v4795 = vunpack.c.l.s4 1966171168
    %v4796 = vunpack.c.0.s8 %v4795
    %v4797 = vlaneseq
    %v4798 = vshrl.u32 %v4797, 7
    %v4799 = vsub.s32 %v4796, %v4798
    %v4800 = vrot.slane %v4784, %v4799
    %v4802 = vunpack.c.l.s4 1966171168
    %v4803 = vunpack.c.0.s8 %v4802
    %v4804 = vlaneseq
    %v4805 = vshrl.u32 %v4804, 7
    %v4806 = vsub.s32 %v4803, %v4805
    %v4807 = vrot.slane %v4785, %v4806
    %v4809 = vunpack.c.l.s4 1966171168
    %v4810 = vunpack.c.0.s8 %v4809
    %v4811 = vlaneseq
    %v4812 = vshrl.u32 %v4811, 7
    %v4813 = vsub.s32 %v4810, %v4812
    %v4814 = vrot.slane %v4786, %v4813
    %v4815 = vcombine.high %v4793, %v4793
    %v4816 = vcombine.high %v4800, %v4800
    %v4817 = vcombine.high %v4807, %v4807
    %v4818 = vcombine.high %v4814, %v4814
    %v4819 = vcombine.high %v3251, %v3251
    %v4821 = vunpack.c.l.s4 1966171168
    %v4822 = vunpack.c.0.s8 %v4821
    %v4823 = vlaneseq
    %v4824 = vshrl.u32 %v4823, 7
    %v4825 = vsub.s32 %v4822, %v4824
    %v4826 = vrot.slane %v3251, %v4825
    %v4828 = vunpack.c.l.s4 1966171168
    %v4829 = vunpack.c.0.s8 %v4828
    %v4830 = vlaneseq
    %v4831 = vshrl.u32 %v4830, 7
    %v4832 = vsub.s32 %v4829, %v4831
    %v4833 = vrot.slane %v4819, %v4832
    %v4834 = vcombine.high %v4826, %v4826
    %v4835 = vcombine.high %v4833, %v4833
    %v4837 = vunpack.c.l.s4 1966171168
    %v4838 = vunpack.c.0.s8 %v4837
    %v4839 = vlaneseq
    %v4840 = vshrl.u32 %v4839, 7
    %v4841 = vsub.s32 %v4838, %v4840
    %v4842 = vrot.slane %v4826, %v4841
    %v4844 = vunpack.c.l.s4 1966171168
    %v4845 = vunpack.c.0.s8 %v4844
    %v4846 = vlaneseq
    %v4847 = vshrl.u32 %v4846, 7
    %v4848 = vsub.s32 %v4845, %v4847
    %v4849 = vrot.slane %v4833, %v4848
    %v4851 = vunpack.c.l.s4 1966171168
    %v4852 = vunpack.c.0.s8 %v4851
    %v4853 = vlaneseq
    %v4854 = vshrl.u32 %v4853, 7
    %v4855 = vsub.s32 %v4852, %v4854
    %v4856 = vrot.slane %v4834, %v4855
    %v4858 = vunpack.c.l.s4 1966171168
    %v4859 = vunpack.c.0.s8 %v4858
    %v4860 = vlaneseq
    %v4861 = vshrl.u32 %v4860, 7
    %v4862 = vsub.s32 %v4859, %v4861
    %v4863 = vrot.slane %v4835, %v4862
    %v4864 = vcombine.high %v4842, %v4842
    %v4865 = vcombine.high %v4849, %v4849
    %v4866 = vcombine.high %v4856, %v4856
    %v4867 = vcombine.high %v4863, %v4863
    %v4868 = vcombine.high %v3252, %v3252
    %v4870 = vunpack.c.l.s4 1966171168
    %v4871 = vunpack.c.0.s8 %v4870
    %v4872 = vlaneseq
    %v4873 = vshrl.u32 %v4872, 7
    %v4874 = vsub.s32 %v4871, %v4873
    %v4875 = vrot.slane %v3252, %v4874
    %v4877 = vunpack.c.l.s4 1966171168
    %v4878 = vunpack.c.0.s8 %v4877
    %v4879 = vlaneseq
    %v4880 = vshrl.u32 %v4879, 7
    %v4881 = vsub.s32 %v4878, %v4880
    %v4882 = vrot.slane %v4868, %v4881
    %v4883 = vcombine.high %v4875, %v4875
    %v4884 = vcombine.high %v4882, %v4882
    %v4886 = vunpack.c.l.s4 1966171168
    %v4887 = vunpack.c.0.s8 %v4886
    %v4888 = vlaneseq
    %v4889 = vshrl.u32 %v4888, 7
    %v4890 = vsub.s32 %v4887, %v4889
    %v4891 = vrot.slane %v4875, %v4890
    %v4893 = vunpack.c.l.s4 1966171168
    %v4894 = vunpack.c.0.s8 %v4893
    %v4895 = vlaneseq
    %v4896 = vshrl.u32 %v4895, 7
    %v4897 = vsub.s32 %v4894, %v4896
    %v4898 = vrot.slane %v4882, %v4897
    %v4900 = vunpack.c.l.s4 1966171168
    %v4901 = vunpack.c.0.s8 %v4900
    %v4902 = vlaneseq
    %v4903 = vshrl.u32 %v4902, 7
    %v4904 = vsub.s32 %v4901, %v4903
    %v4905 = vrot.slane %v4883, %v4904
    %v4907 = vunpack.c.l.s4 1966171168
    %v4908 = vunpack.c.0.s8 %v4907
    %v4909 = vlaneseq
    %v4910 = vshrl.u32 %v4909, 7
    %v4911 = vsub.s32 %v4908, %v4910
    %v4912 = vrot.slane %v4884, %v4911
    %v4913 = vcombine.high %v4891, %v4891
    %v4914 = vcombine.high %v4898, %v4898
    %v4915 = vcombine.high %v4905, %v4905
    %v4916 = vcombine.high %v4912, %v4912
    %v4917 = vcombine.high %v3253, %v3253
    %v4919 = vunpack.c.l.s4 1966171168
    %v4920 = vunpack.c.0.s8 %v4919
    %v4921 = vlaneseq
    %v4922 = vshrl.u32 %v4921, 7
    %v4923 = vsub.s32 %v4920, %v4922
    %v4924 = vrot.slane %v3253, %v4923
    %v4926 = vunpack.c.l.s4 1966171168
    %v4927 = vunpack.c.0.s8 %v4926
    %v4928 = vlaneseq
    %v4929 = vshrl.u32 %v4928, 7
    %v4930 = vsub.s32 %v4927, %v4929
    %v4931 = vrot.slane %v4917, %v4930
    %v4932 = vcombine.high %v4924, %v4924
    %v4933 = vcombine.high %v4931, %v4931
    %v4935 = vunpack.c.l.s4 1966171168
    %v4936 = vunpack.c.0.s8 %v4935
    %v4937 = vlaneseq
    %v4938 = vshrl.u32 %v4937, 7
    %v4939 = vsub.s32 %v4936, %v4938
    %v4940 = vrot.slane %v4924, %v4939
    %v4942 = vunpack.c.l.s4 1966171168
    %v4943 = vunpack.c.0.s8 %v4942
    %v4944 = vlaneseq
    %v4945 = vshrl.u32 %v4944, 7
    %v4946 = vsub.s32 %v4943, %v4945
    %v4947 = vrot.slane %v4931, %v4946
    %v4949 = vunpack.c.l.s4 1966171168
    %v4950 = vunpack.c.0.s8 %v4949
    %v4951 = vlaneseq
    %v4952 = vshrl.u32 %v4951, 7
    %v4953 = vsub.s32 %v4950, %v4952
    %v4954 = vrot.slane %v4932, %v4953
    %v4956 = vunpack.c.l.s4 1966171168
    %v4957 = vunpack.c.0.s8 %v4956
    %v4958 = vlaneseq
    %v4959 = vshrl.u32 %v4958, 7
    %v4960 = vsub.s32 %v4957, %v4959
    %v4961 = vrot.slane %v4933, %v4960
    %v4962 = vcombine.high %v4940, %v4940
    %v4963 = vcombine.high %v4947, %v4947
    %v4964 = vcombine.high %v4954, %v4954
    %v4965 = vcombine.high %v4961, %v4961
    %v4966 = vcombine.high %v3254, %v3254
    %v4968 = vunpack.c.l.s4 1966171168
    %v4969 = vunpack.c.0.s8 %v4968
    %v4970 = vlaneseq
    %v4971 = vshrl.u32 %v4970, 7
    %v4972 = vsub.s32 %v4969, %v4971
    %v4973 = vrot.slane %v3254, %v4972
    %v4975 = vunpack.c.l.s4 1966171168
    %v4976 = vunpack.c.0.s8 %v4975
    %v4977 = vlaneseq
    %v4978 = vshrl.u32 %v4977, 7
    %v4979 = vsub.s32 %v4976, %v4978
    %v4980 = vrot.slane %v4966, %v4979
    %v4981 = vcombine.high %v4973, %v4973
    %v4982 = vcombine.high %v4980, %v4980
    %v4984 = vunpack.c.l.s4 1966171168
    %v4985 = vunpack.c.0.s8 %v4984
    %v4986 = vlaneseq
    %v4987 = vshrl.u32 %v4986, 7
    %v4988 = vsub.s32 %v4985, %v4987
    %v4989 = vrot.slane %v4973, %v4988
    %v4991 = vunpack.c.l.s4 1966171168
    %v4992 = vunpack.c.0.s8 %v4991
    %v4993 = vlaneseq
    %v4994 = vshrl.u32 %v4993, 7
    %v4995 = vsub.s32 %v4992, %v4994
    %v4996 = vrot.slane %v4980, %v4995
    %v4998 = vunpack.c.l.s4 1966171168
    %v4999 = vunpack.c.0.s8 %v4998
    %v5000 = vlaneseq
    %v5001 = vshrl.u32 %v5000, 7
    %v5002 = vsub.s32 %v4999, %v5001
    %v5003 = vrot.slane %v4981, %v5002
    %v5005 = vunpack.c.l.s4 1966171168
    %v5006 = vunpack.c.0.s8 %v5005
    %v5007 = vlaneseq
    %v5008 = vshrl.u32 %v5007, 7
    %v5009 = vsub.s32 %v5006, %v5008
    %v5010 = vrot.slane %v4982, %v5009
    %v5011 = vcombine.high %v4989, %v4989
    %v5012 = vcombine.high %v4996, %v4996
    %v5013 = vcombine.high %v5003, %v5003
    %v5014 = vcombine.high %v5010, %v5010
    %v5015 = vcombine.high %v3255, %v3255
    %v5017 = vunpack.c.l.s4 1966171168
    %v5018 = vunpack.c.0.s8 %v5017
    %v5019 = vlaneseq
    %v5020 = vshrl.u32 %v5019, 7
    %v5021 = vsub.s32 %v5018, %v5020
    %v5022 = vrot.slane %v3255, %v5021
    %v5024 = vunpack.c.l.s4 1966171168
    %v5025 = vunpack.c.0.s8 %v5024
    %v5026 = vlaneseq
    %v5027 = vshrl.u32 %v5026, 7
    %v5028 = vsub.s32 %v5025, %v5027
    %v5029 = vrot.slane %v5015, %v5028
    %v5030 = vcombine.high %v5022, %v5022
    %v5031 = vcombine.high %v5029, %v5029
    %v5033 = vunpack.c.l.s4 1966171168
    %v5034 = vunpack.c.0.s8 %v5033
    %v5035 = vlaneseq
    %v5036 = vshrl.u32 %v5035, 7
    %v5037 = vsub.s32 %v5034, %v5036
    %v5038 = vrot.slane %v5022, %v5037
    %v5040 = vunpack.c.l.s4 1966171168
    %v5041 = vunpack.c.0.s8 %v5040
    %v5042 = vlaneseq
    %v5043 = vshrl.u32 %v5042, 7
    %v5044 = vsub.s32 %v5041, %v5043
    %v5045 = vrot.slane %v5029, %v5044
    %v5047 = vunpack.c.l.s4 1966171168
    %v5048 = vunpack.c.0.s8 %v5047
    %v5049 = vlaneseq
    %v5050 = vshrl.u32 %v5049, 7
    %v5051 = vsub.s32 %v5048, %v5050
    %v5052 = vrot.slane %v5030, %v5051
    %v5054 = vunpack.c.l.s4 1966171168
    %v5055 = vunpack.c.0.s8 %v5054
    %v5056 = vlaneseq
    %v5057 = vshrl.u32 %v5056, 7
    %v5058 = vsub.s32 %v5055, %v5057
    %v5059 = vrot.slane %v5031, %v5058
    %v5060 = vcombine.high %v5038, %v5038
    %v5061 = vcombine.high %v5045, %v5045
    %v5062 = vcombine.high %v5052, %v5052
    %v5063 = vcombine.high %v5059, %v5059
    %v5064 = vcombine.high %v3256, %v3256
    %v5066 = vunpack.c.l.s4 1966171168
    %v5067 = vunpack.c.0.s8 %v5066
    %v5068 = vlaneseq
    %v5069 = vshrl.u32 %v5068, 7
    %v5070 = vsub.s32 %v5067, %v5069
    %v5071 = vrot.slane %v3256, %v5070
    %v5073 = vunpack.c.l.s4 1966171168
    %v5074 = vunpack.c.0.s8 %v5073
    %v5075 = vlaneseq
    %v5076 = vshrl.u32 %v5075, 7
    %v5077 = vsub.s32 %v5074, %v5076
    %v5078 = vrot.slane %v5064, %v5077
    %v5079 = vcombine.high %v5071, %v5071
    %v5080 = vcombine.high %v5078, %v5078
    %v5082 = vunpack.c.l.s4 1966171168
    %v5083 = vunpack.c.0.s8 %v5082
    %v5084 = vlaneseq
    %v5085 = vshrl.u32 %v5084, 7
    %v5086 = vsub.s32 %v5083, %v5085
    %v5087 = vrot.slane %v5071, %v5086
    %v5089 = vunpack.c.l.s4 1966171168
    %v5090 = vunpack.c.0.s8 %v5089
    %v5091 = vlaneseq
    %v5092 = vshrl.u32 %v5091, 7
    %v5093 = vsub.s32 %v5090, %v5092
    %v5094 = vrot.slane %v5078, %v5093
    %v5096 = vunpack.c.l.s4 1966171168
    %v5097 = vunpack.c.0.s8 %v5096
    %v5098 = vlaneseq
    %v5099 = vshrl.u32 %v5098, 7
    %v5100 = vsub.s32 %v5097, %v5099
    %v5101 = vrot.slane %v5079, %v5100
    %v5103 = vunpack.c.l.s4 1966171168
    %v5104 = vunpack.c.0.s8 %v5103
    %v5105 = vlaneseq
    %v5106 = vshrl.u32 %v5105, 7
    %v5107 = vsub.s32 %v5104, %v5106
    %v5108 = vrot.slane %v5080, %v5107
    %v5109 = vcombine.high %v5087, %v5087
    %v5110 = vcombine.high %v5094, %v5094
    %v5111 = vcombine.high %v5101, %v5101
    %v5112 = vcombine.high %v5108, %v5108
    %v5113 = vcombine.high %v3257, %v3257
    %v5115 = vunpack.c.l.s4 1966171168
    %v5116 = vunpack.c.0.s8 %v5115
    %v5117 = vlaneseq
    %v5118 = vshrl.u32 %v5117, 7
    %v5119 = vsub.s32 %v5116, %v5118
    %v5120 = vrot.slane %v3257, %v5119
    %v5122 = vunpack.c.l.s4 1966171168
    %v5123 = vunpack.c.0.s8 %v5122
    %v5124 = vlaneseq
    %v5125 = vshrl.u32 %v5124, 7
    %v5126 = vsub.s32 %v5123, %v5125
    %v5127 = vrot.slane %v5113, %v5126
    %v5128 = vcombine.high %v5120, %v5120
    %v5129 = vcombine.high %v5127, %v5127
    %v5131 = vunpack.c.l.s4 1966171168
    %v5132 = vunpack.c.0.s8 %v5131
    %v5133 = vlaneseq
    %v5134 = vshrl.u32 %v5133, 7
    %v5135 = vsub.s32 %v5132, %v5134
    %v5136 = vrot.slane %v5120, %v5135
    %v5138 = vunpack.c.l.s4 1966171168
    %v5139 = vunpack.c.0.s8 %v5138
    %v5140 = vlaneseq
    %v5141 = vshrl.u32 %v5140, 7
    %v5142 = vsub.s32 %v5139, %v5141
    %v5143 = vrot.slane %v5127, %v5142
    %v5145 = vunpack.c.l.s4 1966171168
    %v5146 = vunpack.c.0.s8 %v5145
    %v5147 = vlaneseq
    %v5148 = vshrl.u32 %v5147, 7
    %v5149 = vsub.s32 %v5146, %v5148
    %v5150 = vrot.slane %v5128, %v5149
    %v5152 = vunpack.c.l.s4 1966171168
    %v5153 = vunpack.c.0.s8 %v5152
    %v5154 = vlaneseq
    %v5155 = vshrl.u32 %v5154, 7
    %v5156 = vsub.s32 %v5153, %v5155
    %v5157 = vrot.slane %v5129, %v5156
    %v5158 = vcombine.high %v5136, %v5136
    %v5159 = vcombine.high %v5143, %v5143
    %v5160 = vcombine.high %v5150, %v5150
    %v5161 = vcombine.high %v5157, %v5157
    %v5162 = vcombine.high %v3258, %v3258
    %v5164 = vunpack.c.l.s4 1966171168
    %v5165 = vunpack.c.0.s8 %v5164
    %v5166 = vlaneseq
    %v5167 = vshrl.u32 %v5166, 7
    %v5168 = vsub.s32 %v5165, %v5167
    %v5169 = vrot.slane %v3258, %v5168
    %v5171 = vunpack.c.l.s4 1966171168
    %v5172 = vunpack.c.0.s8 %v5171
    %v5173 = vlaneseq
    %v5174 = vshrl.u32 %v5173, 7
    %v5175 = vsub.s32 %v5172, %v5174
    %v5176 = vrot.slane %v5162, %v5175
    %v5177 = vcombine.high %v5169, %v5169
    %v5178 = vcombine.high %v5176, %v5176
    %v5180 = vunpack.c.l.s4 1966171168
    %v5181 = vunpack.c.0.s8 %v5180
    %v5182 = vlaneseq
    %v5183 = vshrl.u32 %v5182, 7
    %v5184 = vsub.s32 %v5181, %v5183
    %v5185 = vrot.slane %v5169, %v5184
    %v5187 = vunpack.c.l.s4 1966171168
    %v5188 = vunpack.c.0.s8 %v5187
    %v5189 = vlaneseq
    %v5190 = vshrl.u32 %v5189, 7
    %v5191 = vsub.s32 %v5188, %v5190
    %v5192 = vrot.slane %v5176, %v5191
    %v5194 = vunpack.c.l.s4 1966171168
    %v5195 = vunpack.c.0.s8 %v5194
    %v5196 = vlaneseq
    %v5197 = vshrl.u32 %v5196, 7
    %v5198 = vsub.s32 %v5195, %v5197
    %v5199 = vrot.slane %v5177, %v5198
    %v5201 = vunpack.c.l.s4 1966171168
    %v5202 = vunpack.c.0.s8 %v5201
    %v5203 = vlaneseq
    %v5204 = vshrl.u32 %v5203, 7
    %v5205 = vsub.s32 %v5202, %v5204
    %v5206 = vrot.slane %v5178, %v5205
    %v5207 = vcombine.high %v5185, %v5185
    %v5208 = vcombine.high %v5192, %v5192
    %v5209 = vcombine.high %v5199, %v5199
    %v5210 = vcombine.high %v5206, %v5206
    %v5211 = vcombine.high %v3259, %v3259
    %v5213 = vunpack.c.l.s4 1966171168
    %v5214 = vunpack.c.0.s8 %v5213
    %v5215 = vlaneseq
    %v5216 = vshrl.u32 %v5215, 7
    %v5217 = vsub.s32 %v5214, %v5216
    %v5218 = vrot.slane %v3259, %v5217
    %v5220 = vunpack.c.l.s4 1966171168
    %v5221 = vunpack.c.0.s8 %v5220
    %v5222 = vlaneseq
    %v5223 = vshrl.u32 %v5222, 7
    %v5224 = vsub.s32 %v5221, %v5223
    %v5225 = vrot.slane %v5211, %v5224
    %v5226 = vcombine.high %v5218, %v5218
    %v5227 = vcombine.high %v5225, %v5225
    %v5229 = vunpack.c.l.s4 1966171168
    %v5230 = vunpack.c.0.s8 %v5229
    %v5231 = vlaneseq
    %v5232 = vshrl.u32 %v5231, 7
    %v5233 = vsub.s32 %v5230, %v5232
    %v5234 = vrot.slane %v5218, %v5233
    %v5236 = vunpack.c.l.s4 1966171168
    %v5237 = vunpack.c.0.s8 %v5236
    %v5238 = vlaneseq
    %v5239 = vshrl.u32 %v5238, 7
    %v5240 = vsub.s32 %v5237, %v5239
    %v5241 = vrot.slane %v5225, %v5240
    %v5243 = vunpack.c.l.s4 1966171168
    %v5244 = vunpack.c.0.s8 %v5243
    %v5245 = vlaneseq
    %v5246 = vshrl.u32 %v5245, 7
    %v5247 = vsub.s32 %v5244, %v5246
    %v5248 = vrot.slane %v5226, %v5247
    %v5250 = vunpack.c.l.s4 1966171168
    %v5251 = vunpack.c.0.s8 %v5250
    %v5252 = vlaneseq
    %v5253 = vshrl.u32 %v5252, 7
    %v5254 = vsub.s32 %v5251, %v5253
    %v5255 = vrot.slane %v5227, %v5254
    %v5256 = vcombine.high %v5234, %v5234
    %v5257 = vcombine.high %v5241, %v5241
    %v5258 = vcombine.high %v5248, %v5248
    %v5259 = vcombine.high %v5255, %v5255
    %v5260 = vcombine.low %v3323, %v3337
    %v5261 = vcombine.low %v3345, %v3347
    %v5262 = vcombine.low %v3330, %v3344
    %v5263 = vcombine.low %v3346, %v3348
    %v5265 = vunpack.c.l.s4 1966171168
    %v5266 = vunpack.c.0.s8 %v5265
    %v5267 = vlaneseq
    %v5268 = vshrl.u32 %v5267, 7
    %v5269 = vsub.s32 %v5266, %v5268
    %v5270 = vrot.slane %v5260, %v5269
    %v5272 = vunpack.c.l.s4 1966171168
    %v5273 = vunpack.c.0.s8 %v5272
    %v5274 = vlaneseq
    %v5275 = vshrl.u32 %v5274, 7
    %v5276 = vsub.s32 %v5273, %v5275
    %v5277 = vrot.slane %v5261, %v5276
    %v5279 = vunpack.c.l.s4 1966171168
    %v5280 = vunpack.c.0.s8 %v5279
    %v5281 = vlaneseq
    %v5282 = vshrl.u32 %v5281, 7
    %v5283 = vsub.s32 %v5280, %v5282
    %v5284 = vrot.slane %v5262, %v5283
    %v5286 = vunpack.c.l.s4 1966171168
    %v5287 = vunpack.c.0.s8 %v5286
    %v5288 = vlaneseq
    %v5289 = vshrl.u32 %v5288, 7
    %v5290 = vsub.s32 %v5287, %v5289
    %v5291 = vrot.slane %v5263, %v5290
    %v5292 = vcombine.low %v5270, %v5277
    %v5293 = vcombine.low %v5284, %v5291
    %v5295 = vunpack.c.l.s4 1966171168
    %v5296 = vunpack.c.0.s8 %v5295
    %v5297 = vlaneseq
    %v5298 = vshrl.u32 %v5297, 7
    %v5299 = vsub.s32 %v5296, %v5298
    %v5300 = vrot.slane %v5292, %v5299
    %v5302 = vunpack.c.l.s4 1966171168
    %v5303 = vunpack.c.0.s8 %v5302
    %v5304 = vlaneseq
    %v5305 = vshrl.u32 %v5304, 7
    %v5306 = vsub.s32 %v5303, %v5305
    %v5307 = vrot.slane %v5293, %v5306
    %v5308 = vcombine.low %v5300, %v5307
    %v5309 = vcombine.low %v3372, %v3386
    %v5310 = vcombine.low %v3394, %v3396
    %v5311 = vcombine.low %v3379, %v3393
    %v5312 = vcombine.low %v3395, %v3397
    %v5314 = vunpack.c.l.s4 1966171168
    %v5315 = vunpack.c.0.s8 %v5314
    %v5316 = vlaneseq
    %v5317 = vshrl.u32 %v5316, 7
    %v5318 = vsub.s32 %v5315, %v5317
    %v5319 = vrot.slane %v5309, %v5318
    %v5321 = vunpack.c.l.s4 1966171168
    %v5322 = vunpack.c.0.s8 %v5321
    %v5323 = vlaneseq
    %v5324 = vshrl.u32 %v5323, 7
    %v5325 = vsub.s32 %v5322, %v5324
    %v5326 = vrot.slane %v5310, %v5325
    %v5328 = vunpack.c.l.s4 1966171168
    %v5329 = vunpack.c.0.s8 %v5328
    %v5330 = vlaneseq
    %v5331 = vshrl.u32 %v5330, 7
    %v5332 = vsub.s32 %v5329, %v5331
    %v5333 = vrot.slane %v5311, %v5332
    %v5335 = vunpack.c.l.s4 1966171168
    %v5336 = vunpack.c.0.s8 %v5335
    %v5337 = vlaneseq
    %v5338 = vshrl.u32 %v5337, 7
    %v5339 = vsub.s32 %v5336, %v5338
    %v5340 = vrot.slane %v5312, %v5339
    %v5341 = vcombine.low %v5319, %v5326
    %v5342 = vcombine.low %v5333, %v5340
    %v5344 = vunpack.c.l.s4 1966171168
    %v5345 = vunpack.c.0.s8 %v5344
    %v5346 = vlaneseq
    %v5347 = vshrl.u32 %v5346, 7
    %v5348 = vsub.s32 %v5345, %v5347
    %v5349 = vrot.slane %v5341, %v5348
    %v5351 = vunpack.c.l.s4 1966171168
    %v5352 = vunpack.c.0.s8 %v5351
    %v5353 = vlaneseq
    %v5354 = vshrl.u32 %v5353, 7
    %v5355 = vsub.s32 %v5352, %v5354
    %v5356 = vrot.slane %v5342, %v5355
    %v5357 = vcombine.low %v5349, %v5356
    %v5358 = vcombine.low %v3421, %v3435
    %v5359 = vcombine.low %v3443, %v3445
    %v5360 = vcombine.low %v3428, %v3442
    %v5361 = vcombine.low %v3444, %v3446
    %v5363 = vunpack.c.l.s4 1966171168
    %v5364 = vunpack.c.0.s8 %v5363
    %v5365 = vlaneseq
    %v5366 = vshrl.u32 %v5365, 7
    %v5367 = vsub.s32 %v5364, %v5366
    %v5368 = vrot.slane %v5358, %v5367
    %v5370 = vunpack.c.l.s4 1966171168
    %v5371 = vunpack.c.0.s8 %v5370
    %v5372 = vlaneseq
    %v5373 = vshrl.u32 %v5372, 7
    %v5374 = vsub.s32 %v5371, %v5373
    %v5375 = vrot.slane %v5359, %v5374
    %v5377 = vunpack.c.l.s4 1966171168
    %v5378 = vunpack.c.0.s8 %v5377
    %v5379 = vlaneseq
    %v5380 = vshrl.u32 %v5379, 7
    %v5381 = vsub.s32 %v5378, %v5380
    %v5382 = vrot.slane %v5360, %v5381
    %v5384 = vunpack.c.l.s4 1966171168
    %v5385 = vunpack.c.0.s8 %v5384
    %v5386 = vlaneseq
    %v5387 = vshrl.u32 %v5386, 7
    %v5388 = vsub.s32 %v5385, %v5387
    %v5389 = vrot.slane %v5361, %v5388
    %v5390 = vcombine.low %v5368, %v5375
    %v5391 = vcombine.low %v5382, %v5389
    %v5393 = vunpack.c.l.s4 1966171168
    %v5394 = vunpack.c.0.s8 %v5393
    %v5395 = vlaneseq
    %v5396 = vshrl.u32 %v5395, 7
    %v5397 = vsub.s32 %v5394, %v5396
    %v5398 = vrot.slane %v5390, %v5397
    %v5400 = vunpack.c.l.s4 1966171168
    %v5401 = vunpack.c.0.s8 %v5400
    %v5402 = vlaneseq
    %v5403 = vshrl.u32 %v5402, 7
    %v5404 = vsub.s32 %v5401, %v5403
    %v5405 = vrot.slane %v5391, %v5404
    %v5406 = vcombine.low %v5398, %v5405
    %v5407 = vcombine.low %v3470, %v3484
    %v5408 = vcombine.low %v3492, %v3494
    %v5409 = vcombine.low %v3477, %v3491
    %v5410 = vcombine.low %v3493, %v3495
    %v5412 = vunpack.c.l.s4 1966171168
    %v5413 = vunpack.c.0.s8 %v5412
    %v5414 = vlaneseq
    %v5415 = vshrl.u32 %v5414, 7
    %v5416 = vsub.s32 %v5413, %v5415
    %v5417 = vrot.slane %v5407, %v5416
    %v5419 = vunpack.c.l.s4 1966171168
    %v5420 = vunpack.c.0.s8 %v5419
    %v5421 = vlaneseq
    %v5422 = vshrl.u32 %v5421, 7
    %v5423 = vsub.s32 %v5420, %v5422
    %v5424 = vrot.slane %v5408, %v5423
    %v5426 = vunpack.c.l.s4 1966171168
    %v5427 = vunpack.c.0.s8 %v5426
    %v5428 = vlaneseq
    %v5429 = vshrl.u32 %v5428, 7
    %v5430 = vsub.s32 %v5427, %v5429
    %v5431 = vrot.slane %v5409, %v5430
    %v5433 = vunpack.c.l.s4 1966171168
    %v5434 = vunpack.c.0.s8 %v5433
    %v5435 = vlaneseq
    %v5436 = vshrl.u32 %v5435, 7
    %v5437 = vsub.s32 %v5434, %v5436
    %v5438 = vrot.slane %v5410, %v5437
    %v5439 = vcombine.low %v5417, %v5424
    %v5440 = vcombine.low %v5431, %v5438
    %v5442 = vunpack.c.l.s4 1966171168
    %v5443 = vunpack.c.0.s8 %v5442
    %v5444 = vlaneseq
    %v5445 = vshrl.u32 %v5444, 7
    %v5446 = vsub.s32 %v5443, %v5445
    %v5447 = vrot.slane %v5439, %v5446
    %v5449 = vunpack.c.l.s4 1966171168
    %v5450 = vunpack.c.0.s8 %v5449
    %v5451 = vlaneseq
    %v5452 = vshrl.u32 %v5451, 7
    %v5453 = vsub.s32 %v5450, %v5452
    %v5454 = vrot.slane %v5440, %v5453
    %v5455 = vcombine.low %v5447, %v5454
    %v5456 = vcombine.low %v3519, %v3533
    %v5457 = vcombine.low %v3541, %v3543
    %v5458 = vcombine.low %v3526, %v3540
    %v5459 = vcombine.low %v3542, %v3544
    %v5461 = vunpack.c.l.s4 1966171168
    %v5462 = vunpack.c.0.s8 %v5461
    %v5463 = vlaneseq
    %v5464 = vshrl.u32 %v5463, 7
    %v5465 = vsub.s32 %v5462, %v5464
    %v5466 = vrot.slane %v5456, %v5465
    %v5468 = vunpack.c.l.s4 1966171168
    %v5469 = vunpack.c.0.s8 %v5468
    %v5470 = vlaneseq
    %v5471 = vshrl.u32 %v5470, 7
    %v5472 = vsub.s32 %v5469, %v5471
    %v5473 = vrot.slane %v5457, %v5472
    %v5475 = vunpack.c.l.s4 1966171168
    %v5476 = vunpack.c.0.s8 %v5475
    %v5477 = vlaneseq
    %v5478 = vshrl.u32 %v5477, 7
    %v5479 = vsub.s32 %v5476, %v5478
    %v5480 = vrot.slane %v5458, %v5479
    %v5482 = vunpack.c.l.s4 1966171168
    %v5483 = vunpack.c.0.s8 %v5482
    %v5484 = vlaneseq
    %v5485 = vshrl.u32 %v5484, 7
    %v5486 = vsub.s32 %v5483, %v5485
    %v5487 = vrot.slane %v5459, %v5486
    %v5488 = vcombine.low %v5466, %v5473
    %v5489 = vcombine.low %v5480, %v5487
    %v5491 = vunpack.c.l.s4 1966171168
    %v5492 = vunpack.c.0.s8 %v5491
    %v5493 = vlaneseq
    %v5494 = vshrl.u32 %v5493, 7
    %v5495 = vsub.s32 %v5492, %v5494
    %v5496 = vrot.slane %v5488, %v5495
    %v5498 = vunpack.c.l.s4 1966171168
    %v5499 = vunpack.c.0.s8 %v5498
    %v5500 = vlaneseq
    %v5501 = vshrl.u32 %v5500, 7
    %v5502 = vsub.s32 %v5499, %v5501
    %v5503 = vrot.slane %v5489, %v5502
    %v5504 = vcombine.low %v5496, %v5503
    %v5505 = vcombine.low %v3568, %v3582
    %v5506 = vcombine.low %v3590, %v3592
    %v5507 = vcombine.low %v3575, %v3589
    %v5508 = vcombine.low %v3591, %v3593
    %v5510 = vunpack.c.l.s4 1966171168
    %v5511 = vunpack.c.0.s8 %v5510
    %v5512 = vlaneseq
    %v5513 = vshrl.u32 %v5512, 7
    %v5514 = vsub.s32 %v5511, %v5513
    %v5515 = vrot.slane %v5505, %v5514
    %v5517 = vunpack.c.l.s4 1966171168
    %v5518 = vunpack.c.0.s8 %v5517
    %v5519 = vlaneseq
    %v5520 = vshrl.u32 %v5519, 7
    %v5521 = vsub.s32 %v5518, %v5520
    %v5522 = vrot.slane %v5506, %v5521
    %v5524 = vunpack.c.l.s4 1966171168
    %v5525 = vunpack.c.0.s8 %v5524
    %v5526 = vlaneseq
    %v5527 = vshrl.u32 %v5526, 7
    %v5528 = vsub.s32 %v5525, %v5527
    %v5529 = vrot.slane %v5507, %v5528
    %v5531 = vunpack.c.l.s4 1966171168
    %v5532 = vunpack.c.0.s8 %v5531
    %v5533 = vlaneseq
    %v5534 = vshrl.u32 %v5533, 7
    %v5535 = vsub.s32 %v5532, %v5534
    %v5536 = vrot.slane %v5508, %v5535
    %v5537 = vcombine.low %v5515, %v5522
    %v5538 = vcombine.low %v5529, %v5536
    %v5540 = vunpack.c.l.s4 1966171168
    %v5541 = vunpack.c.0.s8 %v5540
    %v5542 = vlaneseq
    %v5543 = vshrl.u32 %v5542, 7
    %v5544 = vsub.s32 %v5541, %v5543
    %v5545 = vrot.slane %v5537, %v5544
    %v5547 = vunpack.c.l.s4 1966171168
    %v5548 = vunpack.c.0.s8 %v5547
    %v5549 = vlaneseq
    %v5550 = vshrl.u32 %v5549, 7
    %v5551 = vsub.s32 %v5548, %v5550
    %v5552 = vrot.slane %v5538, %v5551
    %v5553 = vcombine.low %v5545, %v5552
    %v5554 = vcombine.low %v3617, %v3631
    %v5555 = vcombine.low %v3639, %v3641
    %v5556 = vcombine.low %v3624, %v3638
    %v5557 = vcombine.low %v3640, %v3642
    %v5559 = vunpack.c.l.s4 1966171168
    %v5560 = vunpack.c.0.s8 %v5559
    %v5561 = vlaneseq
    %v5562 = vshrl.u32 %v5561, 7
    %v5563 = vsub.s32 %v5560, %v5562
    %v5564 = vrot.slane %v5554, %v5563
    %v5566 = vunpack.c.l.s4 1966171168
    %v5567 = vunpack.c.0.s8 %v5566
    %v5568 = vlaneseq
    %v5569 = vshrl.u32 %v5568, 7
    %v5570 = vsub.s32 %v5567, %v5569
    %v5571 = vrot.slane %v5555, %v5570
    %v5573 = vunpack.c.l.s4 1966171168
    %v5574 = vunpack.c.0.s8 %v5573
    %v5575 = vlaneseq
    %v5576 = vshrl.u32 %v5575, 7
    %v5577 = vsub.s32 %v5574, %v5576
    %v5578 = vrot.slane %v5556, %v5577
    %v5580 = vunpack.c.l.s4 1966171168
    %v5581 = vunpack.c.0.s8 %v5580
    %v5582 = vlaneseq
    %v5583 = vshrl.u32 %v5582, 7
    %v5584 = vsub.s32 %v5581, %v5583
    %v5585 = vrot.slane %v5557, %v5584
    %v5586 = vcombine.low %v5564, %v5571
    %v5587 = vcombine.low %v5578, %v5585
    %v5589 = vunpack.c.l.s4 1966171168
    %v5590 = vunpack.c.0.s8 %v5589
    %v5591 = vlaneseq
    %v5592 = vshrl.u32 %v5591, 7
    %v5593 = vsub.s32 %v5590, %v5592
    %v5594 = vrot.slane %v5586, %v5593
    %v5596 = vunpack.c.l.s4 1966171168
    %v5597 = vunpack.c.0.s8 %v5596
    %v5598 = vlaneseq
    %v5599 = vshrl.u32 %v5598, 7
    %v5600 = vsub.s32 %v5597, %v5599
    %v5601 = vrot.slane %v5587, %v5600
    %v5602 = vcombine.low %v5594, %v5601
    %v5603 = vcombine.low %v3666, %v3680
    %v5604 = vcombine.low %v3688, %v3690
    %v5605 = vcombine.low %v3673, %v3687
    %v5606 = vcombine.low %v3689, %v3691
    %v5608 = vunpack.c.l.s4 1966171168
    %v5609 = vunpack.c.0.s8 %v5608
    %v5610 = vlaneseq
    %v5611 = vshrl.u32 %v5610, 7
    %v5612 = vsub.s32 %v5609, %v5611
    %v5613 = vrot.slane %v5603, %v5612
    %v5615 = vunpack.c.l.s4 1966171168
    %v5616 = vunpack.c.0.s8 %v5615
    %v5617 = vlaneseq
    %v5618 = vshrl.u32 %v5617, 7
    %v5619 = vsub.s32 %v5616, %v5618
    %v5620 = vrot.slane %v5604, %v5619
    %v5622 = vunpack.c.l.s4 1966171168
    %v5623 = vunpack.c.0.s8 %v5622
    %v5624 = vlaneseq
    %v5625 = vshrl.u32 %v5624, 7
    %v5626 = vsub.s32 %v5623, %v5625
    %v5627 = vrot.slane %v5605, %v5626
    %v5629 = vunpack.c.l.s4 1966171168
    %v5630 = vunpack.c.0.s8 %v5629
    %v5631 = vlaneseq
    %v5632 = vshrl.u32 %v5631, 7
    %v5633 = vsub.s32 %v5630, %v5632
    %v5634 = vrot.slane %v5606, %v5633
    %v5635 = vcombine.low %v5613, %v5620
    %v5636 = vcombine.low %v5627, %v5634
    %v5638 = vunpack.c.l.s4 1966171168
    %v5639 = vunpack.c.0.s8 %v5638
    %v5640 = vlaneseq
    %v5641 = vshrl.u32 %v5640, 7
    %v5642 = vsub.s32 %v5639, %v5641
    %v5643 = vrot.slane %v5635, %v5642
    %v5645 = vunpack.c.l.s4 1966171168
    %v5646 = vunpack.c.0.s8 %v5645
    %v5647 = vlaneseq
    %v5648 = vshrl.u32 %v5647, 7
    %v5649 = vsub.s32 %v5646, %v5648
    %v5650 = vrot.slane %v5636, %v5649
    %v5651 = vcombine.low %v5643, %v5650
    %v5652 = vcombine.low %v3715, %v3729
    %v5653 = vcombine.low %v3737, %v3739
    %v5654 = vcombine.low %v3722, %v3736
    %v5655 = vcombine.low %v3738, %v3740
    %v5657 = vunpack.c.l.s4 1966171168
    %v5658 = vunpack.c.0.s8 %v5657
    %v5659 = vlaneseq
    %v5660 = vshrl.u32 %v5659, 7
    %v5661 = vsub.s32 %v5658, %v5660
    %v5662 = vrot.slane %v5652, %v5661
    %v5664 = vunpack.c.l.s4 1966171168
    %v5665 = vunpack.c.0.s8 %v5664
    %v5666 = vlaneseq
    %v5667 = vshrl.u32 %v5666, 7
    %v5668 = vsub.s32 %v5665, %v5667
    %v5669 = vrot.slane %v5653, %v5668
    %v5671 = vunpack.c.l.s4 1966171168
    %v5672 = vunpack.c.0.s8 %v5671
    %v5673 = vlaneseq
    %v5674 = vshrl.u32 %v5673, 7
    %v5675 = vsub.s32 %v5672, %v5674
    %v5676 = vrot.slane %v5654, %v5675
    %v5678 = vunpack.c.l.s4 1966171168
    %v5679 = vunpack.c.0.s8 %v5678
    %v5680 = vlaneseq
    %v5681 = vshrl.u32 %v5680, 7
    %v5682 = vsub.s32 %v5679, %v5681
    %v5683 = vrot.slane %v5655, %v5682
    %v5684 = vcombine.low %v5662, %v5669
    %v5685 = vcombine.low %v5676, %v5683
    %v5687 = vunpack.c.l.s4 1966171168
    %v5688 = vunpack.c.0.s8 %v5687
    %v5689 = vlaneseq
    %v5690 = vshrl.u32 %v5689, 7
    %v5691 = vsub.s32 %v5688, %v5690
    %v5692 = vrot.slane %v5684, %v5691
    %v5694 = vunpack.c.l.s4 1966171168
    %v5695 = vunpack.c.0.s8 %v5694
    %v5696 = vlaneseq
    %v5697 = vshrl.u32 %v5696, 7
    %v5698 = vsub.s32 %v5695, %v5697
    %v5699 = vrot.slane %v5685, %v5698
    %v5700 = vcombine.low %v5692, %v5699
    %v5701 = vcombine.low %v3764, %v3778
    %v5702 = vcombine.low %v3786, %v3788
    %v5703 = vcombine.low %v3771, %v3785
    %v5704 = vcombine.low %v3787, %v3789
    %v5706 = vunpack.c.l.s4 1966171168
    %v5707 = vunpack.c.0.s8 %v5706
    %v5708 = vlaneseq
    %v5709 = vshrl.u32 %v5708, 7
    %v5710 = vsub.s32 %v5707, %v5709
    %v5711 = vrot.slane %v5701, %v5710
    %v5713 = vunpack.c.l.s4 1966171168
    %v5714 = vunpack.c.0.s8 %v5713
    %v5715 = vlaneseq
    %v5716 = vshrl.u32 %v5715, 7
    %v5717 = vsub.s32 %v5714, %v5716
    %v5718 = vrot.slane %v5702, %v5717
    %v5720 = vunpack.c.l.s4 1966171168
    %v5721 = vunpack.c.0.s8 %v5720
    %v5722 = vlaneseq
    %v5723 = vshrl.u32 %v5722, 7
    %v5724 = vsub.s32 %v5721, %v5723
    %v5725 = vrot.slane %v5703, %v5724
    %v5727 = vunpack.c.l.s4 1966171168
    %v5728 = vunpack.c.0.s8 %v5727
    %v5729 = vlaneseq
    %v5730 = vshrl.u32 %v5729, 7
    %v5731 = vsub.s32 %v5728, %v5730
    %v5732 = vrot.slane %v5704, %v5731
    %v5733 = vcombine.low %v5711, %v5718
    %v5734 = vcombine.low %v5725, %v5732
    %v5736 = vunpack.c.l.s4 1966171168
    %v5737 = vunpack.c.0.s8 %v5736
    %v5738 = vlaneseq
    %v5739 = vshrl.u32 %v5738, 7
    %v5740 = vsub.s32 %v5737, %v5739
    %v5741 = vrot.slane %v5733, %v5740
    %v5743 = vunpack.c.l.s4 1966171168
    %v5744 = vunpack.c.0.s8 %v5743
    %v5745 = vlaneseq
    %v5746 = vshrl.u32 %v5745, 7
    %v5747 = vsub.s32 %v5744, %v5746
    %v5748 = vrot.slane %v5734, %v5747
    %v5749 = vcombine.low %v5741, %v5748
    %v5750 = vcombine.low %v3813, %v3827
    %v5751 = vcombine.low %v3835, %v3837
    %v5752 = vcombine.low %v3820, %v3834
    %v5753 = vcombine.low %v3836, %v3838
    %v5755 = vunpack.c.l.s4 1966171168
    %v5756 = vunpack.c.0.s8 %v5755
    %v5757 = vlaneseq
    %v5758 = vshrl.u32 %v5757, 7
    %v5759 = vsub.s32 %v5756, %v5758
    %v5760 = vrot.slane %v5750, %v5759
    %v5762 = vunpack.c.l.s4 1966171168
    %v5763 = vunpack.c.0.s8 %v5762
    %v5764 = vlaneseq
    %v5765 = vshrl.u32 %v5764, 7
    %v5766 = vsub.s32 %v5763, %v5765
    %v5767 = vrot.slane %v5751, %v5766
    %v5769 = vunpack.c.l.s4 1966171168
    %v5770 = vunpack.c.0.s8 %v5769
    %v5771 = vlaneseq
    %v5772 = vshrl.u32 %v5771, 7
    %v5773 = vsub.s32 %v5770, %v5772
    %v5774 = vrot.slane %v5752, %v5773
    %v5776 = vunpack.c.l.s4 1966171168
    %v5777 = vunpack.c.0.s8 %v5776
    %v5778 = vlaneseq
    %v5779 = vshrl.u32 %v5778, 7
    %v5780 = vsub.s32 %v5777, %v5779
    %v5781 = vrot.slane %v5753, %v5780
    %v5782 = vcombine.low %v5760, %v5767
    %v5783 = vcombine.low %v5774, %v5781
    %v5785 = vunpack.c.l.s4 1966171168
    %v5786 = vunpack.c.0.s8 %v5785
    %v5787 = vlaneseq
    %v5788 = vshrl.u32 %v5787, 7
    %v5789 = vsub.s32 %v5786, %v5788
    %v5790 = vrot.slane %v5782, %v5789
    %v5792 = vunpack.c.l.s4 1966171168
    %v5793 = vunpack.c.0.s8 %v5792
    %v5794 = vlaneseq
    %v5795 = vshrl.u32 %v5794, 7
    %v5796 = vsub.s32 %v5793, %v5795
    %v5797 = vrot.slane %v5783, %v5796
    %v5798 = vcombine.low %v5790, %v5797
    %v5799 = vcombine.low %v3862, %v3876
    %v5800 = vcombine.low %v3884, %v3886
    %v5801 = vcombine.low %v3869, %v3883
    %v5802 = vcombine.low %v3885, %v3887
    %v5804 = vunpack.c.l.s4 1966171168
    %v5805 = vunpack.c.0.s8 %v5804
    %v5806 = vlaneseq
    %v5807 = vshrl.u32 %v5806, 7
    %v5808 = vsub.s32 %v5805, %v5807
    %v5809 = vrot.slane %v5799, %v5808
    %v5811 = vunpack.c.l.s4 1966171168
    %v5812 = vunpack.c.0.s8 %v5811
    %v5813 = vlaneseq
    %v5814 = vshrl.u32 %v5813, 7
    %v5815 = vsub.s32 %v5812, %v5814
    %v5816 = vrot.slane %v5800, %v5815
    %v5818 = vunpack.c.l.s4 1966171168
    %v5819 = vunpack.c.0.s8 %v5818
    %v5820 = vlaneseq
    %v5821 = vshrl.u32 %v5820, 7
    %v5822 = vsub.s32 %v5819, %v5821
    %v5823 = vrot.slane %v5801, %v5822
    %v5825 = vunpack.c.l.s4 1966171168
    %v5826 = vunpack.c.0.s8 %v5825
    %v5827 = vlaneseq
    %v5828 = vshrl.u32 %v5827, 7
    %v5829 = vsub.s32 %v5826, %v5828
    %v5830 = vrot.slane %v5802, %v5829
    %v5831 = vcombine.low %v5809, %v5816
    %v5832 = vcombine.low %v5823, %v5830
    %v5834 = vunpack.c.l.s4 1966171168
    %v5835 = vunpack.c.0.s8 %v5834
    %v5836 = vlaneseq
    %v5837 = vshrl.u32 %v5836, 7
    %v5838 = vsub.s32 %v5835, %v5837
    %v5839 = vrot.slane %v5831, %v5838
    %v5841 = vunpack.c.l.s4 1966171168
    %v5842 = vunpack.c.0.s8 %v5841
    %v5843 = vlaneseq
    %v5844 = vshrl.u32 %v5843, 7
    %v5845 = vsub.s32 %v5842, %v5844
    %v5846 = vrot.slane %v5832, %v5845
    %v5847 = vcombine.low %v5839, %v5846
    %v5848 = vcombine.low %v3911, %v3925
    %v5849 = vcombine.low %v3933, %v3935
    %v5850 = vcombine.low %v3918, %v3932
    %v5851 = vcombine.low %v3934, %v3936
    %v5853 = vunpack.c.l.s4 1966171168
    %v5854 = vunpack.c.0.s8 %v5853
    %v5855 = vlaneseq
    %v5856 = vshrl.u32 %v5855, 7
    %v5857 = vsub.s32 %v5854, %v5856
    %v5858 = vrot.slane %v5848, %v5857
    %v5860 = vunpack.c.l.s4 1966171168
    %v5861 = vunpack.c.0.s8 %v5860
    %v5862 = vlaneseq
    %v5863 = vshrl.u32 %v5862, 7
    %v5864 = vsub.s32 %v5861, %v5863
    %v5865 = vrot.slane %v5849, %v5864
    %v5867 = vunpack.c.l.s4 1966171168
    %v5868 = vunpack.c.0.s8 %v5867
    %v5869 = vlaneseq
    %v5870 = vshrl.u32 %v5869, 7
    %v5871 = vsub.s32 %v5868, %v5870
    %v5872 = vrot.slane %v5850, %v5871
    %v5874 = vunpack.c.l.s4 1966171168
    %v5875 = vunpack.c.0.s8 %v5874
    %v5876 = vlaneseq
    %v5877 = vshrl.u32 %v5876, 7
    %v5878 = vsub.s32 %v5875, %v5877
    %v5879 = vrot.slane %v5851, %v5878
    %v5880 = vcombine.low %v5858, %v5865
    %v5881 = vcombine.low %v5872, %v5879
    %v5883 = vunpack.c.l.s4 1966171168
    %v5884 = vunpack.c.0.s8 %v5883
    %v5885 = vlaneseq
    %v5886 = vshrl.u32 %v5885, 7
    %v5887 = vsub.s32 %v5884, %v5886
    %v5888 = vrot.slane %v5880, %v5887
    %v5890 = vunpack.c.l.s4 1966171168
    %v5891 = vunpack.c.0.s8 %v5890
    %v5892 = vlaneseq
    %v5893 = vshrl.u32 %v5892, 7
    %v5894 = vsub.s32 %v5891, %v5893
    %v5895 = vrot.slane %v5881, %v5894
    %v5896 = vcombine.low %v5888, %v5895
    %v5897 = vcombine.low %v3960, %v3974
    %v5898 = vcombine.low %v3982, %v3984
    %v5899 = vcombine.low %v3967, %v3981
    %v5900 = vcombine.low %v3983, %v3985
    %v5902 = vunpack.c.l.s4 1966171168
    %v5903 = vunpack.c.0.s8 %v5902
    %v5904 = vlaneseq
    %v5905 = vshrl.u32 %v5904, 7
    %v5906 = vsub.s32 %v5903, %v5905
    %v5907 = vrot.slane %v5897, %v5906
    %v5909 = vunpack.c.l.s4 1966171168
    %v5910 = vunpack.c.0.s8 %v5909
    %v5911 = vlaneseq
    %v5912 = vshrl.u32 %v5911, 7
    %v5913 = vsub.s32 %v5910, %v5912
    %v5914 = vrot.slane %v5898, %v5913
    %v5916 = vunpack.c.l.s4 1966171168
    %v5917 = vunpack.c.0.s8 %v5916
    %v5918 = vlaneseq
    %v5919 = vshrl.u32 %v5918, 7
    %v5920 = vsub.s32 %v5917, %v5919
    %v5921 = vrot.slane %v5899, %v5920
    %v5923 = vunpack.c.l.s4 1966171168
    %v5924 = vunpack.c.0.s8 %v5923
    %v5925 = vlaneseq
    %v5926 = vshrl.u32 %v5925, 7
    %v5927 = vsub.s32 %v5924, %v5926
    %v5928 = vrot.slane %v5900, %v5927
    %v5929 = vcombine.low %v5907, %v5914
    %v5930 = vcombine.low %v5921, %v5928
    %v5932 = vunpack.c.l.s4 1966171168
    %v5933 = vunpack.c.0.s8 %v5932
    %v5934 = vlaneseq
    %v5935 = vshrl.u32 %v5934, 7
    %v5936 = vsub.s32 %v5933, %v5935
    %v5937 = vrot.slane %v5929, %v5936
    %v5939 = vunpack.c.l.s4 1966171168
    %v5940 = vunpack.c.0.s8 %v5939
    %v5941 = vlaneseq
    %v5942 = vshrl.u32 %v5941, 7
    %v5943 = vsub.s32 %v5940, %v5942
    %v5944 = vrot.slane %v5930, %v5943
    %v5945 = vcombine.low %v5937, %v5944
    %v5946 = vcombine.low %v4009, %v4023
    %v5947 = vcombine.low %v4031, %v4033
    %v5948 = vcombine.low %v4016, %v4030
    %v5949 = vcombine.low %v4032, %v4034
    %v5951 = vunpack.c.l.s4 1966171168
    %v5952 = vunpack.c.0.s8 %v5951
    %v5953 = vlaneseq
    %v5954 = vshrl.u32 %v5953, 7
    %v5955 = vsub.s32 %v5952, %v5954
    %v5956 = vrot.slane %v5946, %v5955
    %v5958 = vunpack.c.l.s4 1966171168
    %v5959 = vunpack.c.0.s8 %v5958
    %v5960 = vlaneseq
    %v5961 = vshrl.u32 %v5960, 7
    %v5962 = vsub.s32 %v5959, %v5961
    %v5963 = vrot.slane %v5947, %v5962
    %v5965 = vunpack.c.l.s4 1966171168
    %v5966 = vunpack.c.0.s8 %v5965
    %v5967 = vlaneseq
    %v5968 = vshrl.u32 %v5967, 7
    %v5969 = vsub.s32 %v5966, %v5968
    %v5970 = vrot.slane %v5948, %v5969
    %v5972 = vunpack.c.l.s4 1966171168
    %v5973 = vunpack.c.0.s8 %v5972
    %v5974 = vlaneseq
    %v5975 = vshrl.u32 %v5974, 7
    %v5976 = vsub.s32 %v5973, %v5975
    %v5977 = vrot.slane %v5949, %v5976
    %v5978 = vcombine.low %v5956, %v5963
    %v5979 = vcombine.low %v5970, %v5977
    %v5981 = vunpack.c.l.s4 1966171168
    %v5982 = vunpack.c.0.s8 %v5981
    %v5983 = vlaneseq
    %v5984 = vshrl.u32 %v5983, 7
    %v5985 = vsub.s32 %v5982, %v5984
    %v5986 = vrot.slane %v5978, %v5985
    %v5988 = vunpack.c.l.s4 1966171168
    %v5989 = vunpack.c.0.s8 %v5988
    %v5990 = vlaneseq
    %v5991 = vshrl.u32 %v5990, 7
    %v5992 = vsub.s32 %v5989, %v5991
    %v5993 = vrot.slane %v5979, %v5992
    %v5994 = vcombine.low %v5986, %v5993
    %v5995 = vcombine.low %v4058, %v4072
    %v5996 = vcombine.low %v4080, %v4082
    %v5997 = vcombine.low %v4065, %v4079
    %v5998 = vcombine.low %v4081, %v4083
    %v6000 = vunpack.c.l.s4 1966171168
    %v6001 = vunpack.c.0.s8 %v6000
    %v6002 = vlaneseq
    %v6003 = vshrl.u32 %v6002, 7
    %v6004 = vsub.s32 %v6001, %v6003
    %v6005 = vrot.slane %v5995, %v6004
    %v6007 = vunpack.c.l.s4 1966171168
    %v6008 = vunpack.c.0.s8 %v6007
    %v6009 = vlaneseq
    %v6010 = vshrl.u32 %v6009, 7
    %v6011 = vsub.s32 %v6008, %v6010
    %v6012 = vrot.slane %v5996, %v6011
    %v6014 = vunpack.c.l.s4 1966171168
    %v6015 = vunpack.c.0.s8 %v6014
    %v6016 = vlaneseq
    %v6017 = vshrl.u32 %v6016, 7
    %v6018 = vsub.s32 %v6015, %v6017
    %v6019 = vrot.slane %v5997, %v6018
    %v6021 = vunpack.c.l.s4 1966171168
    %v6022 = vunpack.c.0.s8 %v6021
    %v6023 = vlaneseq
    %v6024 = vshrl.u32 %v6023, 7
    %v6025 = vsub.s32 %v6022, %v6024
    %v6026 = vrot.slane %v5998, %v6025
    %v6027 = vcombine.low %v6005, %v6012
    %v6028 = vcombine.low %v6019, %v6026
    %v6030 = vunpack.c.l.s4 1966171168
    %v6031 = vunpack.c.0.s8 %v6030
    %v6032 = vlaneseq
    %v6033 = vshrl.u32 %v6032, 7
    %v6034 = vsub.s32 %v6031, %v6033
    %v6035 = vrot.slane %v6027, %v6034
    %v6037 = vunpack.c.l.s4 1966171168
    %v6038 = vunpack.c.0.s8 %v6037
    %v6039 = vlaneseq
    %v6040 = vshrl.u32 %v6039, 7
    %v6041 = vsub.s32 %v6038, %v6040
    %v6042 = vrot.slane %v6028, %v6041
    %v6043 = vcombine.low %v6035, %v6042
    %v6044 = vcombine.low %v4107, %v4121
    %v6045 = vcombine.low %v4129, %v4131
    %v6046 = vcombine.low %v4114, %v4128
    %v6047 = vcombine.low %v4130, %v4132
    %v6049 = vunpack.c.l.s4 1966171168
    %v6050 = vunpack.c.0.s8 %v6049
    %v6051 = vlaneseq
    %v6052 = vshrl.u32 %v6051, 7
    %v6053 = vsub.s32 %v6050, %v6052
    %v6054 = vrot.slane %v6044, %v6053
    %v6056 = vunpack.c.l.s4 1966171168
    %v6057 = vunpack.c.0.s8 %v6056
    %v6058 = vlaneseq
    %v6059 = vshrl.u32 %v6058, 7
    %v6060 = vsub.s32 %v6057, %v6059
    %v6061 = vrot.slane %v6045, %v6060
    %v6063 = vunpack.c.l.s4 1966171168
    %v6064 = vunpack.c.0.s8 %v6063
    %v6065 = vlaneseq
    %v6066 = vshrl.u32 %v6065, 7
    %v6067 = vsub.s32 %v6064, %v6066
    %v6068 = vrot.slane %v6046, %v6067
    %v6070 = vunpack.c.l.s4 1966171168
    %v6071 = vunpack.c.0.s8 %v6070
    %v6072 = vlaneseq
    %v6073 = vshrl.u32 %v6072, 7
    %v6074 = vsub.s32 %v6071, %v6073
    %v6075 = vrot.slane %v6047, %v6074
    %v6076 = vcombine.low %v6054, %v6061
    %v6077 = vcombine.low %v6068, %v6075
    %v6079 = vunpack.c.l.s4 1966171168
    %v6080 = vunpack.c.0.s8 %v6079
    %v6081 = vlaneseq
    %v6082 = vshrl.u32 %v6081, 7
    %v6083 = vsub.s32 %v6080, %v6082
    %v6084 = vrot.slane %v6076, %v6083
    %v6086 = vunpack.c.l.s4 1966171168
    %v6087 = vunpack.c.0.s8 %v6086
    %v6088 = vlaneseq
    %v6089 = vshrl.u32 %v6088, 7
    %v6090 = vsub.s32 %v6087, %v6089
    %v6091 = vrot.slane %v6077, %v6090
    %v6092 = vcombine.low %v6084, %v6091
    %v6093 = vcombine.low %v4156, %v4170
    %v6094 = vcombine.low %v4178, %v4180
    %v6095 = vcombine.low %v4163, %v4177
    %v6096 = vcombine.low %v4179, %v4181
    %v6098 = vunpack.c.l.s4 1966171168
    %v6099 = vunpack.c.0.s8 %v6098
    %v6100 = vlaneseq
    %v6101 = vshrl.u32 %v6100, 7
    %v6102 = vsub.s32 %v6099, %v6101
    %v6103 = vrot.slane %v6093, %v6102
    %v6105 = vunpack.c.l.s4 1966171168
    %v6106 = vunpack.c.0.s8 %v6105
    %v6107 = vlaneseq
    %v6108 = vshrl.u32 %v6107, 7
    %v6109 = vsub.s32 %v6106, %v6108
    %v6110 = vrot.slane %v6094, %v6109
    %v6112 = vunpack.c.l.s4 1966171168
    %v6113 = vunpack.c.0.s8 %v6112
    %v6114 = vlaneseq
    %v6115 = vshrl.u32 %v6114, 7
    %v6116 = vsub.s32 %v6113, %v6115
    %v6117 = vrot.slane %v6095, %v6116
    %v6119 = vunpack.c.l.s4 1966171168
    %v6120 = vunpack.c.0.s8 %v6119
    %v6121 = vlaneseq
    %v6122 = vshrl.u32 %v6121, 7
    %v6123 = vsub.s32 %v6120, %v6122
    %v6124 = vrot.slane %v6096, %v6123
    %v6125 = vcombine.low %v6103, %v6110
    %v6126 = vcombine.low %v6117, %v6124
    %v6128 = vunpack.c.l.s4 1966171168
    %v6129 = vunpack.c.0.s8 %v6128
    %v6130 = vlaneseq
    %v6131 = vshrl.u32 %v6130, 7
    %v6132 = vsub.s32 %v6129, %v6131
    %v6133 = vrot.slane %v6125, %v6132
    %v6135 = vunpack.c.l.s4 1966171168
    %v6136 = vunpack.c.0.s8 %v6135
    %v6137 = vlaneseq
    %v6138 = vshrl.u32 %v6137, 7
    %v6139 = vsub.s32 %v6136, %v6138
    %v6140 = vrot.slane %v6126, %v6139
    %v6141 = vcombine.low %v6133, %v6140
    %v6142 = vcombine.low %v4205, %v4219
    %v6143 = vcombine.low %v4227, %v4229
    %v6144 = vcombine.low %v4212, %v4226
    %v6145 = vcombine.low %v4228, %v4230
    %v6147 = vunpack.c.l.s4 1966171168
    %v6148 = vunpack.c.0.s8 %v6147
    %v6149 = vlaneseq
    %v6150 = vshrl.u32 %v6149, 7
    %v6151 = vsub.s32 %v6148, %v6150
    %v6152 = vrot.slane %v6142, %v6151
    %v6154 = vunpack.c.l.s4 1966171168
    %v6155 = vunpack.c.0.s8 %v6154
    %v6156 = vlaneseq
    %v6157 = vshrl.u32 %v6156, 7
    %v6158 = vsub.s32 %v6155, %v6157
    %v6159 = vrot.slane %v6143, %v6158
    %v6161 = vunpack.c.l.s4 1966171168
    %v6162 = vunpack.c.0.s8 %v6161
    %v6163 = vlaneseq
    %v6164 = vshrl.u32 %v6163, 7
    %v6165 = vsub.s32 %v6162, %v6164
    %v6166 = vrot.slane %v6144, %v6165
    %v6168 = vunpack.c.l.s4 1966171168
    %v6169 = vunpack.c.0.s8 %v6168
    %v6170 = vlaneseq
    %v6171 = vshrl.u32 %v6170, 7
    %v6172 = vsub.s32 %v6169, %v6171
    %v6173 = vrot.slane %v6145, %v6172
    %v6174 = vcombine.low %v6152, %v6159
    %v6175 = vcombine.low %v6166, %v6173
    %v6177 = vunpack.c.l.s4 1966171168
    %v6178 = vunpack.c.0.s8 %v6177
    %v6179 = vlaneseq
    %v6180 = vshrl.u32 %v6179, 7
    %v6181 = vsub.s32 %v6178, %v6180
    %v6182 = vrot.slane %v6174, %v6181
    %v6184 = vunpack.c.l.s4 1966171168
    %v6185 = vunpack.c.0.s8 %v6184
    %v6186 = vlaneseq
    %v6187 = vshrl.u32 %v6186, 7
    %v6188 = vsub.s32 %v6185, %v6187
    %v6189 = vrot.slane %v6175, %v6188
    %v6190 = vcombine.low %v6182, %v6189
    %v6191 = vcombine.low %v4254, %v4268
    %v6192 = vcombine.low %v4276, %v4278
    %v6193 = vcombine.low %v4261, %v4275
    %v6194 = vcombine.low %v4277, %v4279
    %v6196 = vunpack.c.l.s4 1966171168
    %v6197 = vunpack.c.0.s8 %v6196
    %v6198 = vlaneseq
    %v6199 = vshrl.u32 %v6198, 7
    %v6200 = vsub.s32 %v6197, %v6199
    %v6201 = vrot.slane %v6191, %v6200
    %v6203 = vunpack.c.l.s4 1966171168
    %v6204 = vunpack.c.0.s8 %v6203
    %v6205 = vlaneseq
    %v6206 = vshrl.u32 %v6205, 7
    %v6207 = vsub.s32 %v6204, %v6206
    %v6208 = vrot.slane %v6192, %v6207
    %v6210 = vunpack.c.l.s4 1966171168
    %v6211 = vunpack.c.0.s8 %v6210
    %v6212 = vlaneseq
    %v6213 = vshrl.u32 %v6212, 7
    %v6214 = vsub.s32 %v6211, %v6213
    %v6215 = vrot.slane %v6193, %v6214
    %v6217 = vunpack.c.l.s4 1966171168
    %v6218 = vunpack.c.0.s8 %v6217
    %v6219 = vlaneseq
    %v6220 = vshrl.u32 %v6219, 7
    %v6221 = vsub.s32 %v6218, %v6220
    %v6222 = vrot.slane %v6194, %v6221
    %v6223 = vcombine.low %v6201, %v6208
    %v6224 = vcombine.low %v6215, %v6222
    %v6226 = vunpack.c.l.s4 1966171168
    %v6227 = vunpack.c.0.s8 %v6226
    %v6228 = vlaneseq
    %v6229 = vshrl.u32 %v6228, 7
    %v6230 = vsub.s32 %v6227, %v6229
    %v6231 = vrot.slane %v6223, %v6230
    %v6233 = vunpack.c.l.s4 1966171168
    %v6234 = vunpack.c.0.s8 %v6233
    %v6235 = vlaneseq
    %v6236 = vshrl.u32 %v6235, 7
    %v6237 = vsub.s32 %v6234, %v6236
    %v6238 = vrot.slane %v6224, %v6237
    %v6239 = vcombine.low %v6231, %v6238
    %v6240 = vcombine.low %v4303, %v4317
    %v6241 = vcombine.low %v4325, %v4327
    %v6242 = vcombine.low %v4310, %v4324
    %v6243 = vcombine.low %v4326, %v4328
    %v6245 = vunpack.c.l.s4 1966171168
    %v6246 = vunpack.c.0.s8 %v6245
    %v6247 = vlaneseq
    %v6248 = vshrl.u32 %v6247, 7
    %v6249 = vsub.s32 %v6246, %v6248
    %v6250 = vrot.slane %v6240, %v6249
    %v6252 = vunpack.c.l.s4 1966171168
    %v6253 = vunpack.c.0.s8 %v6252
    %v6254 = vlaneseq
    %v6255 = vshrl.u32 %v6254, 7
    %v6256 = vsub.s32 %v6253, %v6255
    %v6257 = vrot.slane %v6241, %v6256
    %v6259 = vunpack.c.l.s4 1966171168
    %v6260 = vunpack.c.0.s8 %v6259
    %v6261 = vlaneseq
    %v6262 = vshrl.u32 %v6261, 7
    %v6263 = vsub.s32 %v6260, %v6262
    %v6264 = vrot.slane %v6242, %v6263
    %v6266 = vunpack.c.l.s4 1966171168
    %v6267 = vunpack.c.0.s8 %v6266
    %v6268 = vlaneseq
    %v6269 = vshrl.u32 %v6268, 7
    %v6270 = vsub.s32 %v6267, %v6269
    %v6271 = vrot.slane %v6243, %v6270
    %v6272 = vcombine.low %v6250, %v6257
    %v6273 = vcombine.low %v6264, %v6271
    %v6275 = vunpack.c.l.s4 1966171168
    %v6276 = vunpack.c.0.s8 %v6275
    %v6277 = vlaneseq
    %v6278 = vshrl.u32 %v6277, 7
    %v6279 = vsub.s32 %v6276, %v6278
    %v6280 = vrot.slane %v6272, %v6279
    %v6282 = vunpack.c.l.s4 1966171168
    %v6283 = vunpack.c.0.s8 %v6282
    %v6284 = vlaneseq
    %v6285 = vshrl.u32 %v6284, 7
    %v6286 = vsub.s32 %v6283, %v6285
    %v6287 = vrot.slane %v6273, %v6286
    %v6288 = vcombine.low %v6280, %v6287
    %v6289 = vcombine.low %v4352, %v4366
    %v6290 = vcombine.low %v4374, %v4376
    %v6291 = vcombine.low %v4359, %v4373
    %v6292 = vcombine.low %v4375, %v4377
    %v6294 = vunpack.c.l.s4 1966171168
    %v6295 = vunpack.c.0.s8 %v6294
    %v6296 = vlaneseq
    %v6297 = vshrl.u32 %v6296, 7
    %v6298 = vsub.s32 %v6295, %v6297
    %v6299 = vrot.slane %v6289, %v6298
    %v6301 = vunpack.c.l.s4 1966171168
    %v6302 = vunpack.c.0.s8 %v6301
    %v6303 = vlaneseq
    %v6304 = vshrl.u32 %v6303, 7
    %v6305 = vsub.s32 %v6302, %v6304
    %v6306 = vrot.slane %v6290, %v6305
    %v6308 = vunpack.c.l.s4 1966171168
    %v6309 = vunpack.c.0.s8 %v6308
    %v6310 = vlaneseq
    %v6311 = vshrl.u32 %v6310, 7
    %v6312 = vsub.s32 %v6309, %v6311
    %v6313 = vrot.slane %v6291, %v6312
    %v6315 = vunpack.c.l.s4 1966171168
    %v6316 = vunpack.c.0.s8 %v6315
    %v6317 = vlaneseq
    %v6318 = vshrl.u32 %v6317, 7
    %v6319 = vsub.s32 %v6316, %v6318
    %v6320 = vrot.slane %v6292, %v6319
    %v6321 = vcombine.low %v6299, %v6306
    %v6322 = vcombine.low %v6313, %v6320
    %v6324 = vunpack.c.l.s4 1966171168
    %v6325 = vunpack.c.0.s8 %v6324
    %v6326 = vlaneseq
    %v6327 = vshrl.u32 %v6326, 7
    %v6328 = vsub.s32 %v6325, %v6327
    %v6329 = vrot.slane %v6321, %v6328
    %v6331 = vunpack.c.l.s4 1966171168
    %v6332 = vunpack.c.0.s8 %v6331
    %v6333 = vlaneseq
    %v6334 = vshrl.u32 %v6333, 7
    %v6335 = vsub.s32 %v6332, %v6334
    %v6336 = vrot.slane %v6322, %v6335
    %v6337 = vcombine.low %v6329, %v6336
    %v6338 = vcombine.low %v4401, %v4415
    %v6339 = vcombine.low %v4423, %v4425
    %v6340 = vcombine.low %v4408, %v4422
    %v6341 = vcombine.low %v4424, %v4426
    %v6343 = vunpack.c.l.s4 1966171168
    %v6344 = vunpack.c.0.s8 %v6343
    %v6345 = vlaneseq
    %v6346 = vshrl.u32 %v6345, 7
    %v6347 = vsub.s32 %v6344, %v6346
    %v6348 = vrot.slane %v6338, %v6347
    %v6350 = vunpack.c.l.s4 1966171168
    %v6351 = vunpack.c.0.s8 %v6350
    %v6352 = vlaneseq
    %v6353 = vshrl.u32 %v6352, 7
    %v6354 = vsub.s32 %v6351, %v6353
    %v6355 = vrot.slane %v6339, %v6354
    %v6357 = vunpack.c.l.s4 1966171168
    %v6358 = vunpack.c.0.s8 %v6357
    %v6359 = vlaneseq
    %v6360 = vshrl.u32 %v6359, 7
    %v6361 = vsub.s32 %v6358, %v6360
    %v6362 = vrot.slane %v6340, %v6361
    %v6364 = vunpack.c.l.s4 1966171168
    %v6365 = vunpack.c.0.s8 %v6364
    %v6366 = vlaneseq
    %v6367 = vshrl.u32 %v6366, 7
    %v6368 = vsub.s32 %v6365, %v6367
    %v6369 = vrot.slane %v6341, %v6368
    %v6370 = vcombine.low %v6348, %v6355
    %v6371 = vcombine.low %v6362, %v6369
    %v6373 = vunpack.c.l.s4 1966171168
    %v6374 = vunpack.c.0.s8 %v6373
    %v6375 = vlaneseq
    %v6376 = vshrl.u32 %v6375, 7
    %v6377 = vsub.s32 %v6374, %v6376
    %v6378 = vrot.slane %v6370, %v6377
    %v6380 = vunpack.c.l.s4 1966171168
    %v6381 = vunpack.c.0.s8 %v6380
    %v6382 = vlaneseq
    %v6383 = vshrl.u32 %v6382, 7
    %v6384 = vsub.s32 %v6381, %v6383
    %v6385 = vrot.slane %v6371, %v6384
    %v6386 = vcombine.low %v6378, %v6385
    %v6387 = vcombine.low %v4450, %v4464
    %v6388 = vcombine.low %v4472, %v4474
    %v6389 = vcombine.low %v4457, %v4471
    %v6390 = vcombine.low %v4473, %v4475
    %v6392 = vunpack.c.l.s4 1966171168
    %v6393 = vunpack.c.0.s8 %v6392
    %v6394 = vlaneseq
    %v6395 = vshrl.u32 %v6394, 7
    %v6396 = vsub.s32 %v6393, %v6395
    %v6397 = vrot.slane %v6387, %v6396
    %v6399 = vunpack.c.l.s4 1966171168
    %v6400 = vunpack.c.0.s8 %v6399
    %v6401 = vlaneseq
    %v6402 = vshrl.u32 %v6401, 7
    %v6403 = vsub.s32 %v6400, %v6402
    %v6404 = vrot.slane %v6388, %v6403
    %v6406 = vunpack.c.l.s4 1966171168
    %v6407 = vunpack.c.0.s8 %v6406
    %v6408 = vlaneseq
    %v6409 = vshrl.u32 %v6408, 7
    %v6410 = vsub.s32 %v6407, %v6409
    %v6411 = vrot.slane %v6389, %v6410
    %v6413 = vunpack.c.l.s4 1966171168
    %v6414 = vunpack.c.0.s8 %v6413
    %v6415 = vlaneseq
    %v6416 = vshrl.u32 %v6415, 7
    %v6417 = vsub.s32 %v6414, %v6416
    %v6418 = vrot.slane %v6390, %v6417
    %v6419 = vcombine.low %v6397, %v6404
    %v6420 = vcombine.low %v6411, %v6418
    %v6422 = vunpack.c.l.s4 1966171168
    %v6423 = vunpack.c.0.s8 %v6422
    %v6424 = vlaneseq
    %v6425 = vshrl.u32 %v6424, 7
    %v6426 = vsub.s32 %v6423, %v6425
    %v6427 = vrot.slane %v6419, %v6426
    %v6429 = vunpack.c.l.s4 1966171168
    %v6430 = vunpack.c.0.s8 %v6429
    %v6431 = vlaneseq
    %v6432 = vshrl.u32 %v6431, 7
    %v6433 = vsub.s32 %v6430, %v6432
    %v6434 = vrot.slane %v6420, %v6433
    %v6435 = vcombine.low %v6427, %v6434
    %v6436 = vcombine.low %v4499, %v4513
    %v6437 = vcombine.low %v4521, %v4523
    %v6438 = vcombine.low %v4506, %v4520
    %v6439 = vcombine.low %v4522, %v4524
    %v6441 = vunpack.c.l.s4 1966171168
    %v6442 = vunpack.c.0.s8 %v6441
    %v6443 = vlaneseq
    %v6444 = vshrl.u32 %v6443, 7
    %v6445 = vsub.s32 %v6442, %v6444
    %v6446 = vrot.slane %v6436, %v6445
    %v6448 = vunpack.c.l.s4 1966171168
    %v6449 = vunpack.c.0.s8 %v6448
    %v6450 = vlaneseq
    %v6451 = vshrl.u32 %v6450, 7
    %v6452 = vsub.s32 %v6449, %v6451
    %v6453 = vrot.slane %v6437, %v6452
    %v6455 = vunpack.c.l.s4 1966171168
    %v6456 = vunpack.c.0.s8 %v6455
    %v6457 = vlaneseq
    %v6458 = vshrl.u32 %v6457, 7
    %v6459 = vsub.s32 %v6456, %v6458
    %v6460 = vrot.slane %v6438, %v6459
    %v6462 = vunpack.c.l.s4 1966171168
    %v6463 = vunpack.c.0.s8 %v6462
    %v6464 = vlaneseq
    %v6465 = vshrl.u32 %v6464, 7
    %v6466 = vsub.s32 %v6463, %v6465
    %v6467 = vrot.slane %v6439, %v6466
    %v6468 = vcombine.low %v6446, %v6453
    %v6469 = vcombine.low %v6460, %v6467
    %v6471 = vunpack.c.l.s4 1966171168
    %v6472 = vunpack.c.0.s8 %v6471
    %v6473 = vlaneseq
    %v6474 = vshrl.u32 %v6473, 7
    %v6475 = vsub.s32 %v6472, %v6474
    %v6476 = vrot.slane %v6468, %v6475
    %v6478 = vunpack.c.l.s4 1966171168
    %v6479 = vunpack.c.0.s8 %v6478
    %v6480 = vlaneseq
    %v6481 = vshrl.u32 %v6480, 7
    %v6482 = vsub.s32 %v6479, %v6481
    %v6483 = vrot.slane %v6469, %v6482
    %v6484 = vcombine.low %v6476, %v6483
    %v6485 = vcombine.low %v4548, %v4562
    %v6486 = vcombine.low %v4570, %v4572
    %v6487 = vcombine.low %v4555, %v4569
    %v6488 = vcombine.low %v4571, %v4573
    %v6490 = vunpack.c.l.s4 1966171168
    %v6491 = vunpack.c.0.s8 %v6490
    %v6492 = vlaneseq
    %v6493 = vshrl.u32 %v6492, 7
    %v6494 = vsub.s32 %v6491, %v6493
    %v6495 = vrot.slane %v6485, %v6494
    %v6497 = vunpack.c.l.s4 1966171168
    %v6498 = vunpack.c.0.s8 %v6497
    %v6499 = vlaneseq
    %v6500 = vshrl.u32 %v6499, 7
    %v6501 = vsub.s32 %v6498, %v6500
    %v6502 = vrot.slane %v6486, %v6501
    %v6504 = vunpack.c.l.s4 1966171168
    %v6505 = vunpack.c.0.s8 %v6504
    %v6506 = vlaneseq
    %v6507 = vshrl.u32 %v6506, 7
    %v6508 = vsub.s32 %v6505, %v6507
    %v6509 = vrot.slane %v6487, %v6508
    %v6511 = vunpack.c.l.s4 1966171168
    %v6512 = vunpack.c.0.s8 %v6511
    %v6513 = vlaneseq
    %v6514 = vshrl.u32 %v6513, 7
    %v6515 = vsub.s32 %v6512, %v6514
    %v6516 = vrot.slane %v6488, %v6515
    %v6517 = vcombine.low %v6495, %v6502
    %v6518 = vcombine.low %v6509, %v6516
    %v6520 = vunpack.c.l.s4 1966171168
    %v6521 = vunpack.c.0.s8 %v6520
    %v6522 = vlaneseq
    %v6523 = vshrl.u32 %v6522, 7
    %v6524 = vsub.s32 %v6521, %v6523
    %v6525 = vrot.slane %v6517, %v6524
    %v6527 = vunpack.c.l.s4 1966171168
    %v6528 = vunpack.c.0.s8 %v6527
    %v6529 = vlaneseq
    %v6530 = vshrl.u32 %v6529, 7
    %v6531 = vsub.s32 %v6528, %v6530
    %v6532 = vrot.slane %v6518, %v6531
    %v6533 = vcombine.low %v6525, %v6532
    %v6534 = vcombine.low %v4597, %v4611
    %v6535 = vcombine.low %v4619, %v4621
    %v6536 = vcombine.low %v4604, %v4618
    %v6537 = vcombine.low %v4620, %v4622
    %v6539 = vunpack.c.l.s4 1966171168
    %v6540 = vunpack.c.0.s8 %v6539
    %v6541 = vlaneseq
    %v6542 = vshrl.u32 %v6541, 7
    %v6543 = vsub.s32 %v6540, %v6542
    %v6544 = vrot.slane %v6534, %v6543
    %v6546 = vunpack.c.l.s4 1966171168
    %v6547 = vunpack.c.0.s8 %v6546
    %v6548 = vlaneseq
    %v6549 = vshrl.u32 %v6548, 7
    %v6550 = vsub.s32 %v6547, %v6549
    %v6551 = vrot.slane %v6535, %v6550
    %v6553 = vunpack.c.l.s4 1966171168
    %v6554 = vunpack.c.0.s8 %v6553
    %v6555 = vlaneseq
    %v6556 = vshrl.u32 %v6555, 7
    %v6557 = vsub.s32 %v6554, %v6556
    %v6558 = vrot.slane %v6536, %v6557
    %v6560 = vunpack.c.l.s4 1966171168
    %v6561 = vunpack.c.0.s8 %v6560
    %v6562 = vlaneseq
    %v6563 = vshrl.u32 %v6562, 7
    %v6564 = vsub.s32 %v6561, %v6563
    %v6565 = vrot.slane %v6537, %v6564
    %v6566 = vcombine.low %v6544, %v6551
    %v6567 = vcombine.low %v6558, %v6565
    %v6569 = vunpack.c.l.s4 1966171168
    %v6570 = vunpack.c.0.s8 %v6569
    %v6571 = vlaneseq
    %v6572 = vshrl.u32 %v6571, 7
    %v6573 = vsub.s32 %v6570, %v6572
    %v6574 = vrot.slane %v6566, %v6573
    %v6576 = vunpack.c.l.s4 1966171168
    %v6577 = vunpack.c.0.s8 %v6576
    %v6578 = vlaneseq
    %v6579 = vshrl.u32 %v6578, 7
    %v6580 = vsub.s32 %v6577, %v6579
    %v6581 = vrot.slane %v6567, %v6580
    %v6582 = vcombine.low %v6574, %v6581
    %v6583 = vcombine.low %v4646, %v4660
    %v6584 = vcombine.low %v4668, %v4670
    %v6585 = vcombine.low %v4653, %v4667
    %v6586 = vcombine.low %v4669, %v4671
    %v6588 = vunpack.c.l.s4 1966171168
    %v6589 = vunpack.c.0.s8 %v6588
    %v6590 = vlaneseq
    %v6591 = vshrl.u32 %v6590, 7
    %v6592 = vsub.s32 %v6589, %v6591
    %v6593 = vrot.slane %v6583, %v6592
    %v6595 = vunpack.c.l.s4 1966171168
    %v6596 = vunpack.c.0.s8 %v6595
    %v6597 = vlaneseq
    %v6598 = vshrl.u32 %v6597, 7
    %v6599 = vsub.s32 %v6596, %v6598
    %v6600 = vrot.slane %v6584, %v6599
    %v6602 = vunpack.c.l.s4 1966171168
    %v6603 = vunpack.c.0.s8 %v6602
    %v6604 = vlaneseq
    %v6605 = vshrl.u32 %v6604, 7
    %v6606 = vsub.s32 %v6603, %v6605
    %v6607 = vrot.slane %v6585, %v6606
    %v6609 = vunpack.c.l.s4 1966171168
    %v6610 = vunpack.c.0.s8 %v6609
    %v6611 = vlaneseq
    %v6612 = vshrl.u32 %v6611, 7
    %v6613 = vsub.s32 %v6610, %v6612
    %v6614 = vrot.slane %v6586, %v6613
    %v6615 = vcombine.low %v6593, %v6600
    %v6616 = vcombine.low %v6607, %v6614
    %v6618 = vunpack.c.l.s4 1966171168
    %v6619 = vunpack.c.0.s8 %v6618
    %v6620 = vlaneseq
    %v6621 = vshrl.u32 %v6620, 7
    %v6622 = vsub.s32 %v6619, %v6621
    %v6623 = vrot.slane %v6615, %v6622
    %v6625 = vunpack.c.l.s4 1966171168
    %v6626 = vunpack.c.0.s8 %v6625
    %v6627 = vlaneseq
    %v6628 = vshrl.u32 %v6627, 7
    %v6629 = vsub.s32 %v6626, %v6628
    %v6630 = vrot.slane %v6616, %v6629
    %v6631 = vcombine.low %v6623, %v6630
    %v6632 = vcombine.low %v4695, %v4709
    %v6633 = vcombine.low %v4717, %v4719
    %v6634 = vcombine.low %v4702, %v4716
    %v6635 = vcombine.low %v4718, %v4720
    %v6637 = vunpack.c.l.s4 1966171168
    %v6638 = vunpack.c.0.s8 %v6637
    %v6639 = vlaneseq
    %v6640 = vshrl.u32 %v6639, 7
    %v6641 = vsub.s32 %v6638, %v6640
    %v6642 = vrot.slane %v6632, %v6641
    %v6644 = vunpack.c.l.s4 1966171168
    %v6645 = vunpack.c.0.s8 %v6644
    %v6646 = vlaneseq
    %v6647 = vshrl.u32 %v6646, 7
    %v6648 = vsub.s32 %v6645, %v6647
    %v6649 = vrot.slane %v6633, %v6648
    %v6651 = vunpack.c.l.s4 1966171168
    %v6652 = vunpack.c.0.s8 %v6651
    %v6653 = vlaneseq
    %v6654 = vshrl.u32 %v6653, 7
    %v6655 = vsub.s32 %v6652, %v6654
    %v6656 = vrot.slane %v6634, %v6655
    %v6658 = vunpack.c.l.s4 1966171168
    %v6659 = vunpack.c.0.s8 %v6658
    %v6660 = vlaneseq
    %v6661 = vshrl.u32 %v6660, 7
    %v6662 = vsub.s32 %v6659, %v6661
    %v6663 = vrot.slane %v6635, %v6662
    %v6664 = vcombine.low %v6642, %v6649
    %v6665 = vcombine.low %v6656, %v6663
    %v6667 = vunpack.c.l.s4 1966171168
    %v6668 = vunpack.c.0.s8 %v6667
    %v6669 = vlaneseq
    %v6670 = vshrl.u32 %v6669, 7
    %v6671 = vsub.s32 %v6668, %v6670
    %v6672 = vrot.slane %v6664, %v6671
    %v6674 = vunpack.c.l.s4 1966171168
    %v6675 = vunpack.c.0.s8 %v6674
    %v6676 = vlaneseq
    %v6677 = vshrl.u32 %v6676, 7
    %v6678 = vsub.s32 %v6675, %v6677
    %v6679 = vrot.slane %v6665, %v6678
    %v6680 = vcombine.low %v6672, %v6679
    %v6681 = vcombine.low %v4744, %v4758
    %v6682 = vcombine.low %v4766, %v4768
    %v6683 = vcombine.low %v4751, %v4765
    %v6684 = vcombine.low %v4767, %v4769
    %v6686 = vunpack.c.l.s4 1966171168
    %v6687 = vunpack.c.0.s8 %v6686
    %v6688 = vlaneseq
    %v6689 = vshrl.u32 %v6688, 7
    %v6690 = vsub.s32 %v6687, %v6689
    %v6691 = vrot.slane %v6681, %v6690
    %v6693 = vunpack.c.l.s4 1966171168
    %v6694 = vunpack.c.0.s8 %v6693
    %v6695 = vlaneseq
    %v6696 = vshrl.u32 %v6695, 7
    %v6697 = vsub.s32 %v6694, %v6696
    %v6698 = vrot.slane %v6682, %v6697
    %v6700 = vunpack.c.l.s4 1966171168
    %v6701 = vunpack.c.0.s8 %v6700
    %v6702 = vlaneseq
    %v6703 = vshrl.u32 %v6702, 7
    %v6704 = vsub.s32 %v6701, %v6703
    %v6705 = vrot.slane %v6683, %v6704
    %v6707 = vunpack.c.l.s4 1966171168
    %v6708 = vunpack.c.0.s8 %v6707
    %v6709 = vlaneseq
    %v6710 = vshrl.u32 %v6709, 7
    %v6711 = vsub.s32 %v6708, %v6710
    %v6712 = vrot.slane %v6684, %v6711
    %v6713 = vcombine.low %v6691, %v6698
    %v6714 = vcombine.low %v6705, %v6712
    %v6716 = vunpack.c.l.s4 1966171168
    %v6717 = vunpack.c.0.s8 %v6716
    %v6718 = vlaneseq
    %v6719 = vshrl.u32 %v6718, 7
    %v6720 = vsub.s32 %v6717, %v6719
    %v6721 = vrot.slane %v6713, %v6720
    %v6723 = vunpack.c.l.s4 1966171168
    %v6724 = vunpack.c.0.s8 %v6723
    %v6725 = vlaneseq
    %v6726 = vshrl.u32 %v6725, 7
    %v6727 = vsub.s32 %v6724, %v6726
    %v6728 = vrot.slane %v6714, %v6727
    %v6729 = vcombine.low %v6721, %v6728
    %v6730 = vcombine.low %v4793, %v4807
    %v6731 = vcombine.low %v4815, %v4817
    %v6732 = vcombine.low %v4800, %v4814
    %v6733 = vcombine.low %v4816, %v4818
    %v6735 = vunpack.c.l.s4 1966171168
    %v6736 = vunpack.c.0.s8 %v6735
    %v6737 = vlaneseq
    %v6738 = vshrl.u32 %v6737, 7
    %v6739 = vsub.s32 %v6736, %v6738
    %v6740 = vrot.slane %v6730, %v6739
    %v6742 = vunpack.c.l.s4 1966171168
    %v6743 = vunpack.c.0.s8 %v6742
    %v6744 = vlaneseq
    %v6745 = vshrl.u32 %v6744, 7
    %v6746 = vsub.s32 %v6743, %v6745
    %v6747 = vrot.slane %v6731, %v6746
    %v6749 = vunpack.c.l.s4 1966171168
    %v6750 = vunpack.c.0.s8 %v6749
    %v6751 = vlaneseq
    %v6752 = vshrl.u32 %v6751, 7
    %v6753 = vsub.s32 %v6750, %v6752
    %v6754 = vrot.slane %v6732, %v6753
    %v6756 = vunpack.c.l.s4 1966171168
    %v6757 = vunpack.c.0.s8 %v6756
    %v6758 = vlaneseq
    %v6759 = vshrl.u32 %v6758, 7
    %v6760 = vsub.s32 %v6757, %v6759
    %v6761 = vrot.slane %v6733, %v6760
    %v6762 = vcombine.low %v6740, %v6747
    %v6763 = vcombine.low %v6754, %v6761
    %v6765 = vunpack.c.l.s4 1966171168
    %v6766 = vunpack.c.0.s8 %v6765
    %v6767 = vlaneseq
    %v6768 = vshrl.u32 %v6767, 7
    %v6769 = vsub.s32 %v6766, %v6768
    %v6770 = vrot.slane %v6762, %v6769
    %v6772 = vunpack.c.l.s4 1966171168
    %v6773 = vunpack.c.0.s8 %v6772
    %v6774 = vlaneseq
    %v6775 = vshrl.u32 %v6774, 7
    %v6776 = vsub.s32 %v6773, %v6775
    %v6777 = vrot.slane %v6763, %v6776
    %v6778 = vcombine.low %v6770, %v6777
    %v6779 = vcombine.low %v4842, %v4856
    %v6780 = vcombine.low %v4864, %v4866
    %v6781 = vcombine.low %v4849, %v4863
    %v6782 = vcombine.low %v4865, %v4867
    %v6784 = vunpack.c.l.s4 1966171168
    %v6785 = vunpack.c.0.s8 %v6784
    %v6786 = vlaneseq
    %v6787 = vshrl.u32 %v6786, 7
    %v6788 = vsub.s32 %v6785, %v6787
    %v6789 = vrot.slane %v6779, %v6788
    %v6791 = vunpack.c.l.s4 1966171168
    %v6792 = vunpack.c.0.s8 %v6791
    %v6793 = vlaneseq
    %v6794 = vshrl.u32 %v6793, 7
    %v6795 = vsub.s32 %v6792, %v6794
    %v6796 = vrot.slane %v6780, %v6795
    %v6798 = vunpack.c.l.s4 1966171168
    %v6799 = vunpack.c.0.s8 %v6798
    %v6800 = vlaneseq
    %v6801 = vshrl.u32 %v6800, 7
    %v6802 = vsub.s32 %v6799, %v6801
    %v6803 = vrot.slane %v6781, %v6802
    %v6805 = vunpack.c.l.s4 1966171168
    %v6806 = vunpack.c.0.s8 %v6805
    %v6807 = vlaneseq
    %v6808 = vshrl.u32 %v6807, 7
    %v6809 = vsub.s32 %v6806, %v6808
    %v6810 = vrot.slane %v6782, %v6809
    %v6811 = vcombine.low %v6789, %v6796
    %v6812 = vcombine.low %v6803, %v6810
    %v6814 = vunpack.c.l.s4 1966171168
    %v6815 = vunpack.c.0.s8 %v6814
    %v6816 = vlaneseq
    %v6817 = vshrl.u32 %v6816, 7
    %v6818 = vsub.s32 %v6815, %v6817
    %v6819 = vrot.slane %v6811, %v6818
    %v6821 = vunpack.c.l.s4 1966171168
    %v6822 = vunpack.c.0.s8 %v6821
    %v6823 = vlaneseq
    %v6824 = vshrl.u32 %v6823, 7
    %v6825 = vsub.s32 %v6822, %v6824
    %v6826 = vrot.slane %v6812, %v6825
    %v6827 = vcombine.low %v6819, %v6826
    %v6828 = vcombine.low %v4891, %v4905
    %v6829 = vcombine.low %v4913, %v4915
    %v6830 = vcombine.low %v4898, %v4912
    %v6831 = vcombine.low %v4914, %v4916
    %v6833 = vunpack.c.l.s4 1966171168
    %v6834 = vunpack.c.0.s8 %v6833
    %v6835 = vlaneseq
    %v6836 = vshrl.u32 %v6835, 7
    %v6837 = vsub.s32 %v6834, %v6836
    %v6838 = vrot.slane %v6828, %v6837
    %v6840 = vunpack.c.l.s4 1966171168
    %v6841 = vunpack.c.0.s8 %v6840
    %v6842 = vlaneseq
    %v6843 = vshrl.u32 %v6842, 7
    %v6844 = vsub.s32 %v6841, %v6843
    %v6845 = vrot.slane %v6829, %v6844
    %v6847 = vunpack.c.l.s4 1966171168
    %v6848 = vunpack.c.0.s8 %v6847
    %v6849 = vlaneseq
    %v6850 = vshrl.u32 %v6849, 7
    %v6851 = vsub.s32 %v6848, %v6850
    %v6852 = vrot.slane %v6830, %v6851
    %v6854 = vunpack.c.l.s4 1966171168
    %v6855 = vunpack.c.0.s8 %v6854
    %v6856 = vlaneseq
    %v6857 = vshrl.u32 %v6856, 7
    %v6858 = vsub.s32 %v6855, %v6857
    %v6859 = vrot.slane %v6831, %v6858
    %v6860 = vcombine.low %v6838, %v6845
    %v6861 = vcombine.low %v6852, %v6859
    %v6863 = vunpack.c.l.s4 1966171168
    %v6864 = vunpack.c.0.s8 %v6863
    %v6865 = vlaneseq
    %v6866 = vshrl.u32 %v6865, 7
    %v6867 = vsub.s32 %v6864, %v6866
    %v6868 = vrot.slane %v6860, %v6867
    %v6870 = vunpack.c.l.s4 1966171168
    %v6871 = vunpack.c.0.s8 %v6870
    %v6872 = vlaneseq
    %v6873 = vshrl.u32 %v6872, 7
    %v6874 = vsub.s32 %v6871, %v6873
    %v6875 = vrot.slane %v6861, %v6874
    %v6876 = vcombine.low %v6868, %v6875
    %v6877 = vcombine.low %v4940, %v4954
    %v6878 = vcombine.low %v4962, %v4964
    %v6879 = vcombine.low %v4947, %v4961
    %v6880 = vcombine.low %v4963, %v4965
    %v6882 = vunpack.c.l.s4 1966171168
    %v6883 = vunpack.c.0.s8 %v6882
    %v6884 = vlaneseq
    %v6885 = vshrl.u32 %v6884, 7
    %v6886 = vsub.s32 %v6883, %v6885
    %v6887 = vrot.slane %v6877, %v6886
    %v6889 = vunpack.c.l.s4 1966171168
    %v6890 = vunpack.c.0.s8 %v6889
    %v6891 = vlaneseq
    %v6892 = vshrl.u32 %v6891, 7
    %v6893 = vsub.s32 %v6890, %v6892
    %v6894 = vrot.slane %v6878, %v6893
    %v6896 = vunpack.c.l.s4 1966171168
    %v6897 = vunpack.c.0.s8 %v6896
    %v6898 = vlaneseq
    %v6899 = vshrl.u32 %v6898, 7
    %v6900 = vsub.s32 %v6897, %v6899
    %v6901 = vrot.slane %v6879, %v6900
    %v6903 = vunpack.c.l.s4 1966171168
    %v6904 = vunpack.c.0.s8 %v6903
    %v6905 = vlaneseq
    %v6906 = vshrl.u32 %v6905, 7
    %v6907 = vsub.s32 %v6904, %v6906
    %v6908 = vrot.slane %v6880, %v6907
    %v6909 = vcombine.low %v6887, %v6894
    %v6910 = vcombine.low %v6901, %v6908
    %v6912 = vunpack.c.l.s4 1966171168
    %v6913 = vunpack.c.0.s8 %v6912
    %v6914 = vlaneseq
    %v6915 = vshrl.u32 %v6914, 7
    %v6916 = vsub.s32 %v6913, %v6915
    %v6917 = vrot.slane %v6909, %v6916
    %v6919 = vunpack.c.l.s4 1966171168
    %v6920 = vunpack.c.0.s8 %v6919
    %v6921 = vlaneseq
    %v6922 = vshrl.u32 %v6921, 7
    %v6923 = vsub.s32 %v6920, %v6922
    %v6924 = vrot.slane %v6910, %v6923
    %v6925 = vcombine.low %v6917, %v6924
    %v6926 = vcombine.low %v4989, %v5003
    %v6927 = vcombine.low %v5011, %v5013
    %v6928 = vcombine.low %v4996, %v5010
    %v6929 = vcombine.low %v5012, %v5014
    %v6931 = vunpack.c.l.s4 1966171168
    %v6932 = vunpack.c.0.s8 %v6931
    %v6933 = vlaneseq
    %v6934 = vshrl.u32 %v6933, 7
    %v6935 = vsub.s32 %v6932, %v6934
    %v6936 = vrot.slane %v6926, %v6935
    %v6938 = vunpack.c.l.s4 1966171168
    %v6939 = vunpack.c.0.s8 %v6938
    %v6940 = vlaneseq
    %v6941 = vshrl.u32 %v6940, 7
    %v6942 = vsub.s32 %v6939, %v6941
    %v6943 = vrot.slane %v6927, %v6942
    %v6945 = vunpack.c.l.s4 1966171168
    %v6946 = vunpack.c.0.s8 %v6945
    %v6947 = vlaneseq
    %v6948 = vshrl.u32 %v6947, 7
    %v6949 = vsub.s32 %v6946, %v6948
    %v6950 = vrot.slane %v6928, %v6949
    %v6952 = vunpack.c.l.s4 1966171168
    %v6953 = vunpack.c.0.s8 %v6952
    %v6954 = vlaneseq
    %v6955 = vshrl.u32 %v6954, 7
    %v6956 = vsub.s32 %v6953, %v6955
    %v6957 = vrot.slane %v6929, %v6956
    %v6958 = vcombine.low %v6936, %v6943
    %v6959 = vcombine.low %v6950, %v6957
    %v6961 = vunpack.c.l.s4 1966171168
    %v6962 = vunpack.c.0.s8 %v6961
    %v6963 = vlaneseq
    %v6964 = vshrl.u32 %v6963, 7
    %v6965 = vsub.s32 %v6962, %v6964
    %v6966 = vrot.slane %v6958, %v6965
    %v6968 = vunpack.c.l.s4 1966171168
    %v6969 = vunpack.c.0.s8 %v6968
    %v6970 = vlaneseq
    %v6971 = vshrl.u32 %v6970, 7
    %v6972 = vsub.s32 %v6969, %v6971
    %v6973 = vrot.slane %v6959, %v6972
    %v6974 = vcombine.low %v6966, %v6973
    %v6975 = vcombine.low %v5038, %v5052
    %v6976 = vcombine.low %v5060, %v5062
    %v6977 = vcombine.low %v5045, %v5059
    %v6978 = vcombine.low %v5061, %v5063
    %v6980 = vunpack.c.l.s4 1966171168
    %v6981 = vunpack.c.0.s8 %v6980
    %v6982 = vlaneseq
    %v6983 = vshrl.u32 %v6982, 7
    %v6984 = vsub.s32 %v6981, %v6983
    %v6985 = vrot.slane %v6975, %v6984
    %v6987 = vunpack.c.l.s4 1966171168
    %v6988 = vunpack.c.0.s8 %v6987
    %v6989 = vlaneseq
    %v6990 = vshrl.u32 %v6989, 7
    %v6991 = vsub.s32 %v6988, %v6990
    %v6992 = vrot.slane %v6976, %v6991
    %v6994 = vunpack.c.l.s4 1966171168
    %v6995 = vunpack.c.0.s8 %v6994
    %v6996 = vlaneseq
    %v6997 = vshrl.u32 %v6996, 7
    %v6998 = vsub.s32 %v6995, %v6997
    %v6999 = vrot.slane %v6977, %v6998
    %v7001 = vunpack.c.l.s4 1966171168
    %v7002 = vunpack.c.0.s8 %v7001
    %v7003 = vlaneseq
    %v7004 = vshrl.u32 %v7003, 7
    %v7005 = vsub.s32 %v7002, %v7004
    %v7006 = vrot.slane %v6978, %v7005
    %v7007 = vcombine.low %v6985, %v6992
    %v7008 = vcombine.low %v6999, %v7006
    %v7010 = vunpack.c.l.s4 1966171168
    %v7011 = vunpack.c.0.s8 %v7010
    %v7012 = vlaneseq
    %v7013 = vshrl.u32 %v7012, 7
    %v7014 = vsub.s32 %v7011, %v7013
    %v7015 = vrot.slane %v7007, %v7014
    %v7017 = vunpack.c.l.s4 1966171168
    %v7018 = vunpack.c.0.s8 %v7017
    %v7019 = vlaneseq
    %v7020 = vshrl.u32 %v7019, 7
    %v7021 = vsub.s32 %v7018, %v7020
    %v7022 = vrot.slane %v7008, %v7021
    %v7023 = vcombine.low %v7015, %v7022
    %v7024 = vcombine.low %v5087, %v5101
    %v7025 = vcombine.low %v5109, %v5111
    %v7026 = vcombine.low %v5094, %v5108
    %v7027 = vcombine.low %v5110, %v5112
    %v7029 = vunpack.c.l.s4 1966171168
    %v7030 = vunpack.c.0.s8 %v7029
    %v7031 = vlaneseq
    %v7032 = vshrl.u32 %v7031, 7
    %v7033 = vsub.s32 %v7030, %v7032
    %v7034 = vrot.slane %v7024, %v7033
    %v7036 = vunpack.c.l.s4 1966171168
    %v7037 = vunpack.c.0.s8 %v7036
    %v7038 = vlaneseq
    %v7039 = vshrl.u32 %v7038, 7
    %v7040 = vsub.s32 %v7037, %v7039
    %v7041 = vrot.slane %v7025, %v7040
    %v7043 = vunpack.c.l.s4 1966171168
    %v7044 = vunpack.c.0.s8 %v7043
    %v7045 = vlaneseq
    %v7046 = vshrl.u32 %v7045, 7
    %v7047 = vsub.s32 %v7044, %v7046
    %v7048 = vrot.slane %v7026, %v7047
    %v7050 = vunpack.c.l.s4 1966171168
    %v7051 = vunpack.c.0.s8 %v7050
    %v7052 = vlaneseq
    %v7053 = vshrl.u32 %v7052, 7
    %v7054 = vsub.s32 %v7051, %v7053
    %v7055 = vrot.slane %v7027, %v7054
    %v7056 = vcombine.low %v7034, %v7041
    %v7057 = vcombine.low %v7048, %v7055
    %v7059 = vunpack.c.l.s4 1966171168
    %v7060 = vunpack.c.0.s8 %v7059
    %v7061 = vlaneseq
    %v7062 = vshrl.u32 %v7061, 7
    %v7063 = vsub.s32 %v7060, %v7062
    %v7064 = vrot.slane %v7056, %v7063
    %v7066 = vunpack.c.l.s4 1966171168
    %v7067 = vunpack.c.0.s8 %v7066
    %v7068 = vlaneseq
    %v7069 = vshrl.u32 %v7068, 7
    %v7070 = vsub.s32 %v7067, %v7069
    %v7071 = vrot.slane %v7057, %v7070
    %v7072 = vcombine.low %v7064, %v7071
    %v7073 = vcombine.low %v5136, %v5150
    %v7074 = vcombine.low %v5158, %v5160
    %v7075 = vcombine.low %v5143, %v5157
    %v7076 = vcombine.low %v5159, %v5161
    %v7078 = vunpack.c.l.s4 1966171168
    %v7079 = vunpack.c.0.s8 %v7078
    %v7080 = vlaneseq
    %v7081 = vshrl.u32 %v7080, 7
    %v7082 = vsub.s32 %v7079, %v7081
    %v7083 = vrot.slane %v7073, %v7082
    %v7085 = vunpack.c.l.s4 1966171168
    %v7086 = vunpack.c.0.s8 %v7085
    %v7087 = vlaneseq
    %v7088 = vshrl.u32 %v7087, 7
    %v7089 = vsub.s32 %v7086, %v7088
    %v7090 = vrot.slane %v7074, %v7089
    %v7092 = vunpack.c.l.s4 1966171168
    %v7093 = vunpack.c.0.s8 %v7092
    %v7094 = vlaneseq
    %v7095 = vshrl.u32 %v7094, 7
    %v7096 = vsub.s32 %v7093, %v7095
    %v7097 = vrot.slane %v7075, %v7096
    %v7099 = vunpack.c.l.s4 1966171168
    %v7100 = vunpack.c.0.s8 %v7099
    %v7101 = vlaneseq
    %v7102 = vshrl.u32 %v7101, 7
    %v7103 = vsub.s32 %v7100, %v7102
    %v7104 = vrot.slane %v7076, %v7103
    %v7105 = vcombine.low %v7083, %v7090
    %v7106 = vcombine.low %v7097, %v7104
    %v7108 = vunpack.c.l.s4 1966171168
    %v7109 = vunpack.c.0.s8 %v7108
    %v7110 = vlaneseq
    %v7111 = vshrl.u32 %v7110, 7
    %v7112 = vsub.s32 %v7109, %v7111
    %v7113 = vrot.slane %v7105, %v7112
    %v7115 = vunpack.c.l.s4 1966171168
    %v7116 = vunpack.c.0.s8 %v7115
    %v7117 = vlaneseq
    %v7118 = vshrl.u32 %v7117, 7
    %v7119 = vsub.s32 %v7116, %v7118
    %v7120 = vrot.slane %v7106, %v7119
    %v7121 = vcombine.low %v7113, %v7120
    %v7122 = vcombine.low %v5185, %v5199
    %v7123 = vcombine.low %v5207, %v5209
    %v7124 = vcombine.low %v5192, %v5206
    %v7125 = vcombine.low %v5208, %v5210
    %v7127 = vunpack.c.l.s4 1966171168
    %v7128 = vunpack.c.0.s8 %v7127
    %v7129 = vlaneseq
    %v7130 = vshrl.u32 %v7129, 7
    %v7131 = vsub.s32 %v7128, %v7130
    %v7132 = vrot.slane %v7122, %v7131
    %v7134 = vunpack.c.l.s4 1966171168
    %v7135 = vunpack.c.0.s8 %v7134
    %v7136 = vlaneseq
    %v7137 = vshrl.u32 %v7136, 7
    %v7138 = vsub.s32 %v7135, %v7137
    %v7139 = vrot.slane %v7123, %v7138
    %v7141 = vunpack.c.l.s4 1966171168
    %v7142 = vunpack.c.0.s8 %v7141
    %v7143 = vlaneseq
    %v7144 = vshrl.u32 %v7143, 7
    %v7145 = vsub.s32 %v7142, %v7144
    %v7146 = vrot.slane %v7124, %v7145
    %v7148 = vunpack.c.l.s4 1966171168
    %v7149 = vunpack.c.0.s8 %v7148
    %v7150 = vlaneseq
    %v7151 = vshrl.u32 %v7150, 7
    %v7152 = vsub.s32 %v7149, %v7151
    %v7153 = vrot.slane %v7125, %v7152
    %v7154 = vcombine.low %v7132, %v7139
    %v7155 = vcombine.low %v7146, %v7153
    %v7157 = vunpack.c.l.s4 1966171168
    %v7158 = vunpack.c.0.s8 %v7157
    %v7159 = vlaneseq
    %v7160 = vshrl.u32 %v7159, 7
    %v7161 = vsub.s32 %v7158, %v7160
    %v7162 = vrot.slane %v7154, %v7161
    %v7164 = vunpack.c.l.s4 1966171168
    %v7165 = vunpack.c.0.s8 %v7164
    %v7166 = vlaneseq
    %v7167 = vshrl.u32 %v7166, 7
    %v7168 = vsub.s32 %v7165, %v7167
    %v7169 = vrot.slane %v7155, %v7168
    %v7170 = vcombine.low %v7162, %v7169
    %v7171 = vcombine.low %v5234, %v5248
    %v7172 = vcombine.low %v5256, %v5258
    %v7173 = vcombine.low %v5241, %v5255
    %v7174 = vcombine.low %v5257, %v5259
    %v7176 = vunpack.c.l.s4 1966171168
    %v7177 = vunpack.c.0.s8 %v7176
    %v7178 = vlaneseq
    %v7179 = vshrl.u32 %v7178, 7
    %v7180 = vsub.s32 %v7177, %v7179
    %v7181 = vrot.slane %v7171, %v7180
    %v7183 = vunpack.c.l.s4 1966171168
    %v7184 = vunpack.c.0.s8 %v7183
    %v7185 = vlaneseq
    %v7186 = vshrl.u32 %v7185, 7
    %v7187 = vsub.s32 %v7184, %v7186
    %v7188 = vrot.slane %v7172, %v7187
    %v7190 = vunpack.c.l.s4 1966171168
    %v7191 = vunpack.c.0.s8 %v7190
    %v7192 = vlaneseq
    %v7193 = vshrl.u32 %v7192, 7
    %v7194 = vsub.s32 %v7191, %v7193
    %v7195 = vrot.slane %v7173, %v7194
    %v7197 = vunpack.c.l.s4 1966171168
    %v7198 = vunpack.c.0.s8 %v7197
    %v7199 = vlaneseq
    %v7200 = vshrl.u32 %v7199, 7
    %v7201 = vsub.s32 %v7198, %v7200
    %v7202 = vrot.slane %v7174, %v7201
    %v7203 = vcombine.low %v7181, %v7188
    %v7204 = vcombine.low %v7195, %v7202
    %v7206 = vunpack.c.l.s4 1966171168
    %v7207 = vunpack.c.0.s8 %v7206
    %v7208 = vlaneseq
    %v7209 = vshrl.u32 %v7208, 7
    %v7210 = vsub.s32 %v7207, %v7209
    %v7211 = vrot.slane %v7203, %v7210
    %v7213 = vunpack.c.l.s4 1966171168
    %v7214 = vunpack.c.0.s8 %v7213
    %v7215 = vlaneseq
    %v7216 = vshrl.u32 %v7215, 7
    %v7217 = vsub.s32 %v7214, %v7216
    %v7218 = vrot.slane %v7204, %v7217
    %v7219 = vcombine.low %v7211, %v7218
    %7220 = vset.pattern.permute.xlu0 0
    %7221 = vperm.xlu0 %7220, %v5308
    %v7222 = vpop.permute.xlu0 %7221
    %7223 = vset.pattern.permute.xlu0 0
    %7224 = vperm.xlu0 %7223, %v5357
    %v7225 = vpop.permute.xlu0 %7224
    %7226 = vset.pattern.permute.xlu0 0
    %7227 = vperm.xlu0 %7226, %v5406
    %v7228 = vpop.permute.xlu0 %7227
    %7229 = vset.pattern.permute.xlu0 0
    %7230 = vperm.xlu0 %7229, %v5455
    %v7231 = vpop.permute.xlu0 %7230
    %7232 = vset.pattern.permute.xlu0 0
    %7233 = vperm.xlu0 %7232, %v5504
    %v7234 = vpop.permute.xlu0 %7233
    %7235 = vset.pattern.permute.xlu0 0
    %7236 = vperm.xlu0 %7235, %v5553
    %v7237 = vpop.permute.xlu0 %7236
    %7238 = vset.pattern.permute.xlu0 0
    %7239 = vperm.xlu0 %7238, %v5602
    %v7240 = vpop.permute.xlu0 %7239
    %7241 = vset.pattern.permute.xlu0 0
    %7242 = vperm.xlu0 %7241, %v5651
    %v7243 = vpop.permute.xlu0 %7242
    %7244 = vset.pattern.permute.xlu0 0
    %7245 = vperm.xlu0 %7244, %v5700
    %v7246 = vpop.permute.xlu0 %7245
    %7247 = vset.pattern.permute.xlu0 0
    %7248 = vperm.xlu0 %7247, %v5749
    %v7249 = vpop.permute.xlu0 %7248
    %7250 = vset.pattern.permute.xlu0 0
    %7251 = vperm.xlu0 %7250, %v5798
    %v7252 = vpop.permute.xlu0 %7251
    %7253 = vset.pattern.permute.xlu0 0
    %7254 = vperm.xlu0 %7253, %v5847
    %v7255 = vpop.permute.xlu0 %7254
    %7256 = vset.pattern.permute.xlu0 0
    %7257 = vperm.xlu0 %7256, %v5896
    %v7258 = vpop.permute.xlu0 %7257
    %7259 = vset.pattern.permute.xlu0 0
    %7260 = vperm.xlu0 %7259, %v5945
    %v7261 = vpop.permute.xlu0 %7260
    %7262 = vset.pattern.permute.xlu0 0
    %7263 = vperm.xlu0 %7262, %v5994
    %v7264 = vpop.permute.xlu0 %7263
    %7265 = vset.pattern.permute.xlu0 0
    %7266 = vperm.xlu0 %7265, %v6043
    %v7267 = vpop.permute.xlu0 %7266
    %7268 = vset.pattern.permute.xlu0 0
    %7269 = vperm.xlu0 %7268, %v6092
    %v7270 = vpop.permute.xlu0 %7269
    %7271 = vset.pattern.permute.xlu0 0
    %7272 = vperm.xlu0 %7271, %v6141
    %v7273 = vpop.permute.xlu0 %7272
    %7274 = vset.pattern.permute.xlu0 0
    %7275 = vperm.xlu0 %7274, %v6190
    %v7276 = vpop.permute.xlu0 %7275
    %7277 = vset.pattern.permute.xlu0 0
    %7278 = vperm.xlu0 %7277, %v6239
    %v7279 = vpop.permute.xlu0 %7278
    %7280 = vset.pattern.permute.xlu0 0
    %7281 = vperm.xlu0 %7280, %v6288
    %v7282 = vpop.permute.xlu0 %7281
    %7283 = vset.pattern.permute.xlu0 0
    %7284 = vperm.xlu0 %7283, %v6337
    %v7285 = vpop.permute.xlu0 %7284
    %7286 = vset.pattern.permute.xlu0 0
    %7287 = vperm.xlu0 %7286, %v6386
    %v7288 = vpop.permute.xlu0 %7287
    %7289 = vset.pattern.permute.xlu0 0
    %7290 = vperm.xlu0 %7289, %v6435
    %v7291 = vpop.permute.xlu0 %7290
    %7292 = vset.pattern.permute.xlu0 0
    %7293 = vperm.xlu0 %7292, %v6484
    %v7294 = vpop.permute.xlu0 %7293
    %7295 = vset.pattern.permute.xlu0 0
    %7296 = vperm.xlu0 %7295, %v6533
    %v7297 = vpop.permute.xlu0 %7296
    %7298 = vset.pattern.permute.xlu0 0
    %7299 = vperm.xlu0 %7298, %v6582
    %v7300 = vpop.permute.xlu0 %7299
    %7301 = vset.pattern.permute.xlu0 0
    %7302 = vperm.xlu0 %7301, %v6631
    %v7303 = vpop.permute.xlu0 %7302
    %7304 = vset.pattern.permute.xlu0 0
    %7305 = vperm.xlu0 %7304, %v6680
    %v7306 = vpop.permute.xlu0 %7305
    %7307 = vset.pattern.permute.xlu0 0
    %7308 = vperm.xlu0 %7307, %v6729
    %v7309 = vpop.permute.xlu0 %7308
    %7310 = vset.pattern.permute.xlu0 0
    %7311 = vperm.xlu0 %7310, %v6778
    %v7312 = vpop.permute.xlu0 %7311
    %7313 = vset.pattern.permute.xlu0 0
    %7314 = vperm.xlu0 %7313, %v6827
    %v7315 = vpop.permute.xlu0 %7314
    %7316 = vset.pattern.permute.xlu0 0
    %7317 = vperm.xlu0 %7316, %v6876
    %v7318 = vpop.permute.xlu0 %7317
    %7319 = vset.pattern.permute.xlu0 0
    %7320 = vperm.xlu0 %7319, %v6925
    %v7321 = vpop.permute.xlu0 %7320
    %7322 = vset.pattern.permute.xlu0 0
    %7323 = vperm.xlu0 %7322, %v6974
    %v7324 = vpop.permute.xlu0 %7323
    %7325 = vset.pattern.permute.xlu0 0
    %7326 = vperm.xlu0 %7325, %v7023
    %v7327 = vpop.permute.xlu0 %7326
    %7328 = vset.pattern.permute.xlu0 0
    %7329 = vperm.xlu0 %7328, %v7072
    %v7330 = vpop.permute.xlu0 %7329
    %7331 = vset.pattern.permute.xlu0 0
    %7332 = vperm.xlu0 %7331, %v7121
    %v7333 = vpop.permute.xlu0 %7332
    %7334 = vset.pattern.permute.xlu0 0
    %7335 = vperm.xlu0 %7334, %v7170
    %v7336 = vpop.permute.xlu0 %7335
    %7337 = vset.pattern.permute.xlu0 0
    %7338 = vperm.xlu0 %7337, %v7219
    %v7339 = vpop.permute.xlu0 %7338
    %v7340 = vlaneseq
    %v7341 = vand.u32 %v7340, 127
    %v7342 = vlaneseq
    %v7343 = vshrl.u32 %v7342, 7
    %v7344 = vsub.s32 %v7341, %v7343
    %v7345 = vrot.slane %v7222, %v7344
    %v7346 = vadd.s32 %v7341, 4294967288
    %v7347 = vlaneseq
    %v7348 = vshrl.u32 %v7347, 7
    %v7349 = vsub.s32 %v7346, %v7348
    %v7350 = vrot.slane %v7225, %v7349
    %vm7351 = vcmask 130112
    %v7352 = vsel %vm7351, %v7350, %v7345
    %v7353 = vadd.s32 %v7341, 4294967280
    %v7354 = vlaneseq
    %v7355 = vshrl.u32 %v7354, 7
    %v7356 = vsub.s32 %v7353, %v7355
    %v7357 = vrot.slane %v7228, %v7356
    %vm7358 = vcmask 195712
    %v7359 = vsel %vm7358, %v7357, %v7352
    %v7360 = vadd.s32 %v7341, 4294967272
    %v7361 = vlaneseq
    %v7362 = vshrl.u32 %v7361, 7
    %v7363 = vsub.s32 %v7360, %v7362
    %v7364 = vrot.slane %v7231, %v7363
    %vm7365 = vcmask 261312
    %v7366 = vsel %vm7365, %v7364, %v7359
    %v7367 = vadd.s32 %v7341, 4294967264
    %v7368 = vlaneseq
    %v7369 = vshrl.u32 %v7368, 7
    %v7370 = vsub.s32 %v7367, %v7369
    %v7371 = vrot.slane %v7234, %v7370
    %vm7372 = vcmask 326912
    %v7373 = vsel %vm7372, %v7371, %v7366
    %v7374 = vadd.s32 %v7341, 4294967256
    %v7375 = vlaneseq
    %v7376 = vshrl.u32 %v7375, 7
    %v7377 = vsub.s32 %v7374, %v7376
    %v7378 = vrot.slane %v7237, %v7377
    %vm7379 = vcmask 392512
    %v7380 = vsel %vm7379, %v7378, %v7373
    %v7381 = vadd.s32 %v7341, 4294967248
    %v7382 = vlaneseq
    %v7383 = vshrl.u32 %v7382, 7
    %v7384 = vsub.s32 %v7381, %v7383
    %v7385 = vrot.slane %v7240, %v7384
    %vm7386 = vcmask 458112
    %v7387 = vsel %vm7386, %v7385, %v7380
    %v7388 = vadd.s32 %v7341, 4294967240
    %v7389 = vlaneseq
    %v7390 = vshrl.u32 %v7389, 7
    %v7391 = vsub.s32 %v7388, %v7390
    %v7392 = vrot.slane %v7243, %v7391
    %vm7393 = vcmask 523712
    %v7394 = vsel %vm7393, %v7392, %v7387
    %v7395 = vadd.s32 %v7341, 4294967232
    %v7396 = vlaneseq
    %v7397 = vshrl.u32 %v7396, 7
    %v7398 = vsub.s32 %v7395, %v7397
    %v7399 = vrot.slane %v7246, %v7398
    %vm7400 = vcmask 589312
    %v7401 = vsel %vm7400, %v7399, %v7394
    %v7402 = vadd.s32 %v7341, 4294967224
    %v7403 = vlaneseq
    %v7404 = vshrl.u32 %v7403, 7
    %v7405 = vsub.s32 %v7402, %v7404
    %v7406 = vrot.slane %v7249, %v7405
    %vm7407 = vcmask 654912
    %v7408 = vsel %vm7407, %v7406, %v7401
    %v7409 = vadd.s32 %v7341, 4294967216
    %v7410 = vlaneseq
    %v7411 = vshrl.u32 %v7410, 7
    %v7412 = vsub.s32 %v7409, %v7411
    %v7413 = vrot.slane %v7252, %v7412
    %vm7414 = vcmask 720512
    %v7415 = vsel %vm7414, %v7413, %v7408
    %v7416 = vadd.s32 %v7341, 4294967208
    %v7417 = vlaneseq
    %v7418 = vshrl.u32 %v7417, 7
    %v7419 = vsub.s32 %v7416, %v7418
    %v7420 = vrot.slane %v7255, %v7419
    %vm7421 = vcmask 786112
    %v7422 = vsel %vm7421, %v7420, %v7415
    %v7423 = vadd.s32 %v7341, 4294967200
    %v7424 = vlaneseq
    %v7425 = vshrl.u32 %v7424, 7
    %v7426 = vsub.s32 %v7423, %v7425
    %v7427 = vrot.slane %v7258, %v7426
    %vm7428 = vcmask 851712
    %v7429 = vsel %vm7428, %v7427, %v7422
    %v7430 = vadd.s32 %v7341, 4294967192
    %v7431 = vlaneseq
    %v7432 = vshrl.u32 %v7431, 7
    %v7433 = vsub.s32 %v7430, %v7432
    %v7434 = vrot.slane %v7261, %v7433
    %vm7435 = vcmask 917312
    %v7436 = vsel %vm7435, %v7434, %v7429
    %v7437 = vadd.s32 %v7341, 4294967184
    %v7438 = vlaneseq
    %v7439 = vshrl.u32 %v7438, 7
    %v7440 = vsub.s32 %v7437, %v7439
    %v7441 = vrot.slane %v7264, %v7440
    %vm7442 = vcmask 982912
    %v7443 = vsel %vm7442, %v7441, %v7436
    %v7444 = vadd.s32 %v7341, 4294967176
    %v7445 = vlaneseq
    %v7446 = vshrl.u32 %v7445, 7
    %v7447 = vsub.s32 %v7444, %v7446
    %v7448 = vrot.slane %v7267, %v7447
    %vm7449 = vcmask 1048512
    %v7450 = vsel %vm7449, %v7448, %v7443
    %v7451 = vlaneseq
    %v7452 = vshrl.u32 %v7451, 7
    %v7453 = vsub.s32 %v7341, %v7452
    %v7454 = vrot.slane %v7270, %v7453
    %v7455 = vlaneseq
    %v7456 = vshrl.u32 %v7455, 7
    %v7457 = vsub.s32 %v7346, %v7456
    %v7458 = vrot.slane %v7273, %v7457
    %v7459 = vsel %vm7351, %v7458, %v7454
    %v7460 = vlaneseq
    %v7461 = vshrl.u32 %v7460, 7
    %v7462 = vsub.s32 %v7353, %v7461
    %v7463 = vrot.slane %v7276, %v7462
    %v7464 = vsel %vm7358, %v7463, %v7459
    %v7465 = vlaneseq
    %v7466 = vshrl.u32 %v7465, 7
    %v7467 = vsub.s32 %v7360, %v7466
    %v7468 = vrot.slane %v7279, %v7467
    %v7469 = vsel %vm7365, %v7468, %v7464
    %v7470 = vlaneseq
    %v7471 = vshrl.u32 %v7470, 7
    %v7472 = vsub.s32 %v7367, %v7471
    %v7473 = vrot.slane %v7282, %v7472
    %v7474 = vsel %vm7372, %v7473, %v7469
    %v7475 = vlaneseq
    %v7476 = vshrl.u32 %v7475, 7
    %v7477 = vsub.s32 %v7374, %v7476
    %v7478 = vrot.slane %v7285, %v7477
    %v7479 = vsel %vm7379, %v7478, %v7474
    %v7480 = vlaneseq
    %v7481 = vshrl.u32 %v7480, 7
    %v7482 = vsub.s32 %v7381, %v7481
    %v7483 = vrot.slane %v7288, %v7482
    %v7484 = vsel %vm7386, %v7483, %v7479
    %v7485 = vlaneseq
    %v7486 = vshrl.u32 %v7485, 7
    %v7487 = vsub.s32 %v7388, %v7486
    %v7488 = vrot.slane %v7291, %v7487
    %v7489 = vsel %vm7393, %v7488, %v7484
    %v7490 = vlaneseq
    %v7491 = vshrl.u32 %v7490, 7
    %v7492 = vsub.s32 %v7395, %v7491
    %v7493 = vrot.slane %v7294, %v7492
    %v7494 = vsel %vm7400, %v7493, %v7489
    %v7495 = vlaneseq
    %v7496 = vshrl.u32 %v7495, 7
    %v7497 = vsub.s32 %v7402, %v7496
    %v7498 = vrot.slane %v7297, %v7497
    %v7499 = vsel %vm7407, %v7498, %v7494
    %v7500 = vlaneseq
    %v7501 = vshrl.u32 %v7500, 7
    %v7502 = vsub.s32 %v7409, %v7501
    %v7503 = vrot.slane %v7300, %v7502
    %v7504 = vsel %vm7414, %v7503, %v7499
    %v7505 = vlaneseq
    %v7506 = vshrl.u32 %v7505, 7
    %v7507 = vsub.s32 %v7416, %v7506
    %v7508 = vrot.slane %v7303, %v7507
    %v7509 = vsel %vm7421, %v7508, %v7504
    %v7510 = vlaneseq
    %v7511 = vshrl.u32 %v7510, 7
    %v7512 = vsub.s32 %v7423, %v7511
    %v7513 = vrot.slane %v7306, %v7512
    %v7514 = vsel %vm7428, %v7513, %v7509
    %v7515 = vlaneseq
    %v7516 = vshrl.u32 %v7515, 7
    %v7517 = vsub.s32 %v7430, %v7516
    %v7518 = vrot.slane %v7309, %v7517
    %v7519 = vsel %vm7435, %v7518, %v7514
    %v7520 = vlaneseq
    %v7521 = vshrl.u32 %v7520, 7
    %v7522 = vsub.s32 %v7437, %v7521
    %v7523 = vrot.slane %v7312, %v7522
    %v7524 = vsel %vm7442, %v7523, %v7519
    %v7525 = vlaneseq
    %v7526 = vshrl.u32 %v7525, 7
    %v7527 = vsub.s32 %v7444, %v7526
    %v7528 = vrot.slane %v7315, %v7527
    %v7529 = vsel %vm7449, %v7528, %v7524
    %v7530 = vlaneseq
    %v7531 = vshrl.u32 %v7530, 7
    %v7532 = vsub.s32 %v7341, %v7531
    %v7533 = vrot.slane %v7318, %v7532
    %v7534 = vlaneseq
    %v7535 = vshrl.u32 %v7534, 7
    %v7536 = vsub.s32 %v7346, %v7535
    %v7537 = vrot.slane %v7321, %v7536
    %v7538 = vsel %vm7351, %v7537, %v7533
    %v7539 = vlaneseq
    %v7540 = vshrl.u32 %v7539, 7
    %v7541 = vsub.s32 %v7353, %v7540
    %v7542 = vrot.slane %v7324, %v7541
    %v7543 = vsel %vm7358, %v7542, %v7538
    %v7544 = vlaneseq
    %v7545 = vshrl.u32 %v7544, 7
    %v7546 = vsub.s32 %v7360, %v7545
    %v7547 = vrot.slane %v7327, %v7546
    %v7548 = vsel %vm7365, %v7547, %v7543
    %v7549 = vlaneseq
    %v7550 = vshrl.u32 %v7549, 7
    %v7551 = vsub.s32 %v7367, %v7550
    %v7552 = vrot.slane %v7330, %v7551
    %v7553 = vsel %vm7372, %v7552, %v7548
    %v7554 = vlaneseq
    %v7555 = vshrl.u32 %v7554, 7
    %v7556 = vsub.s32 %v7374, %v7555
    %v7557 = vrot.slane %v7333, %v7556
    %v7558 = vsel %vm7379, %v7557, %v7553
    %v7559 = vlaneseq
    %v7560 = vshrl.u32 %v7559, 7
    %v7561 = vsub.s32 %v7381, %v7560
    %v7562 = vrot.slane %v7336, %v7561
    %v7563 = vsel %vm7386, %v7562, %v7558
    %v7564 = vlaneseq
    %v7565 = vshrl.u32 %v7564, 7
    %v7566 = vsub.s32 %v7388, %v7565
    %v7567 = vrot.slane %v7339, %v7566
    %v7568 = vsel %vm7393, %v7567, %v7563
    %v7569 = vcombine.low %v7450, %v7529
    %v7571 = vunpack.c.l.s4 1966171168
    %v7572 = vunpack.c.0.s8 %v7571
    %v7573 = vlaneseq
    %v7574 = vshrl.u32 %v7573, 7
    %v7575 = vsub.s32 %v7572, %v7574
    %v7576 = vrot.slane %v7569, %v7575
    %v7578 = vunpack.c.l.s4 1966171168
    %v7579 = vunpack.c.0.s8 %v7578
    %v7580 = vlaneseq
    %v7581 = vshrl.u32 %v7580, 7
    %v7582 = vsub.s32 %v7579, %v7581
    %v7583 = vrot.slane %v7568, %v7582
    %v7584 = vcombine.low %v7576, %v7583
    %v7586 = vunpack.c.l.s4 1966171168
    %v7587 = vunpack.c.0.s8 %v7586
    %v7588 = vlaneseq
    %v7589 = vshrl.u32 %v7588, 7
    %v7590 = vsub.s32 %v7587, %v7589
    %v7591 = vrot.slane %v7584, %v7590
    %v7593 = vlaneseq
    %vm7594 = vcmp.ge.s32.totalorder %v7593, 0
    %vm7595 = vcmp.lt.s32.totalorder %v7593, 320
    %vm7596 = vmand %vm7594, %vm7595
    %7597 = vst.msk [vmem:[%s58] sm:$0x7] %vm7596, %v7591
    %v7598 = vmax.f32 %v60, %v100
    %v7599 = vmax.f32 %v61, %v101
    %v7600 = vmax.f32 %v62, %v102
    %v7601 = vmax.f32 %v63, %v103
    %v7602 = vmax.f32 %v64, %v104
    %v7603 = vmax.f32 %v65, %v105
    %v7604 = vmax.f32 %v66, %v106
    %v7605 = vmax.f32 %v67, %v107
    %v7606 = vmax.f32 %v68, %v108
    %v7607 = vmax.f32 %v69, %v109
    %v7608 = vmax.f32 %v70, %v110
    %v7609 = vmax.f32 %v71, %v111
    %v7610 = vmax.f32 %v72, %v112
    %v7611 = vmax.f32 %v73, %v113
    %v7612 = vmax.f32 %v74, %v114
    %v7613 = vmax.f32 %v75, %v115
    %v7614 = vmax.f32 %v76, %v116
    %v7615 = vmax.f32 %v77, %v117
    %v7616 = vmax.f32 %v78, %v118
    %v7617 = vmax.f32 %v79, %v119
    %v7618 = vmax.f32 %v80, %v120
    %v7619 = vmax.f32 %v81, %v121
    %v7620 = vmax.f32 %v82, %v122
    %v7621 = vmax.f32 %v83, %v123
    %v7622 = vmax.f32 %v84, %v124
    %v7623 = vmax.f32 %v85, %v125
    %v7624 = vmax.f32 %v86, %v126
    %v7625 = vmax.f32 %v87, %v127
    %v7626 = vmax.f32 %v88, %v128
    %v7627 = vmax.f32 %v89, %v129
    %v7628 = vmax.f32 %v90, %v130
    %v7629 = vmax.f32 %v91, %v131
    %v7630 = vmax.f32 %v92, %v132
    %v7631 = vmax.f32 %v93, %v133
    %v7632 = vmax.f32 %v94, %v134
    %v7633 = vmax.f32 %v95, %v135
    %v7634 = vmax.f32 %v96, %v136
    %v7635 = vmax.f32 %v97, %v137
    %v7636 = vmax.f32 %v98, %v138
    %v7637 = vmax.f32 %v99, %v139
    %v7638 = vmax.f32 %v7598, %v7618
    %v7639 = vmax.f32 %v7599, %v7619
    %v7640 = vmax.f32 %v7600, %v7620
    %v7641 = vmax.f32 %v7601, %v7621
    %v7642 = vmax.f32 %v7602, %v7622
    %v7643 = vmax.f32 %v7603, %v7623
    %v7644 = vmax.f32 %v7604, %v7624
    %v7645 = vmax.f32 %v7605, %v7625
    %v7646 = vmax.f32 %v7606, %v7626
    %v7647 = vmax.f32 %v7607, %v7627
    %v7648 = vmax.f32 %v7608, %v7628
    %v7649 = vmax.f32 %v7609, %v7629
    %v7650 = vmax.f32 %v7610, %v7630
    %v7651 = vmax.f32 %v7611, %v7631
    %v7652 = vmax.f32 %v7612, %v7632
    %v7653 = vmax.f32 %v7613, %v7633
    %v7654 = vmax.f32 %v7614, %v7634
    %v7655 = vmax.f32 %v7615, %v7635
    %v7656 = vmax.f32 %v7616, %v7636
    %v7657 = vmax.f32 %v7617, %v7637
    %v7658 = vmax.f32 %v7638, %v7648
    %v7659 = vmax.f32 %v7639, %v7649
    %v7660 = vmax.f32 %v7640, %v7650
    %v7661 = vmax.f32 %v7641, %v7651
    %v7662 = vmax.f32 %v7642, %v7652
    %v7663 = vmax.f32 %v7643, %v7653
    %v7664 = vmax.f32 %v7644, %v7654
    %v7665 = vmax.f32 %v7645, %v7655
    %v7666 = vmax.f32 %v7646, %v7656
    %v7667 = vmax.f32 %v7647, %v7657
    %vm7674 = vcmask 1043456
    %v7675 = vrot.slane %v7662, 4
    %v7676 = vrot.slane %v7664, 4
    %v7677 = vsel %vm7674, %v7675, %v7676
    %v7678 = vrot.slane %v7663, 4
    %v7679 = vrot.slane %v7665, 4
    %v7680 = vsel %vm7674, %v7678, %v7679
    %v7681 = vrot.slane %v7666, 4
    %v7682 = vsel %vm7674, %v7676, %v7681
    %v7683 = vrot.slane %v7667, 4
    %v7684 = vsel %vm7674, %v7679, %v7683
    %v7691 = vmax.f32 %v7658, %v7677
    %v7692 = vmax.f32 %v7659, %v7680
    %v7693 = vmax.f32 %v7660, %v7682
    %v7694 = vmax.f32 %v7661, %v7684
    %v7695 = vmax.f32 %v7662, %v7681
    %v7696 = vmax.f32 %v7663, %v7683
    %vm7701 = vcmask 1045504
    %v7702 = vrot.slane %v7693, 2
    %v7703 = vrot.slane %v7695, 2
    %v7704 = vsel %vm7701, %v7702, %v7703
    %v7705 = vrot.slane %v7694, 2
    %v7706 = vrot.slane %v7696, 2
    %v7707 = vsel %vm7701, %v7705, %v7706
    %v7712 = vmax.f32 %v7691, %v7704
    %v7713 = vmax.f32 %v7692, %v7707
    %v7714 = vmax.f32 %v7693, %v7703
    %v7715 = vmax.f32 %v7694, %v7706
    %p7716 = scmp.eq.s32.totalorder 0, 0
    // Predicated region
    $region22: #{supv_localize_forward.1} parent=1 // pred_check
      %p7717 = pneg %p7716
    $region23: #{supv_localize_forward.1} parent=1 // pred_check_branch
      %7719 = sbr.rel (%p7717) target = $region25
    $region24: #{supv_localize_forward.1} parent=1 // pred_region
      %7720 = vst [vmem:[#allocation2] sm:$0xff] %v7712
      %7721 = vst [vmem:[#allocation2 + $0x8] sm:$0xff] %v7713
      %7722 = vst [vmem:[#allocation2 + $0x10] sm:$0x3] %v7714
      %7723 = vst [vmem:[#allocation2 + $0x18] sm:$0x3] %v7715
    $region25: #{supv_localize_forward.1} parent=1 // pred_fallthru
      _
    %p7724 = scmp.ne.s32.totalorder 0, 0
    // Predicated region
    $region26: #{supv_localize_forward.1} parent=1 // pred_check
      %p7725 = pneg %p7724
    $region27: #{supv_localize_forward.1} parent=1 // pred_check_branch
      %7727 = sbr.rel (%p7725) target = $region29
    $region28: #{supv_localize_forward.1} parent=1 // pred_region
      %v7728 = vld [vmem:[#allocation2] sm:$0xff]
      %v7729 = vld [vmem:[#allocation2 + $0x8] sm:$0xff]
      %v7730 = vld [vmem:[#allocation2 + $0x10] sm:$0x3]
      %v7731 = vld [vmem:[#allocation2 + $0x18] sm:$0x3]
      %v7732 = vmax.f32 %v7728, %v7712
      %v7733 = vmax.f32 %v7729, %v7713
      %v7734 = vmax.f32 %v7730, %v7714
      %v7735 = vmax.f32 %v7731, %v7715
      %7736 = vst [vmem:[#allocation2] sm:$0xff] %v7732
      %7737 = vst [vmem:[#allocation2 + $0x8] sm:$0xff] %v7733
      %7738 = vst [vmem:[#allocation2 + $0x10] sm:$0x3] %v7734
      %7739 = vst [vmem:[#allocation2 + $0x18] sm:$0x3] %v7735
    $region29: #{supv_localize_forward.1} parent=1 // pred_fallthru
      _
    // Predicated region
    $region30: #{supv_localize_forward.1} parent=1 // pred_check
      %p7740 = pneg %p7716
    $region31: #{supv_localize_forward.1} parent=1 // pred_check_branch
      %7742 = sbr.rel (%p7740) target = $region33
    $region32: #{supv_localize_forward.1} parent=1 // pred_region
      %v7743 = vld [vmem:[#allocation2] sm:$0xff]
      %v7744 = vld [vmem:[#allocation2 + $0x8] sm:$0xff]
      %v7745 = vld [vmem:[#allocation2 + $0x10] sm:$0x3]
      %v7746 = vld [vmem:[#allocation2 + $0x18] sm:$0x3]
      %v7747 = vld [vmem:[%s3] sm:$0xff]
      %v7748 = vld [vmem:[%s3 + $0x8] sm:$0xff]
      %v7749 = vld [vmem:[%s3 + $0x10] sm:$0xff]
      %v7750 = vld [vmem:[%s3 + $0x18] sm:$0xff]
      %v7751 = vld [vmem:[%s3 + $0x20] sm:$0xff]
      %v7752 = vld [vmem:[%s3 + $0x28] sm:$0xff]
      %v7753 = vld [vmem:[%s3 + $0x30] sm:$0xff]
      %v7754 = vld [vmem:[%s3 + $0x38] sm:$0xff]
      %v7755 = vld [vmem:[%s3 + $0x40] sm:$0xff]
      %v7756 = vld [vmem:[%s3 + $0x48] sm:$0xff]
      %v7757 = vld [vmem:[%s3 + $0x50] sm:$0xff]
      %v7758 = vld [vmem:[%s3 + $0x58] sm:$0xff]
      %v7759 = vld [vmem:[%s3 + $0x60] sm:$0xff]
      %v7760 = vld [vmem:[%s3 + $0x68] sm:$0xff]
      %v7761 = vld [vmem:[%s3 + $0x70] sm:$0xff]
      %v7762 = vld [vmem:[%s3 + $0x78] sm:$0xff]
      %v7763 = vld [vmem:[%s3 + $0x80] sm:$0xff]
      %v7764 = vld [vmem:[%s3 + $0x88] sm:$0xff]
      %v7765 = vld [vmem:[%s3 + $0x90] sm:$0xff]
      %v7766 = vld [vmem:[%s3 + $0x98] sm:$0xff]
      %v7767 = vld [vmem:[%s3 + $0xa0] sm:$0xff]
      %v7768 = vld [vmem:[%s3 + $0xa8] sm:$0xff]
      %v7769 = vld [vmem:[%s3 + $0xb0] sm:$0xff]
      %v7770 = vld [vmem:[%s3 + $0xb8] sm:$0xff]
      %v7771 = vld [vmem:[%s3 + $0xc0] sm:$0xff]
      %v7772 = vld [vmem:[%s3 + $0xc8] sm:$0xff]
      %v7773 = vld [vmem:[%s3 + $0xd0] sm:$0xff]
      %v7774 = vld [vmem:[%s3 + $0xd8] sm:$0xff]
      %v7775 = vld [vmem:[%s3 + $0xe0] sm:$0xff]
      %v7776 = vld [vmem:[%s3 + $0xe8] sm:$0xff]
      %v7777 = vld [vmem:[%s3 + $0xf0] sm:$0xff]
      %v7778 = vld [vmem:[%s3 + $0xf8] sm:$0xff]
      %v7779 = vld [vmem:[%s4] sm:$0x1]
      %v7781 = vlaneseq
      %v7782 = vshrl.u32 %v7781, 7
      %v7783 = vsub.s32 0, %v7782
      %v7784 = vrot.slane %v7779, %v7783
      %7786 = vmatprep.subr.mxu0 0.0
      %v7787 = vand.u32 %v7762, 4294901760
      %7788 = vmatpush1.msra.mxu0 %v7787
      %7789 = vmatprep.subr.mxu0 0.0
      %v7790 = vand.u32 %v7761, 4294901760
      %7791 = vmatpush1.msra.mxu0 %v7790
      %7792 = vmatprep.subr.mxu0 0.0
      %v7793 = vand.u32 %v7760, 4294901760
      %7794 = vmatpush1.msra.mxu0 %v7793
      %7795 = vmatprep.subr.mxu0 0.0
      %v7796 = vand.u32 %v7759, 4294901760
      %7797 = vmatpush1.msra.mxu0 %v7796
      %7798 = vmatprep.subr.mxu0 0.0
      %v7799 = vand.u32 %v7758, 4294901760
      %7800 = vmatpush1.msra.mxu0 %v7799
      %7801 = vmatprep.subr.mxu0 0.0
      %v7802 = vand.u32 %v7757, 4294901760
      %7803 = vmatpush1.msra.mxu0 %v7802
      %7804 = vmatprep.subr.mxu0 0.0
      %v7805 = vand.u32 %v7756, 4294901760
      %7806 = vmatpush1.msra.mxu0 %v7805
      %7807 = vmatprep.subr.mxu0 0.0
      %v7808 = vand.u32 %v7755, 4294901760
      %7809 = vmatpush1.msra.mxu0 %v7808
      %7810 = vmatprep.subr.mxu0 0.0
      %v7811 = vand.u32 %v7754, 4294901760
      %7812 = vmatpush1.msra.mxu0 %v7811
      %7813 = vmatprep.subr.mxu0 0.0
      %v7814 = vand.u32 %v7753, 4294901760
      %7815 = vmatpush1.msra.mxu0 %v7814
      %7816 = vmatprep.subr.mxu0 0.0
      %v7817 = vand.u32 %v7752, 4294901760
      %7818 = vmatpush1.msra.mxu0 %v7817
      %7819 = vmatprep.subr.mxu0 0.0
      %v7820 = vand.u32 %v7751, 4294901760
      %7821 = vmatpush1.msra.mxu0 %v7820
      %7822 = vmatprep.subr.mxu0 0.0
      %v7823 = vand.u32 %v7750, 4294901760
      %7824 = vmatpush1.msra.mxu0 %v7823
      %7825 = vmatprep.subr.mxu0 0.0
      %v7826 = vand.u32 %v7749, 4294901760
      %7827 = vmatpush1.msra.mxu0 %v7826
      %7828 = vmatprep.subr.mxu0 0.0
      %v7829 = vand.u32 %v7748, 4294901760
      %7830 = vmatpush1.msra.mxu0 %v7829
      %7831 = vmatprep.subr.mxu0 0.0
      %v7832 = vand.u32 %v7747, 4294901760
      %7833 = vmatpush1.msra.mxu0 %v7832
      %7834 = vmatprep.subr.mxu0 0.0
      %v7835 = vand.u32 %v7778, 4294901760
      %7836 = vmatpush2.msra.mxu0 %v7835
      %7837 = vmatprep.subr.mxu0 0.0
      %v7838 = vand.u32 %v7777, 4294901760
      %7839 = vmatpush2.msra.mxu0 %v7838
      %7840 = vmatprep.subr.mxu0 0.0
      %v7841 = vand.u32 %v7776, 4294901760
      %7842 = vmatpush2.msra.mxu0 %v7841
      %7843 = vmatprep.subr.mxu0 0.0
      %v7844 = vand.u32 %v7775, 4294901760
      %7845 = vmatpush2.msra.mxu0 %v7844
      %7846 = vmatprep.subr.mxu0 0.0
      %v7847 = vand.u32 %v7774, 4294901760
      %7848 = vmatpush2.msra.mxu0 %v7847
      %7849 = vmatprep.subr.mxu0 0.0
      %v7850 = vand.u32 %v7773, 4294901760
      %7851 = vmatpush2.msra.mxu0 %v7850
      %7852 = vmatprep.subr.mxu0 0.0
      %v7853 = vand.u32 %v7772, 4294901760
      %7854 = vmatpush2.msra.mxu0 %v7853
      %7855 = vmatprep.subr.mxu0 0.0
      %v7856 = vand.u32 %v7771, 4294901760
      %7857 = vmatpush2.msra.mxu0 %v7856
      %7858 = vmatprep.subr.mxu0 0.0
      %v7859 = vand.u32 %v7770, 4294901760
      %7860 = vmatpush2.msra.mxu0 %v7859
      %7861 = vmatprep.subr.mxu0 0.0
      %v7862 = vand.u32 %v7769, 4294901760
      %7863 = vmatpush2.msra.mxu0 %v7862
      %7864 = vmatprep.subr.mxu0 0.0
      %v7865 = vand.u32 %v7768, 4294901760
      %7866 = vmatpush2.msra.mxu0 %v7865
      %7867 = vmatprep.subr.mxu0 0.0
      %v7868 = vand.u32 %v7767, 4294901760
      %7869 = vmatpush2.msra.mxu0 %v7868
      %7870 = vmatprep.subr.mxu0 0.0
      %v7871 = vand.u32 %v7766, 4294901760
      %7872 = vmatpush2.msra.mxu0 %v7871
      %7873 = vmatprep.subr.mxu0 0.0
      %v7874 = vand.u32 %v7765, 4294901760
      %7875 = vmatpush2.msra.mxu0 %v7874
      %7876 = vmatprep.subr.mxu0 0.0
      %v7877 = vand.u32 %v7764, 4294901760
      %7878 = vmatpush2.msra.mxu0 %v7877
      %7879 = vmatprep.subr.mxu0 0.0
      %v7880 = vand.u32 %v7763, 4294901760
      %7881 = vmatpush2.msra.mxu0 %v7880
      %v7882 = vand.u32 %v7744, 4294901760
      %v7883 = vsub.f32 %v7744, %v7882
      %v7884 = vand.u32 %v7883, 4294901760
      %v7885 = vsub.f32 %v7883, %v7884
      %v7886 = vand.u32 %v7885, 4294901760
      %7887 = vmatprep.mubr.f32.mxu0 %v7886
      %v7888 = vand.u32 %v7743, 4294901760
      %v7889 = vsub.f32 %v7743, %v7888
      %v7890 = vand.u32 %v7889, 4294901760
      %v7891 = vsub.f32 %v7889, %v7890
      %v7892 = vand.u32 %v7891, 4294901760
      %7893 = vmatmul.mubr.f32.gmra.mxu0 %v7892
      %v7894 = vpop.f32.mrf.mxu0
      %v7895 = vadd.f32 %v7784, %v7894
      %v7896 = vpop.f32.mrf.mxu0
      %v7897 = vand.u32 %v7746, 4294901760
      %v7898 = vsub.f32 %v7746, %v7897
      %v7899 = vand.u32 %v7898, 4294901760
      %v7900 = vsub.f32 %v7898, %v7899
      %v7901 = vand.u32 %v7900, 4294901760
      %7902 = vmatprep.mubr.f32.mxu0 %v7901
      %v7903 = vand.u32 %v7745, 4294901760
      %v7904 = vsub.f32 %v7745, %v7903
      %v7905 = vand.u32 %v7904, 4294901760
      %v7906 = vsub.f32 %v7904, %v7905
      %v7907 = vand.u32 %v7906, 4294901760
      %7908 = vmatmul.mubr.f32.gmra.mxu0 %v7907
      %v7909 = vpop.f32.mrf.mxu0
      %v7910 = vadd.f32 %v7784, %v7909
      %v7911 = vpop.f32.mrf.mxu0
      %7912 = vdwg.mxu0
      %7913 = vmatprep.subr.mxu0 0.0
      %v7914 = vand.u32 %v7762, 4294901760
      %v7915 = vsub.f32 %v7762, %v7914
      %v7916 = vand.u32 %v7915, 4294901760
      %v7917 = vsub.f32 %v7915, %v7916
      %v7918 = vand.u32 %v7917, 4294901760
      %7919 = vmatpush1.msra.mxu0 %v7918
      %7920 = vmatprep.subr.mxu0 0.0
      %v7921 = vand.u32 %v7761, 4294901760
      %v7922 = vsub.f32 %v7761, %v7921
      %v7923 = vand.u32 %v7922, 4294901760
      %v7924 = vsub.f32 %v7922, %v7923
      %v7925 = vand.u32 %v7924, 4294901760
      %7926 = vmatpush1.msra.mxu0 %v7925
      %7927 = vmatprep.subr.mxu0 0.0
      %v7928 = vand.u32 %v7760, 4294901760
      %v7929 = vsub.f32 %v7760, %v7928
      %v7930 = vand.u32 %v7929, 4294901760
      %v7931 = vsub.f32 %v7929, %v7930
      %v7932 = vand.u32 %v7931, 4294901760
      %7933 = vmatpush1.msra.mxu0 %v7932
      %7934 = vmatprep.subr.mxu0 0.0
      %v7935 = vand.u32 %v7759, 4294901760
      %v7936 = vsub.f32 %v7759, %v7935
      %v7937 = vand.u32 %v7936, 4294901760
      %v7938 = vsub.f32 %v7936, %v7937
      %v7939 = vand.u32 %v7938, 4294901760
      %7940 = vmatpush1.msra.mxu0 %v7939
      %7941 = vmatprep.subr.mxu0 0.0
      %v7942 = vand.u32 %v7758, 4294901760
      %v7943 = vsub.f32 %v7758, %v7942
      %v7944 = vand.u32 %v7943, 4294901760
      %v7945 = vsub.f32 %v7943, %v7944
      %v7946 = vand.u32 %v7945, 4294901760
      %7947 = vmatpush1.msra.mxu0 %v7946
      %7948 = vmatprep.subr.mxu0 0.0
      %v7949 = vand.u32 %v7757, 4294901760
      %v7950 = vsub.f32 %v7757, %v7949
      %v7951 = vand.u32 %v7950, 4294901760
      %v7952 = vsub.f32 %v7950, %v7951
      %v7953 = vand.u32 %v7952, 4294901760
      %7954 = vmatpush1.msra.mxu0 %v7953
      %7955 = vmatprep.subr.mxu0 0.0
      %v7956 = vand.u32 %v7756, 4294901760
      %v7957 = vsub.f32 %v7756, %v7956
      %v7958 = vand.u32 %v7957, 4294901760
      %v7959 = vsub.f32 %v7957, %v7958
      %v7960 = vand.u32 %v7959, 4294901760
      %7961 = vmatpush1.msra.mxu0 %v7960
      %7962 = vmatprep.subr.mxu0 0.0
      %v7963 = vand.u32 %v7755, 4294901760
      %v7964 = vsub.f32 %v7755, %v7963
      %v7965 = vand.u32 %v7964, 4294901760
      %v7966 = vsub.f32 %v7964, %v7965
      %v7967 = vand.u32 %v7966, 4294901760
      %7968 = vmatpush1.msra.mxu0 %v7967
      %7969 = vmatprep.subr.mxu0 0.0
      %v7970 = vand.u32 %v7754, 4294901760
      %v7971 = vsub.f32 %v7754, %v7970
      %v7972 = vand.u32 %v7971, 4294901760
      %v7973 = vsub.f32 %v7971, %v7972
      %v7974 = vand.u32 %v7973, 4294901760
      %7975 = vmatpush1.msra.mxu0 %v7974
      %7976 = vmatprep.subr.mxu0 0.0
      %v7977 = vand.u32 %v7753, 4294901760
      %v7978 = vsub.f32 %v7753, %v7977
      %v7979 = vand.u32 %v7978, 4294901760
      %v7980 = vsub.f32 %v7978, %v7979
      %v7981 = vand.u32 %v7980, 4294901760
      %7982 = vmatpush1.msra.mxu0 %v7981
      %7983 = vmatprep.subr.mxu0 0.0
      %v7984 = vand.u32 %v7752, 4294901760
      %v7985 = vsub.f32 %v7752, %v7984
      %v7986 = vand.u32 %v7985, 4294901760
      %v7987 = vsub.f32 %v7985, %v7986
      %v7988 = vand.u32 %v7987, 4294901760
      %7989 = vmatpush1.msra.mxu0 %v7988
      %7990 = vmatprep.subr.mxu0 0.0
      %v7991 = vand.u32 %v7751, 4294901760
      %v7992 = vsub.f32 %v7751, %v7991
      %v7993 = vand.u32 %v7992, 4294901760
      %v7994 = vsub.f32 %v7992, %v7993
      %v7995 = vand.u32 %v7994, 4294901760
      %7996 = vmatpush1.msra.mxu0 %v7995
      %7997 = vmatprep.subr.mxu0 0.0
      %v7998 = vand.u32 %v7750, 4294901760
      %v7999 = vsub.f32 %v7750, %v7998
      %v8000 = vand.u32 %v7999, 4294901760
      %v8001 = vsub.f32 %v7999, %v8000
      %v8002 = vand.u32 %v8001, 4294901760
      %8003 = vmatpush1.msra.mxu0 %v8002
      %8004 = vmatprep.subr.mxu0 0.0
      %v8005 = vand.u32 %v7749, 4294901760
      %v8006 = vsub.f32 %v7749, %v8005
      %v8007 = vand.u32 %v8006, 4294901760
      %v8008 = vsub.f32 %v8006, %v8007
      %v8009 = vand.u32 %v8008, 4294901760
      %8010 = vmatpush1.msra.mxu0 %v8009
      %8011 = vmatprep.subr.mxu0 0.0
      %v8012 = vand.u32 %v7748, 4294901760
      %v8013 = vsub.f32 %v7748, %v8012
      %v8014 = vand.u32 %v8013, 4294901760
      %v8015 = vsub.f32 %v8013, %v8014
      %v8016 = vand.u32 %v8015, 4294901760
      %8017 = vmatpush1.msra.mxu0 %v8016
      %8018 = vmatprep.subr.mxu0 0.0
      %v8019 = vand.u32 %v7747, 4294901760
      %v8020 = vsub.f32 %v7747, %v8019
      %v8021 = vand.u32 %v8020, 4294901760
      %v8022 = vsub.f32 %v8020, %v8021
      %v8023 = vand.u32 %v8022, 4294901760
      %8024 = vmatpush1.msra.mxu0 %v8023
      %8025 = vmatprep.subr.mxu0 0.0
      %v8026 = vand.u32 %v7778, 4294901760
      %v8027 = vsub.f32 %v7778, %v8026
      %v8028 = vand.u32 %v8027, 4294901760
      %v8029 = vsub.f32 %v8027, %v8028
      %v8030 = vand.u32 %v8029, 4294901760
      %8031 = vmatpush2.msra.mxu0 %v8030
      %8032 = vmatprep.subr.mxu0 0.0
      %v8033 = vand.u32 %v7777, 4294901760
      %v8034 = vsub.f32 %v7777, %v8033
      %v8035 = vand.u32 %v8034, 4294901760
      %v8036 = vsub.f32 %v8034, %v8035
      %v8037 = vand.u32 %v8036, 4294901760
      %8038 = vmatpush2.msra.mxu0 %v8037
      %8039 = vmatprep.subr.mxu0 0.0
      %v8040 = vand.u32 %v7776, 4294901760
      %v8041 = vsub.f32 %v7776, %v8040
      %v8042 = vand.u32 %v8041, 4294901760
      %v8043 = vsub.f32 %v8041, %v8042
      %v8044 = vand.u32 %v8043, 4294901760
      %8045 = vmatpush2.msra.mxu0 %v8044
      %8046 = vmatprep.subr.mxu0 0.0
      %v8047 = vand.u32 %v7775, 4294901760
      %v8048 = vsub.f32 %v7775, %v8047
      %v8049 = vand.u32 %v8048, 4294901760
      %v8050 = vsub.f32 %v8048, %v8049
      %v8051 = vand.u32 %v8050, 4294901760
      %8052 = vmatpush2.msra.mxu0 %v8051
      %8053 = vmatprep.subr.mxu0 0.0
      %v8054 = vand.u32 %v7774, 4294901760
      %v8055 = vsub.f32 %v7774, %v8054
      %v8056 = vand.u32 %v8055, 4294901760
      %v8057 = vsub.f32 %v8055, %v8056
      %v8058 = vand.u32 %v8057, 4294901760
      %8059 = vmatpush2.msra.mxu0 %v8058
      %8060 = vmatprep.subr.mxu0 0.0
      %v8061 = vand.u32 %v7773, 4294901760
      %v8062 = vsub.f32 %v7773, %v8061
      %v8063 = vand.u32 %v8062, 4294901760
      %v8064 = vsub.f32 %v8062, %v8063
      %v8065 = vand.u32 %v8064, 4294901760
      %8066 = vmatpush2.msra.mxu0 %v8065
      %8067 = vmatprep.subr.mxu0 0.0
      %v8068 = vand.u32 %v7772, 4294901760
      %v8069 = vsub.f32 %v7772, %v8068
      %v8070 = vand.u32 %v8069, 4294901760
      %v8071 = vsub.f32 %v8069, %v8070
      %v8072 = vand.u32 %v8071, 4294901760
      %8073 = vmatpush2.msra.mxu0 %v8072
      %8074 = vmatprep.subr.mxu0 0.0
      %v8075 = vand.u32 %v7771, 4294901760
      %v8076 = vsub.f32 %v7771, %v8075
      %v8077 = vand.u32 %v8076, 4294901760
      %v8078 = vsub.f32 %v8076, %v8077
      %v8079 = vand.u32 %v8078, 4294901760
      %8080 = vmatpush2.msra.mxu0 %v8079
      %8081 = vmatprep.subr.mxu0 0.0
      %v8082 = vand.u32 %v7770, 4294901760
      %v8083 = vsub.f32 %v7770, %v8082
      %v8084 = vand.u32 %v8083, 4294901760
      %v8085 = vsub.f32 %v8083, %v8084
      %v8086 = vand.u32 %v8085, 4294901760
      %8087 = vmatpush2.msra.mxu0 %v8086
      %8088 = vmatprep.subr.mxu0 0.0
      %v8089 = vand.u32 %v7769, 4294901760
      %v8090 = vsub.f32 %v7769, %v8089
      %v8091 = vand.u32 %v8090, 4294901760
      %v8092 = vsub.f32 %v8090, %v8091
      %v8093 = vand.u32 %v8092, 4294901760
      %8094 = vmatpush2.msra.mxu0 %v8093
      %8095 = vmatprep.subr.mxu0 0.0
      %v8096 = vand.u32 %v7768, 4294901760
      %v8097 = vsub.f32 %v7768, %v8096
      %v8098 = vand.u32 %v8097, 4294901760
      %v8099 = vsub.f32 %v8097, %v8098
      %v8100 = vand.u32 %v8099, 4294901760
      %8101 = vmatpush2.msra.mxu0 %v8100
      %8102 = vmatprep.subr.mxu0 0.0
      %v8103 = vand.u32 %v7767, 4294901760
      %v8104 = vsub.f32 %v7767, %v8103
      %v8105 = vand.u32 %v8104, 4294901760
      %v8106 = vsub.f32 %v8104, %v8105
      %v8107 = vand.u32 %v8106, 4294901760
      %8108 = vmatpush2.msra.mxu0 %v8107
      %8109 = vmatprep.subr.mxu0 0.0
      %v8110 = vand.u32 %v7766, 4294901760
      %v8111 = vsub.f32 %v7766, %v8110
      %v8112 = vand.u32 %v8111, 4294901760
      %v8113 = vsub.f32 %v8111, %v8112
      %v8114 = vand.u32 %v8113, 4294901760
      %8115 = vmatpush2.msra.mxu0 %v8114
      %8116 = vmatprep.subr.mxu0 0.0
      %v8117 = vand.u32 %v7765, 4294901760
      %v8118 = vsub.f32 %v7765, %v8117
      %v8119 = vand.u32 %v8118, 4294901760
      %v8120 = vsub.f32 %v8118, %v8119
      %v8121 = vand.u32 %v8120, 4294901760
      %8122 = vmatpush2.msra.mxu0 %v8121
      %8123 = vmatprep.subr.mxu0 0.0
      %v8124 = vand.u32 %v7764, 4294901760
      %v8125 = vsub.f32 %v7764, %v8124
      %v8126 = vand.u32 %v8125, 4294901760
      %v8127 = vsub.f32 %v8125, %v8126
      %v8128 = vand.u32 %v8127, 4294901760
      %8129 = vmatpush2.msra.mxu0 %v8128
      %8130 = vmatprep.subr.mxu0 0.0
      %v8131 = vand.u32 %v7763, 4294901760
      %v8132 = vsub.f32 %v7763, %v8131
      %v8133 = vand.u32 %v8132, 4294901760
      %v8134 = vsub.f32 %v8132, %v8133
      %v8135 = vand.u32 %v8134, 4294901760
      %8136 = vmatpush2.msra.mxu0 %v8135
      %v8137 = vand.u32 %v7744, 4294901760
      %8138 = vmatprep.mubr.f32.mxu0 %v8137
      %v8139 = vand.u32 %v7743, 4294901760
      %8140 = vmatmul.mubr.f32.gmra.mxu0 %v8139
      %v8141 = vpop.f32.mrf.mxu0
      %v8142 = vadd.f32 %v7895, %v8141
      %v8143 = vpop.f32.mrf.mxu0
      %v8144 = vand.u32 %v7746, 4294901760
      %8145 = vmatprep.mubr.f32.mxu0 %v8144
      %v8146 = vand.u32 %v7745, 4294901760
      %8147 = vmatmul.mubr.f32.gmra.mxu0 %v8146
      %v8148 = vpop.f32.mrf.mxu0
      %v8149 = vadd.f32 %v7910, %v8148
      %v8150 = vpop.f32.mrf.mxu0
      %8151 = vdwg.mxu0
      %8152 = vmatprep.subr.mxu0 0.0
      %v8153 = vand.u32 %v7762, 4294901760
      %v8154 = vsub.f32 %v7762, %v8153
      %8155 = vmatpush1.msra.mxu0 %v8154
      %8156 = vmatprep.subr.mxu0 0.0
      %v8157 = vand.u32 %v7761, 4294901760
      %v8158 = vsub.f32 %v7761, %v8157
      %8159 = vmatpush1.msra.mxu0 %v8158
      %8160 = vmatprep.subr.mxu0 0.0
      %v8161 = vand.u32 %v7760, 4294901760
      %v8162 = vsub.f32 %v7760, %v8161
      %8163 = vmatpush1.msra.mxu0 %v8162
      %8164 = vmatprep.subr.mxu0 0.0
      %v8165 = vand.u32 %v7759, 4294901760
      %v8166 = vsub.f32 %v7759, %v8165
      %8167 = vmatpush1.msra.mxu0 %v8166
      %8168 = vmatprep.subr.mxu0 0.0
      %v8169 = vand.u32 %v7758, 4294901760
      %v8170 = vsub.f32 %v7758, %v8169
      %8171 = vmatpush1.msra.mxu0 %v8170
      %8172 = vmatprep.subr.mxu0 0.0
      %v8173 = vand.u32 %v7757, 4294901760
      %v8174 = vsub.f32 %v7757, %v8173
      %8175 = vmatpush1.msra.mxu0 %v8174
      %8176 = vmatprep.subr.mxu0 0.0
      %v8177 = vand.u32 %v7756, 4294901760
      %v8178 = vsub.f32 %v7756, %v8177
      %8179 = vmatpush1.msra.mxu0 %v8178
      %8180 = vmatprep.subr.mxu0 0.0
      %v8181 = vand.u32 %v7755, 4294901760
      %v8182 = vsub.f32 %v7755, %v8181
      %8183 = vmatpush1.msra.mxu0 %v8182
      %8184 = vmatprep.subr.mxu0 0.0
      %v8185 = vand.u32 %v7754, 4294901760
      %v8186 = vsub.f32 %v7754, %v8185
      %8187 = vmatpush1.msra.mxu0 %v8186
      %8188 = vmatprep.subr.mxu0 0.0
      %v8189 = vand.u32 %v7753, 4294901760
      %v8190 = vsub.f32 %v7753, %v8189
      %8191 = vmatpush1.msra.mxu0 %v8190
      %8192 = vmatprep.subr.mxu0 0.0
      %v8193 = vand.u32 %v7752, 4294901760
      %v8194 = vsub.f32 %v7752, %v8193
      %8195 = vmatpush1.msra.mxu0 %v8194
      %8196 = vmatprep.subr.mxu0 0.0
      %v8197 = vand.u32 %v7751, 4294901760
      %v8198 = vsub.f32 %v7751, %v8197
      %8199 = vmatpush1.msra.mxu0 %v8198
      %8200 = vmatprep.subr.mxu0 0.0
      %v8201 = vand.u32 %v7750, 4294901760
      %v8202 = vsub.f32 %v7750, %v8201
      %8203 = vmatpush1.msra.mxu0 %v8202
      %8204 = vmatprep.subr.mxu0 0.0
      %v8205 = vand.u32 %v7749, 4294901760
      %v8206 = vsub.f32 %v7749, %v8205
      %8207 = vmatpush1.msra.mxu0 %v8206
      %8208 = vmatprep.subr.mxu0 0.0
      %v8209 = vand.u32 %v7748, 4294901760
      %v8210 = vsub.f32 %v7748, %v8209
      %8211 = vmatpush1.msra.mxu0 %v8210
      %8212 = vmatprep.subr.mxu0 0.0
      %v8213 = vand.u32 %v7747, 4294901760
      %v8214 = vsub.f32 %v7747, %v8213
      %8215 = vmatpush1.msra.mxu0 %v8214
      %8216 = vmatprep.subr.mxu0 0.0
      %v8217 = vand.u32 %v7778, 4294901760
      %v8218 = vsub.f32 %v7778, %v8217
      %8219 = vmatpush2.msra.mxu0 %v8218
      %8220 = vmatprep.subr.mxu0 0.0
      %v8221 = vand.u32 %v7777, 4294901760
      %v8222 = vsub.f32 %v7777, %v8221
      %8223 = vmatpush2.msra.mxu0 %v8222
      %8224 = vmatprep.subr.mxu0 0.0
      %v8225 = vand.u32 %v7776, 4294901760
      %v8226 = vsub.f32 %v7776, %v8225
      %8227 = vmatpush2.msra.mxu0 %v8226
      %8228 = vmatprep.subr.mxu0 0.0
      %v8229 = vand.u32 %v7775, 4294901760
      %v8230 = vsub.f32 %v7775, %v8229
      %8231 = vmatpush2.msra.mxu0 %v8230
      %8232 = vmatprep.subr.mxu0 0.0
      %v8233 = vand.u32 %v7774, 4294901760
      %v8234 = vsub.f32 %v7774, %v8233
      %8235 = vmatpush2.msra.mxu0 %v8234
      %8236 = vmatprep.subr.mxu0 0.0
      %v8237 = vand.u32 %v7773, 4294901760
      %v8238 = vsub.f32 %v7773, %v8237
      %8239 = vmatpush2.msra.mxu0 %v8238
      %8240 = vmatprep.subr.mxu0 0.0
      %v8241 = vand.u32 %v7772, 4294901760
      %v8242 = vsub.f32 %v7772, %v8241
      %8243 = vmatpush2.msra.mxu0 %v8242
      %8244 = vmatprep.subr.mxu0 0.0
      %v8245 = vand.u32 %v7771, 4294901760
      %v8246 = vsub.f32 %v7771, %v8245
      %8247 = vmatpush2.msra.mxu0 %v8246
      %8248 = vmatprep.subr.mxu0 0.0
      %v8249 = vand.u32 %v7770, 4294901760
      %v8250 = vsub.f32 %v7770, %v8249
      %8251 = vmatpush2.msra.mxu0 %v8250
      %8252 = vmatprep.subr.mxu0 0.0
      %v8253 = vand.u32 %v7769, 4294901760
      %v8254 = vsub.f32 %v7769, %v8253
      %8255 = vmatpush2.msra.mxu0 %v8254
      %8256 = vmatprep.subr.mxu0 0.0
      %v8257 = vand.u32 %v7768, 4294901760
      %v8258 = vsub.f32 %v7768, %v8257
      %8259 = vmatpush2.msra.mxu0 %v8258
      %8260 = vmatprep.subr.mxu0 0.0
      %v8261 = vand.u32 %v7767, 4294901760
      %v8262 = vsub.f32 %v7767, %v8261
      %8263 = vmatpush2.msra.mxu0 %v8262
      %8264 = vmatprep.subr.mxu0 0.0
      %v8265 = vand.u32 %v7766, 4294901760
      %v8266 = vsub.f32 %v7766, %v8265
      %8267 = vmatpush2.msra.mxu0 %v8266
      %8268 = vmatprep.subr.mxu0 0.0
      %v8269 = vand.u32 %v7765, 4294901760
      %v8270 = vsub.f32 %v7765, %v8269
      %8271 = vmatpush2.msra.mxu0 %v8270
      %8272 = vmatprep.subr.mxu0 0.0
      %v8273 = vand.u32 %v7764, 4294901760
      %v8274 = vsub.f32 %v7764, %v8273
      %8275 = vmatpush2.msra.mxu0 %v8274
      %8276 = vmatprep.subr.mxu0 0.0
      %v8277 = vand.u32 %v7763, 4294901760
      %v8278 = vsub.f32 %v7763, %v8277
      %8279 = vmatpush2.msra.mxu0 %v8278
      %v8280 = vand.u32 %v7744, 4294901760
      %v8281 = vsub.f32 %v7744, %v8280
      %8282 = vmatprep.mubr.f32.mxu0 %v8281
      %v8283 = vand.u32 %v7743, 4294901760
      %v8284 = vsub.f32 %v7743, %v8283
      %8285 = vmatmul.mubr.f32.gmra.mxu0 %v8284
      %v8286 = vpop.f32.mrf.mxu0
      %v8287 = vadd.f32 %v8142, %v8286
      %v8288 = vpop.f32.mrf.mxu0
      %v8289 = vand.u32 %v7746, 4294901760
      %v8290 = vsub.f32 %v7746, %v8289
      %8291 = vmatprep.mubr.f32.mxu0 %v8290
      %v8292 = vand.u32 %v7745, 4294901760
      %v8293 = vsub.f32 %v7745, %v8292
      %8294 = vmatmul.mubr.f32.gmra.mxu0 %v8293
      %v8295 = vpop.f32.mrf.mxu0
      %v8296 = vadd.f32 %v8149, %v8295
      %v8297 = vpop.f32.mrf.mxu0
      %8298 = vdwg.mxu0
      %8299 = vmatprep.subr.mxu0 0.0
      %v8300 = vand.u32 %v7762, 4294901760
      %8301 = vmatpush1.msra.mxu0 %v8300
      %8302 = vmatprep.subr.mxu0 0.0
      %v8303 = vand.u32 %v7761, 4294901760
      %8304 = vmatpush1.msra.mxu0 %v8303
      %8305 = vmatprep.subr.mxu0 0.0
      %v8306 = vand.u32 %v7760, 4294901760
      %8307 = vmatpush1.msra.mxu0 %v8306
      %8308 = vmatprep.subr.mxu0 0.0
      %v8309 = vand.u32 %v7759, 4294901760
      %8310 = vmatpush1.msra.mxu0 %v8309
      %8311 = vmatprep.subr.mxu0 0.0
      %v8312 = vand.u32 %v7758, 4294901760
      %8313 = vmatpush1.msra.mxu0 %v8312
      %8314 = vmatprep.subr.mxu0 0.0
      %v8315 = vand.u32 %v7757, 4294901760
      %8316 = vmatpush1.msra.mxu0 %v8315
      %8317 = vmatprep.subr.mxu0 0.0
      %v8318 = vand.u32 %v7756, 4294901760
      %8319 = vmatpush1.msra.mxu0 %v8318
      %8320 = vmatprep.subr.mxu0 0.0
      %v8321 = vand.u32 %v7755, 4294901760
      %8322 = vmatpush1.msra.mxu0 %v8321
      %8323 = vmatprep.subr.mxu0 0.0
      %v8324 = vand.u32 %v7754, 4294901760
      %8325 = vmatpush1.msra.mxu0 %v8324
      %8326 = vmatprep.subr.mxu0 0.0
      %v8327 = vand.u32 %v7753, 4294901760
      %8328 = vmatpush1.msra.mxu0 %v8327
      %8329 = vmatprep.subr.mxu0 0.0
      %v8330 = vand.u32 %v7752, 4294901760
      %8331 = vmatpush1.msra.mxu0 %v8330
      %8332 = vmatprep.subr.mxu0 0.0
      %v8333 = vand.u32 %v7751, 4294901760
      %8334 = vmatpush1.msra.mxu0 %v8333
      %8335 = vmatprep.subr.mxu0 0.0
      %v8336 = vand.u32 %v7750, 4294901760
      %8337 = vmatpush1.msra.mxu0 %v8336
      %8338 = vmatprep.subr.mxu0 0.0
      %v8339 = vand.u32 %v7749, 4294901760
      %8340 = vmatpush1.msra.mxu0 %v8339
      %8341 = vmatprep.subr.mxu0 0.0
      %v8342 = vand.u32 %v7748, 4294901760
      %8343 = vmatpush1.msra.mxu0 %v8342
      %8344 = vmatprep.subr.mxu0 0.0
      %v8345 = vand.u32 %v7747, 4294901760
      %8346 = vmatpush1.msra.mxu0 %v8345
      %8347 = vmatprep.subr.mxu0 0.0
      %v8348 = vand.u32 %v7778, 4294901760
      %8349 = vmatpush2.msra.mxu0 %v8348
      %8350 = vmatprep.subr.mxu0 0.0
      %v8351 = vand.u32 %v7777, 4294901760
      %8352 = vmatpush2.msra.mxu0 %v8351
      %8353 = vmatprep.subr.mxu0 0.0
      %v8354 = vand.u32 %v7776, 4294901760
      %8355 = vmatpush2.msra.mxu0 %v8354
      %8356 = vmatprep.subr.mxu0 0.0
      %v8357 = vand.u32 %v7775, 4294901760
      %8358 = vmatpush2.msra.mxu0 %v8357
      %8359 = vmatprep.subr.mxu0 0.0
      %v8360 = vand.u32 %v7774, 4294901760
      %8361 = vmatpush2.msra.mxu0 %v8360
      %8362 = vmatprep.subr.mxu0 0.0
      %v8363 = vand.u32 %v7773, 4294901760
      %8364 = vmatpush2.msra.mxu0 %v8363
      %8365 = vmatprep.subr.mxu0 0.0
      %v8366 = vand.u32 %v7772, 4294901760
      %8367 = vmatpush2.msra.mxu0 %v8366
      %8368 = vmatprep.subr.mxu0 0.0
      %v8369 = vand.u32 %v7771, 4294901760
      %8370 = vmatpush2.msra.mxu0 %v8369
      %8371 = vmatprep.subr.mxu0 0.0
      %v8372 = vand.u32 %v7770, 4294901760
      %8373 = vmatpush2.msra.mxu0 %v8372
      %8374 = vmatprep.subr.mxu0 0.0
      %v8375 = vand.u32 %v7769, 4294901760
      %8376 = vmatpush2.msra.mxu0 %v8375
      %8377 = vmatprep.subr.mxu0 0.0
      %v8378 = vand.u32 %v7768, 4294901760
      %8379 = vmatpush2.msra.mxu0 %v8378
      %8380 = vmatprep.subr.mxu0 0.0
      %v8381 = vand.u32 %v7767, 4294901760
      %8382 = vmatpush2.msra.mxu0 %v8381
      %8383 = vmatprep.subr.mxu0 0.0
      %v8384 = vand.u32 %v7766, 4294901760
      %8385 = vmatpush2.msra.mxu0 %v8384
      %8386 = vmatprep.subr.mxu0 0.0
      %v8387 = vand.u32 %v7765, 4294901760
      %8388 = vmatpush2.msra.mxu0 %v8387
      %8389 = vmatprep.subr.mxu0 0.0
      %v8390 = vand.u32 %v7764, 4294901760
      %8391 = vmatpush2.msra.mxu0 %v8390
      %8392 = vmatprep.subr.mxu0 0.0
      %v8393 = vand.u32 %v7763, 4294901760
      %8394 = vmatpush2.msra.mxu0 %v8393
      %v8395 = vand.u32 %v7744, 4294901760
      %v8396 = vsub.f32 %v7744, %v8395
      %v8397 = vand.u32 %v8396, 4294901760
      %8398 = vmatprep.mubr.f32.mxu0 %v8397
      %v8399 = vand.u32 %v7743, 4294901760
      %v8400 = vsub.f32 %v7743, %v8399
      %v8401 = vand.u32 %v8400, 4294901760
      %8402 = vmatmul.mubr.f32.gmra.mxu0 %v8401
      %v8403 = vpop.f32.mrf.mxu0
      %v8404 = vadd.f32 %v8287, %v8403
      %v8405 = vpop.f32.mrf.mxu0
      %v8406 = vand.u32 %v7746, 4294901760
      %v8407 = vsub.f32 %v7746, %v8406
      %v8408 = vand.u32 %v8407, 4294901760
      %8409 = vmatprep.mubr.f32.mxu0 %v8408
      %v8410 = vand.u32 %v7745, 4294901760
      %v8411 = vsub.f32 %v7745, %v8410
      %v8412 = vand.u32 %v8411, 4294901760
      %8413 = vmatmul.mubr.f32.gmra.mxu0 %v8412
      %v8414 = vpop.f32.mrf.mxu0
      %v8415 = vadd.f32 %v8296, %v8414
      %v8416 = vpop.f32.mrf.mxu0
      %8417 = vdwg.mxu0
      %8418 = vmatprep.subr.mxu0 0.0
      %v8419 = vand.u32 %v7762, 4294901760
      %v8420 = vsub.f32 %v7762, %v8419
      %v8421 = vand.u32 %v8420, 4294901760
      %8422 = vmatpush1.msra.mxu0 %v8421
      %8423 = vmatprep.subr.mxu0 0.0
      %v8424 = vand.u32 %v7761, 4294901760
      %v8425 = vsub.f32 %v7761, %v8424
      %v8426 = vand.u32 %v8425, 4294901760
      %8427 = vmatpush1.msra.mxu0 %v8426
      %8428 = vmatprep.subr.mxu0 0.0
      %v8429 = vand.u32 %v7760, 4294901760
      %v8430 = vsub.f32 %v7760, %v8429
      %v8431 = vand.u32 %v8430, 4294901760
      %8432 = vmatpush1.msra.mxu0 %v8431
      %8433 = vmatprep.subr.mxu0 0.0
      %v8434 = vand.u32 %v7759, 4294901760
      %v8435 = vsub.f32 %v7759, %v8434
      %v8436 = vand.u32 %v8435, 4294901760
      %8437 = vmatpush1.msra.mxu0 %v8436
      %8438 = vmatprep.subr.mxu0 0.0
      %v8439 = vand.u32 %v7758, 4294901760
      %v8440 = vsub.f32 %v7758, %v8439
      %v8441 = vand.u32 %v8440, 4294901760
      %8442 = vmatpush1.msra.mxu0 %v8441
      %8443 = vmatprep.subr.mxu0 0.0
      %v8444 = vand.u32 %v7757, 4294901760
      %v8445 = vsub.f32 %v7757, %v8444
      %v8446 = vand.u32 %v8445, 4294901760
      %8447 = vmatpush1.msra.mxu0 %v8446
      %8448 = vmatprep.subr.mxu0 0.0
      %v8449 = vand.u32 %v7756, 4294901760
      %v8450 = vsub.f32 %v7756, %v8449
      %v8451 = vand.u32 %v8450, 4294901760
      %8452 = vmatpush1.msra.mxu0 %v8451
      %8453 = vmatprep.subr.mxu0 0.0
      %v8454 = vand.u32 %v7755, 4294901760
      %v8455 = vsub.f32 %v7755, %v8454
      %v8456 = vand.u32 %v8455, 4294901760
      %8457 = vmatpush1.msra.mxu0 %v8456
      %8458 = vmatprep.subr.mxu0 0.0
      %v8459 = vand.u32 %v7754, 4294901760
      %v8460 = vsub.f32 %v7754, %v8459
      %v8461 = vand.u32 %v8460, 4294901760
      %8462 = vmatpush1.msra.mxu0 %v8461
      %8463 = vmatprep.subr.mxu0 0.0
      %v8464 = vand.u32 %v7753, 4294901760
      %v8465 = vsub.f32 %v7753, %v8464
      %v8466 = vand.u32 %v8465, 4294901760
      %8467 = vmatpush1.msra.mxu0 %v8466
      %8468 = vmatprep.subr.mxu0 0.0
      %v8469 = vand.u32 %v7752, 4294901760
      %v8470 = vsub.f32 %v7752, %v8469
      %v8471 = vand.u32 %v8470, 4294901760
      %8472 = vmatpush1.msra.mxu0 %v8471
      %8473 = vmatprep.subr.mxu0 0.0
      %v8474 = vand.u32 %v7751, 4294901760
      %v8475 = vsub.f32 %v7751, %v8474
      %v8476 = vand.u32 %v8475, 4294901760
      %8477 = vmatpush1.msra.mxu0 %v8476
      %8478 = vmatprep.subr.mxu0 0.0
      %v8479 = vand.u32 %v7750, 4294901760
      %v8480 = vsub.f32 %v7750, %v8479
      %v8481 = vand.u32 %v8480, 4294901760
      %8482 = vmatpush1.msra.mxu0 %v8481
      %8483 = vmatprep.subr.mxu0 0.0
      %v8484 = vand.u32 %v7749, 4294901760
      %v8485 = vsub.f32 %v7749, %v8484
      %v8486 = vand.u32 %v8485, 4294901760
      %8487 = vmatpush1.msra.mxu0 %v8486
      %8488 = vmatprep.subr.mxu0 0.0
      %v8489 = vand.u32 %v7748, 4294901760
      %v8490 = vsub.f32 %v7748, %v8489
      %v8491 = vand.u32 %v8490, 4294901760
      %8492 = vmatpush1.msra.mxu0 %v8491
      %8493 = vmatprep.subr.mxu0 0.0
      %v8494 = vand.u32 %v7747, 4294901760
      %v8495 = vsub.f32 %v7747, %v8494
      %v8496 = vand.u32 %v8495, 4294901760
      %8497 = vmatpush1.msra.mxu0 %v8496
      %8498 = vmatprep.subr.mxu0 0.0
      %v8499 = vand.u32 %v7778, 4294901760
      %v8500 = vsub.f32 %v7778, %v8499
      %v8501 = vand.u32 %v8500, 4294901760
      %8502 = vmatpush2.msra.mxu0 %v8501
      %8503 = vmatprep.subr.mxu0 0.0
      %v8504 = vand.u32 %v7777, 4294901760
      %v8505 = vsub.f32 %v7777, %v8504
      %v8506 = vand.u32 %v8505, 4294901760
      %8507 = vmatpush2.msra.mxu0 %v8506
      %8508 = vmatprep.subr.mxu0 0.0
      %v8509 = vand.u32 %v7776, 4294901760
      %v8510 = vsub.f32 %v7776, %v8509
      %v8511 = vand.u32 %v8510, 4294901760
      %8512 = vmatpush2.msra.mxu0 %v8511
      %8513 = vmatprep.subr.mxu0 0.0
      %v8514 = vand.u32 %v7775, 4294901760
      %v8515 = vsub.f32 %v7775, %v8514
      %v8516 = vand.u32 %v8515, 4294901760
      %8517 = vmatpush2.msra.mxu0 %v8516
      %8518 = vmatprep.subr.mxu0 0.0
      %v8519 = vand.u32 %v7774, 4294901760
      %v8520 = vsub.f32 %v7774, %v8519
      %v8521 = vand.u32 %v8520, 4294901760
      %8522 = vmatpush2.msra.mxu0 %v8521
      %8523 = vmatprep.subr.mxu0 0.0
      %v8524 = vand.u32 %v7773, 4294901760
      %v8525 = vsub.f32 %v7773, %v8524
      %v8526 = vand.u32 %v8525, 4294901760
      %8527 = vmatpush2.msra.mxu0 %v8526
      %8528 = vmatprep.subr.mxu0 0.0
      %v8529 = vand.u32 %v7772, 4294901760
      %v8530 = vsub.f32 %v7772, %v8529
      %v8531 = vand.u32 %v8530, 4294901760
      %8532 = vmatpush2.msra.mxu0 %v8531
      %8533 = vmatprep.subr.mxu0 0.0
      %v8534 = vand.u32 %v7771, 4294901760
      %v8535 = vsub.f32 %v7771, %v8534
      %v8536 = vand.u32 %v8535, 4294901760
      %8537 = vmatpush2.msra.mxu0 %v8536
      %8538 = vmatprep.subr.mxu0 0.0
      %v8539 = vand.u32 %v7770, 4294901760
      %v8540 = vsub.f32 %v7770, %v8539
      %v8541 = vand.u32 %v8540, 4294901760
      %8542 = vmatpush2.msra.mxu0 %v8541
      %8543 = vmatprep.subr.mxu0 0.0
      %v8544 = vand.u32 %v7769, 4294901760
      %v8545 = vsub.f32 %v7769, %v8544
      %v8546 = vand.u32 %v8545, 4294901760
      %8547 = vmatpush2.msra.mxu0 %v8546
      %8548 = vmatprep.subr.mxu0 0.0
      %v8549 = vand.u32 %v7768, 4294901760
      %v8550 = vsub.f32 %v7768, %v8549
      %v8551 = vand.u32 %v8550, 4294901760
      %8552 = vmatpush2.msra.mxu0 %v8551
      %8553 = vmatprep.subr.mxu0 0.0
      %v8554 = vand.u32 %v7767, 4294901760
      %v8555 = vsub.f32 %v7767, %v8554
      %v8556 = vand.u32 %v8555, 4294901760
      %8557 = vmatpush2.msra.mxu0 %v8556
      %8558 = vmatprep.subr.mxu0 0.0
      %v8559 = vand.u32 %v7766, 4294901760
      %v8560 = vsub.f32 %v7766, %v8559
      %v8561 = vand.u32 %v8560, 4294901760
      %8562 = vmatpush2.msra.mxu0 %v8561
      %8563 = vmatprep.subr.mxu0 0.0
      %v8564 = vand.u32 %v7765, 4294901760
      %v8565 = vsub.f32 %v7765, %v8564
      %v8566 = vand.u32 %v8565, 4294901760
      %8567 = vmatpush2.msra.mxu0 %v8566
      %8568 = vmatprep.subr.mxu0 0.0
      %v8569 = vand.u32 %v7764, 4294901760
      %v8570 = vsub.f32 %v7764, %v8569
      %v8571 = vand.u32 %v8570, 4294901760
      %8572 = vmatpush2.msra.mxu0 %v8571
      %8573 = vmatprep.subr.mxu0 0.0
      %v8574 = vand.u32 %v7763, 4294901760
      %v8575 = vsub.f32 %v7763, %v8574
      %v8576 = vand.u32 %v8575, 4294901760
      %8577 = vmatpush2.msra.mxu0 %v8576
      %v8578 = vand.u32 %v7744, 4294901760
      %8579 = vmatprep.mubr.f32.mxu0 %v8578
      %v8580 = vand.u32 %v7743, 4294901760
      %8581 = vmatmul.mubr.f32.gmra.mxu0 %v8580
      %v8582 = vpop.f32.mrf.mxu0
      %v8583 = vadd.f32 %v8404, %v8582
      %v8584 = vpop.f32.mrf.mxu0
      %v8585 = vand.u32 %v7746, 4294901760
      %8586 = vmatprep.mubr.f32.mxu0 %v8585
      %v8587 = vand.u32 %v7745, 4294901760
      %8588 = vmatmul.mubr.f32.gmra.mxu0 %v8587
      %v8589 = vpop.f32.mrf.mxu0
      %v8590 = vadd.f32 %v8415, %v8589
      %v8591 = vpop.f32.mrf.mxu0
      %8592 = vdwg.mxu0
      %8593 = vmatprep.subr.mxu0 0.0
      %v8594 = vand.u32 %v7762, 4294901760
      %8595 = vmatpush1.msra.mxu0 %v8594
      %8596 = vmatprep.subr.mxu0 0.0
      %v8597 = vand.u32 %v7761, 4294901760
      %8598 = vmatpush1.msra.mxu0 %v8597
      %8599 = vmatprep.subr.mxu0 0.0
      %v8600 = vand.u32 %v7760, 4294901760
      %8601 = vmatpush1.msra.mxu0 %v8600
      %8602 = vmatprep.subr.mxu0 0.0
      %v8603 = vand.u32 %v7759, 4294901760
      %8604 = vmatpush1.msra.mxu0 %v8603
      %8605 = vmatprep.subr.mxu0 0.0
      %v8606 = vand.u32 %v7758, 4294901760
      %8607 = vmatpush1.msra.mxu0 %v8606
      %8608 = vmatprep.subr.mxu0 0.0
      %v8609 = vand.u32 %v7757, 4294901760
      %8610 = vmatpush1.msra.mxu0 %v8609
      %8611 = vmatprep.subr.mxu0 0.0
      %v8612 = vand.u32 %v7756, 4294901760
      %8613 = vmatpush1.msra.mxu0 %v8612
      %8614 = vmatprep.subr.mxu0 0.0
      %v8615 = vand.u32 %v7755, 4294901760
      %8616 = vmatpush1.msra.mxu0 %v8615
      %8617 = vmatprep.subr.mxu0 0.0
      %v8618 = vand.u32 %v7754, 4294901760
      %8619 = vmatpush1.msra.mxu0 %v8618
      %8620 = vmatprep.subr.mxu0 0.0
      %v8621 = vand.u32 %v7753, 4294901760
      %8622 = vmatpush1.msra.mxu0 %v8621
      %8623 = vmatprep.subr.mxu0 0.0
      %v8624 = vand.u32 %v7752, 4294901760
      %8625 = vmatpush1.msra.mxu0 %v8624
      %8626 = vmatprep.subr.mxu0 0.0
      %v8627 = vand.u32 %v7751, 4294901760
      %8628 = vmatpush1.msra.mxu0 %v8627
      %8629 = vmatprep.subr.mxu0 0.0
      %v8630 = vand.u32 %v7750, 4294901760
      %8631 = vmatpush1.msra.mxu0 %v8630
      %8632 = vmatprep.subr.mxu0 0.0
      %v8633 = vand.u32 %v7749, 4294901760
      %8634 = vmatpush1.msra.mxu0 %v8633
      %8635 = vmatprep.subr.mxu0 0.0
      %v8636 = vand.u32 %v7748, 4294901760
      %8637 = vmatpush1.msra.mxu0 %v8636
      %8638 = vmatprep.subr.mxu0 0.0
      %v8639 = vand.u32 %v7747, 4294901760
      %8640 = vmatpush1.msra.mxu0 %v8639
      %8641 = vmatprep.subr.mxu0 0.0
      %v8642 = vand.u32 %v7778, 4294901760
      %8643 = vmatpush2.msra.mxu0 %v8642
      %8644 = vmatprep.subr.mxu0 0.0
      %v8645 = vand.u32 %v7777, 4294901760
      %8646 = vmatpush2.msra.mxu0 %v8645
      %8647 = vmatprep.subr.mxu0 0.0
      %v8648 = vand.u32 %v7776, 4294901760
      %8649 = vmatpush2.msra.mxu0 %v8648
      %8650 = vmatprep.subr.mxu0 0.0
      %v8651 = vand.u32 %v7775, 4294901760
      %8652 = vmatpush2.msra.mxu0 %v8651
      %8653 = vmatprep.subr.mxu0 0.0
      %v8654 = vand.u32 %v7774, 4294901760
      %8655 = vmatpush2.msra.mxu0 %v8654
      %8656 = vmatprep.subr.mxu0 0.0
      %v8657 = vand.u32 %v7773, 4294901760
      %8658 = vmatpush2.msra.mxu0 %v8657
      %8659 = vmatprep.subr.mxu0 0.0
      %v8660 = vand.u32 %v7772, 4294901760
      %8661 = vmatpush2.msra.mxu0 %v8660
      %8662 = vmatprep.subr.mxu0 0.0
      %v8663 = vand.u32 %v7771, 4294901760
      %8664 = vmatpush2.msra.mxu0 %v8663
      %8665 = vmatprep.subr.mxu0 0.0
      %v8666 = vand.u32 %v7770, 4294901760
      %8667 = vmatpush2.msra.mxu0 %v8666
      %8668 = vmatprep.subr.mxu0 0.0
      %v8669 = vand.u32 %v7769, 4294901760
      %8670 = vmatpush2.msra.mxu0 %v8669
      %8671 = vmatprep.subr.mxu0 0.0
      %v8672 = vand.u32 %v7768, 4294901760
      %8673 = vmatpush2.msra.mxu0 %v8672
      %8674 = vmatprep.subr.mxu0 0.0
      %v8675 = vand.u32 %v7767, 4294901760
      %8676 = vmatpush2.msra.mxu0 %v8675
      %8677 = vmatprep.subr.mxu0 0.0
      %v8678 = vand.u32 %v7766, 4294901760
      %8679 = vmatpush2.msra.mxu0 %v8678
      %8680 = vmatprep.subr.mxu0 0.0
      %v8681 = vand.u32 %v7765, 4294901760
      %8682 = vmatpush2.msra.mxu0 %v8681
      %8683 = vmatprep.subr.mxu0 0.0
      %v8684 = vand.u32 %v7764, 4294901760
      %8685 = vmatpush2.msra.mxu0 %v8684
      %8686 = vmatprep.subr.mxu0 0.0
      %v8687 = vand.u32 %v7763, 4294901760
      %8688 = vmatpush2.msra.mxu0 %v8687
      %v8689 = vand.u32 %v7744, 4294901760
      %8690 = vmatprep.mubr.f32.mxu0 %v8689
      %v8691 = vand.u32 %v7743, 4294901760
      %8692 = vmatmul.mubr.f32.gmra.mxu0 %v8691
      %v8693 = vpop.f32.mrf.mxu0
      %v8694 = vadd.f32 %v8583, %v8693
      %v8695 = vpop.f32.mrf.mxu0
      %v8696 = vand.u32 %v7746, 4294901760
      %8697 = vmatprep.mubr.f32.mxu0 %v8696
      %v8698 = vand.u32 %v7745, 4294901760
      %8699 = vmatmul.mubr.f32.gmra.mxu0 %v8698
      %v8700 = vpop.f32.mrf.mxu0
      %v8701 = vadd.f32 %v8590, %v8700
      %v8702 = vpop.f32.mrf.mxu0
      %8703 = vdwg.mxu0
      %vm8704 = vcmask 228352
      %8705 = vst.msk [vmem:[#allocation4] sm:$0xff] %vm8704, %v8694
      %vm8706 = vcmask 222208
      %8707 = vst.msk [vmem:[#allocation4 + $0x8] sm:$0x3] %vm8706, %v8701
    $region33: #{supv_localize_forward.1} parent=1 // pred_fallthru
      _
    %s8708 = sadd.s32 0, 0
    %p8709 = scmp.lt.s32.totalorder %s8708, 0
    %s8710 = scalar_select %p8709, %s8708, 0
    %s8711 = smul.addr %s8710, 3
    %s8712 = scalar_lea.vmem %s5, %s8711
    // Predicated region
    $region34: #{supv_localize_forward.1} parent=1 // pred_check
      _
    $region35: #{supv_localize_forward.1} parent=1 // pred_check_branch
      %8714 = sbr.rel (0) target = $region37
    $region36: #{supv_localize_forward.1} parent=1 // pred_region
      %s8715 = sadd.s32 0, 0
    $region37: #{supv_localize_forward.1} parent=1 // pred_fallthru
      _
    // Predicated region
    $region38: #{supv_localize_forward.1} parent=1 // pred_check
      _
    $region39: #{supv_localize_forward.1} parent=1 // pred_check_branch
      %8717 = sbr.rel (0) target = $region41
    $region40: #{supv_localize_forward.1} parent=1 // pred_region
      %s8719 = ssub.s32 256, 256
      %8720 = vsyncadd [#allocation5], %s8719
      %s8721 = sshll.u32 [#allocation4], 4
      %s8722 = int_to_ptr.vmem [resolvable:$true] %s8721
      %8727 = dma.vmem_to_hbm [thread:$0]  %s8722, 256, %s6, [#allocation5], 128, 128, 8
    $region41: #{supv_localize_forward.1} parent=1 // pred_fallthru
      _
    // Predicated region
    $region42: #{supv_localize_forward.1} parent=1 // pred_check
      _
    $region43: #{supv_localize_forward.1} parent=1 // pred_check_branch
      %8729 = sbr.rel (0) target = $region45
    $region44: #{supv_localize_forward.1} parent=1 // pred_region
      %s8730 = sadd.s32 0, 0
      %p8731 = scmp.lt.s32.totalorder %s8730, 0
      %s8732 = scalar_select %p8731, %s8730, 0
      %s8733 = smul.addr %s8732, 3
      %s8734 = scalar_lea.vmem %s5, %s8733
    $region45: #{supv_localize_forward.1} parent=1 // pred_fallthru
      _
    // Predicated region
    $region46: #{supv_localize_forward.1} parent=1 // pred_check
      _
    $region47: #{supv_localize_forward.1} parent=1 // pred_check_branch
      %8736 = sbr.rel (0) target = $region49
    $region48: #{supv_localize_forward.1} parent=1 // pred_region
      %8737 = dma.done [#allocation5], 256
    $region49: #{supv_localize_forward.1} parent=1 // pred_fallthru
      _
    %8738 = vsyncpa [#allocation5], 1

</llo_original>
